<compile_context>
chip_gen: v7x
topology: tpu7x:2x2x1
jax: 0.10.0
libtpu: 0.0.40
codegen_flags: <defaults>
</compile_context>

<pallas_src>
import numpy as np
import jax
import jax.numpy as jnp
from jax import lax
from jax.experimental import pallas as pl
from jax.experimental.pallas import tpu as pltpu

# (Cin, Cout, kernel, stride) of the torch nn.Sequential cnn
CONV_CFG = [
    (2, 32, 8, 4),
    (32, 64, 4, 2),
    (64, 64, 3, 1),
    (64, 64, 3, 1),
    (64, 64, 3, 1),
    (64, 128, 3, 1),
]
IMAGE_SHAPE = (2, 84, 84)   # (C, H, W). 84x84 -> final spatial 1x1.
EMBED_SIZE = 128
_PSTRIDE = 10               # per-image column stride in the stacked-W layout

# The fused kernel hard-codes this geometry (incl. the k == 2*s rewrites for the
# two strided layers) -- assert it so a config change cannot silently be wrong.
_EXPECTED_CFG = [(2, 32, 8, 4), (32, 64, 4, 2), (64, 64, 3, 1),
                 (64, 64, 3, 1), (64, 64, 3, 1), (64, 128, 3, 1)]
assert CONV_CFG == _EXPECTED_CFG and IMAGE_SHAPE == (2, 84, 84)

# TODO(synk): the torch module also defines nn.Linear(1600, embed_size) but
# never calls it in forward(); it is intentionally not implemented here.


def _stacked_width(nb):
    """Stacked width: nb images * stride 10, >=8 pad cols, rounded to mult of 16."""
    return ((nb * _PSTRIDE + 8 + 15) // 16) * 16


# --------------------------------------------------------------------------
# Fused kernel: whole conv stack for NB images per grid step.
# --------------------------------------------------------------------------
def _make_kernel(nb, sp):
    f32 = jnp.float32
    bf16 = jnp.bfloat16
    n20 = 20 * sp            # rows per W-parity half of the layer-0 output

    def kernel(x_ref,
               w0_ref, b0_ref, w1_ref, b1_ref, w2_ref, b2_ref,
               w3_ref, b3_ref, w4_ref, b4_ref, w5_ref, b5_ref,
               o_ref,
               a0_ref, a1_ref, a2_ref, a3_ref, a4_ref):
        # ---- layer 0: Conv(2->32, k=8, s=4) + ReLU == ONE matmul over the
        # wrapper-built im2col input (M = 2*20*sp, K = 128 = full MXU depth).
        y = jnp.dot(x_ref[...], w0_ref[...], preferred_element_type=f32)
        a0_ref[...] = jnp.maximum(y + b0_ref[...], 0.0)

        # ---- layer 1: Conv(32->64, k=4, s=2) + ReLU == TWO matmuls.
        # a0 rows are ordered (w-parity q, h-parity, h//2, image, u), so every
        # stride-2 tap is a sublane-ALIGNED slice at a constant row offset; the
        # kw in {2,3} taps become a +1 row shift of the second matmul result.
        pieces = []
        for kh in range(4):
            base = ((kh % 2) * 10 + kh // 2) * sp
            for q in range(2):
                r0 = q * n20 + base
                pieces.append(a0_ref[r0:r0 + 9 * sp, :])           # [9*sp, 32]
        p1 = jnp.concatenate(pieces, axis=1).astype(bf16)          # [9*sp, 256]
        q0 = jnp.dot(p1, w1_ref[0], preferred_element_type=f32)
        q1 = jnp.dot(p1, w1_ref[1], preferred_element_type=f32)
        m1 = 9 * sp - 8
        acc1 = q0[0:m1, :] + q1[1:1 + m1, :] + b1_ref[...]
        a1_ref[0:m1, :] = jnp.maximum(acc1, 0.0)

        # ---- layers 2..5: 3x3 stride-1 convs == 3 matmuls each.
        # kh folded into K (aligned row slices + lane concat), kw folded into
        # +0/+1/+2 row shifts of the three matmul results.
        def conv3x3(src_ref, w_ref, b_ref, dst_ref, hi, relu):
            ho = hi - 2
            m = ho * sp
            p = jnp.concatenate(
                [src_ref[kh * sp:kh * sp + m, :] for kh in range(3)],
                axis=1).astype(bf16)                               # [m, 3*Cin]
            r0 = jnp.dot(p, w_ref[0], preferred_element_type=f32)
            r1 = jnp.dot(p, w_ref[1], preferred_element_type=f32)
            r2 = jnp.dot(p, w_ref[2], preferred_element_type=f32)
            mL = m - 8
            out = r0[0:mL, :] + r1[1:1 + mL, :] + r2[2:2 + mL, :] + b_ref[...]
            if relu:
                out = jnp.maximum(out, 0.0)
            dst_ref[0:mL, :] = out
            return mL

        conv3x3(a1_ref, w2_ref, b2_ref, a2_ref, 9, True)
        conv3x3(a2_ref, w3_ref, b3_ref, a3_ref, 7, True)
        conv3x3(a3_ref, w4_ref, b4_ref, a4_ref, 5, True)
        mL = conv3x3(a4_ref, w5_ref, b5_ref, o_ref, 3, False)      # last conv: no ReLU
        o_ref[mL:sp, :] = jnp.zeros((sp - mL, EMBED_SIZE), f32)    # deterministic tail

    return kernel


def _fused_encoder_call(x_in, kparams, *, nb, sp, nblk):
    f32 = jnp.float32
    kernel = _make_kernel(nb, sp)
    rows_in = 2 * 20 * sp

    in_specs = [pl.BlockSpec((rows_in, 128), lambda g: (g, 0))]
    args = [x_in]
    for w, b in kparams:
        # Grid-invariant weights/biases: full-array blocks, constant index_map.
        in_specs.append(pl.BlockSpec(w.shape, lambda g, n=w.ndim: (0,) * n))
        in_specs.append(pl.BlockSpec(b.shape, lambda g: (0, 0)))
        args += [w, b]

    return pl.pallas_call(
        kernel,
        out_shape=jax.ShapeDtypeStruct((nblk * sp, EMBED_SIZE), f32),
        grid=(nblk,),
        in_specs=in_specs,
        out_specs=pl.BlockSpec((sp, EMBED_SIZE), lambda g: (g, 0)),
        scratch_shapes=[
            pltpu.VMEM((2 * 20 * sp, 32), f32),   # layer-0 output (parity split)
            pltpu.VMEM((9 * sp, 64), f32),        # layer-1 output
            pltpu.VMEM((7 * sp, 64), f32),        # layer-2 output
            pltpu.VMEM((5 * sp, 64), f32),        # layer-3 output
            pltpu.VMEM((3 * sp, 64), f32),        # layer-4 output
        ],
        # "parallel" batch-block axis: feeds both v7x TensorCores; harmless on
        # v5e/v6e.  Every step is independent (scratch fully re-derived).
        compiler_params=pltpu.CompilerParams(dimension_semantics=("parallel",)),
    )(*args)


# --------------------------------------------------------------------------
# Parameter / input preparation (tiny layout plumbing, done in plain XLA).
# --------------------------------------------------------------------------
def _prepare_params(params):
    """Flatten conv weights into the bf16 matrices the kernel multiplies by."""
    bf16, f32 = jnp.bfloat16, jnp.float32
    out = []
    w0, b0 = params[0]                                   # [8,8,2,32] HWIO
    # rows ordered (i, j, fh, fw, cin) with kh = 4i+fh, kw = 4j+fw
    w0k = w0.reshape(2, 4, 2, 4, 2, 32).transpose(0, 2, 1, 3, 4, 5).reshape(128, 32)
    out.append((w0k.astype(bf16), b0.reshape(1, -1).astype(f32)))

    w1, b1 = params[1]                                   # [4,4,32,64], kw = 2m+q
    w1k = w1.reshape(4, 2, 2, 32, 64).transpose(1, 0, 2, 3, 4).reshape(2, 256, 64)
    out.append((w1k.astype(bf16), b1.reshape(1, -1).astype(f32)))

    for w, b in params[2:]:                              # [3,3,Cin,Cout]
        kh, kw, cin, cout = w.shape
        wk = w.transpose(1, 0, 2, 3).reshape(kw, kh * cin, cout)   # [3, 3*Cin, Cout]
        out.append((wk.astype(bf16), b.reshape(1, -1).astype(f32)))
    return out


def init_params(key):
    # Deterministic synthetic init (PyTorch-like uniform(-1/sqrt(fan_in), ...)).
    params = []
    for (cin, cout, k, _s) in CONV_CFG:
        key, kw_, kb_ = jax.random.split(key, 3)
        bound = 1.0 / np.sqrt(cin * k * k)
        w = jax.random.uniform(kw_, (k, k, cin, cout), jnp.float32, -bound, bound)
        b = jax.random.uniform(kb_, (cout,), jnp.float32, -bound, bound)
        params.append((w, b))
    return params


def _pick_block(batch):
    for nb in (8, 4, 2, 1):
        if batch % nb == 0 and batch // nb >= 2:
            return nb
    return batch


def image_encoder_forward(image, params, normalize_pixel=False, block_images=None):
    batch_size = image.shape[0]
    x = jnp.reshape(image, (-1,) + IMAGE_SHAPE).astype(jnp.float32)   # NCHW, as in torch
    if normalize_pixel:
        x = x / 255.0
    B = x.shape[0]
    nb = block_images if block_images is not None else _pick_block(B)
    assert B % nb == 0
    nblk = B // nb
    sp = _stacked_width(nb)

    # NCHW -> NHWC, then space-to-depth(f=4): [B, 21, 21, 32], lanes = (fh, fw, c)
    xh = jnp.transpose(x, (0, 2, 3, 1))
    xs = xh.reshape(B, 21, 4, 21, 4, 2).transpose(0, 1, 3, 2, 4, 5).reshape(B, 21, 21, 32)
    # 2x2 im2col of the s2d image == full im2col of the k=8,s=4 conv: [B,20,20,128]
    patches = jnp.concatenate(
        [xs[:, 0:20, 0:20, :], xs[:, 0:20, 1:21, :],
         xs[:, 1:21, 0:20, :], xs[:, 1:21, 1:21, :]], axis=-1)

    def stacked(parity):
        pq = patches[:, :, parity::2, :]                               # [B, 20, 10, 128]
        # reorder rows by H-parity so layer-1's H-stride-2 is a constant offset
        pq = pq.reshape(B, 10, 2, 10, 128).transpose(0, 2, 1, 3, 4).reshape(B, 20, 10, 128)
        # stack NB images along W (per-image stride 10), pad to sp
        pq = pq.reshape(nblk, nb, 20, 10, 128).transpose(0, 2, 1, 3, 4)
        pq = pq.reshape(nblk, 20, nb * 10, 128)
        return jnp.pad(pq, ((0, 0), (0, 0), (0, sp - nb * 10), (0, 0)))

    x_in = jnp.stack([stacked(0), stacked(1)], axis=1)                 # [nblk, 2, 20, sp, 128]
    x_in = x_in.reshape(nblk * 2 * 20 * sp, 128).astype(jnp.bfloat16)  # lane-dense bf16 HBM input

    kparams = _prepare_params(params)
    out = _fused_encoder_call(x_in, kparams, nb=nb, sp=sp, nblk=nblk)  # [nblk*sp, 128]
    emb = out.reshape(nblk, sp, EMBED_SIZE)[:, 0:nb * _PSTRIDE:_PSTRIDE, :]
    emb = emb.reshape(B, EMBED_SIZE)
    return jnp.reshape(emb, (batch_size, -1, EMBED_SIZE))              # [B, 1, 128]


# --------------------------------------------------------------------------
# Pure-XLA references for validation.
# --------------------------------------------------------------------------
def reference_forward(image, params, normalize_pixel=False):
    batch_size = image.shape[0]
    x = jnp.reshape(image, (-1,) + IMAGE_SHAPE).astype(jnp.float32)
    if normalize_pixel:
        x = x / 255.0
    x = jnp.transpose(x, (0, 2, 3, 1))
    n_layers = len(CONV_CFG)
    for i, ((w, b), (_, _, _k, s)) in enumerate(zip(params, CONV_CFG)):
        x = lax.conv_general_dilated(
            x, w, window_strides=(s, s), padding="VALID",
            dimension_numbers=("NHWC", "HWIO", "NHWC"),
            precision=lax.Precision.HIGHEST) + b
        if i < n_layers - 1:
            x = jnp.maximum(x, 0.0)
    x = jnp.transpose(x, (0, 3, 1, 2))
    return jnp.reshape(x, (batch_size, -1, EMBED_SIZE))


def reference_forward_bf16(image, params, normalize_pixel=False):
    """Same math as the kernel: bf16 operands, f32 accumulation/bias/ReLU."""
    batch_size = image.shape[0]
    x = jnp.reshape(image, (-1,) + IMAGE_SHAPE).astype(jnp.float32)
    if normalize_pixel:
        x = x / 255.0
    x = jnp.transpose(x, (0, 2, 3, 1))
    n_layers = len(CONV_CFG)
    for i, ((w, b), (_, _, _k, s)) in enumerate(zip(params, CONV_CFG)):
        x = lax.conv_general_dilated(
            x.astype(jnp.bfloat16), w.astype(jnp.bfloat16),
            window_strides=(s, s), padding="VALID",
            dimension_numbers=("NHWC", "HWIO", "NHWC"),
            preferred_element_type=jnp.float32) + b
        if i < n_layers - 1:
            x = jnp.maximum(x, 0.0)
    x = jnp.transpose(x, (0, 3, 1, 2))
    return jnp.reshape(x, (batch_size, -1, EMBED_SIZE))


if __name__ == "__main__":
    key = jax.random.PRNGKey(0)
    pkey, xkey = jax.random.split(key)
    params = init_params(pkey)

    batch = 8                                             # nb=4 -> grid of 2 steps
    image = jax.random.normal(xkey, (batch,) + IMAGE_SHAPE, jnp.float32)

    fwd = jax.jit(image_encoder_forward)
    out = jax.block_until_ready(fwd(image, params))
    assert out.shape == (batch, 1, EMBED_SIZE), out.shape

    ref_bf = jax.block_until_ready(reference_forward_bf16(image, params))
    ref_f32 = jax.block_until_ready(reference_forward(image, params))
    d_bf = float(jnp.max(jnp.abs(out - ref_bf)))
    d_f32 = float(jnp.max(jnp.abs(out - ref_f32)))
    assert jnp.allclose(out, ref_bf, rtol=5e-3, atol=5e-3), d_bf
    assert jnp.allclose(out, ref_f32, rtol=5e-2, atol=5e-2), d_f32
    print("KERNEL_OK")
</pallas_src>

<mosaic_0001>
module attributes {stable_mosaic.version = 11 : i64} {
  func.func @kernel(%arg0: i32, %arg1: memref<1920x128xbf16, #tpu.memory_space<vmem>>, %arg2: memref<128x32xbf16, #tpu.memory_space<vmem>>, %arg3: memref<1x32xf32, #tpu.memory_space<vmem>>, %arg4: memref<2x256x64xbf16, #tpu.memory_space<vmem>>, %arg5: memref<1x64xf32, #tpu.memory_space<vmem>>, %arg6: memref<3x192x64xbf16, #tpu.memory_space<vmem>>, %arg7: memref<1x64xf32, #tpu.memory_space<vmem>>, %arg8: memref<3x192x64xbf16, #tpu.memory_space<vmem>>, %arg9: memref<1x64xf32, #tpu.memory_space<vmem>>, %arg10: memref<3x192x64xbf16, #tpu.memory_space<vmem>>, %arg11: memref<1x64xf32, #tpu.memory_space<vmem>>, %arg12: memref<3x192x128xbf16, #tpu.memory_space<vmem>>, %arg13: memref<1x128xf32, #tpu.memory_space<vmem>>, %arg14: memref<48x128xf32, #tpu.memory_space<vmem>>, %arg15: memref<1920x32xf32, #tpu.memory_space<vmem>>, %arg16: memref<432x64xf32, #tpu.memory_space<vmem>>, %arg17: memref<336x64xf32, #tpu.memory_space<vmem>>, %arg18: memref<240x64xf32, #tpu.memory_space<vmem>>, %arg19: memref<144x64xf32, #tpu.memory_space<vmem>>) attributes {dimension_semantics = [#tpu.dimension_semantics<parallel>], iteration_bounds = array<i64: 2>, scalar_prefetch = 0 : i64, scratch_operands = 5 : i64, tpu.core_type = #tpu.core_type<tc>, window_params = [{transform_indices = @transform_0, window_bounds = array<i64: 1920, 128>}, {pipeline_mode = #tpu.pipeline_mode<synchronous>, transform_indices = @transform_1, window_bounds = array<i64: 128, 32>}, {pipeline_mode = #tpu.pipeline_mode<synchronous>, transform_indices = @transform_2, window_bounds = array<i64: 1, 32>}, {pipeline_mode = #tpu.pipeline_mode<synchronous>, transform_indices = @transform_3, window_bounds = array<i64: 2, 256, 64>}, {pipeline_mode = #tpu.pipeline_mode<synchronous>, transform_indices = @transform_4, window_bounds = array<i64: 1, 64>}, {pipeline_mode = #tpu.pipeline_mode<synchronous>, transform_indices = @transform_5, window_bounds = array<i64: 3, 192, 64>}, {pipeline_mode = #tpu.pipeline_mode<synchronous>, transform_indices = @transform_6, window_bounds = array<i64: 1, 64>}, {pipeline_mode = #tpu.pipeline_mode<synchronous>, transform_indices = @transform_7, window_bounds = array<i64: 3, 192, 64>}, {pipeline_mode = #tpu.pipeline_mode<synchronous>, transform_indices = @transform_8, window_bounds = array<i64: 1, 64>}, {pipeline_mode = #tpu.pipeline_mode<synchronous>, transform_indices = @transform_9, window_bounds = array<i64: 3, 192, 64>}, {pipeline_mode = #tpu.pipeline_mode<synchronous>, transform_indices = @transform_10, window_bounds = array<i64: 1, 64>}, {pipeline_mode = #tpu.pipeline_mode<synchronous>, transform_indices = @transform_11, window_bounds = array<i64: 3, 192, 128>}, {pipeline_mode = #tpu.pipeline_mode<synchronous>, transform_indices = @transform_12, window_bounds = array<i64: 1, 128>}, {transform_indices = @transform_13, window_bounds = array<i64: 48, 128>}]} {
    %c0 = arith.constant 0 : index
    %c0_0 = arith.constant 0 : index
    %0 = vector.load %arg1[%c0, %c0_0] : memref<1920x128xbf16, #tpu.memory_space<vmem>>, vector<1920x128xbf16>
    %c0_1 = arith.constant 0 : index
    %c0_2 = arith.constant 0 : index
    %1 = vector.load %arg2[%c0_1, %c0_2] : memref<128x32xbf16, #tpu.memory_space<vmem>>, vector<128x32xbf16>
    %cst = arith.constant dense<0.000000e+00> : vector<1920x32xf32>
    %2 = tpu.matmul %0, %1, %cst {dimension_numbers = #tpu.dot_dimension_numbers<[1], [0], [0], [1], [0, 0, 1, 1], [], []>} : vector<1920x128xbf16>, vector<128x32xbf16>, vector<1920x32xf32> -> vector<1920x32xf32>
    %c0_3 = arith.constant 0 : index
    %c0_4 = arith.constant 0 : index
    %3 = vector.load %arg3[%c0_3, %c0_4] : memref<1x32xf32, #tpu.memory_space<vmem>>, vector<1x32xf32>
    %4 = vector.broadcast %3 : vector<1x32xf32> to vector<1920x32xf32>
    %5 = arith.addf %2, %4 : vector<1920x32xf32>
    %cst_5 = arith.constant 0.000000e+00 : f32
    %6 = vector.broadcast %cst_5 : f32 to vector<1920x32xf32>
    %7 = arith.maximumf %5, %6 : vector<1920x32xf32>
    %c0_6 = arith.constant 0 : index
    %c0_7 = arith.constant 0 : index
    %8 = vector.load %arg15[%c0_6, %c0_7] : memref<1920x32xf32, #tpu.memory_space<vmem>>, vector<1920x32xf32>
    tpu.vector_store %arg15[%c0_6, %c0_7], %7 {strides = array<i32>} : memref<1920x32xf32, #tpu.memory_space<vmem>>, vector<1920x32xf32>,
    %c0_8 = arith.constant 0 : index
    %c0_9 = arith.constant 0 : index
    %9 = vector.load %arg15[%c0_8, %c0_9] : memref<1920x32xf32, #tpu.memory_space<vmem>>, vector<432x32xf32>
    %c960 = arith.constant 960 : index
    %c0_10 = arith.constant 0 : index
    %10 = vector.load %arg15[%c960, %c0_10] : memref<1920x32xf32, #tpu.memory_space<vmem>>, vector<432x32xf32>
    %c480 = arith.constant 480 : index
    %c0_11 = arith.constant 0 : index
    %11 = vector.load %arg15[%c480, %c0_11] : memref<1920x32xf32, #tpu.memory_space<vmem>>, vector<432x32xf32>
    %c1440 = arith.constant 1440 : index
    %c0_12 = arith.constant 0 : index
    %12 = vector.load %arg15[%c1440, %c0_12] : memref<1920x32xf32, #tpu.memory_space<vmem>>, vector<432x32xf32>
    %c48 = arith.constant 48 : index
    %c0_13 = arith.constant 0 : index
    %13 = vector.load %arg15[%c48, %c0_13] : memref<1920x32xf32, #tpu.memory_space<vmem>>, vector<432x32xf32>
    %c1008 = arith.constant 1008 : index
    %c0_14 = arith.constant 0 : index
    %14 = vector.load %arg15[%c1008, %c0_14] : memref<1920x32xf32, #tpu.memory_space<vmem>>, vector<432x32xf32>
    %c528 = arith.constant 528 : index
    %c0_15 = arith.constant 0 : index
    %15 = vector.load %arg15[%c528, %c0_15] : memref<1920x32xf32, #tpu.memory_space<vmem>>, vector<432x32xf32>
    %c1488 = arith.constant 1488 : index
    %c0_16 = arith.constant 0 : index
    %16 = vector.load %arg15[%c1488, %c0_16] : memref<1920x32xf32, #tpu.memory_space<vmem>>, vector<432x32xf32>
    %17 = tpu.concatenate %9, %10, %11, %12, %13, %14, %15, %16 in 1 : vector<432x32xf32>, vector<432x32xf32>, vector<432x32xf32>, vector<432x32xf32>, vector<432x32xf32>, vector<432x32xf32>, vector<432x32xf32>, vector<432x32xf32> -> vector<432x256xf32>
    %18 = arith.truncf %17 : vector<432x256xf32> to vector<432x256xbf16>
    %c0_17 = arith.constant 0 : index
    %c0_18 = arith.constant 0 : index
    %c0_19 = arith.constant 0 : index
    %19 = vector.load %arg4[%c0_17, %c0_18, %c0_19] : memref<2x256x64xbf16, #tpu.memory_space<vmem>>, vector<1x256x64xbf16>
    %20 = vector.shape_cast %19 : vector<1x256x64xbf16> to vector<256x64xbf16>
    %cst_20 = arith.constant dense<0.000000e+00> : vector<432x64xf32>
    %21 = tpu.matmul %18, %20, %cst_20 {dimension_numbers = #tpu.dot_dimension_numbers<[1], [0], [0], [1], [0, 0, 1, 1], [], []>} : vector<432x256xbf16>, vector<256x64xbf16>, vector<432x64xf32> -> vector<432x64xf32>
    %c1 = arith.constant 1 : index
    %c0_21 = arith.constant 0 : index
    %c0_22 = arith.constant 0 : index
    %22 = vector.load %arg4[%c1, %c0_21, %c0_22] : memref<2x256x64xbf16, #tpu.memory_space<vmem>>, vector<1x256x64xbf16>
    %23 = vector.shape_cast %22 : vector<1x256x64xbf16> to vector<256x64xbf16>
    %cst_23 = arith.constant dense<0.000000e+00> : vector<432x64xf32>
    %24 = tpu.matmul %18, %23, %cst_23 {dimension_numbers = #tpu.dot_dimension_numbers<[1], [0], [0], [1], [0, 0, 1, 1], [], []>} : vector<432x256xbf16>, vector<256x64xbf16>, vector<432x64xf32> -> vector<432x64xf32>
    %25 = vector.extract_strided_slice %21 {offsets = [0, 0], sizes = [424, 64], strides = [1, 1]} : vector<432x64xf32> to vector<424x64xf32>
    %26 = vector.extract_strided_slice %24 {offsets = [1, 0], sizes = [424, 64], strides = [1, 1]} : vector<432x64xf32> to vector<424x64xf32>
    %27 = arith.addf %25, %26 : vector<424x64xf32>
    %c0_24 = arith.constant 0 : index
    %c0_25 = arith.constant 0 : index
    %28 = vector.load %arg5[%c0_24, %c0_25] : memref<1x64xf32, #tpu.memory_space<vmem>>, vector<1x64xf32>
    %29 = vector.broadcast %28 : vector<1x64xf32> to vector<424x64xf32>
    %30 = arith.addf %27, %29 : vector<424x64xf32>
    %cst_26 = arith.constant 0.000000e+00 : f32
    %31 = vector.broadcast %cst_26 : f32 to vector<424x64xf32>
    %32 = arith.maximumf %30, %31 : vector<424x64xf32>
    %c0_27 = arith.constant 0 : index
    %c0_28 = arith.constant 0 : index
    %33 = vector.load %arg16[%c0_27, %c0_28] : memref<432x64xf32, #tpu.memory_space<vmem>>, vector<424x64xf32>
    tpu.vector_store %arg16[%c0_27, %c0_28], %32 {strides = array<i32>} : memref<432x64xf32, #tpu.memory_space<vmem>>, vector<424x64xf32>,
    %c0_29 = arith.constant 0 : index
    %c0_30 = arith.constant 0 : index
    %34 = vector.load %arg16[%c0_29, %c0_30] : memref<432x64xf32, #tpu.memory_space<vmem>>, vector<336x64xf32>
    %c48_31 = arith.constant 48 : index
    %c0_32 = arith.constant 0 : index
    %35 = vector.load %arg16[%c48_31, %c0_32] : memref<432x64xf32, #tpu.memory_space<vmem>>, vector<336x64xf32>
    %c96 = arith.constant 96 : index
    %c0_33 = arith.constant 0 : index
    %36 = vector.load %arg16[%c96, %c0_33] : memref<432x64xf32, #tpu.memory_space<vmem>>, vector<336x64xf32>
    %37 = tpu.concatenate %34, %35, %36 in 1 : vector<336x64xf32>, vector<336x64xf32>, vector<336x64xf32> -> vector<336x192xf32>
    %38 = arith.truncf %37 : vector<336x192xf32> to vector<336x192xbf16>
    %c0_34 = arith.constant 0 : index
    %c0_35 = arith.constant 0 : index
    %c0_36 = arith.constant 0 : index
    %39 = vector.load %arg6[%c0_34, %c0_35, %c0_36] : memref<3x192x64xbf16, #tpu.memory_space<vmem>>, vector<1x192x64xbf16>
    %40 = vector.shape_cast %39 : vector<1x192x64xbf16> to vector<192x64xbf16>
    %cst_37 = arith.constant dense<0.000000e+00> : vector<336x64xf32>
    %41 = tpu.matmul %38, %40, %cst_37 {dimension_numbers = #tpu.dot_dimension_numbers<[1], [0], [0], [1], [0, 0, 1, 1], [], []>} : vector<336x192xbf16>, vector<192x64xbf16>, vector<336x64xf32> -> vector<336x64xf32>
    %c1_38 = arith.constant 1 : index
    %c0_39 = arith.constant 0 : index
    %c0_40 = arith.constant 0 : index
    %42 = vector.load %arg6[%c1_38, %c0_39, %c0_40] : memref<3x192x64xbf16, #tpu.memory_space<vmem>>, vector<1x192x64xbf16>
    %43 = vector.shape_cast %42 : vector<1x192x64xbf16> to vector<192x64xbf16>
    %cst_41 = arith.constant dense<0.000000e+00> : vector<336x64xf32>
    %44 = tpu.matmul %38, %43, %cst_41 {dimension_numbers = #tpu.dot_dimension_numbers<[1], [0], [0], [1], [0, 0, 1, 1], [], []>} : vector<336x192xbf16>, vector<192x64xbf16>, vector<336x64xf32> -> vector<336x64xf32>
    %c2 = arith.constant 2 : index
    %c0_42 = arith.constant 0 : index
    %c0_43 = arith.constant 0 : index
    %45 = vector.load %arg6[%c2, %c0_42, %c0_43] : memref<3x192x64xbf16, #tpu.memory_space<vmem>>, vector<1x192x64xbf16>
    %46 = vector.shape_cast %45 : vector<1x192x64xbf16> to vector<192x64xbf16>
    %cst_44 = arith.constant dense<0.000000e+00> : vector<336x64xf32>
    %47 = tpu.matmul %38, %46, %cst_44 {dimension_numbers = #tpu.dot_dimension_numbers<[1], [0], [0], [1], [0, 0, 1, 1], [], []>} : vector<336x192xbf16>, vector<192x64xbf16>, vector<336x64xf32> -> vector<336x64xf32>
    %48 = vector.extract_strided_slice %41 {offsets = [0, 0], sizes = [328, 64], strides = [1, 1]} : vector<336x64xf32> to vector<328x64xf32>
    %49 = vector.extract_strided_slice %44 {offsets = [1, 0], sizes = [328, 64], strides = [1, 1]} : vector<336x64xf32> to vector<328x64xf32>
    %50 = arith.addf %48, %49 : vector<328x64xf32>
    %51 = vector.extract_strided_slice %47 {offsets = [2, 0], sizes = [328, 64], strides = [1, 1]} : vector<336x64xf32> to vector<328x64xf32>
    %52 = arith.addf %50, %51 : vector<328x64xf32>
    %c0_45 = arith.constant 0 : index
    %c0_46 = arith.constant 0 : index
    %53 = vector.load %arg7[%c0_45, %c0_46] : memref<1x64xf32, #tpu.memory_space<vmem>>, vector<1x64xf32>
    %54 = vector.broadcast %53 : vector<1x64xf32> to vector<328x64xf32>
    %55 = arith.addf %52, %54 : vector<328x64xf32>
    %cst_47 = arith.constant 0.000000e+00 : f32
    %56 = vector.broadcast %cst_47 : f32 to vector<328x64xf32>
    %57 = arith.maximumf %55, %56 : vector<328x64xf32>
    %c0_48 = arith.constant 0 : index
    %c0_49 = arith.constant 0 : index
    %58 = vector.load %arg17[%c0_48, %c0_49] : memref<336x64xf32, #tpu.memory_space<vmem>>, vector<328x64xf32>
    tpu.vector_store %arg17[%c0_48, %c0_49], %57 {strides = array<i32>} : memref<336x64xf32, #tpu.memory_space<vmem>>, vector<328x64xf32>,
    %c0_50 = arith.constant 0 : index
    %c0_51 = arith.constant 0 : index
    %59 = vector.load %arg17[%c0_50, %c0_51] : memref<336x64xf32, #tpu.memory_space<vmem>>, vector<240x64xf32>
    %c48_52 = arith.constant 48 : index
    %c0_53 = arith.constant 0 : index
    %60 = vector.load %arg17[%c48_52, %c0_53] : memref<336x64xf32, #tpu.memory_space<vmem>>, vector<240x64xf32>
    %c96_54 = arith.constant 96 : index
    %c0_55 = arith.constant 0 : index
    %61 = vector.load %arg17[%c96_54, %c0_55] : memref<336x64xf32, #tpu.memory_space<vmem>>, vector<240x64xf32>
    %62 = tpu.concatenate %59, %60, %61 in 1 : vector<240x64xf32>, vector<240x64xf32>, vector<240x64xf32> -> vector<240x192xf32>
    %63 = arith.truncf %62 : vector<240x192xf32> to vector<240x192xbf16>
    %c0_56 = arith.constant 0 : index
    %c0_57 = arith.constant 0 : index
    %c0_58 = arith.constant 0 : index
    %64 = vector.load %arg8[%c0_56, %c0_57, %c0_58] : memref<3x192x64xbf16, #tpu.memory_space<vmem>>, vector<1x192x64xbf16>
    %65 = vector.shape_cast %64 : vector<1x192x64xbf16> to vector<192x64xbf16>
    %cst_59 = arith.constant dense<0.000000e+00> : vector<240x64xf32>
    %66 = tpu.matmul %63, %65, %cst_59 {dimension_numbers = #tpu.dot_dimension_numbers<[1], [0], [0], [1], [0, 0, 1, 1], [], []>} : vector<240x192xbf16>, vector<192x64xbf16>, vector<240x64xf32> -> vector<240x64xf32>
    %c1_60 = arith.constant 1 : index
    %c0_61 = arith.constant 0 : index
    %c0_62 = arith.constant 0 : index
    %67 = vector.load %arg8[%c1_60, %c0_61, %c0_62] : memref<3x192x64xbf16, #tpu.memory_space<vmem>>, vector<1x192x64xbf16>
    %68 = vector.shape_cast %67 : vector<1x192x64xbf16> to vector<192x64xbf16>
    %cst_63 = arith.constant dense<0.000000e+00> : vector<240x64xf32>
    %69 = tpu.matmul %63, %68, %cst_63 {dimension_numbers = #tpu.dot_dimension_numbers<[1], [0], [0], [1], [0, 0, 1, 1], [], []>} : vector<240x192xbf16>, vector<192x64xbf16>, vector<240x64xf32> -> vector<240x64xf32>
    %c2_64 = arith.constant 2 : index
    %c0_65 = arith.constant 0 : index
    %c0_66 = arith.constant 0 : index
    %70 = vector.load %arg8[%c2_64, %c0_65, %c0_66] : memref<3x192x64xbf16, #tpu.memory_space<vmem>>, vector<1x192x64xbf16>
    %71 = vector.shape_cast %70 : vector<1x192x64xbf16> to vector<192x64xbf16>
    %cst_67 = arith.constant dense<0.000000e+00> : vector<240x64xf32>
    %72 = tpu.matmul %63, %71, %cst_67 {dimension_numbers = #tpu.dot_dimension_numbers<[1], [0], [0], [1], [0, 0, 1, 1], [], []>} : vector<240x192xbf16>, vector<192x64xbf16>, vector<240x64xf32> -> vector<240x64xf32>
    %73 = vector.extract_strided_slice %66 {offsets = [0, 0], sizes = [232, 64], strides = [1, 1]} : vector<240x64xf32> to vector<232x64xf32>
    %74 = vector.extract_strided_slice %69 {offsets = [1, 0], sizes = [232, 64], strides = [1, 1]} : vector<240x64xf32> to vector<232x64xf32>
    %75 = arith.addf %73, %74 : vector<232x64xf32>
    %76 = vector.extract_strided_slice %72 {offsets = [2, 0], sizes = [232, 64], strides = [1, 1]} : vector<240x64xf32> to vector<232x64xf32>
    %77 = arith.addf %75, %76 : vector<232x64xf32>
    %c0_68 = arith.constant 0 : index
    %c0_69 = arith.constant 0 : index
    %78 = vector.load %arg9[%c0_68, %c0_69] : memref<1x64xf32, #tpu.memory_space<vmem>>, vector<1x64xf32>
    %79 = vector.broadcast %78 : vector<1x64xf32> to vector<232x64xf32>
    %80 = arith.addf %77, %79 : vector<232x64xf32>
    %cst_70 = arith.constant 0.000000e+00 : f32
    %81 = vector.broadcast %cst_70 : f32 to vector<232x64xf32>
    %82 = arith.maximumf %80, %81 : vector<232x64xf32>
    %c0_71 = arith.constant 0 : index
    %c0_72 = arith.constant 0 : index
    %83 = vector.load %arg18[%c0_71, %c0_72] : memref<240x64xf32, #tpu.memory_space<vmem>>, vector<232x64xf32>
    tpu.vector_store %arg18[%c0_71, %c0_72], %82 {strides = array<i32>} : memref<240x64xf32, #tpu.memory_space<vmem>>, vector<232x64xf32>,
    %c0_73 = arith.constant 0 : index
    %c0_74 = arith.constant 0 : index
    %84 = vector.load %arg18[%c0_73, %c0_74] : memref<240x64xf32, #tpu.memory_space<vmem>>, vector<144x64xf32>
    %c48_75 = arith.constant 48 : index
    %c0_76 = arith.constant 0 : index
    %85 = vector.load %arg18[%c48_75, %c0_76] : memref<240x64xf32, #tpu.memory_space<vmem>>, vector<144x64xf32>
    %c96_77 = arith.constant 96 : index
    %c0_78 = arith.constant 0 : index
    %86 = vector.load %arg18[%c96_77, %c0_78] : memref<240x64xf32, #tpu.memory_space<vmem>>, vector<144x64xf32>
    %87 = tpu.concatenate %84, %85, %86 in 1 : vector<144x64xf32>, vector<144x64xf32>, vector<144x64xf32> -> vector<144x192xf32>
    %88 = arith.truncf %87 : vector<144x192xf32> to vector<144x192xbf16>
    %c0_79 = arith.constant 0 : index
    %c0_80 = arith.constant 0 : index
    %c0_81 = arith.constant 0 : index
    %89 = vector.load %arg10[%c0_79, %c0_80, %c0_81] : memref<3x192x64xbf16, #tpu.memory_space<vmem>>, vector<1x192x64xbf16>
    %90 = vector.shape_cast %89 : vector<1x192x64xbf16> to vector<192x64xbf16>
    %cst_82 = arith.constant dense<0.000000e+00> : vector<144x64xf32>
    %91 = tpu.matmul %88, %90, %cst_82 {dimension_numbers = #tpu.dot_dimension_numbers<[1], [0], [0], [1], [0, 0, 1, 1], [], []>} : vector<144x192xbf16>, vector<192x64xbf16>, vector<144x64xf32> -> vector<144x64xf32>
    %c1_83 = arith.constant 1 : index
    %c0_84 = arith.constant 0 : index
    %c0_85 = arith.constant 0 : index
    %92 = vector.load %arg10[%c1_83, %c0_84, %c0_85] : memref<3x192x64xbf16, #tpu.memory_space<vmem>>, vector<1x192x64xbf16>
    %93 = vector.shape_cast %92 : vector<1x192x64xbf16> to vector<192x64xbf16>
    %cst_86 = arith.constant dense<0.000000e+00> : vector<144x64xf32>
    %94 = tpu.matmul %88, %93, %cst_86 {dimension_numbers = #tpu.dot_dimension_numbers<[1], [0], [0], [1], [0, 0, 1, 1], [], []>} : vector<144x192xbf16>, vector<192x64xbf16>, vector<144x64xf32> -> vector<144x64xf32>
    %c2_87 = arith.constant 2 : index
    %c0_88 = arith.constant 0 : index
    %c0_89 = arith.constant 0 : index
    %95 = vector.load %arg10[%c2_87, %c0_88, %c0_89] : memref<3x192x64xbf16, #tpu.memory_space<vmem>>, vector<1x192x64xbf16>
    %96 = vector.shape_cast %95 : vector<1x192x64xbf16> to vector<192x64xbf16>
    %cst_90 = arith.constant dense<0.000000e+00> : vector<144x64xf32>
    %97 = tpu.matmul %88, %96, %cst_90 {dimension_numbers = #tpu.dot_dimension_numbers<[1], [0], [0], [1], [0, 0, 1, 1], [], []>} : vector<144x192xbf16>, vector<192x64xbf16>, vector<144x64xf32> -> vector<144x64xf32>
    %98 = vector.extract_strided_slice %91 {offsets = [0, 0], sizes = [136, 64], strides = [1, 1]} : vector<144x64xf32> to vector<136x64xf32>
    %99 = vector.extract_strided_slice %94 {offsets = [1, 0], sizes = [136, 64], strides = [1, 1]} : vector<144x64xf32> to vector<136x64xf32>
    %100 = arith.addf %98, %99 : vector<136x64xf32>
    %101 = vector.extract_strided_slice %97 {offsets = [2, 0], sizes = [136, 64], strides = [1, 1]} : vector<144x64xf32> to vector<136x64xf32>
    %102 = arith.addf %100, %101 : vector<136x64xf32>
    %c0_91 = arith.constant 0 : index
    %c0_92 = arith.constant 0 : index
    %103 = vector.load %arg11[%c0_91, %c0_92] : memref<1x64xf32, #tpu.memory_space<vmem>>, vector<1x64xf32>
    %104 = vector.broadcast %103 : vector<1x64xf32> to vector<136x64xf32>
    %105 = arith.addf %102, %104 : vector<136x64xf32>
    %cst_93 = arith.constant 0.000000e+00 : f32
    %106 = vector.broadcast %cst_93 : f32 to vector<136x64xf32>
    %107 = arith.maximumf %105, %106 : vector<136x64xf32>
    %c0_94 = arith.constant 0 : index
    %c0_95 = arith.constant 0 : index
    %108 = vector.load %arg19[%c0_94, %c0_95] : memref<144x64xf32, #tpu.memory_space<vmem>>, vector<136x64xf32>
    tpu.vector_store %arg19[%c0_94, %c0_95], %107 {strides = array<i32>} : memref<144x64xf32, #tpu.memory_space<vmem>>, vector<136x64xf32>,
    %c0_96 = arith.constant 0 : index
    %c0_97 = arith.constant 0 : index
    %109 = vector.load %arg19[%c0_96, %c0_97] : memref<144x64xf32, #tpu.memory_space<vmem>>, vector<48x64xf32>
    %c48_98 = arith.constant 48 : index
    %c0_99 = arith.constant 0 : index
    %110 = vector.load %arg19[%c48_98, %c0_99] : memref<144x64xf32, #tpu.memory_space<vmem>>, vector<48x64xf32>
    %c96_100 = arith.constant 96 : index
    %c0_101 = arith.constant 0 : index
    %111 = vector.load %arg19[%c96_100, %c0_101] : memref<144x64xf32, #tpu.memory_space<vmem>>, vector<48x64xf32>
    %112 = tpu.concatenate %109, %110, %111 in 1 : vector<48x64xf32>, vector<48x64xf32>, vector<48x64xf32> -> vector<48x192xf32>
    %113 = arith.truncf %112 : vector<48x192xf32> to vector<48x192xbf16>
    %c0_102 = arith.constant 0 : index
    %c0_103 = arith.constant 0 : index
    %c0_104 = arith.constant 0 : index
    %114 = vector.load %arg12[%c0_102, %c0_103, %c0_104] : memref<3x192x128xbf16, #tpu.memory_space<vmem>>, vector<1x192x128xbf16>
    %115 = vector.shape_cast %114 : vector<1x192x128xbf16> to vector<192x128xbf16>
    %cst_105 = arith.constant dense<0.000000e+00> : vector<48x128xf32>
    %116 = tpu.matmul %113, %115, %cst_105 {dimension_numbers = #tpu.dot_dimension_numbers<[1], [0], [0], [1], [0, 0, 1, 1], [], []>} : vector<48x192xbf16>, vector<192x128xbf16>, vector<48x128xf32> -> vector<48x128xf32>
    %c1_106 = arith.constant 1 : index
    %c0_107 = arith.constant 0 : index
    %c0_108 = arith.constant 0 : index
    %117 = vector.load %arg12[%c1_106, %c0_107, %c0_108] : memref<3x192x128xbf16, #tpu.memory_space<vmem>>, vector<1x192x128xbf16>
    %118 = vector.shape_cast %117 : vector<1x192x128xbf16> to vector<192x128xbf16>
    %cst_109 = arith.constant dense<0.000000e+00> : vector<48x128xf32>
    %119 = tpu.matmul %113, %118, %cst_109 {dimension_numbers = #tpu.dot_dimension_numbers<[1], [0], [0], [1], [0, 0, 1, 1], [], []>} : vector<48x192xbf16>, vector<192x128xbf16>, vector<48x128xf32> -> vector<48x128xf32>
    %c2_110 = arith.constant 2 : index
    %c0_111 = arith.constant 0 : index
    %c0_112 = arith.constant 0 : index
    %120 = vector.load %arg12[%c2_110, %c0_111, %c0_112] : memref<3x192x128xbf16, #tpu.memory_space<vmem>>, vector<1x192x128xbf16>
    %121 = vector.shape_cast %120 : vector<1x192x128xbf16> to vector<192x128xbf16>
    %cst_113 = arith.constant dense<0.000000e+00> : vector<48x128xf32>
    %122 = tpu.matmul %113, %121, %cst_113 {dimension_numbers = #tpu.dot_dimension_numbers<[1], [0], [0], [1], [0, 0, 1, 1], [], []>} : vector<48x192xbf16>, vector<192x128xbf16>, vector<48x128xf32> -> vector<48x128xf32>
    %123 = vector.extract_strided_slice %116 {offsets = [0, 0], sizes = [40, 128], strides = [1, 1]} : vector<48x128xf32> to vector<40x128xf32>
    %124 = vector.extract_strided_slice %119 {offsets = [1, 0], sizes = [40, 128], strides = [1, 1]} : vector<48x128xf32> to vector<40x128xf32>
    %125 = arith.addf %123, %124 : vector<40x128xf32>
    %126 = vector.extract_strided_slice %122 {offsets = [2, 0], sizes = [40, 128], strides = [1, 1]} : vector<48x128xf32> to vector<40x128xf32>
    %127 = arith.addf %125, %126 : vector<40x128xf32>
    %c0_114 = arith.constant 0 : index
    %c0_115 = arith.constant 0 : index
    %128 = vector.load %arg13[%c0_114, %c0_115] : memref<1x128xf32, #tpu.memory_space<vmem>>, vector<1x128xf32>
    %129 = vector.broadcast %128 : vector<1x128xf32> to vector<40x128xf32>
    %130 = arith.addf %127, %129 : vector<40x128xf32>
    %c0_116 = arith.constant 0 : index
    %c0_117 = arith.constant 0 : index
    %131 = vector.load %arg14[%c0_116, %c0_117] : memref<48x128xf32, #tpu.memory_space<vmem>>, vector<40x128xf32>
    tpu.vector_store %arg14[%c0_116, %c0_117], %130 {strides = array<i32>} : memref<48x128xf32, #tpu.memory_space<vmem>>, vector<40x128xf32>,
    %cst_118 = arith.constant 0.000000e+00 : f32
    %132 = vector.broadcast %cst_118 : f32 to vector<8x128xf32>
    %c40 = arith.constant 40 : index
    %c0_119 = arith.constant 0 : index
    %133 = vector.load %arg14[%c40, %c0_119] : memref<48x128xf32, #tpu.memory_space<vmem>>, vector<8x128xf32>
    tpu.vector_store %arg14[%c40, %c0_119], %132 {strides = array<i32>} : memref<48x128xf32, #tpu.memory_space<vmem>>, vector<8x128xf32>,
    return
  }
  func.func @transform_0(%arg0: i32) -> (i32, i32) {
    %c0_i32 = arith.constant 0 : i32
    %c0_i32_0 = arith.constant 0 : i32
    return %arg0, %c0_i32 : i32, i32
  }
  func.func @transform_1(%arg0: i32) -> (i32, i32) {
    %c0_i32 = arith.constant 0 : i32
    %c0_i32_0 = arith.constant 0 : i32
    %c0_i32_1 = arith.constant 0 : i32
    return %c0_i32, %c0_i32_0 : i32, i32
  }
  func.func @transform_2(%arg0: i32) -> (i32, i32) {
    %c0_i32 = arith.constant 0 : i32
    %c0_i32_0 = arith.constant 0 : i32
    %c0_i32_1 = arith.constant 0 : i32
    return %c0_i32, %c0_i32_0 : i32, i32
  }
  func.func @transform_3(%arg0: i32) -> (i32, i32, i32) {
    %c0_i32 = arith.constant 0 : i32
    %c0_i32_0 = arith.constant 0 : i32
    %c0_i32_1 = arith.constant 0 : i32
    %c0_i32_2 = arith.constant 0 : i32
    return %c0_i32, %c0_i32_0, %c0_i32_1 : i32, i32, i32
  }
  func.func @transform_4(%arg0: i32) -> (i32, i32) {
    %c0_i32 = arith.constant 0 : i32
    %c0_i32_0 = arith.constant 0 : i32
    %c0_i32_1 = arith.constant 0 : i32
    return %c0_i32, %c0_i32_0 : i32, i32
  }
  func.func @transform_5(%arg0: i32) -> (i32, i32, i32) {
    %c0_i32 = arith.constant 0 : i32
    %c0_i32_0 = arith.constant 0 : i32
    %c0_i32_1 = arith.constant 0 : i32
    %c0_i32_2 = arith.constant 0 : i32
    return %c0_i32, %c0_i32_0, %c0_i32_1 : i32, i32, i32
  }
  func.func @transform_6(%arg0: i32) -> (i32, i32) {
    %c0_i32 = arith.constant 0 : i32
    %c0_i32_0 = arith.constant 0 : i32
    %c0_i32_1 = arith.constant 0 : i32
    return %c0_i32, %c0_i32_0 : i32, i32
  }
  func.func @transform_7(%arg0: i32) -> (i32, i32, i32) {
    %c0_i32 = arith.constant 0 : i32
    %c0_i32_0 = arith.constant 0 : i32
    %c0_i32_1 = arith.constant 0 : i32
    %c0_i32_2 = arith.constant 0 : i32
    return %c0_i32, %c0_i32_0, %c0_i32_1 : i32, i32, i32
  }
  func.func @transform_8(%arg0: i32) -> (i32, i32) {
    %c0_i32 = arith.constant 0 : i32
    %c0_i32_0 = arith.constant 0 : i32
    %c0_i32_1 = arith.constant 0 : i32
    return %c0_i32, %c0_i32_0 : i32, i32
  }
  func.func @transform_9(%arg0: i32) -> (i32, i32, i32) {
    %c0_i32 = arith.constant 0 : i32
    %c0_i32_0 = arith.constant 0 : i32
    %c0_i32_1 = arith.constant 0 : i32
    %c0_i32_2 = arith.constant 0 : i32
    return %c0_i32, %c0_i32_0, %c0_i32_1 : i32, i32, i32
  }
  func.func @transform_10(%arg0: i32) -> (i32, i32) {
    %c0_i32 = arith.constant 0 : i32
    %c0_i32_0 = arith.constant 0 : i32
    %c0_i32_1 = arith.constant 0 : i32
    return %c0_i32, %c0_i32_0 : i32, i32
  }
  func.func @transform_11(%arg0: i32) -> (i32, i32, i32) {
    %c0_i32 = arith.constant 0 : i32
    %c0_i32_0 = arith.constant 0 : i32
    %c0_i32_1 = arith.constant 0 : i32
    %c0_i32_2 = arith.constant 0 : i32
    return %c0_i32, %c0_i32_0, %c0_i32_1 : i32, i32, i32
  }
  func.func @transform_12(%arg0: i32) -> (i32, i32) {
    %c0_i32 = arith.constant 0 : i32
    %c0_i32_0 = arith.constant 0 : i32
    %c0_i32_1 = arith.constant 0 : i32
    return %c0_i32, %c0_i32_0 : i32, i32
  }
  func.func @transform_13(%arg0: i32) -> (i32, i32) {
    %c0_i32 = arith.constant 0 : i32
    %c0_i32_0 = arith.constant 0 : i32
    return %arg0, %c0_i32 : i32, i32
  }
}

</mosaic_0001>

<llo_original>
// kernel: image_encoder_forward.1
$region0: #{image_encoder_forward.1}
  #allocation0 [shape = 'u32[]', space=smem, size = 0x4, offset = 0x4, fixed_abs, tag = 'smem constant byte address 0x4 - core index']
  #allocation1 [shape = 'u32[144,128]{1,0:T(1,128)}', space=vmem, size = 0x12000, scoped, tag = 'internal scratch']
  #allocation2 [shape = 'f32[1920,32]{1,0:T(8,128)}', space=vmem, size = 0xf0000, scoped, tag = 'scratch operand']
  #allocation3 [shape = 'f32[432,64]{1,0:T(8,128)}', space=vmem, size = 0x36000, scoped, tag = 'scratch operand']
  #allocation4 [shape = 'f32[336,64]{1,0:T(8,128)}', space=vmem, size = 0x2a000, scoped, tag = 'scratch operand']
  #allocation5 [shape = 'f32[240,64]{1,0:T(8,128)}', space=vmem, size = 0x1e000, scoped, tag = 'scratch operand']
  #allocation6 [shape = 'f32[144,64]{1,0:T(8,128)}', space=vmem, size = 0x12000, scoped, tag = 'scratch operand']
  %s0 = inlined_call_operand.vmem [shape: bf16[3840,128], index: 0, kind: input, shape index: {}]
  %s1 = inlined_call_operand.vmem [shape: bf16[128,32], index: 1, kind: input, shape index: {}]
  %s2 = inlined_call_operand.vmem [shape: f32[1,32], index: 2, kind: input, shape index: {}]
  %s3 = inlined_call_operand.vmem [shape: bf16[2,256,64], index: 3, kind: input, shape index: {}]
  %s4 = inlined_call_operand.vmem [shape: f32[1,64], index: 4, kind: input, shape index: {}]
  %s5 = inlined_call_operand.vmem [shape: bf16[3,192,64], index: 5, kind: input, shape index: {}]
  %s6 = inlined_call_operand.vmem [shape: f32[1,64], index: 6, kind: input, shape index: {}]
  %s7 = inlined_call_operand.vmem [shape: bf16[3,192,64], index: 7, kind: input, shape index: {}]
  %s8 = inlined_call_operand.vmem [shape: f32[1,64], index: 8, kind: input, shape index: {}]
  %s9 = inlined_call_operand.vmem [shape: bf16[3,192,64], index: 9, kind: input, shape index: {}]
  %s10 = inlined_call_operand.vmem [shape: f32[1,64], index: 10, kind: input, shape index: {}]
  %s11 = inlined_call_operand.vmem [shape: bf16[3,192,128], index: 11, kind: input, shape index: {}]
  %s12 = inlined_call_operand.vmem [shape: f32[1,128], index: 12, kind: input, shape index: {}]
  %s13 = inlined_call_operand.vmem [shape: f32[96,128], index: 13, kind: output, shape index: {}]
  %s14 = sld [smem:[#allocation0]]
  $region85: #{image_encoder_forward.1} parent=0
    _
  %s16 = ssub.s32 1, %s14
  %s17 = scalar_select 0, %s16, %s14
  loop: start=0, step=1, limit=4
  $region2: #{image_encoder_forward.1} parent=0 // loop_pre_header
    _
  $region3: #{image_encoder_forward.1} parent=0 // loop_header
    %s19 = sphi 0, %s23
    %p20 = scmp.ge.s32.totalorder %s19, 4
    %s29 = sphi 0, %s31
    %s32 = sphi 0, %s29
    %s33 = sphi 0, %s32
    %s49 = sphi 0, %s33
    %s53 = sphi 0, %s53
    %s55 = sphi 0, %s53
    %s56 = sphi 0, %s55
    %s70 = sphi 0, %s56
    %s74 = sphi 0, %s74
    %s76 = sphi 0, %s74
    %s77 = sphi 0, %s76
    %s91 = sphi 0, %s77
    %s95 = sphi 0, %s95
    %s97 = sphi 0, %s95
    %s98 = sphi 0, %s97
    %s112 = sphi 0, %s98
    %s116 = sphi 0, %s116
    %s118 = sphi 0, %s116
    %s119 = sphi 0, %s118
    %s133 = sphi 0, %s119
    %s137 = sphi 0, %s137
    %s139 = sphi 0, %s137
    %s140 = sphi 0, %s139
    %s154 = sphi 0, %s140
    %s158 = sphi 0, %s158
    %s160 = sphi 0, %s158
    %s161 = sphi 0, %s160
    %s175 = sphi 0, %s161
    %s179 = sphi 0, %s179
    %s181 = sphi 0, %s179
    %s182 = sphi 0, %s181
    %s196 = sphi 0, %s182
    %s200 = sphi 0, %s200
    %s202 = sphi 0, %s200
    %s203 = sphi 0, %s202
    %s217 = sphi 0, %s203
    %s221 = sphi 0, %s221
    %s223 = sphi 0, %s221
    %s224 = sphi 0, %s223
    %s238 = sphi 0, %s224
    %s242 = sphi 0, %s242
    %s244 = sphi 0, %s242
    %s245 = sphi 0, %s244
    %s259 = sphi 0, %s245
    %s263 = sphi 0, %s263
    %s265 = sphi 0, %s263
    %s266 = sphi 0, %s265
    %s280 = sphi 0, %s266
    %s284 = sphi 0, %s284
    %s286 = sphi 0, %s284
    %s287 = sphi 0, %s286
    %s301 = sphi 0, %s287
    %s307 = sphi 0, %s309
    %s310 = sphi 0, %s307
    %s311 = sphi 0, %s310
    %s327 = sphi 0, %s311
  $region4: #{image_encoder_forward.1} parent=0 // loop_header_branch
    %22 = sbr.rel (%p20) target = $region8
  $region5: #{image_encoder_forward.1} parent=0 // loop_body
    %s24 = ssub.s32 %s19, 1
    %s25 = ssub.s32 %s19, 2
    %s26 = sadd.s32 %s19, 1
    %s27 = ssub.s32 %s19, %s26
    %p28 = scmp.eq.s32.totalorder %s27, 0
    %s30 = sadd.s32 %s29, 1
    %s31 = scalar_select %p28, %s29, %s30
    %p34 = pneg %p28
    %p35 = scmp.eq.s32.totalorder %s19, 1
    %p36 = por %p34, %p35
    %p37 = scmp.ne.s32.totalorder %s29, %s32
    %p38 = scmp.eq.s32.totalorder %s19, 0
    %p39 = por %p37, %p38
    %p40 = scmp.ne.s32.totalorder %s29, %s32
    %p41 = scmp.eq.s32.totalorder %s24, 1
    %p42 = por %p40, %p41
    %p43 = scmp.ne.s32.totalorder %s32, %s33
    %p44 = scmp.eq.s32.totalorder %s24, 0
    %p45 = por %p43, %p44
    %p46 = scmp.ne.s32.totalorder %s32, %s33
    %p47 = scmp.eq.s32.totalorder %s25, 1
    %p48 = por %p46, %p47
    %p50 = scmp.ne.s32.totalorder %s33, %s49
    %p51 = scmp.eq.s32.totalorder %s25, 0
    %p52 = por %p50, %p51
    %s54 = sadd.s32 %s53, 1
    %p57 = scmp.eq.s32.totalorder %s19, 1
    %p58 = scmp.ne.s32.totalorder %s53, %s55
    %p59 = scmp.eq.s32.totalorder %s19, 0
    %p60 = por %p58, %p59
    %p61 = scmp.ne.s32.totalorder %s53, %s55
    %p62 = scmp.eq.s32.totalorder %s24, 1
    %p63 = por %p61, %p62
    %p64 = scmp.ne.s32.totalorder %s55, %s56
    %p65 = scmp.eq.s32.totalorder %s24, 0
    %p66 = por %p64, %p65
    %p67 = scmp.ne.s32.totalorder %s55, %s56
    %p68 = scmp.eq.s32.totalorder %s25, 1
    %p69 = por %p67, %p68
    %p71 = scmp.ne.s32.totalorder %s56, %s70
    %p72 = scmp.eq.s32.totalorder %s25, 0
    %p73 = por %p71, %p72
    %s75 = sadd.s32 %s74, 1
    %p78 = scmp.eq.s32.totalorder %s19, 1
    %p79 = scmp.ne.s32.totalorder %s74, %s76
    %p80 = scmp.eq.s32.totalorder %s19, 0
    %p81 = por %p79, %p80
    %p82 = scmp.ne.s32.totalorder %s74, %s76
    %p83 = scmp.eq.s32.totalorder %s24, 1
    %p84 = por %p82, %p83
    %p85 = scmp.ne.s32.totalorder %s76, %s77
    %p86 = scmp.eq.s32.totalorder %s24, 0
    %p87 = por %p85, %p86
    %p88 = scmp.ne.s32.totalorder %s76, %s77
    %p89 = scmp.eq.s32.totalorder %s25, 1
    %p90 = por %p88, %p89
    %p92 = scmp.ne.s32.totalorder %s77, %s91
    %p93 = scmp.eq.s32.totalorder %s25, 0
    %p94 = por %p92, %p93
    %s96 = sadd.s32 %s95, 1
    %p99 = scmp.eq.s32.totalorder %s19, 1
    %p100 = scmp.ne.s32.totalorder %s95, %s97
    %p101 = scmp.eq.s32.totalorder %s19, 0
    %p102 = por %p100, %p101
    %p103 = scmp.ne.s32.totalorder %s95, %s97
    %p104 = scmp.eq.s32.totalorder %s24, 1
    %p105 = por %p103, %p104
    %p106 = scmp.ne.s32.totalorder %s97, %s98
    %p107 = scmp.eq.s32.totalorder %s24, 0
    %p108 = por %p106, %p107
    %p109 = scmp.ne.s32.totalorder %s97, %s98
    %p110 = scmp.eq.s32.totalorder %s25, 1
    %p111 = por %p109, %p110
    %p113 = scmp.ne.s32.totalorder %s98, %s112
    %p114 = scmp.eq.s32.totalorder %s25, 0
    %p115 = por %p113, %p114
    %s117 = sadd.s32 %s116, 1
    %p120 = scmp.eq.s32.totalorder %s19, 1
    %p121 = scmp.ne.s32.totalorder %s116, %s118
    %p122 = scmp.eq.s32.totalorder %s19, 0
    %p123 = por %p121, %p122
    %p124 = scmp.ne.s32.totalorder %s116, %s118
    %p125 = scmp.eq.s32.totalorder %s24, 1
    %p126 = por %p124, %p125
    %p127 = scmp.ne.s32.totalorder %s118, %s119
    %p128 = scmp.eq.s32.totalorder %s24, 0
    %p129 = por %p127, %p128
    %p130 = scmp.ne.s32.totalorder %s118, %s119
    %p131 = scmp.eq.s32.totalorder %s25, 1
    %p132 = por %p130, %p131
    %p134 = scmp.ne.s32.totalorder %s119, %s133
    %p135 = scmp.eq.s32.totalorder %s25, 0
    %p136 = por %p134, %p135
    %s138 = sadd.s32 %s137, 1
    %p141 = scmp.eq.s32.totalorder %s19, 1
    %p142 = scmp.ne.s32.totalorder %s137, %s139
    %p143 = scmp.eq.s32.totalorder %s19, 0
    %p144 = por %p142, %p143
    %p145 = scmp.ne.s32.totalorder %s137, %s139
    %p146 = scmp.eq.s32.totalorder %s24, 1
    %p147 = por %p145, %p146
    %p148 = scmp.ne.s32.totalorder %s139, %s140
    %p149 = scmp.eq.s32.totalorder %s24, 0
    %p150 = por %p148, %p149
    %p151 = scmp.ne.s32.totalorder %s139, %s140
    %p152 = scmp.eq.s32.totalorder %s25, 1
    %p153 = por %p151, %p152
    %p155 = scmp.ne.s32.totalorder %s140, %s154
    %p156 = scmp.eq.s32.totalorder %s25, 0
    %p157 = por %p155, %p156
    %s159 = sadd.s32 %s158, 1
    %p162 = scmp.eq.s32.totalorder %s19, 1
    %p163 = scmp.ne.s32.totalorder %s158, %s160
    %p164 = scmp.eq.s32.totalorder %s19, 0
    %p165 = por %p163, %p164
    %p166 = scmp.ne.s32.totalorder %s158, %s160
    %p167 = scmp.eq.s32.totalorder %s24, 1
    %p168 = por %p166, %p167
    %p169 = scmp.ne.s32.totalorder %s160, %s161
    %p170 = scmp.eq.s32.totalorder %s24, 0
    %p171 = por %p169, %p170
    %p172 = scmp.ne.s32.totalorder %s160, %s161
    %p173 = scmp.eq.s32.totalorder %s25, 1
    %p174 = por %p172, %p173
    %p176 = scmp.ne.s32.totalorder %s161, %s175
    %p177 = scmp.eq.s32.totalorder %s25, 0
    %p178 = por %p176, %p177
    %s180 = sadd.s32 %s179, 1
    %p183 = scmp.eq.s32.totalorder %s19, 1
    %p184 = scmp.ne.s32.totalorder %s179, %s181
    %p185 = scmp.eq.s32.totalorder %s19, 0
    %p186 = por %p184, %p185
    %p187 = scmp.ne.s32.totalorder %s179, %s181
    %p188 = scmp.eq.s32.totalorder %s24, 1
    %p189 = por %p187, %p188
    %p190 = scmp.ne.s32.totalorder %s181, %s182
    %p191 = scmp.eq.s32.totalorder %s24, 0
    %p192 = por %p190, %p191
    %p193 = scmp.ne.s32.totalorder %s181, %s182
    %p194 = scmp.eq.s32.totalorder %s25, 1
    %p195 = por %p193, %p194
    %p197 = scmp.ne.s32.totalorder %s182, %s196
    %p198 = scmp.eq.s32.totalorder %s25, 0
    %p199 = por %p197, %p198
    %s201 = sadd.s32 %s200, 1
    %p204 = scmp.eq.s32.totalorder %s19, 1
    %p205 = scmp.ne.s32.totalorder %s200, %s202
    %p206 = scmp.eq.s32.totalorder %s19, 0
    %p207 = por %p205, %p206
    %p208 = scmp.ne.s32.totalorder %s200, %s202
    %p209 = scmp.eq.s32.totalorder %s24, 1
    %p210 = por %p208, %p209
    %p211 = scmp.ne.s32.totalorder %s202, %s203
    %p212 = scmp.eq.s32.totalorder %s24, 0
    %p213 = por %p211, %p212
    %p214 = scmp.ne.s32.totalorder %s202, %s203
    %p215 = scmp.eq.s32.totalorder %s25, 1
    %p216 = por %p214, %p215
    %p218 = scmp.ne.s32.totalorder %s203, %s217
    %p219 = scmp.eq.s32.totalorder %s25, 0
    %p220 = por %p218, %p219
    %s222 = sadd.s32 %s221, 1
    %p225 = scmp.eq.s32.totalorder %s19, 1
    %p226 = scmp.ne.s32.totalorder %s221, %s223
    %p227 = scmp.eq.s32.totalorder %s19, 0
    %p228 = por %p226, %p227
    %p229 = scmp.ne.s32.totalorder %s221, %s223
    %p230 = scmp.eq.s32.totalorder %s24, 1
    %p231 = por %p229, %p230
    %p232 = scmp.ne.s32.totalorder %s223, %s224
    %p233 = scmp.eq.s32.totalorder %s24, 0
    %p234 = por %p232, %p233
    %p235 = scmp.ne.s32.totalorder %s223, %s224
    %p236 = scmp.eq.s32.totalorder %s25, 1
    %p237 = por %p235, %p236
    %p239 = scmp.ne.s32.totalorder %s224, %s238
    %p240 = scmp.eq.s32.totalorder %s25, 0
    %p241 = por %p239, %p240
    %s243 = sadd.s32 %s242, 1
    %p246 = scmp.eq.s32.totalorder %s19, 1
    %p247 = scmp.ne.s32.totalorder %s242, %s244
    %p248 = scmp.eq.s32.totalorder %s19, 0
    %p249 = por %p247, %p248
    %p250 = scmp.ne.s32.totalorder %s242, %s244
    %p251 = scmp.eq.s32.totalorder %s24, 1
    %p252 = por %p250, %p251
    %p253 = scmp.ne.s32.totalorder %s244, %s245
    %p254 = scmp.eq.s32.totalorder %s24, 0
    %p255 = por %p253, %p254
    %p256 = scmp.ne.s32.totalorder %s244, %s245
    %p257 = scmp.eq.s32.totalorder %s25, 1
    %p258 = por %p256, %p257
    %p260 = scmp.ne.s32.totalorder %s245, %s259
    %p261 = scmp.eq.s32.totalorder %s25, 0
    %p262 = por %p260, %p261
    %s264 = sadd.s32 %s263, 1
    %p267 = scmp.eq.s32.totalorder %s19, 1
    %p268 = scmp.ne.s32.totalorder %s263, %s265
    %p269 = scmp.eq.s32.totalorder %s19, 0
    %p270 = por %p268, %p269
    %p271 = scmp.ne.s32.totalorder %s263, %s265
    %p272 = scmp.eq.s32.totalorder %s24, 1
    %p273 = por %p271, %p272
    %p274 = scmp.ne.s32.totalorder %s265, %s266
    %p275 = scmp.eq.s32.totalorder %s24, 0
    %p276 = por %p274, %p275
    %p277 = scmp.ne.s32.totalorder %s265, %s266
    %p278 = scmp.eq.s32.totalorder %s25, 1
    %p279 = por %p277, %p278
    %p281 = scmp.ne.s32.totalorder %s266, %s280
    %p282 = scmp.eq.s32.totalorder %s25, 0
    %p283 = por %p281, %p282
    %s285 = sadd.s32 %s284, 1
    %p288 = scmp.eq.s32.totalorder %s19, 1
    %p289 = scmp.ne.s32.totalorder %s284, %s286
    %p290 = scmp.eq.s32.totalorder %s19, 0
    %p291 = por %p289, %p290
    %p292 = scmp.ne.s32.totalorder %s284, %s286
    %p293 = scmp.eq.s32.totalorder %s24, 1
    %p294 = por %p292, %p293
    %p295 = scmp.ne.s32.totalorder %s286, %s287
    %p296 = scmp.eq.s32.totalorder %s24, 0
    %p297 = por %p295, %p296
    %p298 = scmp.ne.s32.totalorder %s286, %s287
    %p299 = scmp.eq.s32.totalorder %s25, 1
    %p300 = por %p298, %p299
    %p302 = scmp.ne.s32.totalorder %s287, %s301
    %p303 = scmp.eq.s32.totalorder %s25, 0
    %p304 = por %p302, %p303
    %s305 = ssub.s32 %s19, %s26
    %p306 = scmp.eq.s32.totalorder %s305, 0
    %s308 = sadd.s32 %s307, 1
    %s309 = scalar_select %p306, %s307, %s308
    %p312 = pneg %p306
    %p313 = scmp.eq.s32.totalorder %s19, 1
    %p314 = por %p312, %p313
    %p315 = scmp.ne.s32.totalorder %s307, %s310
    %p316 = scmp.eq.s32.totalorder %s19, 0
    %p317 = por %p315, %p316
    %p318 = scmp.ne.s32.totalorder %s307, %s310
    %p319 = scmp.eq.s32.totalorder %s24, 1
    %p320 = por %p318, %p319
    %p321 = scmp.ne.s32.totalorder %s310, %s311
    %p322 = scmp.eq.s32.totalorder %s24, 0
    %p323 = por %p321, %p322
    %p324 = scmp.ne.s32.totalorder %s310, %s311
    %p325 = scmp.eq.s32.totalorder %s25, 1
    %p326 = por %p324, %p325
    %p328 = scmp.ne.s32.totalorder %s311, %s327
    %p329 = scmp.eq.s32.totalorder %s25, 0
    %p330 = por %p328, %p329
    %p331 = scmp.le.s32.totalorder 1, %s19
    %p332 = scmp.lt.s32.totalorder %s19, 3
    %p333 = pnand %p331, %p332
    %p334 = pneg %p333
    // Predicated region
    $region9: #{image_encoder_forward.1} parent=5 // pred_check
      _
    $region10: #{image_encoder_forward.1} parent=5 // pred_check_branch
      %336 = sbr.rel (%p333) target = $region12
    $region11: #{image_encoder_forward.1} parent=5 // pred_region
      %s337 = ssub.s32 %s19, 1
      // Predicated region
      $region13: #{image_encoder_forward.1} parent=11 // pred_check
        %p338 = pneg %p66
      $region14: #{image_encoder_forward.1} parent=11 // pred_check_branch
        %340 = sbr.rel (%p338) target = $region16
      $region15: #{image_encoder_forward.1} parent=11 // pred_region
        _
      $region16: #{image_encoder_forward.1} parent=11 // pred_fallthru
        _
      // Predicated region
      $region17: #{image_encoder_forward.1} parent=11 // pred_check
        %p341 = pneg %p87
      $region18: #{image_encoder_forward.1} parent=11 // pred_check_branch
        %343 = sbr.rel (%p341) target = $region20
      $region19: #{image_encoder_forward.1} parent=11 // pred_region
        _
      $region20: #{image_encoder_forward.1} parent=11 // pred_fallthru
        _
      // Predicated region
      $region21: #{image_encoder_forward.1} parent=11 // pred_check
        %p344 = pneg %p108
      $region22: #{image_encoder_forward.1} parent=11 // pred_check_branch
        %346 = sbr.rel (%p344) target = $region24
      $region23: #{image_encoder_forward.1} parent=11 // pred_region
        _
      $region24: #{image_encoder_forward.1} parent=11 // pred_fallthru
        _
      // Predicated region
      $region25: #{image_encoder_forward.1} parent=11 // pred_check
        %p347 = pneg %p129
      $region26: #{image_encoder_forward.1} parent=11 // pred_check_branch
        %349 = sbr.rel (%p347) target = $region28
      $region27: #{image_encoder_forward.1} parent=11 // pred_region
        _
      $region28: #{image_encoder_forward.1} parent=11 // pred_fallthru
        _
      // Predicated region
      $region29: #{image_encoder_forward.1} parent=11 // pred_check
        %p350 = pneg %p150
      $region30: #{image_encoder_forward.1} parent=11 // pred_check_branch
        %352 = sbr.rel (%p350) target = $region32
      $region31: #{image_encoder_forward.1} parent=11 // pred_region
        _
      $region32: #{image_encoder_forward.1} parent=11 // pred_fallthru
        _
      // Predicated region
      $region33: #{image_encoder_forward.1} parent=11 // pred_check
        %p353 = pneg %p171
      $region34: #{image_encoder_forward.1} parent=11 // pred_check_branch
        %355 = sbr.rel (%p353) target = $region36
      $region35: #{image_encoder_forward.1} parent=11 // pred_region
        _
      $region36: #{image_encoder_forward.1} parent=11 // pred_fallthru
        _
      // Predicated region
      $region37: #{image_encoder_forward.1} parent=11 // pred_check
        %p356 = pneg %p192
      $region38: #{image_encoder_forward.1} parent=11 // pred_check_branch
        %358 = sbr.rel (%p356) target = $region40
      $region39: #{image_encoder_forward.1} parent=11 // pred_region
        _
      $region40: #{image_encoder_forward.1} parent=11 // pred_fallthru
        _
      // Predicated region
      $region41: #{image_encoder_forward.1} parent=11 // pred_check
        %p359 = pneg %p213
      $region42: #{image_encoder_forward.1} parent=11 // pred_check_branch
        %361 = sbr.rel (%p359) target = $region44
      $region43: #{image_encoder_forward.1} parent=11 // pred_region
        _
      $region44: #{image_encoder_forward.1} parent=11 // pred_fallthru
        _
      // Predicated region
      $region45: #{image_encoder_forward.1} parent=11 // pred_check
        %p362 = pneg %p234
      $region46: #{image_encoder_forward.1} parent=11 // pred_check_branch
        %364 = sbr.rel (%p362) target = $region48
      $region47: #{image_encoder_forward.1} parent=11 // pred_region
        _
      $region48: #{image_encoder_forward.1} parent=11 // pred_fallthru
        _
      // Predicated region
      $region49: #{image_encoder_forward.1} parent=11 // pred_check
        %p365 = pneg %p255
      $region50: #{image_encoder_forward.1} parent=11 // pred_check_branch
        %367 = sbr.rel (%p365) target = $region52
      $region51: #{image_encoder_forward.1} parent=11 // pred_region
        _
      $region52: #{image_encoder_forward.1} parent=11 // pred_fallthru
        _
      // Predicated region
      $region53: #{image_encoder_forward.1} parent=11 // pred_check
        %p368 = pneg %p276
      $region54: #{image_encoder_forward.1} parent=11 // pred_check_branch
        %370 = sbr.rel (%p368) target = $region56
      $region55: #{image_encoder_forward.1} parent=11 // pred_region
        _
      $region56: #{image_encoder_forward.1} parent=11 // pred_fallthru
        _
      // Predicated region
      $region57: #{image_encoder_forward.1} parent=11 // pred_check
        %p371 = pneg %p297
      $region58: #{image_encoder_forward.1} parent=11 // pred_check_branch
        %373 = sbr.rel (%p371) target = $region60
      $region59: #{image_encoder_forward.1} parent=11 // pred_region
        _
      $region60: #{image_encoder_forward.1} parent=11 // pred_fallthru
        _
    $region12: #{image_encoder_forward.1} parent=5 // pred_fallthru
      _
    %p374 = scmp.lt.s32.totalorder %s19, 2
    // Predicated region
    $region61: #{image_encoder_forward.1} parent=5 // pred_check
      %p375 = pneg %p374
    $region62: #{image_encoder_forward.1} parent=5 // pred_check_branch
      %377 = sbr.rel (%p375) target = $region64
    $region63: #{image_encoder_forward.1} parent=5 // pred_region
      // Predicated region
      $region65: #{image_encoder_forward.1} parent=63 // pred_check
        %p378 = pneg %p39
      $region66: #{image_encoder_forward.1} parent=63 // pred_check_branch
        %380 = sbr.rel (%p378) target = $region68
      $region67: #{image_encoder_forward.1} parent=63 // pred_region
        %s381 = smul.u32 240, %s19
        %p382 = scmp.lt.s32.totalorder %s381, 479
        %s383 = scalar_select %p382, %s381, 479
        %s384 = smul.addr %s383, 4
        %s385 = scalar_lea.vmem %s0, %s384
        %s386 = smul.u32 240, %s19
      $region68: #{image_encoder_forward.1} parent=63 // pred_fallthru
        _
    $region64: #{image_encoder_forward.1} parent=5 // pred_fallthru
      _
    %p387 = scmp.le.s32.totalorder 1, %s19
    %p388 = scmp.lt.s32.totalorder %s19, 3
    %p389 = pnand %p387, %p388
    %p390 = pneg %p389
    // Predicated region
    $region69: #{image_encoder_forward.1} parent=5 // pred_check
      _
    $region70: #{image_encoder_forward.1} parent=5 // pred_check_branch
      %392 = sbr.rel (%p389) target = $region72
    $region71: #{image_encoder_forward.1} parent=5 // pred_region
      %s393 = ssub.s32 %s19, 1
      %s394 = smul.u32 240, %s24
      %p395 = scmp.lt.s32.totalorder %s394, 479
      %s396 = scalar_select %p395, %s394, 479
      %s397 = smul.addr %s396, 4
      %s398 = scalar_lea.vmem %s0, %s397
      %p399 = pneg %p45
      %p400 = pneg %p42
      %p401 = pneg %p66
      %p402 = pneg %p63
      %p403 = pneg %p87
      %p404 = pneg %p84
      %p405 = pneg %p108
      %p406 = pneg %p105
      %p407 = pneg %p129
      %p408 = pneg %p126
      %p409 = pneg %p150
      %p410 = pneg %p147
      %p411 = pneg %p171
      %p412 = pneg %p168
      %p413 = pneg %p192
      %p414 = pneg %p189
      %p415 = pneg %p213
      %p416 = pneg %p210
      %p417 = pneg %p234
      %p418 = pneg %p231
      %p419 = pneg %p255
      %p420 = pneg %p252
      %p421 = pneg %p276
      %p422 = pneg %p273
      %p423 = pneg %p297
      %p424 = pneg %p294
      %p425 = pneg %p323
      %p426 = pneg %p320
      %s427 = smul.u32 6, %s24
      %p428 = scmp.lt.s32.totalorder %s427, 11
      %s429 = scalar_select %p428, %s427, 11
      %s430 = smul.addr %s429, 8
      %s431 = scalar_lea.vmem %s13, %s430
      %s432 = smul.u32 240, %s24
      %p433 = scmp.lt.s32.totalorder %s432, 479
      %s434 = scalar_select %p433, %s432, 479
      %s435 = smul.addr %s434, 4
      %s436 = scalar_lea.vmem %s0, %s435
      %s437 = smul.u32 240, %s24
      %s438 = smul.u32 6, %s24
      %p439 = scmp.lt.s32.totalorder %s438, 11
      %s440 = scalar_select %p439, %s438, 11
      %s441 = smul.addr %s440, 8
      %s442 = scalar_lea.vmem %s13, %s441
      %s443 = smul.u32 6, %s24
      %v445 = vld [vmem:[%s436] sm:$0xf]
      %v446 = vld [vmem:[%s436 + $0x4] sm:$0xf]
      %v447 = vld [vmem:[%s436 + $0x8] sm:$0xf]
      %v448 = vld [vmem:[%s436 + $0xc] sm:$0xf]
      %v449 = vld [vmem:[%s436 + $0x10] sm:$0xf]
      %v450 = vld [vmem:[%s436 + $0x14] sm:$0xf]
      %v451 = vld [vmem:[%s436 + $0x18] sm:$0xf]
      %v452 = vld [vmem:[%s436 + $0x1c] sm:$0xf]
      %v453 = vld [vmem:[%s436 + $0x20] sm:$0xf]
      %v454 = vld [vmem:[%s436 + $0x24] sm:$0xf]
      %v455 = vld [vmem:[%s436 + $0x28] sm:$0xf]
      %v456 = vld [vmem:[%s436 + $0x2c] sm:$0xf]
      %v457 = vld [vmem:[%s436 + $0x30] sm:$0xf]
      %v458 = vld [vmem:[%s436 + $0x34] sm:$0xf]
      %v459 = vld [vmem:[%s436 + $0x38] sm:$0xf]
      %v460 = vld [vmem:[%s436 + $0x3c] sm:$0xf]
      %v461 = vld [vmem:[%s436 + $0x40] sm:$0xf]
      %v462 = vld [vmem:[%s436 + $0x44] sm:$0xf]
      %v463 = vld [vmem:[%s436 + $0x48] sm:$0xf]
      %v464 = vld [vmem:[%s436 + $0x4c] sm:$0xf]
      %v465 = vld [vmem:[%s436 + $0x50] sm:$0xf]
      %v466 = vld [vmem:[%s436 + $0x54] sm:$0xf]
      %v467 = vld [vmem:[%s436 + $0x58] sm:$0xf]
      %v468 = vld [vmem:[%s436 + $0x5c] sm:$0xf]
      %v469 = vld [vmem:[%s436 + $0x60] sm:$0xf]
      %v470 = vld [vmem:[%s436 + $0x64] sm:$0xf]
      %v471 = vld [vmem:[%s436 + $0x68] sm:$0xf]
      %v472 = vld [vmem:[%s436 + $0x6c] sm:$0xf]
      %v473 = vld [vmem:[%s436 + $0x70] sm:$0xf]
      %v474 = vld [vmem:[%s436 + $0x74] sm:$0xf]
      %v475 = vld [vmem:[%s436 + $0x78] sm:$0xf]
      %v476 = vld [vmem:[%s436 + $0x7c] sm:$0xf]
      %v477 = vld [vmem:[%s436 + $0x80] sm:$0xf]
      %v478 = vld [vmem:[%s436 + $0x84] sm:$0xf]
      %v479 = vld [vmem:[%s436 + $0x88] sm:$0xf]
      %v480 = vld [vmem:[%s436 + $0x8c] sm:$0xf]
      %v481 = vld [vmem:[%s436 + $0x90] sm:$0xf]
      %v482 = vld [vmem:[%s436 + $0x94] sm:$0xf]
      %v483 = vld [vmem:[%s436 + $0x98] sm:$0xf]
      %v484 = vld [vmem:[%s436 + $0x9c] sm:$0xf]
      %v485 = vld [vmem:[%s436 + $0xa0] sm:$0xf]
      %v486 = vld [vmem:[%s436 + $0xa4] sm:$0xf]
      %v487 = vld [vmem:[%s436 + $0xa8] sm:$0xf]
      %v488 = vld [vmem:[%s436 + $0xac] sm:$0xf]
      %v489 = vld [vmem:[%s436 + $0xb0] sm:$0xf]
      %v490 = vld [vmem:[%s436 + $0xb4] sm:$0xf]
      %v491 = vld [vmem:[%s436 + $0xb8] sm:$0xf]
      %v492 = vld [vmem:[%s436 + $0xbc] sm:$0xf]
      %v493 = vld [vmem:[%s436 + $0xc0] sm:$0xf]
      %v494 = vld [vmem:[%s436 + $0xc4] sm:$0xf]
      %v495 = vld [vmem:[%s436 + $0xc8] sm:$0xf]
      %v496 = vld [vmem:[%s436 + $0xcc] sm:$0xf]
      %v497 = vld [vmem:[%s436 + $0xd0] sm:$0xf]
      %v498 = vld [vmem:[%s436 + $0xd4] sm:$0xf]
      %v499 = vld [vmem:[%s436 + $0xd8] sm:$0xf]
      %v500 = vld [vmem:[%s436 + $0xdc] sm:$0xf]
      %v501 = vld [vmem:[%s436 + $0xe0] sm:$0xf]
      %v502 = vld [vmem:[%s436 + $0xe4] sm:$0xf]
      %v503 = vld [vmem:[%s436 + $0xe8] sm:$0xf]
      %v504 = vld [vmem:[%s436 + $0xec] sm:$0xf]
      %v505 = vld [vmem:[%s436 + $0xf0] sm:$0xf]
      %v506 = vld [vmem:[%s436 + $0xf4] sm:$0xf]
      %v507 = vld [vmem:[%s436 + $0xf8] sm:$0xf]
      %v508 = vld [vmem:[%s436 + $0xfc] sm:$0xf]
      %v509 = vld [vmem:[%s436 + $0x100] sm:$0xf]
      %v510 = vld [vmem:[%s436 + $0x104] sm:$0xf]
      %v511 = vld [vmem:[%s436 + $0x108] sm:$0xf]
      %v512 = vld [vmem:[%s436 + $0x10c] sm:$0xf]
      %v513 = vld [vmem:[%s436 + $0x110] sm:$0xf]
      %v514 = vld [vmem:[%s436 + $0x114] sm:$0xf]
      %v515 = vld [vmem:[%s436 + $0x118] sm:$0xf]
      %v516 = vld [vmem:[%s436 + $0x11c] sm:$0xf]
      %v517 = vld [vmem:[%s436 + $0x120] sm:$0xf]
      %v518 = vld [vmem:[%s436 + $0x124] sm:$0xf]
      %v519 = vld [vmem:[%s436 + $0x128] sm:$0xf]
      %v520 = vld [vmem:[%s436 + $0x12c] sm:$0xf]
      %v521 = vld [vmem:[%s436 + $0x130] sm:$0xf]
      %v522 = vld [vmem:[%s436 + $0x134] sm:$0xf]
      %v523 = vld [vmem:[%s436 + $0x138] sm:$0xf]
      %v524 = vld [vmem:[%s436 + $0x13c] sm:$0xf]
      %v525 = vld [vmem:[%s436 + $0x140] sm:$0xf]
      %v526 = vld [vmem:[%s436 + $0x144] sm:$0xf]
      %v527 = vld [vmem:[%s436 + $0x148] sm:$0xf]
      %v528 = vld [vmem:[%s436 + $0x14c] sm:$0xf]
      %v529 = vld [vmem:[%s436 + $0x150] sm:$0xf]
      %v530 = vld [vmem:[%s436 + $0x154] sm:$0xf]
      %v531 = vld [vmem:[%s436 + $0x158] sm:$0xf]
      %v532 = vld [vmem:[%s436 + $0x15c] sm:$0xf]
      %v533 = vld [vmem:[%s436 + $0x160] sm:$0xf]
      %v534 = vld [vmem:[%s436 + $0x164] sm:$0xf]
      %v535 = vld [vmem:[%s436 + $0x168] sm:$0xf]
      %v536 = vld [vmem:[%s436 + $0x16c] sm:$0xf]
      %v537 = vld [vmem:[%s436 + $0x170] sm:$0xf]
      %v538 = vld [vmem:[%s436 + $0x174] sm:$0xf]
      %v539 = vld [vmem:[%s436 + $0x178] sm:$0xf]
      %v540 = vld [vmem:[%s436 + $0x17c] sm:$0xf]
      %v541 = vld [vmem:[%s436 + $0x180] sm:$0xf]
      %v542 = vld [vmem:[%s436 + $0x184] sm:$0xf]
      %v543 = vld [vmem:[%s436 + $0x188] sm:$0xf]
      %v544 = vld [vmem:[%s436 + $0x18c] sm:$0xf]
      %v545 = vld [vmem:[%s436 + $0x190] sm:$0xf]
      %v546 = vld [vmem:[%s436 + $0x194] sm:$0xf]
      %v547 = vld [vmem:[%s436 + $0x198] sm:$0xf]
      %v548 = vld [vmem:[%s436 + $0x19c] sm:$0xf]
      %v549 = vld [vmem:[%s436 + $0x1a0] sm:$0xf]
      %v550 = vld [vmem:[%s436 + $0x1a4] sm:$0xf]
      %v551 = vld [vmem:[%s436 + $0x1a8] sm:$0xf]
      %v552 = vld [vmem:[%s436 + $0x1ac] sm:$0xf]
      %v553 = vld [vmem:[%s436 + $0x1b0] sm:$0xf]
      %v554 = vld [vmem:[%s436 + $0x1b4] sm:$0xf]
      %v555 = vld [vmem:[%s436 + $0x1b8] sm:$0xf]
      %v556 = vld [vmem:[%s436 + $0x1bc] sm:$0xf]
      %v557 = vld [vmem:[%s436 + $0x1c0] sm:$0xf]
      %v558 = vld [vmem:[%s436 + $0x1c4] sm:$0xf]
      %v559 = vld [vmem:[%s436 + $0x1c8] sm:$0xf]
      %v560 = vld [vmem:[%s436 + $0x1cc] sm:$0xf]
      %v561 = vld [vmem:[%s436 + $0x1d0] sm:$0xf]
      %v562 = vld [vmem:[%s436 + $0x1d4] sm:$0xf]
      %v563 = vld [vmem:[%s436 + $0x1d8] sm:$0xf]
      %v564 = vld [vmem:[%s436 + $0x1dc] sm:$0xf]
      %v565 = vld [vmem:[%s436 + $0x1e0] sm:$0xf]
      %v566 = vld [vmem:[%s436 + $0x1e4] sm:$0xf]
      %v567 = vld [vmem:[%s436 + $0x1e8] sm:$0xf]
      %v568 = vld [vmem:[%s436 + $0x1ec] sm:$0xf]
      %v569 = vld [vmem:[%s436 + $0x1f0] sm:$0xf]
      %v570 = vld [vmem:[%s436 + $0x1f4] sm:$0xf]
      %v571 = vld [vmem:[%s436 + $0x1f8] sm:$0xf]
      %v572 = vld [vmem:[%s436 + $0x1fc] sm:$0xf]
      %v573 = vld [vmem:[%s436 + $0x200] sm:$0xf]
      %v574 = vld [vmem:[%s436 + $0x204] sm:$0xf]
      %v575 = vld [vmem:[%s436 + $0x208] sm:$0xf]
      %v576 = vld [vmem:[%s436 + $0x20c] sm:$0xf]
      %v577 = vld [vmem:[%s436 + $0x210] sm:$0xf]
      %v578 = vld [vmem:[%s436 + $0x214] sm:$0xf]
      %v579 = vld [vmem:[%s436 + $0x218] sm:$0xf]
      %v580 = vld [vmem:[%s436 + $0x21c] sm:$0xf]
      %v581 = vld [vmem:[%s436 + $0x220] sm:$0xf]
      %v582 = vld [vmem:[%s436 + $0x224] sm:$0xf]
      %v583 = vld [vmem:[%s436 + $0x228] sm:$0xf]
      %v584 = vld [vmem:[%s436 + $0x22c] sm:$0xf]
      %v585 = vld [vmem:[%s436 + $0x230] sm:$0xf]
      %v586 = vld [vmem:[%s436 + $0x234] sm:$0xf]
      %v587 = vld [vmem:[%s436 + $0x238] sm:$0xf]
      %v588 = vld [vmem:[%s436 + $0x23c] sm:$0xf]
      %v589 = vld [vmem:[%s436 + $0x240] sm:$0xf]
      %v590 = vld [vmem:[%s436 + $0x244] sm:$0xf]
      %v591 = vld [vmem:[%s436 + $0x248] sm:$0xf]
      %v592 = vld [vmem:[%s436 + $0x24c] sm:$0xf]
      %v593 = vld [vmem:[%s436 + $0x250] sm:$0xf]
      %v594 = vld [vmem:[%s436 + $0x254] sm:$0xf]
      %v595 = vld [vmem:[%s436 + $0x258] sm:$0xf]
      %v596 = vld [vmem:[%s436 + $0x25c] sm:$0xf]
      %v597 = vld [vmem:[%s436 + $0x260] sm:$0xf]
      %v598 = vld [vmem:[%s436 + $0x264] sm:$0xf]
      %v599 = vld [vmem:[%s436 + $0x268] sm:$0xf]
      %v600 = vld [vmem:[%s436 + $0x26c] sm:$0xf]
      %v601 = vld [vmem:[%s436 + $0x270] sm:$0xf]
      %v602 = vld [vmem:[%s436 + $0x274] sm:$0xf]
      %v603 = vld [vmem:[%s436 + $0x278] sm:$0xf]
      %v604 = vld [vmem:[%s436 + $0x27c] sm:$0xf]
      %v605 = vld [vmem:[%s436 + $0x280] sm:$0xf]
      %v606 = vld [vmem:[%s436 + $0x284] sm:$0xf]
      %v607 = vld [vmem:[%s436 + $0x288] sm:$0xf]
      %v608 = vld [vmem:[%s436 + $0x28c] sm:$0xf]
      %v609 = vld [vmem:[%s436 + $0x290] sm:$0xf]
      %v610 = vld [vmem:[%s436 + $0x294] sm:$0xf]
      %v611 = vld [vmem:[%s436 + $0x298] sm:$0xf]
      %v612 = vld [vmem:[%s436 + $0x29c] sm:$0xf]
      %v613 = vld [vmem:[%s436 + $0x2a0] sm:$0xf]
      %v614 = vld [vmem:[%s436 + $0x2a4] sm:$0xf]
      %v615 = vld [vmem:[%s436 + $0x2a8] sm:$0xf]
      %v616 = vld [vmem:[%s436 + $0x2ac] sm:$0xf]
      %v617 = vld [vmem:[%s436 + $0x2b0] sm:$0xf]
      %v618 = vld [vmem:[%s436 + $0x2b4] sm:$0xf]
      %v619 = vld [vmem:[%s436 + $0x2b8] sm:$0xf]
      %v620 = vld [vmem:[%s436 + $0x2bc] sm:$0xf]
      %v621 = vld [vmem:[%s436 + $0x2c0] sm:$0xf]
      %v622 = vld [vmem:[%s436 + $0x2c4] sm:$0xf]
      %v623 = vld [vmem:[%s436 + $0x2c8] sm:$0xf]
      %v624 = vld [vmem:[%s436 + $0x2cc] sm:$0xf]
      %v625 = vld [vmem:[%s436 + $0x2d0] sm:$0xf]
      %v626 = vld [vmem:[%s436 + $0x2d4] sm:$0xf]
      %v627 = vld [vmem:[%s436 + $0x2d8] sm:$0xf]
      %v628 = vld [vmem:[%s436 + $0x2dc] sm:$0xf]
      %v629 = vld [vmem:[%s436 + $0x2e0] sm:$0xf]
      %v630 = vld [vmem:[%s436 + $0x2e4] sm:$0xf]
      %v631 = vld [vmem:[%s436 + $0x2e8] sm:$0xf]
      %v632 = vld [vmem:[%s436 + $0x2ec] sm:$0xf]
      %v633 = vld [vmem:[%s436 + $0x2f0] sm:$0xf]
      %v634 = vld [vmem:[%s436 + $0x2f4] sm:$0xf]
      %v635 = vld [vmem:[%s436 + $0x2f8] sm:$0xf]
      %v636 = vld [vmem:[%s436 + $0x2fc] sm:$0xf]
      %v637 = vld [vmem:[%s436 + $0x300] sm:$0xf]
      %v638 = vld [vmem:[%s436 + $0x304] sm:$0xf]
      %v639 = vld [vmem:[%s436 + $0x308] sm:$0xf]
      %v640 = vld [vmem:[%s436 + $0x30c] sm:$0xf]
      %v641 = vld [vmem:[%s436 + $0x310] sm:$0xf]
      %v642 = vld [vmem:[%s436 + $0x314] sm:$0xf]
      %v643 = vld [vmem:[%s436 + $0x318] sm:$0xf]
      %v644 = vld [vmem:[%s436 + $0x31c] sm:$0xf]
      %v645 = vld [vmem:[%s436 + $0x320] sm:$0xf]
      %v646 = vld [vmem:[%s436 + $0x324] sm:$0xf]
      %v647 = vld [vmem:[%s436 + $0x328] sm:$0xf]
      %v648 = vld [vmem:[%s436 + $0x32c] sm:$0xf]
      %v649 = vld [vmem:[%s436 + $0x330] sm:$0xf]
      %v650 = vld [vmem:[%s436 + $0x334] sm:$0xf]
      %v651 = vld [vmem:[%s436 + $0x338] sm:$0xf]
      %v652 = vld [vmem:[%s436 + $0x33c] sm:$0xf]
      %v653 = vld [vmem:[%s436 + $0x340] sm:$0xf]
      %v654 = vld [vmem:[%s436 + $0x344] sm:$0xf]
      %v655 = vld [vmem:[%s436 + $0x348] sm:$0xf]
      %v656 = vld [vmem:[%s436 + $0x34c] sm:$0xf]
      %v657 = vld [vmem:[%s436 + $0x350] sm:$0xf]
      %v658 = vld [vmem:[%s436 + $0x354] sm:$0xf]
      %v659 = vld [vmem:[%s436 + $0x358] sm:$0xf]
      %v660 = vld [vmem:[%s436 + $0x35c] sm:$0xf]
      %v661 = vld [vmem:[%s436 + $0x360] sm:$0xf]
      %v662 = vld [vmem:[%s436 + $0x364] sm:$0xf]
      %v663 = vld [vmem:[%s436 + $0x368] sm:$0xf]
      %v664 = vld [vmem:[%s436 + $0x36c] sm:$0xf]
      %v665 = vld [vmem:[%s436 + $0x370] sm:$0xf]
      %v666 = vld [vmem:[%s436 + $0x374] sm:$0xf]
      %v667 = vld [vmem:[%s436 + $0x378] sm:$0xf]
      %v668 = vld [vmem:[%s436 + $0x37c] sm:$0xf]
      %v669 = vld [vmem:[%s436 + $0x380] sm:$0xf]
      %v670 = vld [vmem:[%s436 + $0x384] sm:$0xf]
      %v671 = vld [vmem:[%s436 + $0x388] sm:$0xf]
      %v672 = vld [vmem:[%s436 + $0x38c] sm:$0xf]
      %v673 = vld [vmem:[%s436 + $0x390] sm:$0xf]
      %v674 = vld [vmem:[%s436 + $0x394] sm:$0xf]
      %v675 = vld [vmem:[%s436 + $0x398] sm:$0xf]
      %v676 = vld [vmem:[%s436 + $0x39c] sm:$0xf]
      %v677 = vld [vmem:[%s436 + $0x3a0] sm:$0xf]
      %v678 = vld [vmem:[%s436 + $0x3a4] sm:$0xf]
      %v679 = vld [vmem:[%s436 + $0x3a8] sm:$0xf]
      %v680 = vld [vmem:[%s436 + $0x3ac] sm:$0xf]
      %v681 = vld [vmem:[%s436 + $0x3b0] sm:$0xf]
      %v682 = vld [vmem:[%s436 + $0x3b4] sm:$0xf]
      %v683 = vld [vmem:[%s436 + $0x3b8] sm:$0xf]
      %v684 = vld [vmem:[%s436 + $0x3bc] sm:$0xf]
      %v685 = vld [vmem:[%s1] sm:$0xf]
      %v686 = vld [vmem:[%s1 + $0x4] sm:$0xf]
      %v687 = vld [vmem:[%s1 + $0x8] sm:$0xf]
      %v688 = vld [vmem:[%s1 + $0xc] sm:$0xf]
      %v689 = vld [vmem:[%s1 + $0x10] sm:$0xf]
      %v690 = vld [vmem:[%s1 + $0x14] sm:$0xf]
      %v691 = vld [vmem:[%s1 + $0x18] sm:$0xf]
      %v692 = vld [vmem:[%s1 + $0x1c] sm:$0xf]
      %v693 = vld [vmem:[%s1 + $0x20] sm:$0xf]
      %v694 = vld [vmem:[%s1 + $0x24] sm:$0xf]
      %v695 = vld [vmem:[%s1 + $0x28] sm:$0xf]
      %v696 = vld [vmem:[%s1 + $0x2c] sm:$0xf]
      %v697 = vld [vmem:[%s1 + $0x30] sm:$0xf]
      %v698 = vld [vmem:[%s1 + $0x34] sm:$0xf]
      %v699 = vld [vmem:[%s1 + $0x38] sm:$0xf]
      %v700 = vld [vmem:[%s1 + $0x3c] sm:$0xf]
      %v701 = vld [vmem:[%s2] sm:$0x1]
      %v703 = vlaneseq
      %v704 = vshrl.u32 %v703, 7
      %v705 = vsub.s32 0, %v704
      %v706 = vrot.slane %v701, %v705
      %v948 = vunpack.c.l.b16 %v445
      %v949 = vunpack.c.l.b16 %v446
      %v950 = vunpack.c.l.b16 %v447
      %v951 = vunpack.c.l.b16 %v448
      %v952 = vunpack.c.l.b16 %v449
      %v953 = vunpack.c.l.b16 %v450
      %v954 = vunpack.c.l.b16 %v451
      %v955 = vunpack.c.l.b16 %v452
      %v956 = vunpack.c.l.b16 %v453
      %v957 = vunpack.c.l.b16 %v454
      %v958 = vunpack.c.l.b16 %v455
      %v959 = vunpack.c.l.b16 %v456
      %v960 = vunpack.c.l.b16 %v457
      %v961 = vunpack.c.l.b16 %v458
      %v962 = vunpack.c.l.b16 %v459
      %v963 = vunpack.c.l.b16 %v460
      %v964 = vunpack.c.l.b16 %v461
      %v965 = vunpack.c.l.b16 %v462
      %v966 = vunpack.c.l.b16 %v463
      %v967 = vunpack.c.l.b16 %v464
      %v968 = vunpack.c.l.b16 %v465
      %v969 = vunpack.c.l.b16 %v466
      %v970 = vunpack.c.l.b16 %v467
      %v971 = vunpack.c.l.b16 %v468
      %v972 = vunpack.c.l.b16 %v469
      %v973 = vunpack.c.l.b16 %v470
      %v974 = vunpack.c.l.b16 %v471
      %v975 = vunpack.c.l.b16 %v472
      %v976 = vunpack.c.l.b16 %v473
      %v977 = vunpack.c.l.b16 %v474
      %v978 = vunpack.c.l.b16 %v475
      %v979 = vunpack.c.l.b16 %v476
      %v980 = vunpack.c.l.b16 %v477
      %v981 = vunpack.c.l.b16 %v478
      %v982 = vunpack.c.l.b16 %v479
      %v983 = vunpack.c.l.b16 %v480
      %v984 = vunpack.c.l.b16 %v481
      %v985 = vunpack.c.l.b16 %v482
      %v986 = vunpack.c.l.b16 %v483
      %v987 = vunpack.c.l.b16 %v484
      %v988 = vunpack.c.l.b16 %v485
      %v989 = vunpack.c.l.b16 %v486
      %v990 = vunpack.c.l.b16 %v487
      %v991 = vunpack.c.l.b16 %v488
      %v992 = vunpack.c.l.b16 %v489
      %v993 = vunpack.c.l.b16 %v490
      %v994 = vunpack.c.l.b16 %v491
      %v995 = vunpack.c.l.b16 %v492
      %v996 = vunpack.c.l.b16 %v493
      %v997 = vunpack.c.l.b16 %v494
      %v998 = vunpack.c.l.b16 %v495
      %v999 = vunpack.c.l.b16 %v496
      %v1000 = vunpack.c.l.b16 %v497
      %v1001 = vunpack.c.l.b16 %v498
      %v1002 = vunpack.c.l.b16 %v499
      %v1003 = vunpack.c.l.b16 %v500
      %v1004 = vunpack.c.l.b16 %v501
      %v1005 = vunpack.c.l.b16 %v502
      %v1006 = vunpack.c.l.b16 %v503
      %v1007 = vunpack.c.l.b16 %v504
      %v1008 = vunpack.c.l.b16 %v505
      %v1009 = vunpack.c.l.b16 %v506
      %v1010 = vunpack.c.l.b16 %v507
      %v1011 = vunpack.c.l.b16 %v508
      %v1012 = vunpack.c.l.b16 %v509
      %v1013 = vunpack.c.l.b16 %v510
      %v1014 = vunpack.c.l.b16 %v511
      %v1015 = vunpack.c.l.b16 %v512
      %v1016 = vunpack.c.l.b16 %v513
      %v1017 = vunpack.c.l.b16 %v514
      %v1018 = vunpack.c.l.b16 %v515
      %v1019 = vunpack.c.l.b16 %v516
      %v1020 = vunpack.c.l.b16 %v517
      %v1021 = vunpack.c.l.b16 %v518
      %v1022 = vunpack.c.l.b16 %v519
      %v1023 = vunpack.c.l.b16 %v520
      %v1024 = vunpack.c.l.b16 %v521
      %v1025 = vunpack.c.l.b16 %v522
      %v1026 = vunpack.c.l.b16 %v523
      %v1027 = vunpack.c.l.b16 %v524
      %v1028 = vunpack.c.l.b16 %v525
      %v1029 = vunpack.c.l.b16 %v526
      %v1030 = vunpack.c.l.b16 %v527
      %v1031 = vunpack.c.l.b16 %v528
      %v1032 = vunpack.c.l.b16 %v529
      %v1033 = vunpack.c.l.b16 %v530
      %v1034 = vunpack.c.l.b16 %v531
      %v1035 = vunpack.c.l.b16 %v532
      %v1036 = vunpack.c.l.b16 %v533
      %v1037 = vunpack.c.l.b16 %v534
      %v1038 = vunpack.c.l.b16 %v535
      %v1039 = vunpack.c.l.b16 %v536
      %v1040 = vunpack.c.l.b16 %v537
      %v1041 = vunpack.c.l.b16 %v538
      %v1042 = vunpack.c.l.b16 %v539
      %v1043 = vunpack.c.l.b16 %v540
      %v1044 = vunpack.c.l.b16 %v541
      %v1045 = vunpack.c.l.b16 %v542
      %v1046 = vunpack.c.l.b16 %v543
      %v1047 = vunpack.c.l.b16 %v544
      %v1048 = vunpack.c.l.b16 %v545
      %v1049 = vunpack.c.l.b16 %v546
      %v1050 = vunpack.c.l.b16 %v547
      %v1051 = vunpack.c.l.b16 %v548
      %v1052 = vunpack.c.l.b16 %v549
      %v1053 = vunpack.c.l.b16 %v550
      %v1054 = vunpack.c.l.b16 %v551
      %v1055 = vunpack.c.l.b16 %v552
      %v1056 = vunpack.c.l.b16 %v553
      %v1057 = vunpack.c.l.b16 %v554
      %v1058 = vunpack.c.l.b16 %v555
      %v1059 = vunpack.c.l.b16 %v556
      %v1060 = vunpack.c.l.b16 %v557
      %v1061 = vunpack.c.l.b16 %v558
      %v1062 = vunpack.c.l.b16 %v559
      %v1063 = vunpack.c.l.b16 %v560
      %v1064 = vunpack.c.l.b16 %v561
      %v1065 = vunpack.c.l.b16 %v562
      %v1066 = vunpack.c.l.b16 %v563
      %v1067 = vunpack.c.l.b16 %v564
      %v1068 = vunpack.c.l.b16 %v565
      %v1069 = vunpack.c.l.b16 %v566
      %v1070 = vunpack.c.l.b16 %v567
      %v1071 = vunpack.c.l.b16 %v568
      %v1072 = vunpack.c.l.b16 %v569
      %v1073 = vunpack.c.l.b16 %v570
      %v1074 = vunpack.c.l.b16 %v571
      %v1075 = vunpack.c.l.b16 %v572
      %v1076 = vunpack.c.l.b16 %v573
      %v1077 = vunpack.c.l.b16 %v574
      %v1078 = vunpack.c.l.b16 %v575
      %v1079 = vunpack.c.l.b16 %v576
      %v1080 = vunpack.c.l.b16 %v577
      %v1081 = vunpack.c.l.b16 %v578
      %v1082 = vunpack.c.l.b16 %v579
      %v1083 = vunpack.c.l.b16 %v580
      %v1084 = vunpack.c.l.b16 %v581
      %v1085 = vunpack.c.l.b16 %v582
      %v1086 = vunpack.c.l.b16 %v583
      %v1087 = vunpack.c.l.b16 %v584
      %v1088 = vunpack.c.l.b16 %v585
      %v1089 = vunpack.c.l.b16 %v586
      %v1090 = vunpack.c.l.b16 %v587
      %v1091 = vunpack.c.l.b16 %v588
      %v1092 = vunpack.c.l.b16 %v589
      %v1093 = vunpack.c.l.b16 %v590
      %v1094 = vunpack.c.l.b16 %v591
      %v1095 = vunpack.c.l.b16 %v592
      %v1096 = vunpack.c.l.b16 %v593
      %v1097 = vunpack.c.l.b16 %v594
      %v1098 = vunpack.c.l.b16 %v595
      %v1099 = vunpack.c.l.b16 %v596
      %v1100 = vunpack.c.l.b16 %v597
      %v1101 = vunpack.c.l.b16 %v598
      %v1102 = vunpack.c.l.b16 %v599
      %v1103 = vunpack.c.l.b16 %v600
      %v1104 = vunpack.c.l.b16 %v601
      %v1105 = vunpack.c.l.b16 %v602
      %v1106 = vunpack.c.l.b16 %v603
      %v1107 = vunpack.c.l.b16 %v604
      %v1108 = vunpack.c.l.b16 %v605
      %v1109 = vunpack.c.l.b16 %v606
      %v1110 = vunpack.c.l.b16 %v607
      %v1111 = vunpack.c.l.b16 %v608
      %v1112 = vunpack.c.l.b16 %v609
      %v1113 = vunpack.c.l.b16 %v610
      %v1114 = vunpack.c.l.b16 %v611
      %v1115 = vunpack.c.l.b16 %v612
      %v1116 = vunpack.c.l.b16 %v613
      %v1117 = vunpack.c.l.b16 %v614
      %v1118 = vunpack.c.l.b16 %v615
      %v1119 = vunpack.c.l.b16 %v616
      %v1120 = vunpack.c.l.b16 %v617
      %v1121 = vunpack.c.l.b16 %v618
      %v1122 = vunpack.c.l.b16 %v619
      %v1123 = vunpack.c.l.b16 %v620
      %v1124 = vunpack.c.l.b16 %v621
      %v1125 = vunpack.c.l.b16 %v622
      %v1126 = vunpack.c.l.b16 %v623
      %v1127 = vunpack.c.l.b16 %v624
      %v1128 = vunpack.c.l.b16 %v625
      %v1129 = vunpack.c.l.b16 %v626
      %v1130 = vunpack.c.l.b16 %v627
      %v1131 = vunpack.c.l.b16 %v628
      %v1132 = vunpack.c.l.b16 %v629
      %v1133 = vunpack.c.l.b16 %v630
      %v1134 = vunpack.c.l.b16 %v631
      %v1135 = vunpack.c.l.b16 %v632
      %v1136 = vunpack.c.l.b16 %v633
      %v1137 = vunpack.c.l.b16 %v634
      %v1138 = vunpack.c.l.b16 %v635
      %v1139 = vunpack.c.l.b16 %v636
      %v1140 = vunpack.c.l.b16 %v637
      %v1141 = vunpack.c.l.b16 %v638
      %v1142 = vunpack.c.l.b16 %v639
      %v1143 = vunpack.c.l.b16 %v640
      %v1144 = vunpack.c.l.b16 %v641
      %v1145 = vunpack.c.l.b16 %v642
      %v1146 = vunpack.c.l.b16 %v643
      %v1147 = vunpack.c.l.b16 %v644
      %v1148 = vunpack.c.l.b16 %v645
      %v1149 = vunpack.c.l.b16 %v646
      %v1150 = vunpack.c.l.b16 %v647
      %v1151 = vunpack.c.l.b16 %v648
      %v1152 = vunpack.c.l.b16 %v649
      %v1153 = vunpack.c.l.b16 %v650
      %v1154 = vunpack.c.l.b16 %v651
      %v1155 = vunpack.c.l.b16 %v652
      %v1156 = vunpack.c.l.b16 %v653
      %v1157 = vunpack.c.l.b16 %v654
      %v1158 = vunpack.c.l.b16 %v655
      %v1159 = vunpack.c.l.b16 %v656
      %v1160 = vunpack.c.l.b16 %v657
      %v1161 = vunpack.c.l.b16 %v658
      %v1162 = vunpack.c.l.b16 %v659
      %v1163 = vunpack.c.l.b16 %v660
      %v1164 = vunpack.c.l.b16 %v661
      %v1165 = vunpack.c.l.b16 %v662
      %v1166 = vunpack.c.l.b16 %v663
      %v1167 = vunpack.c.l.b16 %v664
      %v1168 = vunpack.c.l.b16 %v665
      %v1169 = vunpack.c.l.b16 %v666
      %v1170 = vunpack.c.l.b16 %v667
      %v1171 = vunpack.c.l.b16 %v668
      %v1172 = vunpack.c.l.b16 %v669
      %v1173 = vunpack.c.l.b16 %v670
      %v1174 = vunpack.c.l.b16 %v671
      %v1175 = vunpack.c.l.b16 %v672
      %v1176 = vunpack.c.l.b16 %v673
      %v1177 = vunpack.c.l.b16 %v674
      %v1178 = vunpack.c.l.b16 %v675
      %v1179 = vunpack.c.l.b16 %v676
      %v1180 = vunpack.c.l.b16 %v677
      %v1181 = vunpack.c.l.b16 %v678
      %v1182 = vunpack.c.l.b16 %v679
      %v1183 = vunpack.c.l.b16 %v680
      %v1184 = vunpack.c.l.b16 %v681
      %v1185 = vunpack.c.l.b16 %v682
      %v1186 = vunpack.c.l.b16 %v683
      %v1187 = vunpack.c.l.b16 %v684
      %v1188 = vpack.c.b16 %v949, %v948
      %v1189 = vpack.c.b16 %v951, %v950
      %v1190 = vpack.c.b16 %v953, %v952
      %v1191 = vpack.c.b16 %v955, %v954
      %v1192 = vpack.c.b16 %v957, %v956
      %v1193 = vpack.c.b16 %v959, %v958
      %v1194 = vpack.c.b16 %v961, %v960
      %v1195 = vpack.c.b16 %v963, %v962
      %v1196 = vpack.c.b16 %v965, %v964
      %v1197 = vpack.c.b16 %v967, %v966
      %v1198 = vpack.c.b16 %v969, %v968
      %v1199 = vpack.c.b16 %v971, %v970
      %v1200 = vpack.c.b16 %v973, %v972
      %v1201 = vpack.c.b16 %v975, %v974
      %v1202 = vpack.c.b16 %v977, %v976
      %v1203 = vpack.c.b16 %v979, %v978
      %v1204 = vpack.c.b16 %v981, %v980
      %v1205 = vpack.c.b16 %v983, %v982
      %v1206 = vpack.c.b16 %v985, %v984
      %v1207 = vpack.c.b16 %v987, %v986
      %v1208 = vpack.c.b16 %v989, %v988
      %v1209 = vpack.c.b16 %v991, %v990
      %v1210 = vpack.c.b16 %v993, %v992
      %v1211 = vpack.c.b16 %v995, %v994
      %v1212 = vpack.c.b16 %v997, %v996
      %v1213 = vpack.c.b16 %v999, %v998
      %v1214 = vpack.c.b16 %v1001, %v1000
      %v1215 = vpack.c.b16 %v1003, %v1002
      %v1216 = vpack.c.b16 %v1005, %v1004
      %v1217 = vpack.c.b16 %v1007, %v1006
      %v1218 = vpack.c.b16 %v1009, %v1008
      %v1219 = vpack.c.b16 %v1011, %v1010
      %v1220 = vpack.c.b16 %v1013, %v1012
      %v1221 = vpack.c.b16 %v1015, %v1014
      %v1222 = vpack.c.b16 %v1017, %v1016
      %v1223 = vpack.c.b16 %v1019, %v1018
      %v1224 = vpack.c.b16 %v1021, %v1020
      %v1225 = vpack.c.b16 %v1023, %v1022
      %v1226 = vpack.c.b16 %v1025, %v1024
      %v1227 = vpack.c.b16 %v1027, %v1026
      %v1228 = vpack.c.b16 %v1029, %v1028
      %v1229 = vpack.c.b16 %v1031, %v1030
      %v1230 = vpack.c.b16 %v1033, %v1032
      %v1231 = vpack.c.b16 %v1035, %v1034
      %v1232 = vpack.c.b16 %v1037, %v1036
      %v1233 = vpack.c.b16 %v1039, %v1038
      %v1234 = vpack.c.b16 %v1041, %v1040
      %v1235 = vpack.c.b16 %v1043, %v1042
      %v1236 = vpack.c.b16 %v1045, %v1044
      %v1237 = vpack.c.b16 %v1047, %v1046
      %v1238 = vpack.c.b16 %v1049, %v1048
      %v1239 = vpack.c.b16 %v1051, %v1050
      %v1240 = vpack.c.b16 %v1053, %v1052
      %v1241 = vpack.c.b16 %v1055, %v1054
      %v1242 = vpack.c.b16 %v1057, %v1056
      %v1243 = vpack.c.b16 %v1059, %v1058
      %v1244 = vpack.c.b16 %v1061, %v1060
      %v1245 = vpack.c.b16 %v1063, %v1062
      %v1246 = vpack.c.b16 %v1065, %v1064
      %v1247 = vpack.c.b16 %v1067, %v1066
      %v1248 = vpack.c.b16 %v1069, %v1068
      %v1249 = vpack.c.b16 %v1071, %v1070
      %v1250 = vpack.c.b16 %v1073, %v1072
      %v1251 = vpack.c.b16 %v1075, %v1074
      %v1252 = vpack.c.b16 %v1077, %v1076
      %v1253 = vpack.c.b16 %v1079, %v1078
      %v1254 = vpack.c.b16 %v1081, %v1080
      %v1255 = vpack.c.b16 %v1083, %v1082
      %v1256 = vpack.c.b16 %v1085, %v1084
      %v1257 = vpack.c.b16 %v1087, %v1086
      %v1258 = vpack.c.b16 %v1089, %v1088
      %v1259 = vpack.c.b16 %v1091, %v1090
      %v1260 = vpack.c.b16 %v1093, %v1092
      %v1261 = vpack.c.b16 %v1095, %v1094
      %v1262 = vpack.c.b16 %v1097, %v1096
      %v1263 = vpack.c.b16 %v1099, %v1098
      %v1264 = vpack.c.b16 %v1101, %v1100
      %v1265 = vpack.c.b16 %v1103, %v1102
      %v1266 = vpack.c.b16 %v1105, %v1104
      %v1267 = vpack.c.b16 %v1107, %v1106
      %v1268 = vpack.c.b16 %v1109, %v1108
      %v1269 = vpack.c.b16 %v1111, %v1110
      %v1270 = vpack.c.b16 %v1113, %v1112
      %v1271 = vpack.c.b16 %v1115, %v1114
      %v1272 = vpack.c.b16 %v1117, %v1116
      %v1273 = vpack.c.b16 %v1119, %v1118
      %v1274 = vpack.c.b16 %v1121, %v1120
      %v1275 = vpack.c.b16 %v1123, %v1122
      %v1276 = vpack.c.b16 %v1125, %v1124
      %v1277 = vpack.c.b16 %v1127, %v1126
      %v1278 = vpack.c.b16 %v1129, %v1128
      %v1279 = vpack.c.b16 %v1131, %v1130
      %v1280 = vpack.c.b16 %v1133, %v1132
      %v1281 = vpack.c.b16 %v1135, %v1134
      %v1282 = vpack.c.b16 %v1137, %v1136
      %v1283 = vpack.c.b16 %v1139, %v1138
      %v1284 = vpack.c.b16 %v1141, %v1140
      %v1285 = vpack.c.b16 %v1143, %v1142
      %v1286 = vpack.c.b16 %v1145, %v1144
      %v1287 = vpack.c.b16 %v1147, %v1146
      %v1288 = vpack.c.b16 %v1149, %v1148
      %v1289 = vpack.c.b16 %v1151, %v1150
      %v1290 = vpack.c.b16 %v1153, %v1152
      %v1291 = vpack.c.b16 %v1155, %v1154
      %v1292 = vpack.c.b16 %v1157, %v1156
      %v1293 = vpack.c.b16 %v1159, %v1158
      %v1294 = vpack.c.b16 %v1161, %v1160
      %v1295 = vpack.c.b16 %v1163, %v1162
      %v1296 = vpack.c.b16 %v1165, %v1164
      %v1297 = vpack.c.b16 %v1167, %v1166
      %v1298 = vpack.c.b16 %v1169, %v1168
      %v1299 = vpack.c.b16 %v1171, %v1170
      %v1300 = vpack.c.b16 %v1173, %v1172
      %v1301 = vpack.c.b16 %v1175, %v1174
      %v1302 = vpack.c.b16 %v1177, %v1176
      %v1303 = vpack.c.b16 %v1179, %v1178
      %v1304 = vpack.c.b16 %v1181, %v1180
      %v1305 = vpack.c.b16 %v1183, %v1182
      %v1306 = vpack.c.b16 %v1185, %v1184
      %v1307 = vpack.c.b16 %v1187, %v1186
      %v1444 = vunpack.c.l.b16 %v685
      %v1445 = vunpack.c.l.b16 %v686
      %v1446 = vunpack.c.l.b16 %v687
      %v1447 = vunpack.c.l.b16 %v688
      %v1448 = vunpack.c.l.b16 %v689
      %v1449 = vunpack.c.l.b16 %v690
      %v1450 = vunpack.c.l.b16 %v691
      %v1451 = vunpack.c.l.b16 %v692
      %v1452 = vunpack.c.l.b16 %v693
      %v1453 = vunpack.c.l.b16 %v694
      %v1454 = vunpack.c.l.b16 %v695
      %v1455 = vunpack.c.l.b16 %v696
      %v1456 = vunpack.c.l.b16 %v697
      %v1457 = vunpack.c.l.b16 %v698
      %v1458 = vunpack.c.l.b16 %v699
      %v1459 = vunpack.c.l.b16 %v700
      %v1460 = vpack.c.b16 %v1445, %v1444
      %v1461 = vpack.c.b16 %v1447, %v1446
      %v1462 = vpack.c.b16 %v1449, %v1448
      %v1463 = vpack.c.b16 %v1451, %v1450
      %v1464 = vpack.c.b16 %v1453, %v1452
      %v1465 = vpack.c.b16 %v1455, %v1454
      %v1466 = vpack.c.b16 %v1457, %v1456
      %v1467 = vpack.c.b16 %v1459, %v1458
      %1476 = vmatprep.subr.bf16.mxu0 0
      %1477 = vmatpush1.bf16.msra.mxu0 %v1460
      %1478 = vmatprep.subr.bf16.mxu0 0
      %1479 = vmatpush1.bf16.msra.mxu0 %v1461
      %1480 = vmatprep.subr.bf16.mxu0 0
      %1481 = vmatpush1.bf16.msra.mxu0 %v1462
      %1482 = vmatprep.subr.bf16.mxu0 0
      %1483 = vmatpush1.bf16.msra.mxu0 %v1463
      %1484 = vmatprep.subr.bf16.mxu0 0
      %1485 = vmatpush1.bf16.msra.mxu0 %v1464
      %1486 = vmatprep.subr.bf16.mxu0 0
      %1487 = vmatpush1.bf16.msra.mxu0 %v1465
      %1488 = vmatprep.subr.bf16.mxu0 0
      %1489 = vmatpush1.bf16.msra.mxu0 %v1466
      %1490 = vmatprep.subr.bf16.mxu0 0
      %1491 = vmatpush1.bf16.msra.mxu0 %v1467
      %1492 = vmatprep.subr.bf16.mxu0 0
      %1493 = vmatpush1.bf16.msra.mxu0 0
      %1494 = vmatprep.subr.bf16.mxu0 0
      %1495 = vmatpush1.bf16.msra.mxu0 0
      %1496 = vmatprep.subr.bf16.mxu0 0
      %1497 = vmatpush1.bf16.msra.mxu0 0
      %1498 = vmatprep.subr.bf16.mxu0 0
      %1499 = vmatpush1.bf16.msra.mxu0 0
      %1500 = vmatprep.subr.bf16.mxu0 0
      %1501 = vmatpush1.bf16.msra.mxu0 0
      %1502 = vmatprep.subr.bf16.mxu0 0
      %1503 = vmatpush1.bf16.msra.mxu0 0
      %1504 = vmatprep.subr.bf16.mxu0 0
      %1505 = vmatpush1.bf16.msra.mxu0 0
      %1506 = vmatprep.subr.bf16.mxu0 0
      %1507 = vmatpush1.bf16.msra.mxu0 0
      %1508 = vmatprep.mubr.bf16.mxu0 0
      %1509 = vmatmul.mubr.bf16.gmra.mrb[0].mxu0 %v1188
      %v1510 = vpop.f32.mrb[0].mxu0
      %v1511 = vadd.f32 %v706, %v1510
      %v1512 = vpop.f32.mrb[0].mxu0
      %v1513 = vpop.f32.mrb[0].mxu0
      %v1514 = vadd.f32 %v706, %v1513
      %v1515 = vpop.f32.mrb[0].mxu0
      %1516 = vmatprep.mubr.bf16.mxu0 0
      %1517 = vmatmul.mubr.bf16.gmra.mrb[0].mxu0 %v1189
      %v1518 = vpop.f32.mrb[0].mxu0
      %v1519 = vadd.f32 %v706, %v1518
      %v1520 = vpop.f32.mrb[0].mxu0
      %v1521 = vpop.f32.mrb[0].mxu0
      %v1522 = vadd.f32 %v706, %v1521
      %v1523 = vpop.f32.mrb[0].mxu0
      %1524 = vmatprep.mubr.bf16.mxu0 0
      %1525 = vmatmul.mubr.bf16.gmra.mrb[0].mxu0 %v1190
      %v1526 = vpop.f32.mrb[0].mxu0
      %v1527 = vadd.f32 %v706, %v1526
      %v1528 = vpop.f32.mrb[0].mxu0
      %v1529 = vpop.f32.mrb[0].mxu0
      %v1530 = vadd.f32 %v706, %v1529
      %v1531 = vpop.f32.mrb[0].mxu0
      %1532 = vmatprep.mubr.bf16.mxu0 0
      %1533 = vmatmul.mubr.bf16.gmra.mrb[0].mxu0 %v1191
      %v1534 = vpop.f32.mrb[0].mxu0
      %v1535 = vadd.f32 %v706, %v1534
      %v1536 = vpop.f32.mrb[0].mxu0
      %v1537 = vpop.f32.mrb[0].mxu0
      %v1538 = vadd.f32 %v706, %v1537
      %v1539 = vpop.f32.mrb[0].mxu0
      %1540 = vmatprep.mubr.bf16.mxu0 0
      %1541 = vmatmul.mubr.bf16.gmra.mrb[0].mxu0 %v1192
      %v1542 = vpop.f32.mrb[0].mxu0
      %v1543 = vadd.f32 %v706, %v1542
      %v1544 = vpop.f32.mrb[0].mxu0
      %v1545 = vpop.f32.mrb[0].mxu0
      %v1546 = vadd.f32 %v706, %v1545
      %v1547 = vpop.f32.mrb[0].mxu0
      %1548 = vmatprep.mubr.bf16.mxu0 0
      %1549 = vmatmul.mubr.bf16.gmra.mrb[0].mxu0 %v1193
      %v1550 = vpop.f32.mrb[0].mxu0
      %v1551 = vadd.f32 %v706, %v1550
      %v1552 = vpop.f32.mrb[0].mxu0
      %v1553 = vpop.f32.mrb[0].mxu0
      %v1554 = vadd.f32 %v706, %v1553
      %v1555 = vpop.f32.mrb[0].mxu0
      %1556 = vmatprep.mubr.bf16.mxu0 0
      %1557 = vmatmul.mubr.bf16.gmra.mrb[0].mxu0 %v1194
      %v1558 = vpop.f32.mrb[0].mxu0
      %v1559 = vadd.f32 %v706, %v1558
      %v1560 = vpop.f32.mrb[0].mxu0
      %v1561 = vpop.f32.mrb[0].mxu0
      %v1562 = vadd.f32 %v706, %v1561
      %v1563 = vpop.f32.mrb[0].mxu0
      %1564 = vmatprep.mubr.bf16.mxu0 0
      %1565 = vmatmul.mubr.bf16.gmra.mrb[0].mxu0 %v1195
      %v1566 = vpop.f32.mrb[0].mxu0
      %v1567 = vadd.f32 %v706, %v1566
      %v1568 = vpop.f32.mrb[0].mxu0
      %v1569 = vpop.f32.mrb[0].mxu0
      %v1570 = vadd.f32 %v706, %v1569
      %v1571 = vpop.f32.mrb[0].mxu0
      %1572 = vmatprep.mubr.bf16.mxu0 0
      %1573 = vmatmul.mubr.bf16.gmra.mrb[0].mxu0 %v1196
      %v1574 = vpop.f32.mrb[0].mxu0
      %v1575 = vadd.f32 %v706, %v1574
      %v1576 = vpop.f32.mrb[0].mxu0
      %v1577 = vpop.f32.mrb[0].mxu0
      %v1578 = vadd.f32 %v706, %v1577
      %v1579 = vpop.f32.mrb[0].mxu0
      %1580 = vmatprep.mubr.bf16.mxu0 0
      %1581 = vmatmul.mubr.bf16.gmra.mrb[0].mxu0 %v1197
      %v1582 = vpop.f32.mrb[0].mxu0
      %v1583 = vadd.f32 %v706, %v1582
      %v1584 = vpop.f32.mrb[0].mxu0
      %v1585 = vpop.f32.mrb[0].mxu0
      %v1586 = vadd.f32 %v706, %v1585
      %v1587 = vpop.f32.mrb[0].mxu0
      %1588 = vmatprep.mubr.bf16.mxu0 0
      %1589 = vmatmul.mubr.bf16.gmra.mrb[0].mxu0 %v1198
      %v1590 = vpop.f32.mrb[0].mxu0
      %v1591 = vadd.f32 %v706, %v1590
      %v1592 = vpop.f32.mrb[0].mxu0
      %v1593 = vpop.f32.mrb[0].mxu0
      %v1594 = vadd.f32 %v706, %v1593
      %v1595 = vpop.f32.mrb[0].mxu0
      %1596 = vmatprep.mubr.bf16.mxu0 0
      %1597 = vmatmul.mubr.bf16.gmra.mrb[0].mxu0 %v1199
      %v1598 = vpop.f32.mrb[0].mxu0
      %v1599 = vadd.f32 %v706, %v1598
      %v1600 = vpop.f32.mrb[0].mxu0
      %v1601 = vpop.f32.mrb[0].mxu0
      %v1602 = vadd.f32 %v706, %v1601
      %v1603 = vpop.f32.mrb[0].mxu0
      %1604 = vmatprep.mubr.bf16.mxu0 0
      %1605 = vmatmul.mubr.bf16.gmra.mrb[0].mxu0 %v1200
      %v1606 = vpop.f32.mrb[0].mxu0
      %v1607 = vadd.f32 %v706, %v1606
      %v1608 = vpop.f32.mrb[0].mxu0
      %v1609 = vpop.f32.mrb[0].mxu0
      %v1610 = vadd.f32 %v706, %v1609
      %v1611 = vpop.f32.mrb[0].mxu0
      %1612 = vmatprep.mubr.bf16.mxu0 0
      %1613 = vmatmul.mubr.bf16.gmra.mrb[0].mxu0 %v1201
      %v1614 = vpop.f32.mrb[0].mxu0
      %v1615 = vadd.f32 %v706, %v1614
      %v1616 = vpop.f32.mrb[0].mxu0
      %v1617 = vpop.f32.mrb[0].mxu0
      %v1618 = vadd.f32 %v706, %v1617
      %v1619 = vpop.f32.mrb[0].mxu0
      %1620 = vmatprep.mubr.bf16.mxu0 0
      %1621 = vmatmul.mubr.bf16.gmra.mrb[0].mxu0 %v1202
      %v1622 = vpop.f32.mrb[0].mxu0
      %v1623 = vadd.f32 %v706, %v1622
      %v1624 = vpop.f32.mrb[0].mxu0
      %v1625 = vpop.f32.mrb[0].mxu0
      %v1626 = vadd.f32 %v706, %v1625
      %v1627 = vpop.f32.mrb[0].mxu0
      %1628 = vmatprep.mubr.bf16.mxu0 0
      %1629 = vmatmul.mubr.bf16.gmra.mrb[0].mxu0 %v1203
      %v1630 = vpop.f32.mrb[0].mxu0
      %v1631 = vadd.f32 %v706, %v1630
      %v1632 = vpop.f32.mrb[0].mxu0
      %v1633 = vpop.f32.mrb[0].mxu0
      %v1634 = vadd.f32 %v706, %v1633
      %v1635 = vpop.f32.mrb[0].mxu0
      %1636 = vmatprep.mubr.bf16.mxu0 0
      %1637 = vmatmul.mubr.bf16.gmra.mrb[0].mxu0 %v1204
      %v1638 = vpop.f32.mrb[0].mxu0
      %v1639 = vadd.f32 %v706, %v1638
      %v1640 = vpop.f32.mrb[0].mxu0
      %v1641 = vpop.f32.mrb[0].mxu0
      %v1642 = vadd.f32 %v706, %v1641
      %v1643 = vpop.f32.mrb[0].mxu0
      %1644 = vmatprep.mubr.bf16.mxu0 0
      %1645 = vmatmul.mubr.bf16.gmra.mrb[0].mxu0 %v1205
      %v1646 = vpop.f32.mrb[0].mxu0
      %v1647 = vadd.f32 %v706, %v1646
      %v1648 = vpop.f32.mrb[0].mxu0
      %v1649 = vpop.f32.mrb[0].mxu0
      %v1650 = vadd.f32 %v706, %v1649
      %v1651 = vpop.f32.mrb[0].mxu0
      %1652 = vmatprep.mubr.bf16.mxu0 0
      %1653 = vmatmul.mubr.bf16.gmra.mrb[0].mxu0 %v1206
      %v1654 = vpop.f32.mrb[0].mxu0
      %v1655 = vadd.f32 %v706, %v1654
      %v1656 = vpop.f32.mrb[0].mxu0
      %v1657 = vpop.f32.mrb[0].mxu0
      %v1658 = vadd.f32 %v706, %v1657
      %v1659 = vpop.f32.mrb[0].mxu0
      %1660 = vmatprep.mubr.bf16.mxu0 0
      %1661 = vmatmul.mubr.bf16.gmra.mrb[0].mxu0 %v1207
      %v1662 = vpop.f32.mrb[0].mxu0
      %v1663 = vadd.f32 %v706, %v1662
      %v1664 = vpop.f32.mrb[0].mxu0
      %v1665 = vpop.f32.mrb[0].mxu0
      %v1666 = vadd.f32 %v706, %v1665
      %v1667 = vpop.f32.mrb[0].mxu0
      %1668 = vmatprep.mubr.bf16.mxu0 0
      %1669 = vmatmul.mubr.bf16.gmra.mrb[0].mxu0 %v1208
      %v1670 = vpop.f32.mrb[0].mxu0
      %v1671 = vadd.f32 %v706, %v1670
      %v1672 = vpop.f32.mrb[0].mxu0
      %v1673 = vpop.f32.mrb[0].mxu0
      %v1674 = vadd.f32 %v706, %v1673
      %v1675 = vpop.f32.mrb[0].mxu0
      %1676 = vmatprep.mubr.bf16.mxu0 0
      %1677 = vmatmul.mubr.bf16.gmra.mrb[0].mxu0 %v1209
      %v1678 = vpop.f32.mrb[0].mxu0
      %v1679 = vadd.f32 %v706, %v1678
      %v1680 = vpop.f32.mrb[0].mxu0
      %v1681 = vpop.f32.mrb[0].mxu0
      %v1682 = vadd.f32 %v706, %v1681
      %v1683 = vpop.f32.mrb[0].mxu0
      %1684 = vmatprep.mubr.bf16.mxu0 0
      %1685 = vmatmul.mubr.bf16.gmra.mrb[0].mxu0 %v1210
      %v1686 = vpop.f32.mrb[0].mxu0
      %v1687 = vadd.f32 %v706, %v1686
      %v1688 = vpop.f32.mrb[0].mxu0
      %v1689 = vpop.f32.mrb[0].mxu0
      %v1690 = vadd.f32 %v706, %v1689
      %v1691 = vpop.f32.mrb[0].mxu0
      %1692 = vmatprep.mubr.bf16.mxu0 0
      %1693 = vmatmul.mubr.bf16.gmra.mrb[0].mxu0 %v1211
      %v1694 = vpop.f32.mrb[0].mxu0
      %v1695 = vadd.f32 %v706, %v1694
      %v1696 = vpop.f32.mrb[0].mxu0
      %v1697 = vpop.f32.mrb[0].mxu0
      %v1698 = vadd.f32 %v706, %v1697
      %v1699 = vpop.f32.mrb[0].mxu0
      %1700 = vmatprep.mubr.bf16.mxu0 0
      %1701 = vmatmul.mubr.bf16.gmra.mrb[0].mxu0 %v1212
      %v1702 = vpop.f32.mrb[0].mxu0
      %v1703 = vadd.f32 %v706, %v1702
      %v1704 = vpop.f32.mrb[0].mxu0
      %v1705 = vpop.f32.mrb[0].mxu0
      %v1706 = vadd.f32 %v706, %v1705
      %v1707 = vpop.f32.mrb[0].mxu0
      %1708 = vmatprep.mubr.bf16.mxu0 0
      %1709 = vmatmul.mubr.bf16.gmra.mrb[0].mxu0 %v1213
      %v1710 = vpop.f32.mrb[0].mxu0
      %v1711 = vadd.f32 %v706, %v1710
      %v1712 = vpop.f32.mrb[0].mxu0
      %v1713 = vpop.f32.mrb[0].mxu0
      %v1714 = vadd.f32 %v706, %v1713
      %v1715 = vpop.f32.mrb[0].mxu0
      %1716 = vmatprep.mubr.bf16.mxu0 0
      %1717 = vmatmul.mubr.bf16.gmra.mrb[0].mxu0 %v1214
      %v1718 = vpop.f32.mrb[0].mxu0
      %v1719 = vadd.f32 %v706, %v1718
      %v1720 = vpop.f32.mrb[0].mxu0
      %v1721 = vpop.f32.mrb[0].mxu0
      %v1722 = vadd.f32 %v706, %v1721
      %v1723 = vpop.f32.mrb[0].mxu0
      %1724 = vmatprep.mubr.bf16.mxu0 0
      %1725 = vmatmul.mubr.bf16.gmra.mrb[0].mxu0 %v1215
      %v1726 = vpop.f32.mrb[0].mxu0
      %v1727 = vadd.f32 %v706, %v1726
      %v1728 = vpop.f32.mrb[0].mxu0
      %v1729 = vpop.f32.mrb[0].mxu0
      %v1730 = vadd.f32 %v706, %v1729
      %v1731 = vpop.f32.mrb[0].mxu0
      %1732 = vmatprep.mubr.bf16.mxu0 0
      %1733 = vmatmul.mubr.bf16.gmra.mrb[0].mxu0 %v1216
      %v1734 = vpop.f32.mrb[0].mxu0
      %v1735 = vadd.f32 %v706, %v1734
      %v1736 = vpop.f32.mrb[0].mxu0
      %v1737 = vpop.f32.mrb[0].mxu0
      %v1738 = vadd.f32 %v706, %v1737
      %v1739 = vpop.f32.mrb[0].mxu0
      %1740 = vmatprep.mubr.bf16.mxu0 0
      %1741 = vmatmul.mubr.bf16.gmra.mrb[0].mxu0 %v1217
      %v1742 = vpop.f32.mrb[0].mxu0
      %v1743 = vadd.f32 %v706, %v1742
      %v1744 = vpop.f32.mrb[0].mxu0
      %v1745 = vpop.f32.mrb[0].mxu0
      %v1746 = vadd.f32 %v706, %v1745
      %v1747 = vpop.f32.mrb[0].mxu0
      %1748 = vmatprep.mubr.bf16.mxu0 0
      %1749 = vmatmul.mubr.bf16.gmra.mrb[0].mxu0 %v1218
      %v1750 = vpop.f32.mrb[0].mxu0
      %v1751 = vadd.f32 %v706, %v1750
      %v1752 = vpop.f32.mrb[0].mxu0
      %v1753 = vpop.f32.mrb[0].mxu0
      %v1754 = vadd.f32 %v706, %v1753
      %v1755 = vpop.f32.mrb[0].mxu0
      %1756 = vmatprep.mubr.bf16.mxu0 0
      %1757 = vmatmul.mubr.bf16.gmra.mrb[0].mxu0 %v1219
      %v1758 = vpop.f32.mrb[0].mxu0
      %v1759 = vadd.f32 %v706, %v1758
      %v1760 = vpop.f32.mrb[0].mxu0
      %v1761 = vpop.f32.mrb[0].mxu0
      %v1762 = vadd.f32 %v706, %v1761
      %v1763 = vpop.f32.mrb[0].mxu0
      %1764 = vmatprep.mubr.bf16.mxu0 0
      %1765 = vmatmul.mubr.bf16.gmra.mrb[0].mxu0 %v1220
      %v1766 = vpop.f32.mrb[0].mxu0
      %v1767 = vadd.f32 %v706, %v1766
      %v1768 = vpop.f32.mrb[0].mxu0
      %v1769 = vpop.f32.mrb[0].mxu0
      %v1770 = vadd.f32 %v706, %v1769
      %v1771 = vpop.f32.mrb[0].mxu0
      %1772 = vmatprep.mubr.bf16.mxu0 0
      %1773 = vmatmul.mubr.bf16.gmra.mrb[0].mxu0 %v1221
      %v1774 = vpop.f32.mrb[0].mxu0
      %v1775 = vadd.f32 %v706, %v1774
      %v1776 = vpop.f32.mrb[0].mxu0
      %v1777 = vpop.f32.mrb[0].mxu0
      %v1778 = vadd.f32 %v706, %v1777
      %v1779 = vpop.f32.mrb[0].mxu0
      %1780 = vmatprep.mubr.bf16.mxu0 0
      %1781 = vmatmul.mubr.bf16.gmra.mrb[0].mxu0 %v1222
      %v1782 = vpop.f32.mrb[0].mxu0
      %v1783 = vadd.f32 %v706, %v1782
      %v1784 = vpop.f32.mrb[0].mxu0
      %v1785 = vpop.f32.mrb[0].mxu0
      %v1786 = vadd.f32 %v706, %v1785
      %v1787 = vpop.f32.mrb[0].mxu0
      %1788 = vmatprep.mubr.bf16.mxu0 0
      %1789 = vmatmul.mubr.bf16.gmra.mrb[0].mxu0 %v1223
      %v1790 = vpop.f32.mrb[0].mxu0
      %v1791 = vadd.f32 %v706, %v1790
      %v1792 = vpop.f32.mrb[0].mxu0
      %v1793 = vpop.f32.mrb[0].mxu0
      %v1794 = vadd.f32 %v706, %v1793
      %v1795 = vpop.f32.mrb[0].mxu0
      %1796 = vmatprep.mubr.bf16.mxu0 0
      %1797 = vmatmul.mubr.bf16.gmra.mrb[0].mxu0 %v1224
      %v1798 = vpop.f32.mrb[0].mxu0
      %v1799 = vadd.f32 %v706, %v1798
      %v1800 = vpop.f32.mrb[0].mxu0
      %v1801 = vpop.f32.mrb[0].mxu0
      %v1802 = vadd.f32 %v706, %v1801
      %v1803 = vpop.f32.mrb[0].mxu0
      %1804 = vmatprep.mubr.bf16.mxu0 0
      %1805 = vmatmul.mubr.bf16.gmra.mrb[0].mxu0 %v1225
      %v1806 = vpop.f32.mrb[0].mxu0
      %v1807 = vadd.f32 %v706, %v1806
      %v1808 = vpop.f32.mrb[0].mxu0
      %v1809 = vpop.f32.mrb[0].mxu0
      %v1810 = vadd.f32 %v706, %v1809
      %v1811 = vpop.f32.mrb[0].mxu0
      %1812 = vmatprep.mubr.bf16.mxu0 0
      %1813 = vmatmul.mubr.bf16.gmra.mrb[0].mxu0 %v1226
      %v1814 = vpop.f32.mrb[0].mxu0
      %v1815 = vadd.f32 %v706, %v1814
      %v1816 = vpop.f32.mrb[0].mxu0
      %v1817 = vpop.f32.mrb[0].mxu0
      %v1818 = vadd.f32 %v706, %v1817
      %v1819 = vpop.f32.mrb[0].mxu0
      %1820 = vmatprep.mubr.bf16.mxu0 0
      %1821 = vmatmul.mubr.bf16.gmra.mrb[0].mxu0 %v1227
      %v1822 = vpop.f32.mrb[0].mxu0
      %v1823 = vadd.f32 %v706, %v1822
      %v1824 = vpop.f32.mrb[0].mxu0
      %v1825 = vpop.f32.mrb[0].mxu0
      %v1826 = vadd.f32 %v706, %v1825
      %v1827 = vpop.f32.mrb[0].mxu0
      %1828 = vmatprep.mubr.bf16.mxu0 0
      %1829 = vmatmul.mubr.bf16.gmra.mrb[0].mxu0 %v1228
      %v1830 = vpop.f32.mrb[0].mxu0
      %v1831 = vadd.f32 %v706, %v1830
      %v1832 = vpop.f32.mrb[0].mxu0
      %v1833 = vpop.f32.mrb[0].mxu0
      %v1834 = vadd.f32 %v706, %v1833
      %v1835 = vpop.f32.mrb[0].mxu0
      %1836 = vmatprep.mubr.bf16.mxu0 0
      %1837 = vmatmul.mubr.bf16.gmra.mrb[0].mxu0 %v1229
      %v1838 = vpop.f32.mrb[0].mxu0
      %v1839 = vadd.f32 %v706, %v1838
      %v1840 = vpop.f32.mrb[0].mxu0
      %v1841 = vpop.f32.mrb[0].mxu0
      %v1842 = vadd.f32 %v706, %v1841
      %v1843 = vpop.f32.mrb[0].mxu0
      %1844 = vmatprep.mubr.bf16.mxu0 0
      %1845 = vmatmul.mubr.bf16.gmra.mrb[0].mxu0 %v1230
      %v1846 = vpop.f32.mrb[0].mxu0
      %v1847 = vadd.f32 %v706, %v1846
      %v1848 = vpop.f32.mrb[0].mxu0
      %v1849 = vpop.f32.mrb[0].mxu0
      %v1850 = vadd.f32 %v706, %v1849
      %v1851 = vpop.f32.mrb[0].mxu0
      %1852 = vmatprep.mubr.bf16.mxu0 0
      %1853 = vmatmul.mubr.bf16.gmra.mrb[0].mxu0 %v1231
      %v1854 = vpop.f32.mrb[0].mxu0
      %v1855 = vadd.f32 %v706, %v1854
      %v1856 = vpop.f32.mrb[0].mxu0
      %v1857 = vpop.f32.mrb[0].mxu0
      %v1858 = vadd.f32 %v706, %v1857
      %v1859 = vpop.f32.mrb[0].mxu0
      %1860 = vmatprep.mubr.bf16.mxu0 0
      %1861 = vmatmul.mubr.bf16.gmra.mrb[0].mxu0 %v1232
      %v1862 = vpop.f32.mrb[0].mxu0
      %v1863 = vadd.f32 %v706, %v1862
      %v1864 = vpop.f32.mrb[0].mxu0
      %v1865 = vpop.f32.mrb[0].mxu0
      %v1866 = vadd.f32 %v706, %v1865
      %v1867 = vpop.f32.mrb[0].mxu0
      %1868 = vmatprep.mubr.bf16.mxu0 0
      %1869 = vmatmul.mubr.bf16.gmra.mrb[0].mxu0 %v1233
      %v1870 = vpop.f32.mrb[0].mxu0
      %v1871 = vadd.f32 %v706, %v1870
      %v1872 = vpop.f32.mrb[0].mxu0
      %v1873 = vpop.f32.mrb[0].mxu0
      %v1874 = vadd.f32 %v706, %v1873
      %v1875 = vpop.f32.mrb[0].mxu0
      %1876 = vmatprep.mubr.bf16.mxu0 0
      %1877 = vmatmul.mubr.bf16.gmra.mrb[0].mxu0 %v1234
      %v1878 = vpop.f32.mrb[0].mxu0
      %v1879 = vadd.f32 %v706, %v1878
      %v1880 = vpop.f32.mrb[0].mxu0
      %v1881 = vpop.f32.mrb[0].mxu0
      %v1882 = vadd.f32 %v706, %v1881
      %v1883 = vpop.f32.mrb[0].mxu0
      %1884 = vmatprep.mubr.bf16.mxu0 0
      %1885 = vmatmul.mubr.bf16.gmra.mrb[0].mxu0 %v1235
      %v1886 = vpop.f32.mrb[0].mxu0
      %v1887 = vadd.f32 %v706, %v1886
      %v1888 = vpop.f32.mrb[0].mxu0
      %v1889 = vpop.f32.mrb[0].mxu0
      %v1890 = vadd.f32 %v706, %v1889
      %v1891 = vpop.f32.mrb[0].mxu0
      %1892 = vmatprep.mubr.bf16.mxu0 0
      %1893 = vmatmul.mubr.bf16.gmra.mrb[0].mxu0 %v1236
      %v1894 = vpop.f32.mrb[0].mxu0
      %v1895 = vadd.f32 %v706, %v1894
      %v1896 = vpop.f32.mrb[0].mxu0
      %v1897 = vpop.f32.mrb[0].mxu0
      %v1898 = vadd.f32 %v706, %v1897
      %v1899 = vpop.f32.mrb[0].mxu0
      %1900 = vmatprep.mubr.bf16.mxu0 0
      %1901 = vmatmul.mubr.bf16.gmra.mrb[0].mxu0 %v1237
      %v1902 = vpop.f32.mrb[0].mxu0
      %v1903 = vadd.f32 %v706, %v1902
      %v1904 = vpop.f32.mrb[0].mxu0
      %v1905 = vpop.f32.mrb[0].mxu0
      %v1906 = vadd.f32 %v706, %v1905
      %v1907 = vpop.f32.mrb[0].mxu0
      %1908 = vmatprep.mubr.bf16.mxu0 0
      %1909 = vmatmul.mubr.bf16.gmra.mrb[0].mxu0 %v1238
      %v1910 = vpop.f32.mrb[0].mxu0
      %v1911 = vadd.f32 %v706, %v1910
      %v1912 = vpop.f32.mrb[0].mxu0
      %v1913 = vpop.f32.mrb[0].mxu0
      %v1914 = vadd.f32 %v706, %v1913
      %v1915 = vpop.f32.mrb[0].mxu0
      %1916 = vmatprep.mubr.bf16.mxu0 0
      %1917 = vmatmul.mubr.bf16.gmra.mrb[0].mxu0 %v1239
      %v1918 = vpop.f32.mrb[0].mxu0
      %v1919 = vadd.f32 %v706, %v1918
      %v1920 = vpop.f32.mrb[0].mxu0
      %v1921 = vpop.f32.mrb[0].mxu0
      %v1922 = vadd.f32 %v706, %v1921
      %v1923 = vpop.f32.mrb[0].mxu0
      %1924 = vmatprep.mubr.bf16.mxu0 0
      %1925 = vmatmul.mubr.bf16.gmra.mrb[0].mxu0 %v1240
      %v1926 = vpop.f32.mrb[0].mxu0
      %v1927 = vadd.f32 %v706, %v1926
      %v1928 = vpop.f32.mrb[0].mxu0
      %v1929 = vpop.f32.mrb[0].mxu0
      %v1930 = vadd.f32 %v706, %v1929
      %v1931 = vpop.f32.mrb[0].mxu0
      %1932 = vmatprep.mubr.bf16.mxu0 0
      %1933 = vmatmul.mubr.bf16.gmra.mrb[0].mxu0 %v1241
      %v1934 = vpop.f32.mrb[0].mxu0
      %v1935 = vadd.f32 %v706, %v1934
      %v1936 = vpop.f32.mrb[0].mxu0
      %v1937 = vpop.f32.mrb[0].mxu0
      %v1938 = vadd.f32 %v706, %v1937
      %v1939 = vpop.f32.mrb[0].mxu0
      %1940 = vmatprep.mubr.bf16.mxu0 0
      %1941 = vmatmul.mubr.bf16.gmra.mrb[0].mxu0 %v1242
      %v1942 = vpop.f32.mrb[0].mxu0
      %v1943 = vadd.f32 %v706, %v1942
      %v1944 = vpop.f32.mrb[0].mxu0
      %v1945 = vpop.f32.mrb[0].mxu0
      %v1946 = vadd.f32 %v706, %v1945
      %v1947 = vpop.f32.mrb[0].mxu0
      %1948 = vmatprep.mubr.bf16.mxu0 0
      %1949 = vmatmul.mubr.bf16.gmra.mrb[0].mxu0 %v1243
      %v1950 = vpop.f32.mrb[0].mxu0
      %v1951 = vadd.f32 %v706, %v1950
      %v1952 = vpop.f32.mrb[0].mxu0
      %v1953 = vpop.f32.mrb[0].mxu0
      %v1954 = vadd.f32 %v706, %v1953
      %v1955 = vpop.f32.mrb[0].mxu0
      %1956 = vmatprep.mubr.bf16.mxu0 0
      %1957 = vmatmul.mubr.bf16.gmra.mrb[0].mxu0 %v1244
      %v1958 = vpop.f32.mrb[0].mxu0
      %v1959 = vadd.f32 %v706, %v1958
      %v1960 = vpop.f32.mrb[0].mxu0
      %v1961 = vpop.f32.mrb[0].mxu0
      %v1962 = vadd.f32 %v706, %v1961
      %v1963 = vpop.f32.mrb[0].mxu0
      %1964 = vmatprep.mubr.bf16.mxu0 0
      %1965 = vmatmul.mubr.bf16.gmra.mrb[0].mxu0 %v1245
      %v1966 = vpop.f32.mrb[0].mxu0
      %v1967 = vadd.f32 %v706, %v1966
      %v1968 = vpop.f32.mrb[0].mxu0
      %v1969 = vpop.f32.mrb[0].mxu0
      %v1970 = vadd.f32 %v706, %v1969
      %v1971 = vpop.f32.mrb[0].mxu0
      %1972 = vmatprep.mubr.bf16.mxu0 0
      %1973 = vmatmul.mubr.bf16.gmra.mrb[0].mxu0 %v1246
      %v1974 = vpop.f32.mrb[0].mxu0
      %v1975 = vadd.f32 %v706, %v1974
      %v1976 = vpop.f32.mrb[0].mxu0
      %v1977 = vpop.f32.mrb[0].mxu0
      %v1978 = vadd.f32 %v706, %v1977
      %v1979 = vpop.f32.mrb[0].mxu0
      %1980 = vmatprep.mubr.bf16.mxu0 0
      %1981 = vmatmul.mubr.bf16.gmra.mrb[0].mxu0 %v1247
      %v1982 = vpop.f32.mrb[0].mxu0
      %v1983 = vadd.f32 %v706, %v1982
      %v1984 = vpop.f32.mrb[0].mxu0
      %v1985 = vpop.f32.mrb[0].mxu0
      %v1986 = vadd.f32 %v706, %v1985
      %v1987 = vpop.f32.mrb[0].mxu0
      %1988 = vmatprep.mubr.bf16.mxu0 0
      %1989 = vmatmul.mubr.bf16.gmra.mrb[0].mxu0 %v1248
      %v1990 = vpop.f32.mrb[0].mxu0
      %v1991 = vadd.f32 %v706, %v1990
      %v1992 = vpop.f32.mrb[0].mxu0
      %v1993 = vpop.f32.mrb[0].mxu0
      %v1994 = vadd.f32 %v706, %v1993
      %v1995 = vpop.f32.mrb[0].mxu0
      %1996 = vmatprep.mubr.bf16.mxu0 0
      %1997 = vmatmul.mubr.bf16.gmra.mrb[0].mxu0 %v1249
      %v1998 = vpop.f32.mrb[0].mxu0
      %v1999 = vadd.f32 %v706, %v1998
      %v2000 = vpop.f32.mrb[0].mxu0
      %v2001 = vpop.f32.mrb[0].mxu0
      %v2002 = vadd.f32 %v706, %v2001
      %v2003 = vpop.f32.mrb[0].mxu0
      %2004 = vmatprep.mubr.bf16.mxu0 0
      %2005 = vmatmul.mubr.bf16.gmra.mrb[0].mxu0 %v1250
      %v2006 = vpop.f32.mrb[0].mxu0
      %v2007 = vadd.f32 %v706, %v2006
      %v2008 = vpop.f32.mrb[0].mxu0
      %v2009 = vpop.f32.mrb[0].mxu0
      %v2010 = vadd.f32 %v706, %v2009
      %v2011 = vpop.f32.mrb[0].mxu0
      %2012 = vmatprep.mubr.bf16.mxu0 0
      %2013 = vmatmul.mubr.bf16.gmra.mrb[0].mxu0 %v1251
      %v2014 = vpop.f32.mrb[0].mxu0
      %v2015 = vadd.f32 %v706, %v2014
      %v2016 = vpop.f32.mrb[0].mxu0
      %v2017 = vpop.f32.mrb[0].mxu0
      %v2018 = vadd.f32 %v706, %v2017
      %v2019 = vpop.f32.mrb[0].mxu0
      %2020 = vmatprep.mubr.bf16.mxu0 0
      %2021 = vmatmul.mubr.bf16.gmra.mrb[0].mxu0 %v1252
      %v2022 = vpop.f32.mrb[0].mxu0
      %v2023 = vadd.f32 %v706, %v2022
      %v2024 = vpop.f32.mrb[0].mxu0
      %v2025 = vpop.f32.mrb[0].mxu0
      %v2026 = vadd.f32 %v706, %v2025
      %v2027 = vpop.f32.mrb[0].mxu0
      %2028 = vmatprep.mubr.bf16.mxu0 0
      %2029 = vmatmul.mubr.bf16.gmra.mrb[0].mxu0 %v1253
      %v2030 = vpop.f32.mrb[0].mxu0
      %v2031 = vadd.f32 %v706, %v2030
      %v2032 = vpop.f32.mrb[0].mxu0
      %v2033 = vpop.f32.mrb[0].mxu0
      %v2034 = vadd.f32 %v706, %v2033
      %v2035 = vpop.f32.mrb[0].mxu0
      %2036 = vmatprep.mubr.bf16.mxu0 0
      %2037 = vmatmul.mubr.bf16.gmra.mrb[0].mxu0 %v1254
      %v2038 = vpop.f32.mrb[0].mxu0
      %v2039 = vadd.f32 %v706, %v2038
      %v2040 = vpop.f32.mrb[0].mxu0
      %v2041 = vpop.f32.mrb[0].mxu0
      %v2042 = vadd.f32 %v706, %v2041
      %v2043 = vpop.f32.mrb[0].mxu0
      %2044 = vmatprep.mubr.bf16.mxu0 0
      %2045 = vmatmul.mubr.bf16.gmra.mrb[0].mxu0 %v1255
      %v2046 = vpop.f32.mrb[0].mxu0
      %v2047 = vadd.f32 %v706, %v2046
      %v2048 = vpop.f32.mrb[0].mxu0
      %v2049 = vpop.f32.mrb[0].mxu0
      %v2050 = vadd.f32 %v706, %v2049
      %v2051 = vpop.f32.mrb[0].mxu0
      %2052 = vmatprep.mubr.bf16.mxu0 0
      %2053 = vmatmul.mubr.bf16.gmra.mrb[0].mxu0 %v1256
      %v2054 = vpop.f32.mrb[0].mxu0
      %v2055 = vadd.f32 %v706, %v2054
      %v2056 = vpop.f32.mrb[0].mxu0
      %v2057 = vpop.f32.mrb[0].mxu0
      %v2058 = vadd.f32 %v706, %v2057
      %v2059 = vpop.f32.mrb[0].mxu0
      %2060 = vmatprep.mubr.bf16.mxu0 0
      %2061 = vmatmul.mubr.bf16.gmra.mrb[0].mxu0 %v1257
      %v2062 = vpop.f32.mrb[0].mxu0
      %v2063 = vadd.f32 %v706, %v2062
      %v2064 = vpop.f32.mrb[0].mxu0
      %v2065 = vpop.f32.mrb[0].mxu0
      %v2066 = vadd.f32 %v706, %v2065
      %v2067 = vpop.f32.mrb[0].mxu0
      %2068 = vmatprep.mubr.bf16.mxu0 0
      %2069 = vmatmul.mubr.bf16.gmra.mrb[0].mxu0 %v1258
      %v2070 = vpop.f32.mrb[0].mxu0
      %v2071 = vadd.f32 %v706, %v2070
      %v2072 = vpop.f32.mrb[0].mxu0
      %v2073 = vpop.f32.mrb[0].mxu0
      %v2074 = vadd.f32 %v706, %v2073
      %v2075 = vpop.f32.mrb[0].mxu0
      %2076 = vmatprep.mubr.bf16.mxu0 0
      %2077 = vmatmul.mubr.bf16.gmra.mrb[0].mxu0 %v1259
      %v2078 = vpop.f32.mrb[0].mxu0
      %v2079 = vadd.f32 %v706, %v2078
      %v2080 = vpop.f32.mrb[0].mxu0
      %v2081 = vpop.f32.mrb[0].mxu0
      %v2082 = vadd.f32 %v706, %v2081
      %v2083 = vpop.f32.mrb[0].mxu0
      %2084 = vmatprep.mubr.bf16.mxu0 0
      %2085 = vmatmul.mubr.bf16.gmra.mrb[0].mxu0 %v1260
      %v2086 = vpop.f32.mrb[0].mxu0
      %v2087 = vadd.f32 %v706, %v2086
      %v2088 = vpop.f32.mrb[0].mxu0
      %v2089 = vpop.f32.mrb[0].mxu0
      %v2090 = vadd.f32 %v706, %v2089
      %v2091 = vpop.f32.mrb[0].mxu0
      %2092 = vmatprep.mubr.bf16.mxu0 0
      %2093 = vmatmul.mubr.bf16.gmra.mrb[0].mxu0 %v1261
      %v2094 = vpop.f32.mrb[0].mxu0
      %v2095 = vadd.f32 %v706, %v2094
      %v2096 = vpop.f32.mrb[0].mxu0
      %v2097 = vpop.f32.mrb[0].mxu0
      %v2098 = vadd.f32 %v706, %v2097
      %v2099 = vpop.f32.mrb[0].mxu0
      %2100 = vmatprep.mubr.bf16.mxu0 0
      %2101 = vmatmul.mubr.bf16.gmra.mrb[0].mxu0 %v1262
      %v2102 = vpop.f32.mrb[0].mxu0
      %v2103 = vadd.f32 %v706, %v2102
      %v2104 = vpop.f32.mrb[0].mxu0
      %v2105 = vpop.f32.mrb[0].mxu0
      %v2106 = vadd.f32 %v706, %v2105
      %v2107 = vpop.f32.mrb[0].mxu0
      %2108 = vmatprep.mubr.bf16.mxu0 0
      %2109 = vmatmul.mubr.bf16.gmra.mrb[0].mxu0 %v1263
      %v2110 = vpop.f32.mrb[0].mxu0
      %v2111 = vadd.f32 %v706, %v2110
      %v2112 = vpop.f32.mrb[0].mxu0
      %v2113 = vpop.f32.mrb[0].mxu0
      %v2114 = vadd.f32 %v706, %v2113
      %v2115 = vpop.f32.mrb[0].mxu0
      %2116 = vmatprep.mubr.bf16.mxu0 0
      %2117 = vmatmul.mubr.bf16.gmra.mrb[0].mxu0 %v1264
      %v2118 = vpop.f32.mrb[0].mxu0
      %v2119 = vadd.f32 %v706, %v2118
      %v2120 = vpop.f32.mrb[0].mxu0
      %v2121 = vpop.f32.mrb[0].mxu0
      %v2122 = vadd.f32 %v706, %v2121
      %v2123 = vpop.f32.mrb[0].mxu0
      %2124 = vmatprep.mubr.bf16.mxu0 0
      %2125 = vmatmul.mubr.bf16.gmra.mrb[0].mxu0 %v1265
      %v2126 = vpop.f32.mrb[0].mxu0
      %v2127 = vadd.f32 %v706, %v2126
      %v2128 = vpop.f32.mrb[0].mxu0
      %v2129 = vpop.f32.mrb[0].mxu0
      %v2130 = vadd.f32 %v706, %v2129
      %v2131 = vpop.f32.mrb[0].mxu0
      %2132 = vmatprep.mubr.bf16.mxu0 0
      %2133 = vmatmul.mubr.bf16.gmra.mrb[0].mxu0 %v1266
      %v2134 = vpop.f32.mrb[0].mxu0
      %v2135 = vadd.f32 %v706, %v2134
      %v2136 = vpop.f32.mrb[0].mxu0
      %v2137 = vpop.f32.mrb[0].mxu0
      %v2138 = vadd.f32 %v706, %v2137
      %v2139 = vpop.f32.mrb[0].mxu0
      %2140 = vmatprep.mubr.bf16.mxu0 0
      %2141 = vmatmul.mubr.bf16.gmra.mrb[0].mxu0 %v1267
      %v2142 = vpop.f32.mrb[0].mxu0
      %v2143 = vadd.f32 %v706, %v2142
      %v2144 = vpop.f32.mrb[0].mxu0
      %v2145 = vpop.f32.mrb[0].mxu0
      %v2146 = vadd.f32 %v706, %v2145
      %v2147 = vpop.f32.mrb[0].mxu0
      %2148 = vmatprep.mubr.bf16.mxu0 0
      %2149 = vmatmul.mubr.bf16.gmra.mrb[0].mxu0 %v1268
      %v2150 = vpop.f32.mrb[0].mxu0
      %v2151 = vadd.f32 %v706, %v2150
      %v2152 = vpop.f32.mrb[0].mxu0
      %v2153 = vpop.f32.mrb[0].mxu0
      %v2154 = vadd.f32 %v706, %v2153
      %v2155 = vpop.f32.mrb[0].mxu0
      %2156 = vmatprep.mubr.bf16.mxu0 0
      %2157 = vmatmul.mubr.bf16.gmra.mrb[0].mxu0 %v1269
      %v2158 = vpop.f32.mrb[0].mxu0
      %v2159 = vadd.f32 %v706, %v2158
      %v2160 = vpop.f32.mrb[0].mxu0
      %v2161 = vpop.f32.mrb[0].mxu0
      %v2162 = vadd.f32 %v706, %v2161
      %v2163 = vpop.f32.mrb[0].mxu0
      %2164 = vmatprep.mubr.bf16.mxu0 0
      %2165 = vmatmul.mubr.bf16.gmra.mrb[0].mxu0 %v1270
      %v2166 = vpop.f32.mrb[0].mxu0
      %v2167 = vadd.f32 %v706, %v2166
      %v2168 = vpop.f32.mrb[0].mxu0
      %v2169 = vpop.f32.mrb[0].mxu0
      %v2170 = vadd.f32 %v706, %v2169
      %v2171 = vpop.f32.mrb[0].mxu0
      %2172 = vmatprep.mubr.bf16.mxu0 0
      %2173 = vmatmul.mubr.bf16.gmra.mrb[0].mxu0 %v1271
      %v2174 = vpop.f32.mrb[0].mxu0
      %v2175 = vadd.f32 %v706, %v2174
      %v2176 = vpop.f32.mrb[0].mxu0
      %v2177 = vpop.f32.mrb[0].mxu0
      %v2178 = vadd.f32 %v706, %v2177
      %v2179 = vpop.f32.mrb[0].mxu0
      %2180 = vmatprep.mubr.bf16.mxu0 0
      %2181 = vmatmul.mubr.bf16.gmra.mrb[0].mxu0 %v1272
      %v2182 = vpop.f32.mrb[0].mxu0
      %v2183 = vadd.f32 %v706, %v2182
      %v2184 = vpop.f32.mrb[0].mxu0
      %v2185 = vpop.f32.mrb[0].mxu0
      %v2186 = vadd.f32 %v706, %v2185
      %v2187 = vpop.f32.mrb[0].mxu0
      %2188 = vmatprep.mubr.bf16.mxu0 0
      %2189 = vmatmul.mubr.bf16.gmra.mrb[0].mxu0 %v1273
      %v2190 = vpop.f32.mrb[0].mxu0
      %v2191 = vadd.f32 %v706, %v2190
      %v2192 = vpop.f32.mrb[0].mxu0
      %v2193 = vpop.f32.mrb[0].mxu0
      %v2194 = vadd.f32 %v706, %v2193
      %v2195 = vpop.f32.mrb[0].mxu0
      %2196 = vmatprep.mubr.bf16.mxu0 0
      %2197 = vmatmul.mubr.bf16.gmra.mrb[0].mxu0 %v1274
      %v2198 = vpop.f32.mrb[0].mxu0
      %v2199 = vadd.f32 %v706, %v2198
      %v2200 = vpop.f32.mrb[0].mxu0
      %v2201 = vpop.f32.mrb[0].mxu0
      %v2202 = vadd.f32 %v706, %v2201
      %v2203 = vpop.f32.mrb[0].mxu0
      %2204 = vmatprep.mubr.bf16.mxu0 0
      %2205 = vmatmul.mubr.bf16.gmra.mrb[0].mxu0 %v1275
      %v2206 = vpop.f32.mrb[0].mxu0
      %v2207 = vadd.f32 %v706, %v2206
      %v2208 = vpop.f32.mrb[0].mxu0
      %v2209 = vpop.f32.mrb[0].mxu0
      %v2210 = vadd.f32 %v706, %v2209
      %v2211 = vpop.f32.mrb[0].mxu0
      %2212 = vmatprep.mubr.bf16.mxu0 0
      %2213 = vmatmul.mubr.bf16.gmra.mrb[0].mxu0 %v1276
      %v2214 = vpop.f32.mrb[0].mxu0
      %v2215 = vadd.f32 %v706, %v2214
      %v2216 = vpop.f32.mrb[0].mxu0
      %v2217 = vpop.f32.mrb[0].mxu0
      %v2218 = vadd.f32 %v706, %v2217
      %v2219 = vpop.f32.mrb[0].mxu0
      %2220 = vmatprep.mubr.bf16.mxu0 0
      %2221 = vmatmul.mubr.bf16.gmra.mrb[0].mxu0 %v1277
      %v2222 = vpop.f32.mrb[0].mxu0
      %v2223 = vadd.f32 %v706, %v2222
      %v2224 = vpop.f32.mrb[0].mxu0
      %v2225 = vpop.f32.mrb[0].mxu0
      %v2226 = vadd.f32 %v706, %v2225
      %v2227 = vpop.f32.mrb[0].mxu0
      %2228 = vmatprep.mubr.bf16.mxu0 0
      %2229 = vmatmul.mubr.bf16.gmra.mrb[0].mxu0 %v1278
      %v2230 = vpop.f32.mrb[0].mxu0
      %v2231 = vadd.f32 %v706, %v2230
      %v2232 = vpop.f32.mrb[0].mxu0
      %v2233 = vpop.f32.mrb[0].mxu0
      %v2234 = vadd.f32 %v706, %v2233
      %v2235 = vpop.f32.mrb[0].mxu0
      %2236 = vmatprep.mubr.bf16.mxu0 0
      %2237 = vmatmul.mubr.bf16.gmra.mrb[0].mxu0 %v1279
      %v2238 = vpop.f32.mrb[0].mxu0
      %v2239 = vadd.f32 %v706, %v2238
      %v2240 = vpop.f32.mrb[0].mxu0
      %v2241 = vpop.f32.mrb[0].mxu0
      %v2242 = vadd.f32 %v706, %v2241
      %v2243 = vpop.f32.mrb[0].mxu0
      %2244 = vmatprep.mubr.bf16.mxu0 0
      %2245 = vmatmul.mubr.bf16.gmra.mrb[0].mxu0 %v1280
      %v2246 = vpop.f32.mrb[0].mxu0
      %v2247 = vadd.f32 %v706, %v2246
      %v2248 = vpop.f32.mrb[0].mxu0
      %v2249 = vpop.f32.mrb[0].mxu0
      %v2250 = vadd.f32 %v706, %v2249
      %v2251 = vpop.f32.mrb[0].mxu0
      %2252 = vmatprep.mubr.bf16.mxu0 0
      %2253 = vmatmul.mubr.bf16.gmra.mrb[0].mxu0 %v1281
      %v2254 = vpop.f32.mrb[0].mxu0
      %v2255 = vadd.f32 %v706, %v2254
      %v2256 = vpop.f32.mrb[0].mxu0
      %v2257 = vpop.f32.mrb[0].mxu0
      %v2258 = vadd.f32 %v706, %v2257
      %v2259 = vpop.f32.mrb[0].mxu0
      %2260 = vmatprep.mubr.bf16.mxu0 0
      %2261 = vmatmul.mubr.bf16.gmra.mrb[0].mxu0 %v1282
      %v2262 = vpop.f32.mrb[0].mxu0
      %v2263 = vadd.f32 %v706, %v2262
      %v2264 = vpop.f32.mrb[0].mxu0
      %v2265 = vpop.f32.mrb[0].mxu0
      %v2266 = vadd.f32 %v706, %v2265
      %v2267 = vpop.f32.mrb[0].mxu0
      %2268 = vmatprep.mubr.bf16.mxu0 0
      %2269 = vmatmul.mubr.bf16.gmra.mrb[0].mxu0 %v1283
      %v2270 = vpop.f32.mrb[0].mxu0
      %v2271 = vadd.f32 %v706, %v2270
      %v2272 = vpop.f32.mrb[0].mxu0
      %v2273 = vpop.f32.mrb[0].mxu0
      %v2274 = vadd.f32 %v706, %v2273
      %v2275 = vpop.f32.mrb[0].mxu0
      %2276 = vmatprep.mubr.bf16.mxu0 0
      %2277 = vmatmul.mubr.bf16.gmra.mrb[0].mxu0 %v1284
      %v2278 = vpop.f32.mrb[0].mxu0
      %v2279 = vadd.f32 %v706, %v2278
      %v2280 = vpop.f32.mrb[0].mxu0
      %v2281 = vpop.f32.mrb[0].mxu0
      %v2282 = vadd.f32 %v706, %v2281
      %v2283 = vpop.f32.mrb[0].mxu0
      %2284 = vmatprep.mubr.bf16.mxu0 0
      %2285 = vmatmul.mubr.bf16.gmra.mrb[0].mxu0 %v1285
      %v2286 = vpop.f32.mrb[0].mxu0
      %v2287 = vadd.f32 %v706, %v2286
      %v2288 = vpop.f32.mrb[0].mxu0
      %v2289 = vpop.f32.mrb[0].mxu0
      %v2290 = vadd.f32 %v706, %v2289
      %v2291 = vpop.f32.mrb[0].mxu0
      %2292 = vmatprep.mubr.bf16.mxu0 0
      %2293 = vmatmul.mubr.bf16.gmra.mrb[0].mxu0 %v1286
      %v2294 = vpop.f32.mrb[0].mxu0
      %v2295 = vadd.f32 %v706, %v2294
      %v2296 = vpop.f32.mrb[0].mxu0
      %v2297 = vpop.f32.mrb[0].mxu0
      %v2298 = vadd.f32 %v706, %v2297
      %v2299 = vpop.f32.mrb[0].mxu0
      %2300 = vmatprep.mubr.bf16.mxu0 0
      %2301 = vmatmul.mubr.bf16.gmra.mrb[0].mxu0 %v1287
      %v2302 = vpop.f32.mrb[0].mxu0
      %v2303 = vadd.f32 %v706, %v2302
      %v2304 = vpop.f32.mrb[0].mxu0
      %v2305 = vpop.f32.mrb[0].mxu0
      %v2306 = vadd.f32 %v706, %v2305
      %v2307 = vpop.f32.mrb[0].mxu0
      %2308 = vmatprep.mubr.bf16.mxu0 0
      %2309 = vmatmul.mubr.bf16.gmra.mrb[0].mxu0 %v1288
      %v2310 = vpop.f32.mrb[0].mxu0
      %v2311 = vadd.f32 %v706, %v2310
      %v2312 = vpop.f32.mrb[0].mxu0
      %v2313 = vpop.f32.mrb[0].mxu0
      %v2314 = vadd.f32 %v706, %v2313
      %v2315 = vpop.f32.mrb[0].mxu0
      %2316 = vmatprep.mubr.bf16.mxu0 0
      %2317 = vmatmul.mubr.bf16.gmra.mrb[0].mxu0 %v1289
      %v2318 = vpop.f32.mrb[0].mxu0
      %v2319 = vadd.f32 %v706, %v2318
      %v2320 = vpop.f32.mrb[0].mxu0
      %v2321 = vpop.f32.mrb[0].mxu0
      %v2322 = vadd.f32 %v706, %v2321
      %v2323 = vpop.f32.mrb[0].mxu0
      %2324 = vmatprep.mubr.bf16.mxu0 0
      %2325 = vmatmul.mubr.bf16.gmra.mrb[0].mxu0 %v1290
      %v2326 = vpop.f32.mrb[0].mxu0
      %v2327 = vadd.f32 %v706, %v2326
      %v2328 = vpop.f32.mrb[0].mxu0
      %v2329 = vpop.f32.mrb[0].mxu0
      %v2330 = vadd.f32 %v706, %v2329
      %v2331 = vpop.f32.mrb[0].mxu0
      %2332 = vmatprep.mubr.bf16.mxu0 0
      %2333 = vmatmul.mubr.bf16.gmra.mrb[0].mxu0 %v1291
      %v2334 = vpop.f32.mrb[0].mxu0
      %v2335 = vadd.f32 %v706, %v2334
      %v2336 = vpop.f32.mrb[0].mxu0
      %v2337 = vpop.f32.mrb[0].mxu0
      %v2338 = vadd.f32 %v706, %v2337
      %v2339 = vpop.f32.mrb[0].mxu0
      %2340 = vmatprep.mubr.bf16.mxu0 0
      %2341 = vmatmul.mubr.bf16.gmra.mrb[0].mxu0 %v1292
      %v2342 = vpop.f32.mrb[0].mxu0
      %v2343 = vadd.f32 %v706, %v2342
      %v2344 = vpop.f32.mrb[0].mxu0
      %v2345 = vpop.f32.mrb[0].mxu0
      %v2346 = vadd.f32 %v706, %v2345
      %v2347 = vpop.f32.mrb[0].mxu0
      %2348 = vmatprep.mubr.bf16.mxu0 0
      %2349 = vmatmul.mubr.bf16.gmra.mrb[0].mxu0 %v1293
      %v2350 = vpop.f32.mrb[0].mxu0
      %v2351 = vadd.f32 %v706, %v2350
      %v2352 = vpop.f32.mrb[0].mxu0
      %v2353 = vpop.f32.mrb[0].mxu0
      %v2354 = vadd.f32 %v706, %v2353
      %v2355 = vpop.f32.mrb[0].mxu0
      %2356 = vmatprep.mubr.bf16.mxu0 0
      %2357 = vmatmul.mubr.bf16.gmra.mrb[0].mxu0 %v1294
      %v2358 = vpop.f32.mrb[0].mxu0
      %v2359 = vadd.f32 %v706, %v2358
      %v2360 = vpop.f32.mrb[0].mxu0
      %v2361 = vpop.f32.mrb[0].mxu0
      %v2362 = vadd.f32 %v706, %v2361
      %v2363 = vpop.f32.mrb[0].mxu0
      %2364 = vmatprep.mubr.bf16.mxu0 0
      %2365 = vmatmul.mubr.bf16.gmra.mrb[0].mxu0 %v1295
      %v2366 = vpop.f32.mrb[0].mxu0
      %v2367 = vadd.f32 %v706, %v2366
      %v2368 = vpop.f32.mrb[0].mxu0
      %v2369 = vpop.f32.mrb[0].mxu0
      %v2370 = vadd.f32 %v706, %v2369
      %v2371 = vpop.f32.mrb[0].mxu0
      %2372 = vmatprep.mubr.bf16.mxu0 0
      %2373 = vmatmul.mubr.bf16.gmra.mrb[0].mxu0 %v1296
      %v2374 = vpop.f32.mrb[0].mxu0
      %v2375 = vadd.f32 %v706, %v2374
      %v2376 = vpop.f32.mrb[0].mxu0
      %v2377 = vpop.f32.mrb[0].mxu0
      %v2378 = vadd.f32 %v706, %v2377
      %v2379 = vpop.f32.mrb[0].mxu0
      %2380 = vmatprep.mubr.bf16.mxu0 0
      %2381 = vmatmul.mubr.bf16.gmra.mrb[0].mxu0 %v1297
      %v2382 = vpop.f32.mrb[0].mxu0
      %v2383 = vadd.f32 %v706, %v2382
      %v2384 = vpop.f32.mrb[0].mxu0
      %v2385 = vpop.f32.mrb[0].mxu0
      %v2386 = vadd.f32 %v706, %v2385
      %v2387 = vpop.f32.mrb[0].mxu0
      %2388 = vmatprep.mubr.bf16.mxu0 0
      %2389 = vmatmul.mubr.bf16.gmra.mrb[0].mxu0 %v1298
      %v2390 = vpop.f32.mrb[0].mxu0
      %v2391 = vadd.f32 %v706, %v2390
      %v2392 = vpop.f32.mrb[0].mxu0
      %v2393 = vpop.f32.mrb[0].mxu0
      %v2394 = vadd.f32 %v706, %v2393
      %v2395 = vpop.f32.mrb[0].mxu0
      %2396 = vmatprep.mubr.bf16.mxu0 0
      %2397 = vmatmul.mubr.bf16.gmra.mrb[0].mxu0 %v1299
      %v2398 = vpop.f32.mrb[0].mxu0
      %v2399 = vadd.f32 %v706, %v2398
      %v2400 = vpop.f32.mrb[0].mxu0
      %v2401 = vpop.f32.mrb[0].mxu0
      %v2402 = vadd.f32 %v706, %v2401
      %v2403 = vpop.f32.mrb[0].mxu0
      %2404 = vmatprep.mubr.bf16.mxu0 0
      %2405 = vmatmul.mubr.bf16.gmra.mrb[0].mxu0 %v1300
      %v2406 = vpop.f32.mrb[0].mxu0
      %v2407 = vadd.f32 %v706, %v2406
      %v2408 = vpop.f32.mrb[0].mxu0
      %v2409 = vpop.f32.mrb[0].mxu0
      %v2410 = vadd.f32 %v706, %v2409
      %v2411 = vpop.f32.mrb[0].mxu0
      %2412 = vmatprep.mubr.bf16.mxu0 0
      %2413 = vmatmul.mubr.bf16.gmra.mrb[0].mxu0 %v1301
      %v2414 = vpop.f32.mrb[0].mxu0
      %v2415 = vadd.f32 %v706, %v2414
      %v2416 = vpop.f32.mrb[0].mxu0
      %v2417 = vpop.f32.mrb[0].mxu0
      %v2418 = vadd.f32 %v706, %v2417
      %v2419 = vpop.f32.mrb[0].mxu0
      %2420 = vmatprep.mubr.bf16.mxu0 0
      %2421 = vmatmul.mubr.bf16.gmra.mrb[0].mxu0 %v1302
      %v2422 = vpop.f32.mrb[0].mxu0
      %v2423 = vadd.f32 %v706, %v2422
      %v2424 = vpop.f32.mrb[0].mxu0
      %v2425 = vpop.f32.mrb[0].mxu0
      %v2426 = vadd.f32 %v706, %v2425
      %v2427 = vpop.f32.mrb[0].mxu0
      %2428 = vmatprep.mubr.bf16.mxu0 0
      %2429 = vmatmul.mubr.bf16.gmra.mrb[0].mxu0 %v1303
      %v2430 = vpop.f32.mrb[0].mxu0
      %v2431 = vadd.f32 %v706, %v2430
      %v2432 = vpop.f32.mrb[0].mxu0
      %v2433 = vpop.f32.mrb[0].mxu0
      %v2434 = vadd.f32 %v706, %v2433
      %v2435 = vpop.f32.mrb[0].mxu0
      %2436 = vmatprep.mubr.bf16.mxu0 0
      %2437 = vmatmul.mubr.bf16.gmra.mrb[0].mxu0 %v1304
      %v2438 = vpop.f32.mrb[0].mxu0
      %v2439 = vadd.f32 %v706, %v2438
      %v2440 = vpop.f32.mrb[0].mxu0
      %v2441 = vpop.f32.mrb[0].mxu0
      %v2442 = vadd.f32 %v706, %v2441
      %v2443 = vpop.f32.mrb[0].mxu0
      %2444 = vmatprep.mubr.bf16.mxu0 0
      %2445 = vmatmul.mubr.bf16.gmra.mrb[0].mxu0 %v1305
      %v2446 = vpop.f32.mrb[0].mxu0
      %v2447 = vadd.f32 %v706, %v2446
      %v2448 = vpop.f32.mrb[0].mxu0
      %v2449 = vpop.f32.mrb[0].mxu0
      %v2450 = vadd.f32 %v706, %v2449
      %v2451 = vpop.f32.mrb[0].mxu0
      %2452 = vmatprep.mubr.bf16.mxu0 0
      %2453 = vmatmul.mubr.bf16.gmra.mrb[0].mxu0 %v1306
      %v2454 = vpop.f32.mrb[0].mxu0
      %v2455 = vadd.f32 %v706, %v2454
      %v2456 = vpop.f32.mrb[0].mxu0
      %v2457 = vpop.f32.mrb[0].mxu0
      %v2458 = vadd.f32 %v706, %v2457
      %v2459 = vpop.f32.mrb[0].mxu0
      %2460 = vmatprep.mubr.bf16.mxu0 0
      %2461 = vmatmul.mubr.bf16.gmra.mrb[0].mxu0 %v1307
      %v2462 = vpop.f32.mrb[0].mxu0
      %v2463 = vadd.f32 %v706, %v2462
      %v2464 = vpop.f32.mrb[0].mxu0
      %v2465 = vpop.f32.mrb[0].mxu0
      %v2466 = vadd.f32 %v706, %v2465
      %v2467 = vpop.f32.mrb[0].mxu0
      %2468 = vdwg.mxu0
      %v2469 = vmax.f32 %v1511, 0.0
      %v2470 = vmax.f32 %v1514, 0.0
      %v2471 = vmax.f32 %v1519, 0.0
      %v2472 = vmax.f32 %v1522, 0.0
      %v2473 = vmax.f32 %v1527, 0.0
      %v2474 = vmax.f32 %v1530, 0.0
      %v2475 = vmax.f32 %v1535, 0.0
      %v2476 = vmax.f32 %v1538, 0.0
      %v2477 = vmax.f32 %v1543, 0.0
      %v2478 = vmax.f32 %v1546, 0.0
      %v2479 = vmax.f32 %v1551, 0.0
      %v2480 = vmax.f32 %v1554, 0.0
      %v2481 = vmax.f32 %v1559, 0.0
      %v2482 = vmax.f32 %v1562, 0.0
      %v2483 = vmax.f32 %v1567, 0.0
      %v2484 = vmax.f32 %v1570, 0.0
      %v2485 = vmax.f32 %v1575, 0.0
      %v2486 = vmax.f32 %v1578, 0.0
      %v2487 = vmax.f32 %v1583, 0.0
      %v2488 = vmax.f32 %v1586, 0.0
      %v2489 = vmax.f32 %v1591, 0.0
      %v2490 = vmax.f32 %v1594, 0.0
      %v2491 = vmax.f32 %v1599, 0.0
      %v2492 = vmax.f32 %v1602, 0.0
      %v2493 = vmax.f32 %v1607, 0.0
      %v2494 = vmax.f32 %v1610, 0.0
      %v2495 = vmax.f32 %v1615, 0.0
      %v2496 = vmax.f32 %v1618, 0.0
      %v2497 = vmax.f32 %v1623, 0.0
      %v2498 = vmax.f32 %v1626, 0.0
      %v2499 = vmax.f32 %v1631, 0.0
      %v2500 = vmax.f32 %v1634, 0.0
      %v2501 = vmax.f32 %v1639, 0.0
      %v2502 = vmax.f32 %v1642, 0.0
      %v2503 = vmax.f32 %v1647, 0.0
      %v2504 = vmax.f32 %v1650, 0.0
      %v2505 = vmax.f32 %v1655, 0.0
      %v2506 = vmax.f32 %v1658, 0.0
      %v2507 = vmax.f32 %v1663, 0.0
      %v2508 = vmax.f32 %v1666, 0.0
      %v2509 = vmax.f32 %v1671, 0.0
      %v2510 = vmax.f32 %v1674, 0.0
      %v2511 = vmax.f32 %v1679, 0.0
      %v2512 = vmax.f32 %v1682, 0.0
      %v2513 = vmax.f32 %v1687, 0.0
      %v2514 = vmax.f32 %v1690, 0.0
      %v2515 = vmax.f32 %v1695, 0.0
      %v2516 = vmax.f32 %v1698, 0.0
      %v2517 = vmax.f32 %v1703, 0.0
      %v2518 = vmax.f32 %v1706, 0.0
      %v2519 = vmax.f32 %v1711, 0.0
      %v2520 = vmax.f32 %v1714, 0.0
      %v2521 = vmax.f32 %v1719, 0.0
      %v2522 = vmax.f32 %v1722, 0.0
      %v2523 = vmax.f32 %v1727, 0.0
      %v2524 = vmax.f32 %v1730, 0.0
      %v2525 = vmax.f32 %v1735, 0.0
      %v2526 = vmax.f32 %v1738, 0.0
      %v2527 = vmax.f32 %v1743, 0.0
      %v2528 = vmax.f32 %v1746, 0.0
      %v2529 = vmax.f32 %v1751, 0.0
      %v2530 = vmax.f32 %v1754, 0.0
      %v2531 = vmax.f32 %v1759, 0.0
      %v2532 = vmax.f32 %v1762, 0.0
      %v2533 = vmax.f32 %v1767, 0.0
      %v2534 = vmax.f32 %v1770, 0.0
      %v2535 = vmax.f32 %v1775, 0.0
      %v2536 = vmax.f32 %v1778, 0.0
      %v2537 = vmax.f32 %v1783, 0.0
      %v2538 = vmax.f32 %v1786, 0.0
      %v2539 = vmax.f32 %v1791, 0.0
      %v2540 = vmax.f32 %v1794, 0.0
      %v2541 = vmax.f32 %v1799, 0.0
      %v2542 = vmax.f32 %v1802, 0.0
      %v2543 = vmax.f32 %v1807, 0.0
      %v2544 = vmax.f32 %v1810, 0.0
      %v2545 = vmax.f32 %v1815, 0.0
      %v2546 = vmax.f32 %v1818, 0.0
      %v2547 = vmax.f32 %v1823, 0.0
      %v2548 = vmax.f32 %v1826, 0.0
      %v2549 = vmax.f32 %v1831, 0.0
      %v2550 = vmax.f32 %v1834, 0.0
      %v2551 = vmax.f32 %v1839, 0.0
      %v2552 = vmax.f32 %v1842, 0.0
      %v2553 = vmax.f32 %v1847, 0.0
      %v2554 = vmax.f32 %v1850, 0.0
      %v2555 = vmax.f32 %v1855, 0.0
      %v2556 = vmax.f32 %v1858, 0.0
      %v2557 = vmax.f32 %v1863, 0.0
      %v2558 = vmax.f32 %v1866, 0.0
      %v2559 = vmax.f32 %v1871, 0.0
      %v2560 = vmax.f32 %v1874, 0.0
      %v2561 = vmax.f32 %v1879, 0.0
      %v2562 = vmax.f32 %v1882, 0.0
      %v2563 = vmax.f32 %v1887, 0.0
      %v2564 = vmax.f32 %v1890, 0.0
      %v2565 = vmax.f32 %v1895, 0.0
      %v2566 = vmax.f32 %v1898, 0.0
      %v2567 = vmax.f32 %v1903, 0.0
      %v2568 = vmax.f32 %v1906, 0.0
      %v2569 = vmax.f32 %v1911, 0.0
      %v2570 = vmax.f32 %v1914, 0.0
      %v2571 = vmax.f32 %v1919, 0.0
      %v2572 = vmax.f32 %v1922, 0.0
      %v2573 = vmax.f32 %v1927, 0.0
      %v2574 = vmax.f32 %v1930, 0.0
      %v2575 = vmax.f32 %v1935, 0.0
      %v2576 = vmax.f32 %v1938, 0.0
      %v2577 = vmax.f32 %v1943, 0.0
      %v2578 = vmax.f32 %v1946, 0.0
      %v2579 = vmax.f32 %v1951, 0.0
      %v2580 = vmax.f32 %v1954, 0.0
      %v2581 = vmax.f32 %v1959, 0.0
      %v2582 = vmax.f32 %v1962, 0.0
      %v2583 = vmax.f32 %v1967, 0.0
      %v2584 = vmax.f32 %v1970, 0.0
      %v2585 = vmax.f32 %v1975, 0.0
      %v2586 = vmax.f32 %v1978, 0.0
      %v2587 = vmax.f32 %v1983, 0.0
      %v2588 = vmax.f32 %v1986, 0.0
      %v2589 = vmax.f32 %v1991, 0.0
      %v2590 = vmax.f32 %v1994, 0.0
      %v2591 = vmax.f32 %v1999, 0.0
      %v2592 = vmax.f32 %v2002, 0.0
      %v2593 = vmax.f32 %v2007, 0.0
      %v2594 = vmax.f32 %v2010, 0.0
      %v2595 = vmax.f32 %v2015, 0.0
      %v2596 = vmax.f32 %v2018, 0.0
      %v2597 = vmax.f32 %v2023, 0.0
      %v2598 = vmax.f32 %v2026, 0.0
      %v2599 = vmax.f32 %v2031, 0.0
      %v2600 = vmax.f32 %v2034, 0.0
      %v2601 = vmax.f32 %v2039, 0.0
      %v2602 = vmax.f32 %v2042, 0.0
      %v2603 = vmax.f32 %v2047, 0.0
      %v2604 = vmax.f32 %v2050, 0.0
      %v2605 = vmax.f32 %v2055, 0.0
      %v2606 = vmax.f32 %v2058, 0.0
      %v2607 = vmax.f32 %v2063, 0.0
      %v2608 = vmax.f32 %v2066, 0.0
      %v2609 = vmax.f32 %v2071, 0.0
      %v2610 = vmax.f32 %v2074, 0.0
      %v2611 = vmax.f32 %v2079, 0.0
      %v2612 = vmax.f32 %v2082, 0.0
      %v2613 = vmax.f32 %v2087, 0.0
      %v2614 = vmax.f32 %v2090, 0.0
      %v2615 = vmax.f32 %v2095, 0.0
      %v2616 = vmax.f32 %v2098, 0.0
      %v2617 = vmax.f32 %v2103, 0.0
      %v2618 = vmax.f32 %v2106, 0.0
      %v2619 = vmax.f32 %v2111, 0.0
      %v2620 = vmax.f32 %v2114, 0.0
      %v2621 = vmax.f32 %v2119, 0.0
      %v2622 = vmax.f32 %v2122, 0.0
      %v2623 = vmax.f32 %v2127, 0.0
      %v2624 = vmax.f32 %v2130, 0.0
      %v2625 = vmax.f32 %v2135, 0.0
      %v2626 = vmax.f32 %v2138, 0.0
      %v2627 = vmax.f32 %v2143, 0.0
      %v2628 = vmax.f32 %v2146, 0.0
      %v2629 = vmax.f32 %v2151, 0.0
      %v2630 = vmax.f32 %v2154, 0.0
      %v2631 = vmax.f32 %v2159, 0.0
      %v2632 = vmax.f32 %v2162, 0.0
      %v2633 = vmax.f32 %v2167, 0.0
      %v2634 = vmax.f32 %v2170, 0.0
      %v2635 = vmax.f32 %v2175, 0.0
      %v2636 = vmax.f32 %v2178, 0.0
      %v2637 = vmax.f32 %v2183, 0.0
      %v2638 = vmax.f32 %v2186, 0.0
      %v2639 = vmax.f32 %v2191, 0.0
      %v2640 = vmax.f32 %v2194, 0.0
      %v2641 = vmax.f32 %v2199, 0.0
      %v2642 = vmax.f32 %v2202, 0.0
      %v2643 = vmax.f32 %v2207, 0.0
      %v2644 = vmax.f32 %v2210, 0.0
      %v2645 = vmax.f32 %v2215, 0.0
      %v2646 = vmax.f32 %v2218, 0.0
      %v2647 = vmax.f32 %v2223, 0.0
      %v2648 = vmax.f32 %v2226, 0.0
      %v2649 = vmax.f32 %v2231, 0.0
      %v2650 = vmax.f32 %v2234, 0.0
      %v2651 = vmax.f32 %v2239, 0.0
      %v2652 = vmax.f32 %v2242, 0.0
      %v2653 = vmax.f32 %v2247, 0.0
      %v2654 = vmax.f32 %v2250, 0.0
      %v2655 = vmax.f32 %v2255, 0.0
      %v2656 = vmax.f32 %v2258, 0.0
      %v2657 = vmax.f32 %v2263, 0.0
      %v2658 = vmax.f32 %v2266, 0.0
      %v2659 = vmax.f32 %v2271, 0.0
      %v2660 = vmax.f32 %v2274, 0.0
      %v2661 = vmax.f32 %v2279, 0.0
      %v2662 = vmax.f32 %v2282, 0.0
      %v2663 = vmax.f32 %v2287, 0.0
      %v2664 = vmax.f32 %v2290, 0.0
      %v2665 = vmax.f32 %v2295, 0.0
      %v2666 = vmax.f32 %v2298, 0.0
      %v2667 = vmax.f32 %v2303, 0.0
      %v2668 = vmax.f32 %v2306, 0.0
      %v2669 = vmax.f32 %v2311, 0.0
      %v2670 = vmax.f32 %v2314, 0.0
      %v2671 = vmax.f32 %v2319, 0.0
      %v2672 = vmax.f32 %v2322, 0.0
      %v2673 = vmax.f32 %v2327, 0.0
      %v2674 = vmax.f32 %v2330, 0.0
      %v2675 = vmax.f32 %v2335, 0.0
      %v2676 = vmax.f32 %v2338, 0.0
      %v2677 = vmax.f32 %v2343, 0.0
      %v2678 = vmax.f32 %v2346, 0.0
      %v2679 = vmax.f32 %v2351, 0.0
      %v2680 = vmax.f32 %v2354, 0.0
      %v2681 = vmax.f32 %v2359, 0.0
      %v2682 = vmax.f32 %v2362, 0.0
      %v2683 = vmax.f32 %v2367, 0.0
      %v2684 = vmax.f32 %v2370, 0.0
      %v2685 = vmax.f32 %v2375, 0.0
      %v2686 = vmax.f32 %v2378, 0.0
      %v2687 = vmax.f32 %v2383, 0.0
      %v2688 = vmax.f32 %v2386, 0.0
      %v2689 = vmax.f32 %v2391, 0.0
      %v2690 = vmax.f32 %v2394, 0.0
      %v2691 = vmax.f32 %v2399, 0.0
      %v2692 = vmax.f32 %v2402, 0.0
      %v2693 = vmax.f32 %v2407, 0.0
      %v2694 = vmax.f32 %v2410, 0.0
      %v2695 = vmax.f32 %v2415, 0.0
      %v2696 = vmax.f32 %v2418, 0.0
      %v2697 = vmax.f32 %v2423, 0.0
      %v2698 = vmax.f32 %v2426, 0.0
      %v2699 = vmax.f32 %v2431, 0.0
      %v2700 = vmax.f32 %v2434, 0.0
      %v2701 = vmax.f32 %v2439, 0.0
      %v2702 = vmax.f32 %v2442, 0.0
      %v2703 = vmax.f32 %v2447, 0.0
      %v2704 = vmax.f32 %v2450, 0.0
      %v2705 = vmax.f32 %v2455, 0.0
      %v2706 = vmax.f32 %v2458, 0.0
      %v2707 = vmax.f32 %v2463, 0.0
      %v2708 = vmax.f32 %v2466, 0.0
      %vm2709 = vcmask 261120
      %2710 = vst.msk [vmem:[#allocation2] sm:$0xff] %vm2709, %v2469
      %2711 = vst.msk [vmem:[#allocation2 + $0x8] sm:$0xff] %vm2709, %v2470
      %2712 = vst.msk [vmem:[#allocation2 + $0x10] sm:$0xff] %vm2709, %v2471
      %2713 = vst.msk [vmem:[#allocation2 + $0x18] sm:$0xff] %vm2709, %v2472
      %2714 = vst.msk [vmem:[#allocation2 + $0x20] sm:$0xff] %vm2709, %v2473
      %2715 = vst.msk [vmem:[#allocation2 + $0x28] sm:$0xff] %vm2709, %v2474
      %2716 = vst.msk [vmem:[#allocation2 + $0x30] sm:$0xff] %vm2709, %v2475
      %2717 = vst.msk [vmem:[#allocation2 + $0x38] sm:$0xff] %vm2709, %v2476
      %2718 = vst.msk [vmem:[#allocation2 + $0x40] sm:$0xff] %vm2709, %v2477
      %2719 = vst.msk [vmem:[#allocation2 + $0x48] sm:$0xff] %vm2709, %v2478
      %2720 = vst.msk [vmem:[#allocation2 + $0x50] sm:$0xff] %vm2709, %v2479
      %2721 = vst.msk [vmem:[#allocation2 + $0x58] sm:$0xff] %vm2709, %v2480
      %2722 = vst.msk [vmem:[#allocation2 + $0x60] sm:$0xff] %vm2709, %v2481
      %2723 = vst.msk [vmem:[#allocation2 + $0x68] sm:$0xff] %vm2709, %v2482
      %2724 = vst.msk [vmem:[#allocation2 + $0x70] sm:$0xff] %vm2709, %v2483
      %2725 = vst.msk [vmem:[#allocation2 + $0x78] sm:$0xff] %vm2709, %v2484
      %2726 = vst.msk [vmem:[#allocation2 + $0x80] sm:$0xff] %vm2709, %v2485
      %2727 = vst.msk [vmem:[#allocation2 + $0x88] sm:$0xff] %vm2709, %v2486
      %2728 = vst.msk [vmem:[#allocation2 + $0x90] sm:$0xff] %vm2709, %v2487
      %2729 = vst.msk [vmem:[#allocation2 + $0x98] sm:$0xff] %vm2709, %v2488
      %2730 = vst.msk [vmem:[#allocation2 + $0xa0] sm:$0xff] %vm2709, %v2489
      %2731 = vst.msk [vmem:[#allocation2 + $0xa8] sm:$0xff] %vm2709, %v2490
      %2732 = vst.msk [vmem:[#allocation2 + $0xb0] sm:$0xff] %vm2709, %v2491
      %2733 = vst.msk [vmem:[#allocation2 + $0xb8] sm:$0xff] %vm2709, %v2492
      %2734 = vst.msk [vmem:[#allocation2 + $0xc0] sm:$0xff] %vm2709, %v2493
      %2735 = vst.msk [vmem:[#allocation2 + $0xc8] sm:$0xff] %vm2709, %v2494
      %2736 = vst.msk [vmem:[#allocation2 + $0xd0] sm:$0xff] %vm2709, %v2495
      %2737 = vst.msk [vmem:[#allocation2 + $0xd8] sm:$0xff] %vm2709, %v2496
      %2738 = vst.msk [vmem:[#allocation2 + $0xe0] sm:$0xff] %vm2709, %v2497
      %2739 = vst.msk [vmem:[#allocation2 + $0xe8] sm:$0xff] %vm2709, %v2498
      %2740 = vst.msk [vmem:[#allocation2 + $0xf0] sm:$0xff] %vm2709, %v2499
      %2741 = vst.msk [vmem:[#allocation2 + $0xf8] sm:$0xff] %vm2709, %v2500
      %2742 = vst.msk [vmem:[#allocation2 + $0x100] sm:$0xff] %vm2709, %v2501
      %2743 = vst.msk [vmem:[#allocation2 + $0x108] sm:$0xff] %vm2709, %v2502
      %2744 = vst.msk [vmem:[#allocation2 + $0x110] sm:$0xff] %vm2709, %v2503
      %2745 = vst.msk [vmem:[#allocation2 + $0x118] sm:$0xff] %vm2709, %v2504
      %2746 = vst.msk [vmem:[#allocation2 + $0x120] sm:$0xff] %vm2709, %v2505
      %2747 = vst.msk [vmem:[#allocation2 + $0x128] sm:$0xff] %vm2709, %v2506
      %2748 = vst.msk [vmem:[#allocation2 + $0x130] sm:$0xff] %vm2709, %v2507
      %2749 = vst.msk [vmem:[#allocation2 + $0x138] sm:$0xff] %vm2709, %v2508
      %2750 = vst.msk [vmem:[#allocation2 + $0x140] sm:$0xff] %vm2709, %v2509
      %2751 = vst.msk [vmem:[#allocation2 + $0x148] sm:$0xff] %vm2709, %v2510
      %2752 = vst.msk [vmem:[#allocation2 + $0x150] sm:$0xff] %vm2709, %v2511
      %2753 = vst.msk [vmem:[#allocation2 + $0x158] sm:$0xff] %vm2709, %v2512
      %2754 = vst.msk [vmem:[#allocation2 + $0x160] sm:$0xff] %vm2709, %v2513
      %2755 = vst.msk [vmem:[#allocation2 + $0x168] sm:$0xff] %vm2709, %v2514
      %2756 = vst.msk [vmem:[#allocation2 + $0x170] sm:$0xff] %vm2709, %v2515
      %2757 = vst.msk [vmem:[#allocation2 + $0x178] sm:$0xff] %vm2709, %v2516
      %2758 = vst.msk [vmem:[#allocation2 + $0x180] sm:$0xff] %vm2709, %v2517
      %2759 = vst.msk [vmem:[#allocation2 + $0x188] sm:$0xff] %vm2709, %v2518
      %2760 = vst.msk [vmem:[#allocation2 + $0x190] sm:$0xff] %vm2709, %v2519
      %2761 = vst.msk [vmem:[#allocation2 + $0x198] sm:$0xff] %vm2709, %v2520
      %2762 = vst.msk [vmem:[#allocation2 + $0x1a0] sm:$0xff] %vm2709, %v2521
      %2763 = vst.msk [vmem:[#allocation2 + $0x1a8] sm:$0xff] %vm2709, %v2522
      %2764 = vst.msk [vmem:[#allocation2 + $0x1b0] sm:$0xff] %vm2709, %v2523
      %2765 = vst.msk [vmem:[#allocation2 + $0x1b8] sm:$0xff] %vm2709, %v2524
      %2766 = vst.msk [vmem:[#allocation2 + $0x1c0] sm:$0xff] %vm2709, %v2525
      %2767 = vst.msk [vmem:[#allocation2 + $0x1c8] sm:$0xff] %vm2709, %v2526
      %2768 = vst.msk [vmem:[#allocation2 + $0x1d0] sm:$0xff] %vm2709, %v2527
      %2769 = vst.msk [vmem:[#allocation2 + $0x1d8] sm:$0xff] %vm2709, %v2528
      %2770 = vst.msk [vmem:[#allocation2 + $0x1e0] sm:$0xff] %vm2709, %v2529
      %2771 = vst.msk [vmem:[#allocation2 + $0x1e8] sm:$0xff] %vm2709, %v2530
      %2772 = vst.msk [vmem:[#allocation2 + $0x1f0] sm:$0xff] %vm2709, %v2531
      %2773 = vst.msk [vmem:[#allocation2 + $0x1f8] sm:$0xff] %vm2709, %v2532
      %2774 = vst.msk [vmem:[#allocation2 + $0x200] sm:$0xff] %vm2709, %v2533
      %2775 = vst.msk [vmem:[#allocation2 + $0x208] sm:$0xff] %vm2709, %v2534
      %2776 = vst.msk [vmem:[#allocation2 + $0x210] sm:$0xff] %vm2709, %v2535
      %2777 = vst.msk [vmem:[#allocation2 + $0x218] sm:$0xff] %vm2709, %v2536
      %2778 = vst.msk [vmem:[#allocation2 + $0x220] sm:$0xff] %vm2709, %v2537
      %2779 = vst.msk [vmem:[#allocation2 + $0x228] sm:$0xff] %vm2709, %v2538
      %2780 = vst.msk [vmem:[#allocation2 + $0x230] sm:$0xff] %vm2709, %v2539
      %2781 = vst.msk [vmem:[#allocation2 + $0x238] sm:$0xff] %vm2709, %v2540
      %2782 = vst.msk [vmem:[#allocation2 + $0x240] sm:$0xff] %vm2709, %v2541
      %2783 = vst.msk [vmem:[#allocation2 + $0x248] sm:$0xff] %vm2709, %v2542
      %2784 = vst.msk [vmem:[#allocation2 + $0x250] sm:$0xff] %vm2709, %v2543
      %2785 = vst.msk [vmem:[#allocation2 + $0x258] sm:$0xff] %vm2709, %v2544
      %2786 = vst.msk [vmem:[#allocation2 + $0x260] sm:$0xff] %vm2709, %v2545
      %2787 = vst.msk [vmem:[#allocation2 + $0x268] sm:$0xff] %vm2709, %v2546
      %2788 = vst.msk [vmem:[#allocation2 + $0x270] sm:$0xff] %vm2709, %v2547
      %2789 = vst.msk [vmem:[#allocation2 + $0x278] sm:$0xff] %vm2709, %v2548
      %2790 = vst.msk [vmem:[#allocation2 + $0x280] sm:$0xff] %vm2709, %v2549
      %2791 = vst.msk [vmem:[#allocation2 + $0x288] sm:$0xff] %vm2709, %v2550
      %2792 = vst.msk [vmem:[#allocation2 + $0x290] sm:$0xff] %vm2709, %v2551
      %2793 = vst.msk [vmem:[#allocation2 + $0x298] sm:$0xff] %vm2709, %v2552
      %2794 = vst.msk [vmem:[#allocation2 + $0x2a0] sm:$0xff] %vm2709, %v2553
      %2795 = vst.msk [vmem:[#allocation2 + $0x2a8] sm:$0xff] %vm2709, %v2554
      %2796 = vst.msk [vmem:[#allocation2 + $0x2b0] sm:$0xff] %vm2709, %v2555
      %2797 = vst.msk [vmem:[#allocation2 + $0x2b8] sm:$0xff] %vm2709, %v2556
      %2798 = vst.msk [vmem:[#allocation2 + $0x2c0] sm:$0xff] %vm2709, %v2557
      %2799 = vst.msk [vmem:[#allocation2 + $0x2c8] sm:$0xff] %vm2709, %v2558
      %2800 = vst.msk [vmem:[#allocation2 + $0x2d0] sm:$0xff] %vm2709, %v2559
      %2801 = vst.msk [vmem:[#allocation2 + $0x2d8] sm:$0xff] %vm2709, %v2560
      %2802 = vst.msk [vmem:[#allocation2 + $0x2e0] sm:$0xff] %vm2709, %v2561
      %2803 = vst.msk [vmem:[#allocation2 + $0x2e8] sm:$0xff] %vm2709, %v2562
      %2804 = vst.msk [vmem:[#allocation2 + $0x2f0] sm:$0xff] %vm2709, %v2563
      %2805 = vst.msk [vmem:[#allocation2 + $0x2f8] sm:$0xff] %vm2709, %v2564
      %2806 = vst.msk [vmem:[#allocation2 + $0x300] sm:$0xff] %vm2709, %v2565
      %2807 = vst.msk [vmem:[#allocation2 + $0x308] sm:$0xff] %vm2709, %v2566
      %2808 = vst.msk [vmem:[#allocation2 + $0x310] sm:$0xff] %vm2709, %v2567
      %2809 = vst.msk [vmem:[#allocation2 + $0x318] sm:$0xff] %vm2709, %v2568
      %2810 = vst.msk [vmem:[#allocation2 + $0x320] sm:$0xff] %vm2709, %v2569
      %2811 = vst.msk [vmem:[#allocation2 + $0x328] sm:$0xff] %vm2709, %v2570
      %2812 = vst.msk [vmem:[#allocation2 + $0x330] sm:$0xff] %vm2709, %v2571
      %2813 = vst.msk [vmem:[#allocation2 + $0x338] sm:$0xff] %vm2709, %v2572
      %2814 = vst.msk [vmem:[#allocation2 + $0x340] sm:$0xff] %vm2709, %v2573
      %2815 = vst.msk [vmem:[#allocation2 + $0x348] sm:$0xff] %vm2709, %v2574
      %2816 = vst.msk [vmem:[#allocation2 + $0x350] sm:$0xff] %vm2709, %v2575
      %2817 = vst.msk [vmem:[#allocation2 + $0x358] sm:$0xff] %vm2709, %v2576
      %2818 = vst.msk [vmem:[#allocation2 + $0x360] sm:$0xff] %vm2709, %v2577
      %2819 = vst.msk [vmem:[#allocation2 + $0x368] sm:$0xff] %vm2709, %v2578
      %2820 = vst.msk [vmem:[#allocation2 + $0x370] sm:$0xff] %vm2709, %v2579
      %2821 = vst.msk [vmem:[#allocation2 + $0x378] sm:$0xff] %vm2709, %v2580
      %2822 = vst.msk [vmem:[#allocation2 + $0x380] sm:$0xff] %vm2709, %v2581
      %2823 = vst.msk [vmem:[#allocation2 + $0x388] sm:$0xff] %vm2709, %v2582
      %2824 = vst.msk [vmem:[#allocation2 + $0x390] sm:$0xff] %vm2709, %v2583
      %2825 = vst.msk [vmem:[#allocation2 + $0x398] sm:$0xff] %vm2709, %v2584
      %2826 = vst.msk [vmem:[#allocation2 + $0x3a0] sm:$0xff] %vm2709, %v2585
      %2827 = vst.msk [vmem:[#allocation2 + $0x3a8] sm:$0xff] %vm2709, %v2586
      %2828 = vst.msk [vmem:[#allocation2 + $0x3b0] sm:$0xff] %vm2709, %v2587
      %2829 = vst.msk [vmem:[#allocation2 + $0x3b8] sm:$0xff] %vm2709, %v2588
      %2830 = vst.msk [vmem:[#allocation2 + $0x3c0] sm:$0xff] %vm2709, %v2589
      %2831 = vst.msk [vmem:[#allocation2 + $0x3c8] sm:$0xff] %vm2709, %v2590
      %2832 = vst.msk [vmem:[#allocation2 + $0x3d0] sm:$0xff] %vm2709, %v2591
      %2833 = vst.msk [vmem:[#allocation2 + $0x3d8] sm:$0xff] %vm2709, %v2592
      %2834 = vst.msk [vmem:[#allocation2 + $0x3e0] sm:$0xff] %vm2709, %v2593
      %2835 = vst.msk [vmem:[#allocation2 + $0x3e8] sm:$0xff] %vm2709, %v2594
      %2836 = vst.msk [vmem:[#allocation2 + $0x3f0] sm:$0xff] %vm2709, %v2595
      %2837 = vst.msk [vmem:[#allocation2 + $0x3f8] sm:$0xff] %vm2709, %v2596
      %2838 = vst.msk [vmem:[#allocation2 + $0x400] sm:$0xff] %vm2709, %v2597
      %2839 = vst.msk [vmem:[#allocation2 + $0x408] sm:$0xff] %vm2709, %v2598
      %2840 = vst.msk [vmem:[#allocation2 + $0x410] sm:$0xff] %vm2709, %v2599
      %2841 = vst.msk [vmem:[#allocation2 + $0x418] sm:$0xff] %vm2709, %v2600
      %2842 = vst.msk [vmem:[#allocation2 + $0x420] sm:$0xff] %vm2709, %v2601
      %2843 = vst.msk [vmem:[#allocation2 + $0x428] sm:$0xff] %vm2709, %v2602
      %2844 = vst.msk [vmem:[#allocation2 + $0x430] sm:$0xff] %vm2709, %v2603
      %2845 = vst.msk [vmem:[#allocation2 + $0x438] sm:$0xff] %vm2709, %v2604
      %2846 = vst.msk [vmem:[#allocation2 + $0x440] sm:$0xff] %vm2709, %v2605
      %2847 = vst.msk [vmem:[#allocation2 + $0x448] sm:$0xff] %vm2709, %v2606
      %2848 = vst.msk [vmem:[#allocation2 + $0x450] sm:$0xff] %vm2709, %v2607
      %2849 = vst.msk [vmem:[#allocation2 + $0x458] sm:$0xff] %vm2709, %v2608
      %2850 = vst.msk [vmem:[#allocation2 + $0x460] sm:$0xff] %vm2709, %v2609
      %2851 = vst.msk [vmem:[#allocation2 + $0x468] sm:$0xff] %vm2709, %v2610
      %2852 = vst.msk [vmem:[#allocation2 + $0x470] sm:$0xff] %vm2709, %v2611
      %2853 = vst.msk [vmem:[#allocation2 + $0x478] sm:$0xff] %vm2709, %v2612
      %2854 = vst.msk [vmem:[#allocation2 + $0x480] sm:$0xff] %vm2709, %v2613
      %2855 = vst.msk [vmem:[#allocation2 + $0x488] sm:$0xff] %vm2709, %v2614
      %2856 = vst.msk [vmem:[#allocation2 + $0x490] sm:$0xff] %vm2709, %v2615
      %2857 = vst.msk [vmem:[#allocation2 + $0x498] sm:$0xff] %vm2709, %v2616
      %2858 = vst.msk [vmem:[#allocation2 + $0x4a0] sm:$0xff] %vm2709, %v2617
      %2859 = vst.msk [vmem:[#allocation2 + $0x4a8] sm:$0xff] %vm2709, %v2618
      %2860 = vst.msk [vmem:[#allocation2 + $0x4b0] sm:$0xff] %vm2709, %v2619
      %2861 = vst.msk [vmem:[#allocation2 + $0x4b8] sm:$0xff] %vm2709, %v2620
      %2862 = vst.msk [vmem:[#allocation2 + $0x4c0] sm:$0xff] %vm2709, %v2621
      %2863 = vst.msk [vmem:[#allocation2 + $0x4c8] sm:$0xff] %vm2709, %v2622
      %2864 = vst.msk [vmem:[#allocation2 + $0x4d0] sm:$0xff] %vm2709, %v2623
      %2865 = vst.msk [vmem:[#allocation2 + $0x4d8] sm:$0xff] %vm2709, %v2624
      %2866 = vst.msk [vmem:[#allocation2 + $0x4e0] sm:$0xff] %vm2709, %v2625
      %2867 = vst.msk [vmem:[#allocation2 + $0x4e8] sm:$0xff] %vm2709, %v2626
      %2868 = vst.msk [vmem:[#allocation2 + $0x4f0] sm:$0xff] %vm2709, %v2627
      %2869 = vst.msk [vmem:[#allocation2 + $0x4f8] sm:$0xff] %vm2709, %v2628
      %2870 = vst.msk [vmem:[#allocation2 + $0x500] sm:$0xff] %vm2709, %v2629
      %2871 = vst.msk [vmem:[#allocation2 + $0x508] sm:$0xff] %vm2709, %v2630
      %2872 = vst.msk [vmem:[#allocation2 + $0x510] sm:$0xff] %vm2709, %v2631
      %2873 = vst.msk [vmem:[#allocation2 + $0x518] sm:$0xff] %vm2709, %v2632
      %2874 = vst.msk [vmem:[#allocation2 + $0x520] sm:$0xff] %vm2709, %v2633
      %2875 = vst.msk [vmem:[#allocation2 + $0x528] sm:$0xff] %vm2709, %v2634
      %2876 = vst.msk [vmem:[#allocation2 + $0x530] sm:$0xff] %vm2709, %v2635
      %2877 = vst.msk [vmem:[#allocation2 + $0x538] sm:$0xff] %vm2709, %v2636
      %2878 = vst.msk [vmem:[#allocation2 + $0x540] sm:$0xff] %vm2709, %v2637
      %2879 = vst.msk [vmem:[#allocation2 + $0x548] sm:$0xff] %vm2709, %v2638
      %2880 = vst.msk [vmem:[#allocation2 + $0x550] sm:$0xff] %vm2709, %v2639
      %2881 = vst.msk [vmem:[#allocation2 + $0x558] sm:$0xff] %vm2709, %v2640
      %2882 = vst.msk [vmem:[#allocation2 + $0x560] sm:$0xff] %vm2709, %v2641
      %2883 = vst.msk [vmem:[#allocation2 + $0x568] sm:$0xff] %vm2709, %v2642
      %2884 = vst.msk [vmem:[#allocation2 + $0x570] sm:$0xff] %vm2709, %v2643
      %2885 = vst.msk [vmem:[#allocation2 + $0x578] sm:$0xff] %vm2709, %v2644
      %2886 = vst.msk [vmem:[#allocation2 + $0x580] sm:$0xff] %vm2709, %v2645
      %2887 = vst.msk [vmem:[#allocation2 + $0x588] sm:$0xff] %vm2709, %v2646
      %2888 = vst.msk [vmem:[#allocation2 + $0x590] sm:$0xff] %vm2709, %v2647
      %2889 = vst.msk [vmem:[#allocation2 + $0x598] sm:$0xff] %vm2709, %v2648
      %2890 = vst.msk [vmem:[#allocation2 + $0x5a0] sm:$0xff] %vm2709, %v2649
      %2891 = vst.msk [vmem:[#allocation2 + $0x5a8] sm:$0xff] %vm2709, %v2650
      %2892 = vst.msk [vmem:[#allocation2 + $0x5b0] sm:$0xff] %vm2709, %v2651
      %2893 = vst.msk [vmem:[#allocation2 + $0x5b8] sm:$0xff] %vm2709, %v2652
      %2894 = vst.msk [vmem:[#allocation2 + $0x5c0] sm:$0xff] %vm2709, %v2653
      %2895 = vst.msk [vmem:[#allocation2 + $0x5c8] sm:$0xff] %vm2709, %v2654
      %2896 = vst.msk [vmem:[#allocation2 + $0x5d0] sm:$0xff] %vm2709, %v2655
      %2897 = vst.msk [vmem:[#allocation2 + $0x5d8] sm:$0xff] %vm2709, %v2656
      %2898 = vst.msk [vmem:[#allocation2 + $0x5e0] sm:$0xff] %vm2709, %v2657
      %2899 = vst.msk [vmem:[#allocation2 + $0x5e8] sm:$0xff] %vm2709, %v2658
      %2900 = vst.msk [vmem:[#allocation2 + $0x5f0] sm:$0xff] %vm2709, %v2659
      %2901 = vst.msk [vmem:[#allocation2 + $0x5f8] sm:$0xff] %vm2709, %v2660
      %2902 = vst.msk [vmem:[#allocation2 + $0x600] sm:$0xff] %vm2709, %v2661
      %2903 = vst.msk [vmem:[#allocation2 + $0x608] sm:$0xff] %vm2709, %v2662
      %2904 = vst.msk [vmem:[#allocation2 + $0x610] sm:$0xff] %vm2709, %v2663
      %2905 = vst.msk [vmem:[#allocation2 + $0x618] sm:$0xff] %vm2709, %v2664
      %2906 = vst.msk [vmem:[#allocation2 + $0x620] sm:$0xff] %vm2709, %v2665
      %2907 = vst.msk [vmem:[#allocation2 + $0x628] sm:$0xff] %vm2709, %v2666
      %2908 = vst.msk [vmem:[#allocation2 + $0x630] sm:$0xff] %vm2709, %v2667
      %2909 = vst.msk [vmem:[#allocation2 + $0x638] sm:$0xff] %vm2709, %v2668
      %2910 = vst.msk [vmem:[#allocation2 + $0x640] sm:$0xff] %vm2709, %v2669
      %2911 = vst.msk [vmem:[#allocation2 + $0x648] sm:$0xff] %vm2709, %v2670
      %2912 = vst.msk [vmem:[#allocation2 + $0x650] sm:$0xff] %vm2709, %v2671
      %2913 = vst.msk [vmem:[#allocation2 + $0x658] sm:$0xff] %vm2709, %v2672
      %2914 = vst.msk [vmem:[#allocation2 + $0x660] sm:$0xff] %vm2709, %v2673
      %2915 = vst.msk [vmem:[#allocation2 + $0x668] sm:$0xff] %vm2709, %v2674
      %2916 = vst.msk [vmem:[#allocation2 + $0x670] sm:$0xff] %vm2709, %v2675
      %2917 = vst.msk [vmem:[#allocation2 + $0x678] sm:$0xff] %vm2709, %v2676
      %2918 = vst.msk [vmem:[#allocation2 + $0x680] sm:$0xff] %vm2709, %v2677
      %2919 = vst.msk [vmem:[#allocation2 + $0x688] sm:$0xff] %vm2709, %v2678
      %2920 = vst.msk [vmem:[#allocation2 + $0x690] sm:$0xff] %vm2709, %v2679
      %2921 = vst.msk [vmem:[#allocation2 + $0x698] sm:$0xff] %vm2709, %v2680
      %2922 = vst.msk [vmem:[#allocation2 + $0x6a0] sm:$0xff] %vm2709, %v2681
      %2923 = vst.msk [vmem:[#allocation2 + $0x6a8] sm:$0xff] %vm2709, %v2682
      %2924 = vst.msk [vmem:[#allocation2 + $0x6b0] sm:$0xff] %vm2709, %v2683
      %2925 = vst.msk [vmem:[#allocation2 + $0x6b8] sm:$0xff] %vm2709, %v2684
      %2926 = vst.msk [vmem:[#allocation2 + $0x6c0] sm:$0xff] %vm2709, %v2685
      %2927 = vst.msk [vmem:[#allocation2 + $0x6c8] sm:$0xff] %vm2709, %v2686
      %2928 = vst.msk [vmem:[#allocation2 + $0x6d0] sm:$0xff] %vm2709, %v2687
      %2929 = vst.msk [vmem:[#allocation2 + $0x6d8] sm:$0xff] %vm2709, %v2688
      %2930 = vst.msk [vmem:[#allocation2 + $0x6e0] sm:$0xff] %vm2709, %v2689
      %2931 = vst.msk [vmem:[#allocation2 + $0x6e8] sm:$0xff] %vm2709, %v2690
      %2932 = vst.msk [vmem:[#allocation2 + $0x6f0] sm:$0xff] %vm2709, %v2691
      %2933 = vst.msk [vmem:[#allocation2 + $0x6f8] sm:$0xff] %vm2709, %v2692
      %2934 = vst.msk [vmem:[#allocation2 + $0x700] sm:$0xff] %vm2709, %v2693
      %2935 = vst.msk [vmem:[#allocation2 + $0x708] sm:$0xff] %vm2709, %v2694
      %2936 = vst.msk [vmem:[#allocation2 + $0x710] sm:$0xff] %vm2709, %v2695
      %2937 = vst.msk [vmem:[#allocation2 + $0x718] sm:$0xff] %vm2709, %v2696
      %2938 = vst.msk [vmem:[#allocation2 + $0x720] sm:$0xff] %vm2709, %v2697
      %2939 = vst.msk [vmem:[#allocation2 + $0x728] sm:$0xff] %vm2709, %v2698
      %2940 = vst.msk [vmem:[#allocation2 + $0x730] sm:$0xff] %vm2709, %v2699
      %2941 = vst.msk [vmem:[#allocation2 + $0x738] sm:$0xff] %vm2709, %v2700
      %2942 = vst.msk [vmem:[#allocation2 + $0x740] sm:$0xff] %vm2709, %v2701
      %2943 = vst.msk [vmem:[#allocation2 + $0x748] sm:$0xff] %vm2709, %v2702
      %2944 = vst.msk [vmem:[#allocation2 + $0x750] sm:$0xff] %vm2709, %v2703
      %2945 = vst.msk [vmem:[#allocation2 + $0x758] sm:$0xff] %vm2709, %v2704
      %2946 = vst.msk [vmem:[#allocation2 + $0x760] sm:$0xff] %vm2709, %v2705
      %2947 = vst.msk [vmem:[#allocation2 + $0x768] sm:$0xff] %vm2709, %v2706
      %2948 = vst.msk [vmem:[#allocation2 + $0x770] sm:$0xff] %vm2709, %v2707
      %2949 = vst.msk [vmem:[#allocation2 + $0x778] sm:$0xff] %vm2709, %v2708
      %v2950 = vld [vmem:[#allocation2] sm:$0xff]
      %v2951 = vld [vmem:[#allocation2 + $0x8] sm:$0xff]
      %v2952 = vld [vmem:[#allocation2 + $0x10] sm:$0xff]
      %v2953 = vld [vmem:[#allocation2 + $0x18] sm:$0xff]
      %v2954 = vld [vmem:[#allocation2 + $0x20] sm:$0xff]
      %v2955 = vld [vmem:[#allocation2 + $0x28] sm:$0xff]
      %v2956 = vld [vmem:[#allocation2 + $0x30] sm:$0xff]
      %v2957 = vld [vmem:[#allocation2 + $0x38] sm:$0xff]
      %v2958 = vld [vmem:[#allocation2 + $0x40] sm:$0xff]
      %v2959 = vld [vmem:[#allocation2 + $0x48] sm:$0xff]
      %v2960 = vld [vmem:[#allocation2 + $0x50] sm:$0xff]
      %v2961 = vld [vmem:[#allocation2 + $0x58] sm:$0xff]
      %v2962 = vld [vmem:[#allocation2 + $0x60] sm:$0xff]
      %v2963 = vld [vmem:[#allocation2 + $0x68] sm:$0xff]
      %v2964 = vld [vmem:[#allocation2 + $0x70] sm:$0xff]
      %v2965 = vld [vmem:[#allocation2 + $0x78] sm:$0xff]
      %v2966 = vld [vmem:[#allocation2 + $0x80] sm:$0xff]
      %v2967 = vld [vmem:[#allocation2 + $0x88] sm:$0xff]
      %v2968 = vld [vmem:[#allocation2 + $0x90] sm:$0xff]
      %v2969 = vld [vmem:[#allocation2 + $0x98] sm:$0xff]
      %v2970 = vld [vmem:[#allocation2 + $0xa0] sm:$0xff]
      %v2971 = vld [vmem:[#allocation2 + $0xa8] sm:$0xff]
      %v2972 = vld [vmem:[#allocation2 + $0xb0] sm:$0xff]
      %v2973 = vld [vmem:[#allocation2 + $0xb8] sm:$0xff]
      %v2974 = vld [vmem:[#allocation2 + $0xc0] sm:$0xff]
      %v2975 = vld [vmem:[#allocation2 + $0xc8] sm:$0xff]
      %v2976 = vld [vmem:[#allocation2 + $0xd0] sm:$0xff]
      %v2977 = vld [vmem:[#allocation2 + $0xd8] sm:$0xff]
      %v2978 = vld [vmem:[#allocation2 + $0xe0] sm:$0xff]
      %v2979 = vld [vmem:[#allocation2 + $0xe8] sm:$0xff]
      %v2980 = vld [vmem:[#allocation2 + $0xf0] sm:$0xff]
      %v2981 = vld [vmem:[#allocation2 + $0xf8] sm:$0xff]
      %v2982 = vld [vmem:[#allocation2 + $0x100] sm:$0xff]
      %v2983 = vld [vmem:[#allocation2 + $0x108] sm:$0xff]
      %v2984 = vld [vmem:[#allocation2 + $0x110] sm:$0xff]
      %v2985 = vld [vmem:[#allocation2 + $0x118] sm:$0xff]
      %v2986 = vld [vmem:[#allocation2 + $0x120] sm:$0xff]
      %v2987 = vld [vmem:[#allocation2 + $0x128] sm:$0xff]
      %v2988 = vld [vmem:[#allocation2 + $0x130] sm:$0xff]
      %v2989 = vld [vmem:[#allocation2 + $0x138] sm:$0xff]
      %v2990 = vld [vmem:[#allocation2 + $0x140] sm:$0xff]
      %v2991 = vld [vmem:[#allocation2 + $0x148] sm:$0xff]
      %v2992 = vld [vmem:[#allocation2 + $0x150] sm:$0xff]
      %v2993 = vld [vmem:[#allocation2 + $0x158] sm:$0xff]
      %v2994 = vld [vmem:[#allocation2 + $0x160] sm:$0xff]
      %v2995 = vld [vmem:[#allocation2 + $0x168] sm:$0xff]
      %v2996 = vld [vmem:[#allocation2 + $0x170] sm:$0xff]
      %v2997 = vld [vmem:[#allocation2 + $0x178] sm:$0xff]
      %v2998 = vld [vmem:[#allocation2 + $0x180] sm:$0xff]
      %v2999 = vld [vmem:[#allocation2 + $0x188] sm:$0xff]
      %v3000 = vld [vmem:[#allocation2 + $0x190] sm:$0xff]
      %v3001 = vld [vmem:[#allocation2 + $0x198] sm:$0xff]
      %v3002 = vld [vmem:[#allocation2 + $0x1a0] sm:$0xff]
      %v3003 = vld [vmem:[#allocation2 + $0x1a8] sm:$0xff]
      %v3004 = vld [vmem:[#allocation2 + $0x3c0] sm:$0xff]
      %v3005 = vld [vmem:[#allocation2 + $0x3c8] sm:$0xff]
      %v3006 = vld [vmem:[#allocation2 + $0x3d0] sm:$0xff]
      %v3007 = vld [vmem:[#allocation2 + $0x3d8] sm:$0xff]
      %v3008 = vld [vmem:[#allocation2 + $0x3e0] sm:$0xff]
      %v3009 = vld [vmem:[#allocation2 + $0x3e8] sm:$0xff]
      %v3010 = vld [vmem:[#allocation2 + $0x3f0] sm:$0xff]
      %v3011 = vld [vmem:[#allocation2 + $0x3f8] sm:$0xff]
      %v3012 = vld [vmem:[#allocation2 + $0x400] sm:$0xff]
      %v3013 = vld [vmem:[#allocation2 + $0x408] sm:$0xff]
      %v3014 = vld [vmem:[#allocation2 + $0x410] sm:$0xff]
      %v3015 = vld [vmem:[#allocation2 + $0x418] sm:$0xff]
      %v3016 = vld [vmem:[#allocation2 + $0x420] sm:$0xff]
      %v3017 = vld [vmem:[#allocation2 + $0x428] sm:$0xff]
      %v3018 = vld [vmem:[#allocation2 + $0x430] sm:$0xff]
      %v3019 = vld [vmem:[#allocation2 + $0x438] sm:$0xff]
      %v3020 = vld [vmem:[#allocation2 + $0x440] sm:$0xff]
      %v3021 = vld [vmem:[#allocation2 + $0x448] sm:$0xff]
      %v3022 = vld [vmem:[#allocation2 + $0x450] sm:$0xff]
      %v3023 = vld [vmem:[#allocation2 + $0x458] sm:$0xff]
      %v3024 = vld [vmem:[#allocation2 + $0x460] sm:$0xff]
      %v3025 = vld [vmem:[#allocation2 + $0x468] sm:$0xff]
      %v3026 = vld [vmem:[#allocation2 + $0x470] sm:$0xff]
      %v3027 = vld [vmem:[#allocation2 + $0x478] sm:$0xff]
      %v3028 = vld [vmem:[#allocation2 + $0x480] sm:$0xff]
      %v3029 = vld [vmem:[#allocation2 + $0x488] sm:$0xff]
      %v3030 = vld [vmem:[#allocation2 + $0x490] sm:$0xff]
      %v3031 = vld [vmem:[#allocation2 + $0x498] sm:$0xff]
      %v3032 = vld [vmem:[#allocation2 + $0x4a0] sm:$0xff]
      %v3033 = vld [vmem:[#allocation2 + $0x4a8] sm:$0xff]
      %v3034 = vld [vmem:[#allocation2 + $0x4b0] sm:$0xff]
      %v3035 = vld [vmem:[#allocation2 + $0x4b8] sm:$0xff]
      %v3036 = vld [vmem:[#allocation2 + $0x4c0] sm:$0xff]
      %v3037 = vld [vmem:[#allocation2 + $0x4c8] sm:$0xff]
      %v3038 = vld [vmem:[#allocation2 + $0x4d0] sm:$0xff]
      %v3039 = vld [vmem:[#allocation2 + $0x4d8] sm:$0xff]
      %v3040 = vld [vmem:[#allocation2 + $0x4e0] sm:$0xff]
      %v3041 = vld [vmem:[#allocation2 + $0x4e8] sm:$0xff]
      %v3042 = vld [vmem:[#allocation2 + $0x4f0] sm:$0xff]
      %v3043 = vld [vmem:[#allocation2 + $0x4f8] sm:$0xff]
      %v3044 = vld [vmem:[#allocation2 + $0x500] sm:$0xff]
      %v3045 = vld [vmem:[#allocation2 + $0x508] sm:$0xff]
      %v3046 = vld [vmem:[#allocation2 + $0x510] sm:$0xff]
      %v3047 = vld [vmem:[#allocation2 + $0x518] sm:$0xff]
      %v3048 = vld [vmem:[#allocation2 + $0x520] sm:$0xff]
      %v3049 = vld [vmem:[#allocation2 + $0x528] sm:$0xff]
      %v3050 = vld [vmem:[#allocation2 + $0x530] sm:$0xff]
      %v3051 = vld [vmem:[#allocation2 + $0x538] sm:$0xff]
      %v3052 = vld [vmem:[#allocation2 + $0x540] sm:$0xff]
      %v3053 = vld [vmem:[#allocation2 + $0x548] sm:$0xff]
      %v3054 = vld [vmem:[#allocation2 + $0x550] sm:$0xff]
      %v3055 = vld [vmem:[#allocation2 + $0x558] sm:$0xff]
      %v3056 = vld [vmem:[#allocation2 + $0x560] sm:$0xff]
      %v3057 = vld [vmem:[#allocation2 + $0x568] sm:$0xff]
      %v3058 = vld [vmem:[#allocation2 + $0x1e0] sm:$0xff]
      %v3059 = vld [vmem:[#allocation2 + $0x1e8] sm:$0xff]
      %v3060 = vld [vmem:[#allocation2 + $0x1f0] sm:$0xff]
      %v3061 = vld [vmem:[#allocation2 + $0x1f8] sm:$0xff]
      %v3062 = vld [vmem:[#allocation2 + $0x200] sm:$0xff]
      %v3063 = vld [vmem:[#allocation2 + $0x208] sm:$0xff]
      %v3064 = vld [vmem:[#allocation2 + $0x210] sm:$0xff]
      %v3065 = vld [vmem:[#allocation2 + $0x218] sm:$0xff]
      %v3066 = vld [vmem:[#allocation2 + $0x220] sm:$0xff]
      %v3067 = vld [vmem:[#allocation2 + $0x228] sm:$0xff]
      %v3068 = vld [vmem:[#allocation2 + $0x230] sm:$0xff]
      %v3069 = vld [vmem:[#allocation2 + $0x238] sm:$0xff]
      %v3070 = vld [vmem:[#allocation2 + $0x240] sm:$0xff]
      %v3071 = vld [vmem:[#allocation2 + $0x248] sm:$0xff]
      %v3072 = vld [vmem:[#allocation2 + $0x250] sm:$0xff]
      %v3073 = vld [vmem:[#allocation2 + $0x258] sm:$0xff]
      %v3074 = vld [vmem:[#allocation2 + $0x260] sm:$0xff]
      %v3075 = vld [vmem:[#allocation2 + $0x268] sm:$0xff]
      %v3076 = vld [vmem:[#allocation2 + $0x270] sm:$0xff]
      %v3077 = vld [vmem:[#allocation2 + $0x278] sm:$0xff]
      %v3078 = vld [vmem:[#allocation2 + $0x280] sm:$0xff]
      %v3079 = vld [vmem:[#allocation2 + $0x288] sm:$0xff]
      %v3080 = vld [vmem:[#allocation2 + $0x290] sm:$0xff]
      %v3081 = vld [vmem:[#allocation2 + $0x298] sm:$0xff]
      %v3082 = vld [vmem:[#allocation2 + $0x2a0] sm:$0xff]
      %v3083 = vld [vmem:[#allocation2 + $0x2a8] sm:$0xff]
      %v3084 = vld [vmem:[#allocation2 + $0x2b0] sm:$0xff]
      %v3085 = vld [vmem:[#allocation2 + $0x2b8] sm:$0xff]
      %v3086 = vld [vmem:[#allocation2 + $0x2c0] sm:$0xff]
      %v3087 = vld [vmem:[#allocation2 + $0x2c8] sm:$0xff]
      %v3088 = vld [vmem:[#allocation2 + $0x2d0] sm:$0xff]
      %v3089 = vld [vmem:[#allocation2 + $0x2d8] sm:$0xff]
      %v3090 = vld [vmem:[#allocation2 + $0x2e0] sm:$0xff]
      %v3091 = vld [vmem:[#allocation2 + $0x2e8] sm:$0xff]
      %v3092 = vld [vmem:[#allocation2 + $0x2f0] sm:$0xff]
      %v3093 = vld [vmem:[#allocation2 + $0x2f8] sm:$0xff]
      %v3094 = vld [vmem:[#allocation2 + $0x300] sm:$0xff]
      %v3095 = vld [vmem:[#allocation2 + $0x308] sm:$0xff]
      %v3096 = vld [vmem:[#allocation2 + $0x310] sm:$0xff]
      %v3097 = vld [vmem:[#allocation2 + $0x318] sm:$0xff]
      %v3098 = vld [vmem:[#allocation2 + $0x320] sm:$0xff]
      %v3099 = vld [vmem:[#allocation2 + $0x328] sm:$0xff]
      %v3100 = vld [vmem:[#allocation2 + $0x330] sm:$0xff]
      %v3101 = vld [vmem:[#allocation2 + $0x338] sm:$0xff]
      %v3102 = vld [vmem:[#allocation2 + $0x340] sm:$0xff]
      %v3103 = vld [vmem:[#allocation2 + $0x348] sm:$0xff]
      %v3104 = vld [vmem:[#allocation2 + $0x350] sm:$0xff]
      %v3105 = vld [vmem:[#allocation2 + $0x358] sm:$0xff]
      %v3106 = vld [vmem:[#allocation2 + $0x360] sm:$0xff]
      %v3107 = vld [vmem:[#allocation2 + $0x368] sm:$0xff]
      %v3108 = vld [vmem:[#allocation2 + $0x370] sm:$0xff]
      %v3109 = vld [vmem:[#allocation2 + $0x378] sm:$0xff]
      %v3110 = vld [vmem:[#allocation2 + $0x380] sm:$0xff]
      %v3111 = vld [vmem:[#allocation2 + $0x388] sm:$0xff]
      %v3112 = vld [vmem:[#allocation2 + $0x5a0] sm:$0xff]
      %v3113 = vld [vmem:[#allocation2 + $0x5a8] sm:$0xff]
      %v3114 = vld [vmem:[#allocation2 + $0x5b0] sm:$0xff]
      %v3115 = vld [vmem:[#allocation2 + $0x5b8] sm:$0xff]
      %v3116 = vld [vmem:[#allocation2 + $0x5c0] sm:$0xff]
      %v3117 = vld [vmem:[#allocation2 + $0x5c8] sm:$0xff]
      %v3118 = vld [vmem:[#allocation2 + $0x5d0] sm:$0xff]
      %v3119 = vld [vmem:[#allocation2 + $0x5d8] sm:$0xff]
      %v3120 = vld [vmem:[#allocation2 + $0x5e0] sm:$0xff]
      %v3121 = vld [vmem:[#allocation2 + $0x5e8] sm:$0xff]
      %v3122 = vld [vmem:[#allocation2 + $0x5f0] sm:$0xff]
      %v3123 = vld [vmem:[#allocation2 + $0x5f8] sm:$0xff]
      %v3124 = vld [vmem:[#allocation2 + $0x600] sm:$0xff]
      %v3125 = vld [vmem:[#allocation2 + $0x608] sm:$0xff]
      %v3126 = vld [vmem:[#allocation2 + $0x610] sm:$0xff]
      %v3127 = vld [vmem:[#allocation2 + $0x618] sm:$0xff]
      %v3128 = vld [vmem:[#allocation2 + $0x620] sm:$0xff]
      %v3129 = vld [vmem:[#allocation2 + $0x628] sm:$0xff]
      %v3130 = vld [vmem:[#allocation2 + $0x630] sm:$0xff]
      %v3131 = vld [vmem:[#allocation2 + $0x638] sm:$0xff]
      %v3132 = vld [vmem:[#allocation2 + $0x640] sm:$0xff]
      %v3133 = vld [vmem:[#allocation2 + $0x648] sm:$0xff]
      %v3134 = vld [vmem:[#allocation2 + $0x650] sm:$0xff]
      %v3135 = vld [vmem:[#allocation2 + $0x658] sm:$0xff]
      %v3136 = vld [vmem:[#allocation2 + $0x660] sm:$0xff]
      %v3137 = vld [vmem:[#allocation2 + $0x668] sm:$0xff]
      %v3138 = vld [vmem:[#allocation2 + $0x670] sm:$0xff]
      %v3139 = vld [vmem:[#allocation2 + $0x678] sm:$0xff]
      %v3140 = vld [vmem:[#allocation2 + $0x680] sm:$0xff]
      %v3141 = vld [vmem:[#allocation2 + $0x688] sm:$0xff]
      %v3142 = vld [vmem:[#allocation2 + $0x690] sm:$0xff]
      %v3143 = vld [vmem:[#allocation2 + $0x698] sm:$0xff]
      %v3144 = vld [vmem:[#allocation2 + $0x6a0] sm:$0xff]
      %v3145 = vld [vmem:[#allocation2 + $0x6a8] sm:$0xff]
      %v3146 = vld [vmem:[#allocation2 + $0x6b0] sm:$0xff]
      %v3147 = vld [vmem:[#allocation2 + $0x6b8] sm:$0xff]
      %v3148 = vld [vmem:[#allocation2 + $0x6c0] sm:$0xff]
      %v3149 = vld [vmem:[#allocation2 + $0x6c8] sm:$0xff]
      %v3150 = vld [vmem:[#allocation2 + $0x6d0] sm:$0xff]
      %v3151 = vld [vmem:[#allocation2 + $0x6d8] sm:$0xff]
      %v3152 = vld [vmem:[#allocation2 + $0x6e0] sm:$0xff]
      %v3153 = vld [vmem:[#allocation2 + $0x6e8] sm:$0xff]
      %v3154 = vld [vmem:[#allocation2 + $0x6f0] sm:$0xff]
      %v3155 = vld [vmem:[#allocation2 + $0x6f8] sm:$0xff]
      %v3156 = vld [vmem:[#allocation2 + $0x700] sm:$0xff]
      %v3157 = vld [vmem:[#allocation2 + $0x708] sm:$0xff]
      %v3158 = vld [vmem:[#allocation2 + $0x710] sm:$0xff]
      %v3159 = vld [vmem:[#allocation2 + $0x718] sm:$0xff]
      %v3160 = vld [vmem:[#allocation2 + $0x720] sm:$0xff]
      %v3161 = vld [vmem:[#allocation2 + $0x728] sm:$0xff]
      %v3162 = vld [vmem:[#allocation2 + $0x730] sm:$0xff]
      %v3163 = vld [vmem:[#allocation2 + $0x738] sm:$0xff]
      %v3164 = vld [vmem:[#allocation2 + $0x740] sm:$0xff]
      %v3165 = vld [vmem:[#allocation2 + $0x748] sm:$0xff]
      %v3166 = vld [vmem:[#allocation2 + $0x1b0] sm:$0xff]
      %v3167 = vld [vmem:[#allocation2 + $0x1b8] sm:$0xff]
      %v3168 = vld [vmem:[#allocation2 + $0x1c0] sm:$0xff]
      %v3169 = vld [vmem:[#allocation2 + $0x1c8] sm:$0xff]
      %v3170 = vld [vmem:[#allocation2 + $0x1d0] sm:$0xff]
      %v3171 = vld [vmem:[#allocation2 + $0x1d8] sm:$0xff]
      %v3172 = vld [vmem:[#allocation2 + $0x570] sm:$0xff]
      %v3173 = vld [vmem:[#allocation2 + $0x578] sm:$0xff]
      %v3174 = vld [vmem:[#allocation2 + $0x580] sm:$0xff]
      %v3175 = vld [vmem:[#allocation2 + $0x588] sm:$0xff]
      %v3176 = vld [vmem:[#allocation2 + $0x590] sm:$0xff]
      %v3177 = vld [vmem:[#allocation2 + $0x598] sm:$0xff]
      %v3178 = vld [vmem:[#allocation2 + $0x390] sm:$0xff]
      %v3179 = vld [vmem:[#allocation2 + $0x398] sm:$0xff]
      %v3180 = vld [vmem:[#allocation2 + $0x3a0] sm:$0xff]
      %v3181 = vld [vmem:[#allocation2 + $0x3a8] sm:$0xff]
      %v3182 = vld [vmem:[#allocation2 + $0x3b0] sm:$0xff]
      %v3183 = vld [vmem:[#allocation2 + $0x3b8] sm:$0xff]
      %v3184 = vld [vmem:[#allocation2 + $0x750] sm:$0xff]
      %v3185 = vld [vmem:[#allocation2 + $0x758] sm:$0xff]
      %v3186 = vld [vmem:[#allocation2 + $0x760] sm:$0xff]
      %v3187 = vld [vmem:[#allocation2 + $0x768] sm:$0xff]
      %v3188 = vld [vmem:[#allocation2 + $0x770] sm:$0xff]
      %v3189 = vld [vmem:[#allocation2 + $0x778] sm:$0xff]
      %3244 = vrot.lane.b32.xlu0 %v3004, 32
      %v3245 = vpop.permute.xlu0 %3244
      %3246 = vrot.lane.b32.xlu0 %v3005, 32
      %v3247 = vpop.permute.xlu0 %3246
      %3248 = vrot.lane.b32.xlu0 %v3006, 32
      %v3249 = vpop.permute.xlu0 %3248
      %3250 = vrot.lane.b32.xlu0 %v3007, 32
      %v3251 = vpop.permute.xlu0 %3250
      %3252 = vrot.lane.b32.xlu0 %v3008, 32
      %v3253 = vpop.permute.xlu0 %3252
      %3254 = vrot.lane.b32.xlu0 %v3009, 32
      %v3255 = vpop.permute.xlu0 %3254
      %3256 = vrot.lane.b32.xlu0 %v3010, 32
      %v3257 = vpop.permute.xlu0 %3256
      %3258 = vrot.lane.b32.xlu0 %v3011, 32
      %v3259 = vpop.permute.xlu0 %3258
      %3260 = vrot.lane.b32.xlu0 %v3012, 32
      %v3261 = vpop.permute.xlu0 %3260
      %3262 = vrot.lane.b32.xlu0 %v3013, 32
      %v3263 = vpop.permute.xlu0 %3262
      %3264 = vrot.lane.b32.xlu0 %v3014, 32
      %v3265 = vpop.permute.xlu0 %3264
      %3266 = vrot.lane.b32.xlu0 %v3015, 32
      %v3267 = vpop.permute.xlu0 %3266
      %3268 = vrot.lane.b32.xlu0 %v3016, 32
      %v3269 = vpop.permute.xlu0 %3268
      %3270 = vrot.lane.b32.xlu0 %v3017, 32
      %v3271 = vpop.permute.xlu0 %3270
      %3272 = vrot.lane.b32.xlu0 %v3018, 32
      %v3273 = vpop.permute.xlu0 %3272
      %3274 = vrot.lane.b32.xlu0 %v3019, 32
      %v3275 = vpop.permute.xlu0 %3274
      %3276 = vrot.lane.b32.xlu0 %v3020, 32
      %v3277 = vpop.permute.xlu0 %3276
      %3278 = vrot.lane.b32.xlu0 %v3021, 32
      %v3279 = vpop.permute.xlu0 %3278
      %3280 = vrot.lane.b32.xlu0 %v3022, 32
      %v3281 = vpop.permute.xlu0 %3280
      %3282 = vrot.lane.b32.xlu0 %v3023, 32
      %v3283 = vpop.permute.xlu0 %3282
      %3284 = vrot.lane.b32.xlu0 %v3024, 32
      %v3285 = vpop.permute.xlu0 %3284
      %3286 = vrot.lane.b32.xlu0 %v3025, 32
      %v3287 = vpop.permute.xlu0 %3286
      %3288 = vrot.lane.b32.xlu0 %v3026, 32
      %v3289 = vpop.permute.xlu0 %3288
      %3290 = vrot.lane.b32.xlu0 %v3027, 32
      %v3291 = vpop.permute.xlu0 %3290
      %3292 = vrot.lane.b32.xlu0 %v3028, 32
      %v3293 = vpop.permute.xlu0 %3292
      %3294 = vrot.lane.b32.xlu0 %v3029, 32
      %v3295 = vpop.permute.xlu0 %3294
      %3296 = vrot.lane.b32.xlu0 %v3030, 32
      %v3297 = vpop.permute.xlu0 %3296
      %3298 = vrot.lane.b32.xlu0 %v3031, 32
      %v3299 = vpop.permute.xlu0 %3298
      %3300 = vrot.lane.b32.xlu0 %v3032, 32
      %v3301 = vpop.permute.xlu0 %3300
      %3302 = vrot.lane.b32.xlu0 %v3033, 32
      %v3303 = vpop.permute.xlu0 %3302
      %3304 = vrot.lane.b32.xlu0 %v3034, 32
      %v3305 = vpop.permute.xlu0 %3304
      %3306 = vrot.lane.b32.xlu0 %v3035, 32
      %v3307 = vpop.permute.xlu0 %3306
      %3308 = vrot.lane.b32.xlu0 %v3036, 32
      %v3309 = vpop.permute.xlu0 %3308
      %3310 = vrot.lane.b32.xlu0 %v3037, 32
      %v3311 = vpop.permute.xlu0 %3310
      %3312 = vrot.lane.b32.xlu0 %v3038, 32
      %v3313 = vpop.permute.xlu0 %3312
      %3314 = vrot.lane.b32.xlu0 %v3039, 32
      %v3315 = vpop.permute.xlu0 %3314
      %3316 = vrot.lane.b32.xlu0 %v3040, 32
      %v3317 = vpop.permute.xlu0 %3316
      %3318 = vrot.lane.b32.xlu0 %v3041, 32
      %v3319 = vpop.permute.xlu0 %3318
      %3320 = vrot.lane.b32.xlu0 %v3042, 32
      %v3321 = vpop.permute.xlu0 %3320
      %3322 = vrot.lane.b32.xlu0 %v3043, 32
      %v3323 = vpop.permute.xlu0 %3322
      %3324 = vrot.lane.b32.xlu0 %v3044, 32
      %v3325 = vpop.permute.xlu0 %3324
      %3326 = vrot.lane.b32.xlu0 %v3045, 32
      %v3327 = vpop.permute.xlu0 %3326
      %3328 = vrot.lane.b32.xlu0 %v3046, 32
      %v3329 = vpop.permute.xlu0 %3328
      %3330 = vrot.lane.b32.xlu0 %v3047, 32
      %v3331 = vpop.permute.xlu0 %3330
      %3332 = vrot.lane.b32.xlu0 %v3048, 32
      %v3333 = vpop.permute.xlu0 %3332
      %3334 = vrot.lane.b32.xlu0 %v3049, 32
      %v3335 = vpop.permute.xlu0 %3334
      %3336 = vrot.lane.b32.xlu0 %v3050, 32
      %v3337 = vpop.permute.xlu0 %3336
      %3338 = vrot.lane.b32.xlu0 %v3051, 32
      %v3339 = vpop.permute.xlu0 %3338
      %3340 = vrot.lane.b32.xlu0 %v3052, 32
      %v3341 = vpop.permute.xlu0 %3340
      %3342 = vrot.lane.b32.xlu0 %v3053, 32
      %v3343 = vpop.permute.xlu0 %3342
      %3344 = vrot.lane.b32.xlu0 %v3054, 32
      %v3345 = vpop.permute.xlu0 %3344
      %3346 = vrot.lane.b32.xlu0 %v3055, 32
      %v3347 = vpop.permute.xlu0 %3346
      %3348 = vrot.lane.b32.xlu0 %v3056, 32
      %v3349 = vpop.permute.xlu0 %3348
      %3350 = vrot.lane.b32.xlu0 %v3057, 32
      %v3351 = vpop.permute.xlu0 %3350
      %3460 = vrot.lane.b32.xlu0 %v3058, 64
      %v3461 = vpop.permute.xlu0 %3460
      %3462 = vrot.lane.b32.xlu0 %v3059, 64
      %v3463 = vpop.permute.xlu0 %3462
      %3464 = vrot.lane.b32.xlu0 %v3060, 64
      %v3465 = vpop.permute.xlu0 %3464
      %3466 = vrot.lane.b32.xlu0 %v3061, 64
      %v3467 = vpop.permute.xlu0 %3466
      %3468 = vrot.lane.b32.xlu0 %v3062, 64
      %v3469 = vpop.permute.xlu0 %3468
      %3470 = vrot.lane.b32.xlu0 %v3063, 64
      %v3471 = vpop.permute.xlu0 %3470
      %3472 = vrot.lane.b32.xlu0 %v3064, 64
      %v3473 = vpop.permute.xlu0 %3472
      %3474 = vrot.lane.b32.xlu0 %v3065, 64
      %v3475 = vpop.permute.xlu0 %3474
      %3476 = vrot.lane.b32.xlu0 %v3066, 64
      %v3477 = vpop.permute.xlu0 %3476
      %3478 = vrot.lane.b32.xlu0 %v3067, 64
      %v3479 = vpop.permute.xlu0 %3478
      %3480 = vrot.lane.b32.xlu0 %v3068, 64
      %v3481 = vpop.permute.xlu0 %3480
      %3482 = vrot.lane.b32.xlu0 %v3069, 64
      %v3483 = vpop.permute.xlu0 %3482
      %3484 = vrot.lane.b32.xlu0 %v3070, 64
      %v3485 = vpop.permute.xlu0 %3484
      %3486 = vrot.lane.b32.xlu0 %v3071, 64
      %v3487 = vpop.permute.xlu0 %3486
      %3488 = vrot.lane.b32.xlu0 %v3072, 64
      %v3489 = vpop.permute.xlu0 %3488
      %3490 = vrot.lane.b32.xlu0 %v3073, 64
      %v3491 = vpop.permute.xlu0 %3490
      %3492 = vrot.lane.b32.xlu0 %v3074, 64
      %v3493 = vpop.permute.xlu0 %3492
      %3494 = vrot.lane.b32.xlu0 %v3075, 64
      %v3495 = vpop.permute.xlu0 %3494
      %3496 = vrot.lane.b32.xlu0 %v3076, 64
      %v3497 = vpop.permute.xlu0 %3496
      %3498 = vrot.lane.b32.xlu0 %v3077, 64
      %v3499 = vpop.permute.xlu0 %3498
      %3500 = vrot.lane.b32.xlu0 %v3078, 64
      %v3501 = vpop.permute.xlu0 %3500
      %3502 = vrot.lane.b32.xlu0 %v3079, 64
      %v3503 = vpop.permute.xlu0 %3502
      %3504 = vrot.lane.b32.xlu0 %v3080, 64
      %v3505 = vpop.permute.xlu0 %3504
      %3506 = vrot.lane.b32.xlu0 %v3081, 64
      %v3507 = vpop.permute.xlu0 %3506
      %3508 = vrot.lane.b32.xlu0 %v3082, 64
      %v3509 = vpop.permute.xlu0 %3508
      %3510 = vrot.lane.b32.xlu0 %v3083, 64
      %v3511 = vpop.permute.xlu0 %3510
      %3512 = vrot.lane.b32.xlu0 %v3084, 64
      %v3513 = vpop.permute.xlu0 %3512
      %3514 = vrot.lane.b32.xlu0 %v3085, 64
      %v3515 = vpop.permute.xlu0 %3514
      %3516 = vrot.lane.b32.xlu0 %v3086, 64
      %v3517 = vpop.permute.xlu0 %3516
      %3518 = vrot.lane.b32.xlu0 %v3087, 64
      %v3519 = vpop.permute.xlu0 %3518
      %3520 = vrot.lane.b32.xlu0 %v3088, 64
      %v3521 = vpop.permute.xlu0 %3520
      %3522 = vrot.lane.b32.xlu0 %v3089, 64
      %v3523 = vpop.permute.xlu0 %3522
      %3524 = vrot.lane.b32.xlu0 %v3090, 64
      %v3525 = vpop.permute.xlu0 %3524
      %3526 = vrot.lane.b32.xlu0 %v3091, 64
      %v3527 = vpop.permute.xlu0 %3526
      %3528 = vrot.lane.b32.xlu0 %v3092, 64
      %v3529 = vpop.permute.xlu0 %3528
      %3530 = vrot.lane.b32.xlu0 %v3093, 64
      %v3531 = vpop.permute.xlu0 %3530
      %3532 = vrot.lane.b32.xlu0 %v3094, 64
      %v3533 = vpop.permute.xlu0 %3532
      %3534 = vrot.lane.b32.xlu0 %v3095, 64
      %v3535 = vpop.permute.xlu0 %3534
      %3536 = vrot.lane.b32.xlu0 %v3096, 64
      %v3537 = vpop.permute.xlu0 %3536
      %3538 = vrot.lane.b32.xlu0 %v3097, 64
      %v3539 = vpop.permute.xlu0 %3538
      %3540 = vrot.lane.b32.xlu0 %v3098, 64
      %v3541 = vpop.permute.xlu0 %3540
      %3542 = vrot.lane.b32.xlu0 %v3099, 64
      %v3543 = vpop.permute.xlu0 %3542
      %3544 = vrot.lane.b32.xlu0 %v3100, 64
      %v3545 = vpop.permute.xlu0 %3544
      %3546 = vrot.lane.b32.xlu0 %v3101, 64
      %v3547 = vpop.permute.xlu0 %3546
      %3548 = vrot.lane.b32.xlu0 %v3102, 64
      %v3549 = vpop.permute.xlu0 %3548
      %3550 = vrot.lane.b32.xlu0 %v3103, 64
      %v3551 = vpop.permute.xlu0 %3550
      %3552 = vrot.lane.b32.xlu0 %v3104, 64
      %v3553 = vpop.permute.xlu0 %3552
      %3554 = vrot.lane.b32.xlu0 %v3105, 64
      %v3555 = vpop.permute.xlu0 %3554
      %3556 = vrot.lane.b32.xlu0 %v3106, 64
      %v3557 = vpop.permute.xlu0 %3556
      %3558 = vrot.lane.b32.xlu0 %v3107, 64
      %v3559 = vpop.permute.xlu0 %3558
      %3560 = vrot.lane.b32.xlu0 %v3108, 64
      %v3561 = vpop.permute.xlu0 %3560
      %3562 = vrot.lane.b32.xlu0 %v3109, 64
      %v3563 = vpop.permute.xlu0 %3562
      %3564 = vrot.lane.b32.xlu0 %v3110, 64
      %v3565 = vpop.permute.xlu0 %3564
      %3566 = vrot.lane.b32.xlu0 %v3111, 64
      %v3567 = vpop.permute.xlu0 %3566
      %3676 = vrot.lane.b32.xlu0 %v3112, 96
      %v3677 = vpop.permute.xlu0 %3676
      %3678 = vrot.lane.b32.xlu0 %v3113, 96
      %v3679 = vpop.permute.xlu0 %3678
      %3680 = vrot.lane.b32.xlu0 %v3114, 96
      %v3681 = vpop.permute.xlu0 %3680
      %3682 = vrot.lane.b32.xlu0 %v3115, 96
      %v3683 = vpop.permute.xlu0 %3682
      %3684 = vrot.lane.b32.xlu0 %v3116, 96
      %v3685 = vpop.permute.xlu0 %3684
      %3686 = vrot.lane.b32.xlu0 %v3117, 96
      %v3687 = vpop.permute.xlu0 %3686
      %3688 = vrot.lane.b32.xlu0 %v3118, 96
      %v3689 = vpop.permute.xlu0 %3688
      %3690 = vrot.lane.b32.xlu0 %v3119, 96
      %v3691 = vpop.permute.xlu0 %3690
      %3692 = vrot.lane.b32.xlu0 %v3120, 96
      %v3693 = vpop.permute.xlu0 %3692
      %3694 = vrot.lane.b32.xlu0 %v3121, 96
      %v3695 = vpop.permute.xlu0 %3694
      %3696 = vrot.lane.b32.xlu0 %v3122, 96
      %v3697 = vpop.permute.xlu0 %3696
      %3698 = vrot.lane.b32.xlu0 %v3123, 96
      %v3699 = vpop.permute.xlu0 %3698
      %3700 = vrot.lane.b32.xlu0 %v3124, 96
      %v3701 = vpop.permute.xlu0 %3700
      %3702 = vrot.lane.b32.xlu0 %v3125, 96
      %v3703 = vpop.permute.xlu0 %3702
      %3704 = vrot.lane.b32.xlu0 %v3126, 96
      %v3705 = vpop.permute.xlu0 %3704
      %3706 = vrot.lane.b32.xlu0 %v3127, 96
      %v3707 = vpop.permute.xlu0 %3706
      %3708 = vrot.lane.b32.xlu0 %v3128, 96
      %v3709 = vpop.permute.xlu0 %3708
      %3710 = vrot.lane.b32.xlu0 %v3129, 96
      %v3711 = vpop.permute.xlu0 %3710
      %3712 = vrot.lane.b32.xlu0 %v3130, 96
      %v3713 = vpop.permute.xlu0 %3712
      %3714 = vrot.lane.b32.xlu0 %v3131, 96
      %v3715 = vpop.permute.xlu0 %3714
      %3716 = vrot.lane.b32.xlu0 %v3132, 96
      %v3717 = vpop.permute.xlu0 %3716
      %3718 = vrot.lane.b32.xlu0 %v3133, 96
      %v3719 = vpop.permute.xlu0 %3718
      %3720 = vrot.lane.b32.xlu0 %v3134, 96
      %v3721 = vpop.permute.xlu0 %3720
      %3722 = vrot.lane.b32.xlu0 %v3135, 96
      %v3723 = vpop.permute.xlu0 %3722
      %3724 = vrot.lane.b32.xlu0 %v3136, 96
      %v3725 = vpop.permute.xlu0 %3724
      %3726 = vrot.lane.b32.xlu0 %v3137, 96
      %v3727 = vpop.permute.xlu0 %3726
      %3728 = vrot.lane.b32.xlu0 %v3138, 96
      %v3729 = vpop.permute.xlu0 %3728
      %3730 = vrot.lane.b32.xlu0 %v3139, 96
      %v3731 = vpop.permute.xlu0 %3730
      %3732 = vrot.lane.b32.xlu0 %v3140, 96
      %v3733 = vpop.permute.xlu0 %3732
      %3734 = vrot.lane.b32.xlu0 %v3141, 96
      %v3735 = vpop.permute.xlu0 %3734
      %3736 = vrot.lane.b32.xlu0 %v3142, 96
      %v3737 = vpop.permute.xlu0 %3736
      %3738 = vrot.lane.b32.xlu0 %v3143, 96
      %v3739 = vpop.permute.xlu0 %3738
      %3740 = vrot.lane.b32.xlu0 %v3144, 96
      %v3741 = vpop.permute.xlu0 %3740
      %3742 = vrot.lane.b32.xlu0 %v3145, 96
      %v3743 = vpop.permute.xlu0 %3742
      %3744 = vrot.lane.b32.xlu0 %v3146, 96
      %v3745 = vpop.permute.xlu0 %3744
      %3746 = vrot.lane.b32.xlu0 %v3147, 96
      %v3747 = vpop.permute.xlu0 %3746
      %3748 = vrot.lane.b32.xlu0 %v3148, 96
      %v3749 = vpop.permute.xlu0 %3748
      %3750 = vrot.lane.b32.xlu0 %v3149, 96
      %v3751 = vpop.permute.xlu0 %3750
      %3752 = vrot.lane.b32.xlu0 %v3150, 96
      %v3753 = vpop.permute.xlu0 %3752
      %3754 = vrot.lane.b32.xlu0 %v3151, 96
      %v3755 = vpop.permute.xlu0 %3754
      %3756 = vrot.lane.b32.xlu0 %v3152, 96
      %v3757 = vpop.permute.xlu0 %3756
      %3758 = vrot.lane.b32.xlu0 %v3153, 96
      %v3759 = vpop.permute.xlu0 %3758
      %3760 = vrot.lane.b32.xlu0 %v3154, 96
      %v3761 = vpop.permute.xlu0 %3760
      %3762 = vrot.lane.b32.xlu0 %v3155, 96
      %v3763 = vpop.permute.xlu0 %3762
      %3764 = vrot.lane.b32.xlu0 %v3156, 96
      %v3765 = vpop.permute.xlu0 %3764
      %3766 = vrot.lane.b32.xlu0 %v3157, 96
      %v3767 = vpop.permute.xlu0 %3766
      %3768 = vrot.lane.b32.xlu0 %v3158, 96
      %v3769 = vpop.permute.xlu0 %3768
      %3770 = vrot.lane.b32.xlu0 %v3159, 96
      %v3771 = vpop.permute.xlu0 %3770
      %3772 = vrot.lane.b32.xlu0 %v3160, 96
      %v3773 = vpop.permute.xlu0 %3772
      %3774 = vrot.lane.b32.xlu0 %v3161, 96
      %v3775 = vpop.permute.xlu0 %3774
      %3776 = vrot.lane.b32.xlu0 %v3162, 96
      %v3777 = vpop.permute.xlu0 %3776
      %3778 = vrot.lane.b32.xlu0 %v3163, 96
      %v3779 = vpop.permute.xlu0 %3778
      %3780 = vrot.lane.b32.xlu0 %v3164, 96
      %v3781 = vpop.permute.xlu0 %3780
      %3782 = vrot.lane.b32.xlu0 %v3165, 96
      %v3783 = vpop.permute.xlu0 %3782
      %3844 = vrot.lane.b32.xlu0 %v3172, 32
      %v3845 = vpop.permute.xlu0 %3844
      %3846 = vrot.lane.b32.xlu0 %v3173, 32
      %v3847 = vpop.permute.xlu0 %3846
      %3848 = vrot.lane.b32.xlu0 %v3174, 32
      %v3849 = vpop.permute.xlu0 %3848
      %3850 = vrot.lane.b32.xlu0 %v3175, 32
      %v3851 = vpop.permute.xlu0 %3850
      %3852 = vrot.lane.b32.xlu0 %v3176, 32
      %v3853 = vpop.permute.xlu0 %3852
      %3854 = vrot.lane.b32.xlu0 %v3177, 32
      %v3855 = vpop.permute.xlu0 %3854
      %3868 = vrot.lane.b32.xlu0 %v3178, 64
      %v3869 = vpop.permute.xlu0 %3868
      %3870 = vrot.lane.b32.xlu0 %v3179, 64
      %v3871 = vpop.permute.xlu0 %3870
      %3872 = vrot.lane.b32.xlu0 %v3180, 64
      %v3873 = vpop.permute.xlu0 %3872
      %3874 = vrot.lane.b32.xlu0 %v3181, 64
      %v3875 = vpop.permute.xlu0 %3874
      %3876 = vrot.lane.b32.xlu0 %v3182, 64
      %v3877 = vpop.permute.xlu0 %3876
      %3878 = vrot.lane.b32.xlu0 %v3183, 64
      %v3879 = vpop.permute.xlu0 %3878
      %3892 = vrot.lane.b32.xlu0 %v3184, 96
      %v3893 = vpop.permute.xlu0 %3892
      %3894 = vrot.lane.b32.xlu0 %v3185, 96
      %v3895 = vpop.permute.xlu0 %3894
      %3896 = vrot.lane.b32.xlu0 %v3186, 96
      %v3897 = vpop.permute.xlu0 %3896
      %3898 = vrot.lane.b32.xlu0 %v3187, 96
      %v3899 = vpop.permute.xlu0 %3898
      %3900 = vrot.lane.b32.xlu0 %v3188, 96
      %v3901 = vpop.permute.xlu0 %3900
      %3902 = vrot.lane.b32.xlu0 %v3189, 96
      %v3903 = vpop.permute.xlu0 %3902
      %v3910 = vsel %vm2709, %v2950, %v3245
      %v3911 = vsel %vm2709, %v2951, %v3247
      %v3912 = vsel %vm2709, %v2952, %v3249
      %v3913 = vsel %vm2709, %v2953, %v3251
      %v3914 = vsel %vm2709, %v2954, %v3253
      %v3915 = vsel %vm2709, %v2955, %v3255
      %v3916 = vsel %vm2709, %v2956, %v3257
      %v3917 = vsel %vm2709, %v2957, %v3259
      %v3918 = vsel %vm2709, %v2958, %v3261
      %v3919 = vsel %vm2709, %v2959, %v3263
      %v3920 = vsel %vm2709, %v2960, %v3265
      %v3921 = vsel %vm2709, %v2961, %v3267
      %v3922 = vsel %vm2709, %v2962, %v3269
      %v3923 = vsel %vm2709, %v2963, %v3271
      %v3924 = vsel %vm2709, %v2964, %v3273
      %v3925 = vsel %vm2709, %v2965, %v3275
      %v3926 = vsel %vm2709, %v2966, %v3277
      %v3927 = vsel %vm2709, %v2967, %v3279
      %v3928 = vsel %vm2709, %v2968, %v3281
      %v3929 = vsel %vm2709, %v2969, %v3283
      %v3930 = vsel %vm2709, %v2970, %v3285
      %v3931 = vsel %vm2709, %v2971, %v3287
      %v3932 = vsel %vm2709, %v2972, %v3289
      %v3933 = vsel %vm2709, %v2973, %v3291
      %v3934 = vsel %vm2709, %v2974, %v3293
      %v3935 = vsel %vm2709, %v2975, %v3295
      %v3936 = vsel %vm2709, %v2976, %v3297
      %v3937 = vsel %vm2709, %v2977, %v3299
      %v3938 = vsel %vm2709, %v2978, %v3301
      %v3939 = vsel %vm2709, %v2979, %v3303
      %v3940 = vsel %vm2709, %v2980, %v3305
      %v3941 = vsel %vm2709, %v2981, %v3307
      %v3942 = vsel %vm2709, %v2982, %v3309
      %v3943 = vsel %vm2709, %v2983, %v3311
      %v3944 = vsel %vm2709, %v2984, %v3313
      %v3945 = vsel %vm2709, %v2985, %v3315
      %v3946 = vsel %vm2709, %v2986, %v3317
      %v3947 = vsel %vm2709, %v2987, %v3319
      %v3948 = vsel %vm2709, %v2988, %v3321
      %v3949 = vsel %vm2709, %v2989, %v3323
      %v3950 = vsel %vm2709, %v2990, %v3325
      %v3951 = vsel %vm2709, %v2991, %v3327
      %v3952 = vsel %vm2709, %v2992, %v3329
      %v3953 = vsel %vm2709, %v2993, %v3331
      %v3954 = vsel %vm2709, %v2994, %v3333
      %v3955 = vsel %vm2709, %v2995, %v3335
      %v3956 = vsel %vm2709, %v2996, %v3337
      %v3957 = vsel %vm2709, %v2997, %v3339
      %v3958 = vsel %vm2709, %v2998, %v3341
      %v3959 = vsel %vm2709, %v2999, %v3343
      %v3960 = vsel %vm2709, %v3000, %v3345
      %v3961 = vsel %vm2709, %v3001, %v3347
      %v3962 = vsel %vm2709, %v3002, %v3349
      %v3963 = vsel %vm2709, %v3003, %v3351
      %vm3964 = vcmask 523264
      %v3965 = vsel %vm3964, %v3910, %v3461
      %v3966 = vsel %vm3964, %v3911, %v3463
      %v3967 = vsel %vm3964, %v3912, %v3465
      %v3968 = vsel %vm3964, %v3913, %v3467
      %v3969 = vsel %vm3964, %v3914, %v3469
      %v3970 = vsel %vm3964, %v3915, %v3471
      %v3971 = vsel %vm3964, %v3916, %v3473
      %v3972 = vsel %vm3964, %v3917, %v3475
      %v3973 = vsel %vm3964, %v3918, %v3477
      %v3974 = vsel %vm3964, %v3919, %v3479
      %v3975 = vsel %vm3964, %v3920, %v3481
      %v3976 = vsel %vm3964, %v3921, %v3483
      %v3977 = vsel %vm3964, %v3922, %v3485
      %v3978 = vsel %vm3964, %v3923, %v3487
      %v3979 = vsel %vm3964, %v3924, %v3489
      %v3980 = vsel %vm3964, %v3925, %v3491
      %v3981 = vsel %vm3964, %v3926, %v3493
      %v3982 = vsel %vm3964, %v3927, %v3495
      %v3983 = vsel %vm3964, %v3928, %v3497
      %v3984 = vsel %vm3964, %v3929, %v3499
      %v3985 = vsel %vm3964, %v3930, %v3501
      %v3986 = vsel %vm3964, %v3931, %v3503
      %v3987 = vsel %vm3964, %v3932, %v3505
      %v3988 = vsel %vm3964, %v3933, %v3507
      %v3989 = vsel %vm3964, %v3934, %v3509
      %v3990 = vsel %vm3964, %v3935, %v3511
      %v3991 = vsel %vm3964, %v3936, %v3513
      %v3992 = vsel %vm3964, %v3937, %v3515
      %v3993 = vsel %vm3964, %v3938, %v3517
      %v3994 = vsel %vm3964, %v3939, %v3519
      %v3995 = vsel %vm3964, %v3940, %v3521
      %v3996 = vsel %vm3964, %v3941, %v3523
      %v3997 = vsel %vm3964, %v3942, %v3525
      %v3998 = vsel %vm3964, %v3943, %v3527
      %v3999 = vsel %vm3964, %v3944, %v3529
      %v4000 = vsel %vm3964, %v3945, %v3531
      %v4001 = vsel %vm3964, %v3946, %v3533
      %v4002 = vsel %vm3964, %v3947, %v3535
      %v4003 = vsel %vm3964, %v3948, %v3537
      %v4004 = vsel %vm3964, %v3949, %v3539
      %v4005 = vsel %vm3964, %v3950, %v3541
      %v4006 = vsel %vm3964, %v3951, %v3543
      %v4007 = vsel %vm3964, %v3952, %v3545
      %v4008 = vsel %vm3964, %v3953, %v3547
      %v4009 = vsel %vm3964, %v3954, %v3549
      %v4010 = vsel %vm3964, %v3955, %v3551
      %v4011 = vsel %vm3964, %v3956, %v3553
      %v4012 = vsel %vm3964, %v3957, %v3555
      %v4013 = vsel %vm3964, %v3958, %v3557
      %v4014 = vsel %vm3964, %v3959, %v3559
      %v4015 = vsel %vm3964, %v3960, %v3561
      %v4016 = vsel %vm3964, %v3961, %v3563
      %v4017 = vsel %vm3964, %v3962, %v3565
      %v4018 = vsel %vm3964, %v3963, %v3567
      %vm4019 = vcmask 785408
      %v4020 = vsel %vm4019, %v3965, %v3677
      %v4021 = vsel %vm4019, %v3966, %v3679
      %v4022 = vsel %vm4019, %v3967, %v3681
      %v4023 = vsel %vm4019, %v3968, %v3683
      %v4024 = vsel %vm4019, %v3969, %v3685
      %v4025 = vsel %vm4019, %v3970, %v3687
      %v4026 = vsel %vm4019, %v3971, %v3689
      %v4027 = vsel %vm4019, %v3972, %v3691
      %v4028 = vsel %vm4019, %v3973, %v3693
      %v4029 = vsel %vm4019, %v3974, %v3695
      %v4030 = vsel %vm4019, %v3975, %v3697
      %v4031 = vsel %vm4019, %v3976, %v3699
      %v4032 = vsel %vm4019, %v3977, %v3701
      %v4033 = vsel %vm4019, %v3978, %v3703
      %v4034 = vsel %vm4019, %v3979, %v3705
      %v4035 = vsel %vm4019, %v3980, %v3707
      %v4036 = vsel %vm4019, %v3981, %v3709
      %v4037 = vsel %vm4019, %v3982, %v3711
      %v4038 = vsel %vm4019, %v3983, %v3713
      %v4039 = vsel %vm4019, %v3984, %v3715
      %v4040 = vsel %vm4019, %v3985, %v3717
      %v4041 = vsel %vm4019, %v3986, %v3719
      %v4042 = vsel %vm4019, %v3987, %v3721
      %v4043 = vsel %vm4019, %v3988, %v3723
      %v4044 = vsel %vm4019, %v3989, %v3725
      %v4045 = vsel %vm4019, %v3990, %v3727
      %v4046 = vsel %vm4019, %v3991, %v3729
      %v4047 = vsel %vm4019, %v3992, %v3731
      %v4048 = vsel %vm4019, %v3993, %v3733
      %v4049 = vsel %vm4019, %v3994, %v3735
      %v4050 = vsel %vm4019, %v3995, %v3737
      %v4051 = vsel %vm4019, %v3996, %v3739
      %v4052 = vsel %vm4019, %v3997, %v3741
      %v4053 = vsel %vm4019, %v3998, %v3743
      %v4054 = vsel %vm4019, %v3999, %v3745
      %v4055 = vsel %vm4019, %v4000, %v3747
      %v4056 = vsel %vm4019, %v4001, %v3749
      %v4057 = vsel %vm4019, %v4002, %v3751
      %v4058 = vsel %vm4019, %v4003, %v3753
      %v4059 = vsel %vm4019, %v4004, %v3755
      %v4060 = vsel %vm4019, %v4005, %v3757
      %v4061 = vsel %vm4019, %v4006, %v3759
      %v4062 = vsel %vm4019, %v4007, %v3761
      %v4063 = vsel %vm4019, %v4008, %v3763
      %v4064 = vsel %vm4019, %v4009, %v3765
      %v4065 = vsel %vm4019, %v4010, %v3767
      %v4066 = vsel %vm4019, %v4011, %v3769
      %v4067 = vsel %vm4019, %v4012, %v3771
      %v4068 = vsel %vm4019, %v4013, %v3773
      %v4069 = vsel %vm4019, %v4014, %v3775
      %v4070 = vsel %vm4019, %v4015, %v3777
      %v4071 = vsel %vm4019, %v4016, %v3779
      %v4072 = vsel %vm4019, %v4017, %v3781
      %v4073 = vsel %vm4019, %v4018, %v3783
      %v4074 = vsel %vm2709, %v3166, %v3845
      %v4075 = vsel %vm2709, %v3167, %v3847
      %v4076 = vsel %vm2709, %v3168, %v3849
      %v4077 = vsel %vm2709, %v3169, %v3851
      %v4078 = vsel %vm2709, %v3170, %v3853
      %v4079 = vsel %vm2709, %v3171, %v3855
      %v4080 = vsel %vm3964, %v4074, %v3869
      %v4081 = vsel %vm3964, %v4075, %v3871
      %v4082 = vsel %vm3964, %v4076, %v3873
      %v4083 = vsel %vm3964, %v4077, %v3875
      %v4084 = vsel %vm3964, %v4078, %v3877
      %v4085 = vsel %vm3964, %v4079, %v3879
      %v4086 = vsel %vm4019, %v4080, %v3893
      %v4087 = vsel %vm4019, %v4081, %v3895
      %v4088 = vsel %vm4019, %v4082, %v3897
      %v4089 = vsel %vm4019, %v4083, %v3899
      %v4090 = vsel %vm4019, %v4084, %v3901
      %v4091 = vsel %vm4019, %v4085, %v3903
      %v4092 = vpack.c.bf16 %v4021, %v4020
      %v4093 = vpack.c.bf16 %v4027, %v4026
      %v4094 = vpack.c.bf16 %v4023, %v4022
      %v4095 = vpack.c.bf16 %v4029, %v4028
      %v4096 = vpack.c.bf16 %v4025, %v4024
      %v4097 = vpack.c.bf16 %v4031, %v4030
      %v4098 = vpack.c.bf16 %v4033, %v4032
      %v4099 = vpack.c.bf16 %v4035, %v4034
      %v4100 = vpack.c.bf16 %v4037, %v4036
      %v4101 = vpack.c.bf16 %v4039, %v4038
      %v4102 = vpack.c.bf16 %v4041, %v4040
      %v4103 = vpack.c.bf16 %v4043, %v4042
      %v4104 = vpack.c.bf16 %v4045, %v4044
      %v4105 = vpack.c.bf16 %v4047, %v4046
      %v4106 = vpack.c.bf16 %v4049, %v4048
      %v4107 = vpack.c.bf16 %v4051, %v4050
      %v4108 = vpack.c.bf16 %v4053, %v4052
      %v4109 = vpack.c.bf16 %v4055, %v4054
      %v4110 = vpack.c.bf16 %v4057, %v4056
      %v4111 = vpack.c.bf16 %v4059, %v4058
      %v4112 = vpack.c.bf16 %v4061, %v4060
      %v4113 = vpack.c.bf16 %v4063, %v4062
      %v4114 = vpack.c.bf16 %v4065, %v4064
      %v4115 = vpack.c.bf16 %v4067, %v4066
      %v4116 = vpack.c.bf16 %v4069, %v4068
      %v4117 = vpack.c.bf16 %v4071, %v4070
      %v4118 = vpack.c.bf16 %v4073, %v4072
      %v4119 = vpack.c.bf16 %v4087, %v4086
      %v4120 = vpack.c.bf16 %v4089, %v4088
      %v4121 = vpack.c.bf16 %v4091, %v4090
      %v4122 = vld [vmem:[%s3] sm:$0xf]
      %v4123 = vld [vmem:[%s3 + $0x4] sm:$0xf]
      %v4124 = vld [vmem:[%s3 + $0x8] sm:$0xf]
      %v4125 = vld [vmem:[%s3 + $0xc] sm:$0xf]
      %v4126 = vld [vmem:[%s3 + $0x10] sm:$0xf]
      %v4127 = vld [vmem:[%s3 + $0x14] sm:$0xf]
      %v4128 = vld [vmem:[%s3 + $0x18] sm:$0xf]
      %v4129 = vld [vmem:[%s3 + $0x1c] sm:$0xf]
      %v4130 = vld [vmem:[%s3 + $0x20] sm:$0xf]
      %v4131 = vld [vmem:[%s3 + $0x24] sm:$0xf]
      %v4132 = vld [vmem:[%s3 + $0x28] sm:$0xf]
      %v4133 = vld [vmem:[%s3 + $0x2c] sm:$0xf]
      %v4134 = vld [vmem:[%s3 + $0x30] sm:$0xf]
      %v4135 = vld [vmem:[%s3 + $0x34] sm:$0xf]
      %v4136 = vld [vmem:[%s3 + $0x38] sm:$0xf]
      %v4137 = vld [vmem:[%s3 + $0x3c] sm:$0xf]
      %v4138 = vld [vmem:[%s3 + $0x40] sm:$0xf]
      %v4139 = vld [vmem:[%s3 + $0x44] sm:$0xf]
      %v4140 = vld [vmem:[%s3 + $0x48] sm:$0xf]
      %v4141 = vld [vmem:[%s3 + $0x4c] sm:$0xf]
      %v4142 = vld [vmem:[%s3 + $0x50] sm:$0xf]
      %v4143 = vld [vmem:[%s3 + $0x54] sm:$0xf]
      %v4144 = vld [vmem:[%s3 + $0x58] sm:$0xf]
      %v4145 = vld [vmem:[%s3 + $0x5c] sm:$0xf]
      %v4146 = vld [vmem:[%s3 + $0x60] sm:$0xf]
      %v4147 = vld [vmem:[%s3 + $0x64] sm:$0xf]
      %v4148 = vld [vmem:[%s3 + $0x68] sm:$0xf]
      %v4149 = vld [vmem:[%s3 + $0x6c] sm:$0xf]
      %v4150 = vld [vmem:[%s3 + $0x70] sm:$0xf]
      %v4151 = vld [vmem:[%s3 + $0x74] sm:$0xf]
      %v4152 = vld [vmem:[%s3 + $0x78] sm:$0xf]
      %v4153 = vld [vmem:[%s3 + $0x7c] sm:$0xf]
      %v4186 = vunpack.c.l.b16 %v4122
      %v4187 = vunpack.c.l.b16 %v4123
      %v4188 = vunpack.c.l.b16 %v4124
      %v4189 = vunpack.c.l.b16 %v4125
      %v4190 = vunpack.c.l.b16 %v4126
      %v4191 = vunpack.c.l.b16 %v4127
      %v4192 = vunpack.c.l.b16 %v4128
      %v4193 = vunpack.c.l.b16 %v4129
      %v4194 = vunpack.c.l.b16 %v4130
      %v4195 = vunpack.c.l.b16 %v4131
      %v4196 = vunpack.c.l.b16 %v4132
      %v4197 = vunpack.c.l.b16 %v4133
      %v4198 = vunpack.c.l.b16 %v4134
      %v4199 = vunpack.c.l.b16 %v4135
      %v4200 = vunpack.c.l.b16 %v4136
      %v4201 = vunpack.c.l.b16 %v4137
      %v4202 = vunpack.c.l.b16 %v4138
      %v4203 = vunpack.c.l.b16 %v4139
      %v4204 = vunpack.c.l.b16 %v4140
      %v4205 = vunpack.c.l.b16 %v4141
      %v4206 = vunpack.c.l.b16 %v4142
      %v4207 = vunpack.c.l.b16 %v4143
      %v4208 = vunpack.c.l.b16 %v4144
      %v4209 = vunpack.c.l.b16 %v4145
      %v4210 = vunpack.c.l.b16 %v4146
      %v4211 = vunpack.c.l.b16 %v4147
      %v4212 = vunpack.c.l.b16 %v4148
      %v4213 = vunpack.c.l.b16 %v4149
      %v4214 = vunpack.c.l.b16 %v4150
      %v4215 = vunpack.c.l.b16 %v4151
      %v4216 = vunpack.c.l.b16 %v4152
      %v4217 = vunpack.c.l.b16 %v4153
      %v4218 = vpack.c.b16 %v4187, %v4186
      %v4219 = vpack.c.b16 %v4189, %v4188
      %v4220 = vpack.c.b16 %v4191, %v4190
      %v4221 = vpack.c.b16 %v4193, %v4192
      %v4222 = vpack.c.b16 %v4195, %v4194
      %v4223 = vpack.c.b16 %v4197, %v4196
      %v4224 = vpack.c.b16 %v4199, %v4198
      %v4225 = vpack.c.b16 %v4201, %v4200
      %v4226 = vpack.c.b16 %v4203, %v4202
      %v4227 = vpack.c.b16 %v4205, %v4204
      %v4228 = vpack.c.b16 %v4207, %v4206
      %v4229 = vpack.c.b16 %v4209, %v4208
      %v4230 = vpack.c.b16 %v4211, %v4210
      %v4231 = vpack.c.b16 %v4213, %v4212
      %v4232 = vpack.c.b16 %v4215, %v4214
      %v4233 = vpack.c.b16 %v4217, %v4216
      %4250 = vmatprep.subr.bf16.mxu0 0
      %4251 = vmatpush1.bf16.msra.mxu0 %v4218
      %4252 = vmatprep.subr.bf16.mxu0 0
      %4253 = vmatpush1.bf16.msra.mxu0 %v4219
      %4254 = vmatprep.subr.bf16.mxu0 0
      %4255 = vmatpush1.bf16.msra.mxu0 %v4220
      %4256 = vmatprep.subr.bf16.mxu0 0
      %4257 = vmatpush1.bf16.msra.mxu0 %v4221
      %4258 = vmatprep.subr.bf16.mxu0 0
      %4259 = vmatpush1.bf16.msra.mxu0 %v4222
      %4260 = vmatprep.subr.bf16.mxu0 0
      %4261 = vmatpush1.bf16.msra.mxu0 %v4223
      %4262 = vmatprep.subr.bf16.mxu0 0
      %4263 = vmatpush1.bf16.msra.mxu0 %v4224
      %4264 = vmatprep.subr.bf16.mxu0 0
      %4265 = vmatpush1.bf16.msra.mxu0 %v4225
      %4266 = vmatprep.subr.bf16.mxu0 0
      %4267 = vmatpush1.bf16.msra.mxu0 %v4226
      %4268 = vmatprep.subr.bf16.mxu0 0
      %4269 = vmatpush1.bf16.msra.mxu0 %v4227
      %4270 = vmatprep.subr.bf16.mxu0 0
      %4271 = vmatpush1.bf16.msra.mxu0 %v4228
      %4272 = vmatprep.subr.bf16.mxu0 0
      %4273 = vmatpush1.bf16.msra.mxu0 %v4229
      %4274 = vmatprep.subr.bf16.mxu0 0
      %4275 = vmatpush1.bf16.msra.mxu0 %v4230
      %4276 = vmatprep.subr.bf16.mxu0 0
      %4277 = vmatpush1.bf16.msra.mxu0 %v4231
      %4278 = vmatprep.subr.bf16.mxu0 0
      %4279 = vmatpush1.bf16.msra.mxu0 %v4232
      %4280 = vmatprep.subr.bf16.mxu0 0
      %4281 = vmatpush1.bf16.msra.mxu0 %v4233
      %4282 = vmatprep.mubr.bf16.mxu0 %v4093
      %4283 = vmatmul.mubr.bf16.gmra.mrb[0].mxu0 %v4092
      %v4284 = vpop.f32.mrb[0].mxu0
      %v4285 = vadd.f32 0.0, %v4284
      %v4286 = vpop.f32.mrb[0].mxu0
      %v4287 = vpop.f32.mrb[0].mxu0
      %v4288 = vadd.f32 0.0, %v4287
      %v4289 = vpop.f32.mrb[0].mxu0
      %4290 = vmatprep.mubr.bf16.mxu0 %v4095
      %4291 = vmatmul.mubr.bf16.gmra.mrb[0].mxu0 %v4094
      %v4292 = vpop.f32.mrb[0].mxu0
      %v4293 = vadd.f32 0.0, %v4292
      %v4294 = vpop.f32.mrb[0].mxu0
      %v4295 = vpop.f32.mrb[0].mxu0
      %v4296 = vadd.f32 0.0, %v4295
      %v4297 = vpop.f32.mrb[0].mxu0
      %4298 = vmatprep.mubr.bf16.mxu0 %v4097
      %4299 = vmatmul.mubr.bf16.gmra.mrb[0].mxu0 %v4096
      %v4300 = vpop.f32.mrb[0].mxu0
      %v4301 = vadd.f32 0.0, %v4300
      %v4302 = vpop.f32.mrb[0].mxu0
      %v4303 = vpop.f32.mrb[0].mxu0
      %v4304 = vadd.f32 0.0, %v4303
      %v4305 = vpop.f32.mrb[0].mxu0
      %4306 = vmatprep.mubr.bf16.mxu0 %v4098
      %4307 = vmatmul.mubr.bf16.gmra.mrb[0].mxu0 %v4093
      %v4308 = vpop.f32.mrb[0].mxu0
      %v4309 = vadd.f32 0.0, %v4308
      %v4310 = vpop.f32.mrb[0].mxu0
      %v4311 = vpop.f32.mrb[0].mxu0
      %v4312 = vadd.f32 0.0, %v4311
      %v4313 = vpop.f32.mrb[0].mxu0
      %4314 = vmatprep.mubr.bf16.mxu0 %v4099
      %4315 = vmatmul.mubr.bf16.gmra.mrb[0].mxu0 %v4095
      %v4316 = vpop.f32.mrb[0].mxu0
      %v4317 = vadd.f32 0.0, %v4316
      %v4318 = vpop.f32.mrb[0].mxu0
      %v4319 = vpop.f32.mrb[0].mxu0
      %v4320 = vadd.f32 0.0, %v4319
      %v4321 = vpop.f32.mrb[0].mxu0
      %4322 = vmatprep.mubr.bf16.mxu0 %v4100
      %4323 = vmatmul.mubr.bf16.gmra.mrb[0].mxu0 %v4097
      %v4324 = vpop.f32.mrb[0].mxu0
      %v4325 = vadd.f32 0.0, %v4324
      %v4326 = vpop.f32.mrb[0].mxu0
      %v4327 = vpop.f32.mrb[0].mxu0
      %v4328 = vadd.f32 0.0, %v4327
      %v4329 = vpop.f32.mrb[0].mxu0
      %4330 = vmatprep.mubr.bf16.mxu0 %v4101
      %4331 = vmatmul.mubr.bf16.gmra.mrb[0].mxu0 %v4098
      %v4332 = vpop.f32.mrb[0].mxu0
      %v4333 = vadd.f32 0.0, %v4332
      %v4334 = vpop.f32.mrb[0].mxu0
      %v4335 = vpop.f32.mrb[0].mxu0
      %v4336 = vadd.f32 0.0, %v4335
      %v4337 = vpop.f32.mrb[0].mxu0
      %4338 = vmatprep.mubr.bf16.mxu0 %v4102
      %4339 = vmatmul.mubr.bf16.gmra.mrb[0].mxu0 %v4099
      %v4340 = vpop.f32.mrb[0].mxu0
      %v4341 = vadd.f32 0.0, %v4340
      %v4342 = vpop.f32.mrb[0].mxu0
      %v4343 = vpop.f32.mrb[0].mxu0
      %v4344 = vadd.f32 0.0, %v4343
      %v4345 = vpop.f32.mrb[0].mxu0
      %4346 = vmatprep.mubr.bf16.mxu0 %v4103
      %4347 = vmatmul.mubr.bf16.gmra.mrb[0].mxu0 %v4100
      %v4348 = vpop.f32.mrb[0].mxu0
      %v4349 = vadd.f32 0.0, %v4348
      %v4350 = vpop.f32.mrb[0].mxu0
      %v4351 = vpop.f32.mrb[0].mxu0
      %v4352 = vadd.f32 0.0, %v4351
      %v4353 = vpop.f32.mrb[0].mxu0
      %4354 = vmatprep.mubr.bf16.mxu0 %v4104
      %4355 = vmatmul.mubr.bf16.gmra.mrb[0].mxu0 %v4101
      %v4356 = vpop.f32.mrb[0].mxu0
      %v4357 = vadd.f32 0.0, %v4356
      %v4358 = vpop.f32.mrb[0].mxu0
      %v4359 = vpop.f32.mrb[0].mxu0
      %v4360 = vadd.f32 0.0, %v4359
      %v4361 = vpop.f32.mrb[0].mxu0
      %4362 = vmatprep.mubr.bf16.mxu0 %v4105
      %4363 = vmatmul.mubr.bf16.gmra.mrb[0].mxu0 %v4102
      %v4364 = vpop.f32.mrb[0].mxu0
      %v4365 = vadd.f32 0.0, %v4364
      %v4366 = vpop.f32.mrb[0].mxu0
      %v4367 = vpop.f32.mrb[0].mxu0
      %v4368 = vadd.f32 0.0, %v4367
      %v4369 = vpop.f32.mrb[0].mxu0
      %4370 = vmatprep.mubr.bf16.mxu0 %v4106
      %4371 = vmatmul.mubr.bf16.gmra.mrb[0].mxu0 %v4103
      %v4372 = vpop.f32.mrb[0].mxu0
      %v4373 = vadd.f32 0.0, %v4372
      %v4374 = vpop.f32.mrb[0].mxu0
      %v4375 = vpop.f32.mrb[0].mxu0
      %v4376 = vadd.f32 0.0, %v4375
      %v4377 = vpop.f32.mrb[0].mxu0
      %4378 = vmatprep.mubr.bf16.mxu0 %v4107
      %4379 = vmatmul.mubr.bf16.gmra.mrb[0].mxu0 %v4104
      %v4380 = vpop.f32.mrb[0].mxu0
      %v4381 = vadd.f32 0.0, %v4380
      %v4382 = vpop.f32.mrb[0].mxu0
      %v4383 = vpop.f32.mrb[0].mxu0
      %v4384 = vadd.f32 0.0, %v4383
      %v4385 = vpop.f32.mrb[0].mxu0
      %4386 = vmatprep.mubr.bf16.mxu0 %v4108
      %4387 = vmatmul.mubr.bf16.gmra.mrb[0].mxu0 %v4105
      %v4388 = vpop.f32.mrb[0].mxu0
      %v4389 = vadd.f32 0.0, %v4388
      %v4390 = vpop.f32.mrb[0].mxu0
      %v4391 = vpop.f32.mrb[0].mxu0
      %v4392 = vadd.f32 0.0, %v4391
      %v4393 = vpop.f32.mrb[0].mxu0
      %4394 = vmatprep.mubr.bf16.mxu0 %v4109
      %4395 = vmatmul.mubr.bf16.gmra.mrb[0].mxu0 %v4106
      %v4396 = vpop.f32.mrb[0].mxu0
      %v4397 = vadd.f32 0.0, %v4396
      %v4398 = vpop.f32.mrb[0].mxu0
      %v4399 = vpop.f32.mrb[0].mxu0
      %v4400 = vadd.f32 0.0, %v4399
      %v4401 = vpop.f32.mrb[0].mxu0
      %4402 = vmatprep.mubr.bf16.mxu0 %v4110
      %4403 = vmatmul.mubr.bf16.gmra.mrb[0].mxu0 %v4107
      %v4404 = vpop.f32.mrb[0].mxu0
      %v4405 = vadd.f32 0.0, %v4404
      %v4406 = vpop.f32.mrb[0].mxu0
      %v4407 = vpop.f32.mrb[0].mxu0
      %v4408 = vadd.f32 0.0, %v4407
      %v4409 = vpop.f32.mrb[0].mxu0
      %4410 = vmatprep.mubr.bf16.mxu0 %v4111
      %4411 = vmatmul.mubr.bf16.gmra.mrb[0].mxu0 %v4108
      %v4412 = vpop.f32.mrb[0].mxu0
      %v4413 = vadd.f32 0.0, %v4412
      %v4414 = vpop.f32.mrb[0].mxu0
      %v4415 = vpop.f32.mrb[0].mxu0
      %v4416 = vadd.f32 0.0, %v4415
      %v4417 = vpop.f32.mrb[0].mxu0
      %4418 = vmatprep.mubr.bf16.mxu0 %v4112
      %4419 = vmatmul.mubr.bf16.gmra.mrb[0].mxu0 %v4109
      %v4420 = vpop.f32.mrb[0].mxu0
      %v4421 = vadd.f32 0.0, %v4420
      %v4422 = vpop.f32.mrb[0].mxu0
      %v4423 = vpop.f32.mrb[0].mxu0
      %v4424 = vadd.f32 0.0, %v4423
      %v4425 = vpop.f32.mrb[0].mxu0
      %4426 = vmatprep.mubr.bf16.mxu0 %v4113
      %4427 = vmatmul.mubr.bf16.gmra.mrb[0].mxu0 %v4110
      %v4428 = vpop.f32.mrb[0].mxu0
      %v4429 = vadd.f32 0.0, %v4428
      %v4430 = vpop.f32.mrb[0].mxu0
      %v4431 = vpop.f32.mrb[0].mxu0
      %v4432 = vadd.f32 0.0, %v4431
      %v4433 = vpop.f32.mrb[0].mxu0
      %4434 = vmatprep.mubr.bf16.mxu0 %v4114
      %4435 = vmatmul.mubr.bf16.gmra.mrb[0].mxu0 %v4111
      %v4436 = vpop.f32.mrb[0].mxu0
      %v4437 = vadd.f32 0.0, %v4436
      %v4438 = vpop.f32.mrb[0].mxu0
      %v4439 = vpop.f32.mrb[0].mxu0
      %v4440 = vadd.f32 0.0, %v4439
      %v4441 = vpop.f32.mrb[0].mxu0
      %4442 = vmatprep.mubr.bf16.mxu0 %v4115
      %4443 = vmatmul.mubr.bf16.gmra.mrb[0].mxu0 %v4112
      %v4444 = vpop.f32.mrb[0].mxu0
      %v4445 = vadd.f32 0.0, %v4444
      %v4446 = vpop.f32.mrb[0].mxu0
      %v4447 = vpop.f32.mrb[0].mxu0
      %v4448 = vadd.f32 0.0, %v4447
      %v4449 = vpop.f32.mrb[0].mxu0
      %4450 = vmatprep.mubr.bf16.mxu0 %v4116
      %4451 = vmatmul.mubr.bf16.gmra.mrb[0].mxu0 %v4113
      %v4452 = vpop.f32.mrb[0].mxu0
      %v4453 = vadd.f32 0.0, %v4452
      %v4454 = vpop.f32.mrb[0].mxu0
      %v4455 = vpop.f32.mrb[0].mxu0
      %v4456 = vadd.f32 0.0, %v4455
      %v4457 = vpop.f32.mrb[0].mxu0
      %4458 = vmatprep.mubr.bf16.mxu0 %v4117
      %4459 = vmatmul.mubr.bf16.gmra.mrb[0].mxu0 %v4114
      %v4460 = vpop.f32.mrb[0].mxu0
      %v4461 = vadd.f32 0.0, %v4460
      %v4462 = vpop.f32.mrb[0].mxu0
      %v4463 = vpop.f32.mrb[0].mxu0
      %v4464 = vadd.f32 0.0, %v4463
      %v4465 = vpop.f32.mrb[0].mxu0
      %4466 = vmatprep.mubr.bf16.mxu0 %v4118
      %4467 = vmatmul.mubr.bf16.gmra.mrb[0].mxu0 %v4115
      %v4468 = vpop.f32.mrb[0].mxu0
      %v4469 = vadd.f32 0.0, %v4468
      %v4470 = vpop.f32.mrb[0].mxu0
      %v4471 = vpop.f32.mrb[0].mxu0
      %v4472 = vadd.f32 0.0, %v4471
      %v4473 = vpop.f32.mrb[0].mxu0
      %4474 = vmatprep.mubr.bf16.mxu0 %v4119
      %4475 = vmatmul.mubr.bf16.gmra.mrb[0].mxu0 %v4116
      %v4476 = vpop.f32.mrb[0].mxu0
      %v4477 = vadd.f32 0.0, %v4476
      %v4478 = vpop.f32.mrb[0].mxu0
      %v4479 = vpop.f32.mrb[0].mxu0
      %v4480 = vadd.f32 0.0, %v4479
      %v4481 = vpop.f32.mrb[0].mxu0
      %4482 = vmatprep.mubr.bf16.mxu0 %v4120
      %4483 = vmatmul.mubr.bf16.gmra.mrb[0].mxu0 %v4117
      %v4484 = vpop.f32.mrb[0].mxu0
      %v4485 = vadd.f32 0.0, %v4484
      %v4486 = vpop.f32.mrb[0].mxu0
      %v4487 = vpop.f32.mrb[0].mxu0
      %v4488 = vadd.f32 0.0, %v4487
      %v4489 = vpop.f32.mrb[0].mxu0
      %4490 = vmatprep.mubr.bf16.mxu0 %v4121
      %4491 = vmatmul.mubr.bf16.gmra.mrb[0].mxu0 %v4118
      %v4492 = vpop.f32.mrb[0].mxu0
      %v4493 = vadd.f32 0.0, %v4492
      %v4494 = vpop.f32.mrb[0].mxu0
      %v4495 = vpop.f32.mrb[0].mxu0
      %v4496 = vpop.f32.mrb[0].mxu0
      %4497 = vdwg.mxu0
      %s4498 = scalar_lea.vmem %s3, 128
      %v4499 = vld [vmem:[%s4498] sm:$0xf]
      %v4500 = vld [vmem:[%s4498 + $0x4] sm:$0xf]
      %v4501 = vld [vmem:[%s4498 + $0x8] sm:$0xf]
      %v4502 = vld [vmem:[%s4498 + $0xc] sm:$0xf]
      %v4503 = vld [vmem:[%s4498 + $0x10] sm:$0xf]
      %v4504 = vld [vmem:[%s4498 + $0x14] sm:$0xf]
      %v4505 = vld [vmem:[%s4498 + $0x18] sm:$0xf]
      %v4506 = vld [vmem:[%s4498 + $0x1c] sm:$0xf]
      %v4507 = vld [vmem:[%s4498 + $0x20] sm:$0xf]
      %v4508 = vld [vmem:[%s4498 + $0x24] sm:$0xf]
      %v4509 = vld [vmem:[%s4498 + $0x28] sm:$0xf]
      %v4510 = vld [vmem:[%s4498 + $0x2c] sm:$0xf]
      %v4511 = vld [vmem:[%s4498 + $0x30] sm:$0xf]
      %v4512 = vld [vmem:[%s4498 + $0x34] sm:$0xf]
      %v4513 = vld [vmem:[%s4498 + $0x38] sm:$0xf]
      %v4514 = vld [vmem:[%s4498 + $0x3c] sm:$0xf]
      %v4515 = vld [vmem:[%s4498 + $0x40] sm:$0xf]
      %v4516 = vld [vmem:[%s4498 + $0x44] sm:$0xf]
      %v4517 = vld [vmem:[%s4498 + $0x48] sm:$0xf]
      %v4518 = vld [vmem:[%s4498 + $0x4c] sm:$0xf]
      %v4519 = vld [vmem:[%s4498 + $0x50] sm:$0xf]
      %v4520 = vld [vmem:[%s4498 + $0x54] sm:$0xf]
      %v4521 = vld [vmem:[%s4498 + $0x58] sm:$0xf]
      %v4522 = vld [vmem:[%s4498 + $0x5c] sm:$0xf]
      %v4523 = vld [vmem:[%s4498 + $0x60] sm:$0xf]
      %v4524 = vld [vmem:[%s4498 + $0x64] sm:$0xf]
      %v4525 = vld [vmem:[%s4498 + $0x68] sm:$0xf]
      %v4526 = vld [vmem:[%s4498 + $0x6c] sm:$0xf]
      %v4527 = vld [vmem:[%s4498 + $0x70] sm:$0xf]
      %v4528 = vld [vmem:[%s4498 + $0x74] sm:$0xf]
      %v4529 = vld [vmem:[%s4498 + $0x78] sm:$0xf]
      %v4530 = vld [vmem:[%s4498 + $0x7c] sm:$0xf]
      %v4563 = vunpack.c.l.b16 %v4499
      %v4564 = vunpack.c.l.b16 %v4500
      %v4565 = vunpack.c.l.b16 %v4501
      %v4566 = vunpack.c.l.b16 %v4502
      %v4567 = vunpack.c.l.b16 %v4503
      %v4568 = vunpack.c.l.b16 %v4504
      %v4569 = vunpack.c.l.b16 %v4505
      %v4570 = vunpack.c.l.b16 %v4506
      %v4571 = vunpack.c.l.b16 %v4507
      %v4572 = vunpack.c.l.b16 %v4508
      %v4573 = vunpack.c.l.b16 %v4509
      %v4574 = vunpack.c.l.b16 %v4510
      %v4575 = vunpack.c.l.b16 %v4511
      %v4576 = vunpack.c.l.b16 %v4512
      %v4577 = vunpack.c.l.b16 %v4513
      %v4578 = vunpack.c.l.b16 %v4514
      %v4579 = vunpack.c.l.b16 %v4515
      %v4580 = vunpack.c.l.b16 %v4516
      %v4581 = vunpack.c.l.b16 %v4517
      %v4582 = vunpack.c.l.b16 %v4518
      %v4583 = vunpack.c.l.b16 %v4519
      %v4584 = vunpack.c.l.b16 %v4520
      %v4585 = vunpack.c.l.b16 %v4521
      %v4586 = vunpack.c.l.b16 %v4522
      %v4587 = vunpack.c.l.b16 %v4523
      %v4588 = vunpack.c.l.b16 %v4524
      %v4589 = vunpack.c.l.b16 %v4525
      %v4590 = vunpack.c.l.b16 %v4526
      %v4591 = vunpack.c.l.b16 %v4527
      %v4592 = vunpack.c.l.b16 %v4528
      %v4593 = vunpack.c.l.b16 %v4529
      %v4594 = vunpack.c.l.b16 %v4530
      %v4595 = vpack.c.b16 %v4564, %v4563
      %v4596 = vpack.c.b16 %v4566, %v4565
      %v4597 = vpack.c.b16 %v4568, %v4567
      %v4598 = vpack.c.b16 %v4570, %v4569
      %v4599 = vpack.c.b16 %v4572, %v4571
      %v4600 = vpack.c.b16 %v4574, %v4573
      %v4601 = vpack.c.b16 %v4576, %v4575
      %v4602 = vpack.c.b16 %v4578, %v4577
      %v4603 = vpack.c.b16 %v4580, %v4579
      %v4604 = vpack.c.b16 %v4582, %v4581
      %v4605 = vpack.c.b16 %v4584, %v4583
      %v4606 = vpack.c.b16 %v4586, %v4585
      %v4607 = vpack.c.b16 %v4588, %v4587
      %v4608 = vpack.c.b16 %v4590, %v4589
      %v4609 = vpack.c.b16 %v4592, %v4591
      %v4610 = vpack.c.b16 %v4594, %v4593
      %4627 = vmatprep.subr.bf16.mxu0 0
      %4628 = vmatpush1.bf16.msra.mxu0 %v4595
      %4629 = vmatprep.subr.bf16.mxu0 0
      %4630 = vmatpush1.bf16.msra.mxu0 %v4596
      %4631 = vmatprep.subr.bf16.mxu0 0
      %4632 = vmatpush1.bf16.msra.mxu0 %v4597
      %4633 = vmatprep.subr.bf16.mxu0 0
      %4634 = vmatpush1.bf16.msra.mxu0 %v4598
      %4635 = vmatprep.subr.bf16.mxu0 0
      %4636 = vmatpush1.bf16.msra.mxu0 %v4599
      %4637 = vmatprep.subr.bf16.mxu0 0
      %4638 = vmatpush1.bf16.msra.mxu0 %v4600
      %4639 = vmatprep.subr.bf16.mxu0 0
      %4640 = vmatpush1.bf16.msra.mxu0 %v4601
      %4641 = vmatprep.subr.bf16.mxu0 0
      %4642 = vmatpush1.bf16.msra.mxu0 %v4602
      %4643 = vmatprep.subr.bf16.mxu0 0
      %4644 = vmatpush1.bf16.msra.mxu0 %v4603
      %4645 = vmatprep.subr.bf16.mxu0 0
      %4646 = vmatpush1.bf16.msra.mxu0 %v4604
      %4647 = vmatprep.subr.bf16.mxu0 0
      %4648 = vmatpush1.bf16.msra.mxu0 %v4605
      %4649 = vmatprep.subr.bf16.mxu0 0
      %4650 = vmatpush1.bf16.msra.mxu0 %v4606
      %4651 = vmatprep.subr.bf16.mxu0 0
      %4652 = vmatpush1.bf16.msra.mxu0 %v4607
      %4653 = vmatprep.subr.bf16.mxu0 0
      %4654 = vmatpush1.bf16.msra.mxu0 %v4608
      %4655 = vmatprep.subr.bf16.mxu0 0
      %4656 = vmatpush1.bf16.msra.mxu0 %v4609
      %4657 = vmatprep.subr.bf16.mxu0 0
      %4658 = vmatpush1.bf16.msra.mxu0 %v4610
      %4659 = vmatprep.mubr.bf16.mxu0 %v4093
      %4660 = vmatmul.mubr.bf16.gmra.mrb[0].mxu0 %v4092
      %v4661 = vpop.f32.mrb[0].mxu0
      %v4662 = vadd.f32 0.0, %v4661
      %v4663 = vpop.f32.mrb[0].mxu0
      %v4664 = vpop.f32.mrb[0].mxu0
      %v4665 = vadd.f32 0.0, %v4664
      %v4666 = vpop.f32.mrb[0].mxu0
      %4667 = vmatprep.mubr.bf16.mxu0 %v4095
      %4668 = vmatmul.mubr.bf16.gmra.mrb[0].mxu0 %v4094
      %v4669 = vpop.f32.mrb[0].mxu0
      %v4670 = vadd.f32 0.0, %v4669
      %v4671 = vpop.f32.mrb[0].mxu0
      %v4672 = vpop.f32.mrb[0].mxu0
      %v4673 = vadd.f32 0.0, %v4672
      %v4674 = vpop.f32.mrb[0].mxu0
      %4675 = vmatprep.mubr.bf16.mxu0 %v4097
      %4676 = vmatmul.mubr.bf16.gmra.mrb[0].mxu0 %v4096
      %v4677 = vpop.f32.mrb[0].mxu0
      %v4678 = vadd.f32 0.0, %v4677
      %v4679 = vpop.f32.mrb[0].mxu0
      %v4680 = vpop.f32.mrb[0].mxu0
      %v4681 = vadd.f32 0.0, %v4680
      %v4682 = vpop.f32.mrb[0].mxu0
      %4683 = vmatprep.mubr.bf16.mxu0 %v4098
      %4684 = vmatmul.mubr.bf16.gmra.mrb[0].mxu0 %v4093
      %v4685 = vpop.f32.mrb[0].mxu0
      %v4686 = vadd.f32 0.0, %v4685
      %v4687 = vpop.f32.mrb[0].mxu0
      %v4688 = vpop.f32.mrb[0].mxu0
      %v4689 = vadd.f32 0.0, %v4688
      %v4690 = vpop.f32.mrb[0].mxu0
      %4691 = vmatprep.mubr.bf16.mxu0 %v4099
      %4692 = vmatmul.mubr.bf16.gmra.mrb[0].mxu0 %v4095
      %v4693 = vpop.f32.mrb[0].mxu0
      %v4694 = vadd.f32 0.0, %v4693
      %v4695 = vpop.f32.mrb[0].mxu0
      %v4696 = vpop.f32.mrb[0].mxu0
      %v4697 = vadd.f32 0.0, %v4696
      %v4698 = vpop.f32.mrb[0].mxu0
      %4699 = vmatprep.mubr.bf16.mxu0 %v4100
      %4700 = vmatmul.mubr.bf16.gmra.mrb[0].mxu0 %v4097
      %v4701 = vpop.f32.mrb[0].mxu0
      %v4702 = vadd.f32 0.0, %v4701
      %v4703 = vpop.f32.mrb[0].mxu0
      %v4704 = vpop.f32.mrb[0].mxu0
      %v4705 = vadd.f32 0.0, %v4704
      %v4706 = vpop.f32.mrb[0].mxu0
      %4707 = vmatprep.mubr.bf16.mxu0 %v4101
      %4708 = vmatmul.mubr.bf16.gmra.mrb[0].mxu0 %v4098
      %v4709 = vpop.f32.mrb[0].mxu0
      %v4710 = vadd.f32 0.0, %v4709
      %v4711 = vpop.f32.mrb[0].mxu0
      %v4712 = vpop.f32.mrb[0].mxu0
      %v4713 = vadd.f32 0.0, %v4712
      %v4714 = vpop.f32.mrb[0].mxu0
      %4715 = vmatprep.mubr.bf16.mxu0 %v4102
      %4716 = vmatmul.mubr.bf16.gmra.mrb[0].mxu0 %v4099
      %v4717 = vpop.f32.mrb[0].mxu0
      %v4718 = vadd.f32 0.0, %v4717
      %v4719 = vpop.f32.mrb[0].mxu0
      %v4720 = vpop.f32.mrb[0].mxu0
      %v4721 = vadd.f32 0.0, %v4720
      %v4722 = vpop.f32.mrb[0].mxu0
      %4723 = vmatprep.mubr.bf16.mxu0 %v4103
      %4724 = vmatmul.mubr.bf16.gmra.mrb[0].mxu0 %v4100
      %v4725 = vpop.f32.mrb[0].mxu0
      %v4726 = vadd.f32 0.0, %v4725
      %v4727 = vpop.f32.mrb[0].mxu0
      %v4728 = vpop.f32.mrb[0].mxu0
      %v4729 = vadd.f32 0.0, %v4728
      %v4730 = vpop.f32.mrb[0].mxu0
      %4731 = vmatprep.mubr.bf16.mxu0 %v4104
      %4732 = vmatmul.mubr.bf16.gmra.mrb[0].mxu0 %v4101
      %v4733 = vpop.f32.mrb[0].mxu0
      %v4734 = vadd.f32 0.0, %v4733
      %v4735 = vpop.f32.mrb[0].mxu0
      %v4736 = vpop.f32.mrb[0].mxu0
      %v4737 = vadd.f32 0.0, %v4736
      %v4738 = vpop.f32.mrb[0].mxu0
      %4739 = vmatprep.mubr.bf16.mxu0 %v4105
      %4740 = vmatmul.mubr.bf16.gmra.mrb[0].mxu0 %v4102
      %v4741 = vpop.f32.mrb[0].mxu0
      %v4742 = vadd.f32 0.0, %v4741
      %v4743 = vpop.f32.mrb[0].mxu0
      %v4744 = vpop.f32.mrb[0].mxu0
      %v4745 = vadd.f32 0.0, %v4744
      %v4746 = vpop.f32.mrb[0].mxu0
      %4747 = vmatprep.mubr.bf16.mxu0 %v4106
      %4748 = vmatmul.mubr.bf16.gmra.mrb[0].mxu0 %v4103
      %v4749 = vpop.f32.mrb[0].mxu0
      %v4750 = vadd.f32 0.0, %v4749
      %v4751 = vpop.f32.mrb[0].mxu0
      %v4752 = vpop.f32.mrb[0].mxu0
      %v4753 = vadd.f32 0.0, %v4752
      %v4754 = vpop.f32.mrb[0].mxu0
      %4755 = vmatprep.mubr.bf16.mxu0 %v4107
      %4756 = vmatmul.mubr.bf16.gmra.mrb[0].mxu0 %v4104
      %v4757 = vpop.f32.mrb[0].mxu0
      %v4758 = vadd.f32 0.0, %v4757
      %v4759 = vpop.f32.mrb[0].mxu0
      %v4760 = vpop.f32.mrb[0].mxu0
      %v4761 = vadd.f32 0.0, %v4760
      %v4762 = vpop.f32.mrb[0].mxu0
      %4763 = vmatprep.mubr.bf16.mxu0 %v4108
      %4764 = vmatmul.mubr.bf16.gmra.mrb[0].mxu0 %v4105
      %v4765 = vpop.f32.mrb[0].mxu0
      %v4766 = vadd.f32 0.0, %v4765
      %v4767 = vpop.f32.mrb[0].mxu0
      %v4768 = vpop.f32.mrb[0].mxu0
      %v4769 = vadd.f32 0.0, %v4768
      %v4770 = vpop.f32.mrb[0].mxu0
      %4771 = vmatprep.mubr.bf16.mxu0 %v4109
      %4772 = vmatmul.mubr.bf16.gmra.mrb[0].mxu0 %v4106
      %v4773 = vpop.f32.mrb[0].mxu0
      %v4774 = vadd.f32 0.0, %v4773
      %v4775 = vpop.f32.mrb[0].mxu0
      %v4776 = vpop.f32.mrb[0].mxu0
      %v4777 = vadd.f32 0.0, %v4776
      %v4778 = vpop.f32.mrb[0].mxu0
      %4779 = vmatprep.mubr.bf16.mxu0 %v4110
      %4780 = vmatmul.mubr.bf16.gmra.mrb[0].mxu0 %v4107
      %v4781 = vpop.f32.mrb[0].mxu0
      %v4782 = vadd.f32 0.0, %v4781
      %v4783 = vpop.f32.mrb[0].mxu0
      %v4784 = vpop.f32.mrb[0].mxu0
      %v4785 = vadd.f32 0.0, %v4784
      %v4786 = vpop.f32.mrb[0].mxu0
      %4787 = vmatprep.mubr.bf16.mxu0 %v4111
      %4788 = vmatmul.mubr.bf16.gmra.mrb[0].mxu0 %v4108
      %v4789 = vpop.f32.mrb[0].mxu0
      %v4790 = vadd.f32 0.0, %v4789
      %v4791 = vpop.f32.mrb[0].mxu0
      %v4792 = vpop.f32.mrb[0].mxu0
      %v4793 = vadd.f32 0.0, %v4792
      %v4794 = vpop.f32.mrb[0].mxu0
      %4795 = vmatprep.mubr.bf16.mxu0 %v4112
      %4796 = vmatmul.mubr.bf16.gmra.mrb[0].mxu0 %v4109
      %v4797 = vpop.f32.mrb[0].mxu0
      %v4798 = vadd.f32 0.0, %v4797
      %v4799 = vpop.f32.mrb[0].mxu0
      %v4800 = vpop.f32.mrb[0].mxu0
      %v4801 = vadd.f32 0.0, %v4800
      %v4802 = vpop.f32.mrb[0].mxu0
      %4803 = vmatprep.mubr.bf16.mxu0 %v4113
      %4804 = vmatmul.mubr.bf16.gmra.mrb[0].mxu0 %v4110
      %v4805 = vpop.f32.mrb[0].mxu0
      %v4806 = vadd.f32 0.0, %v4805
      %v4807 = vpop.f32.mrb[0].mxu0
      %v4808 = vpop.f32.mrb[0].mxu0
      %v4809 = vadd.f32 0.0, %v4808
      %v4810 = vpop.f32.mrb[0].mxu0
      %4811 = vmatprep.mubr.bf16.mxu0 %v4114
      %4812 = vmatmul.mubr.bf16.gmra.mrb[0].mxu0 %v4111
      %v4813 = vpop.f32.mrb[0].mxu0
      %v4814 = vadd.f32 0.0, %v4813
      %v4815 = vpop.f32.mrb[0].mxu0
      %v4816 = vpop.f32.mrb[0].mxu0
      %v4817 = vadd.f32 0.0, %v4816
      %v4818 = vpop.f32.mrb[0].mxu0
      %4819 = vmatprep.mubr.bf16.mxu0 %v4115
      %4820 = vmatmul.mubr.bf16.gmra.mrb[0].mxu0 %v4112
      %v4821 = vpop.f32.mrb[0].mxu0
      %v4822 = vadd.f32 0.0, %v4821
      %v4823 = vpop.f32.mrb[0].mxu0
      %v4824 = vpop.f32.mrb[0].mxu0
      %v4825 = vadd.f32 0.0, %v4824
      %v4826 = vpop.f32.mrb[0].mxu0
      %4827 = vmatprep.mubr.bf16.mxu0 %v4116
      %4828 = vmatmul.mubr.bf16.gmra.mrb[0].mxu0 %v4113
      %v4829 = vpop.f32.mrb[0].mxu0
      %v4830 = vadd.f32 0.0, %v4829
      %v4831 = vpop.f32.mrb[0].mxu0
      %v4832 = vpop.f32.mrb[0].mxu0
      %v4833 = vadd.f32 0.0, %v4832
      %v4834 = vpop.f32.mrb[0].mxu0
      %4835 = vmatprep.mubr.bf16.mxu0 %v4117
      %4836 = vmatmul.mubr.bf16.gmra.mrb[0].mxu0 %v4114
      %v4837 = vpop.f32.mrb[0].mxu0
      %v4838 = vadd.f32 0.0, %v4837
      %v4839 = vpop.f32.mrb[0].mxu0
      %v4840 = vpop.f32.mrb[0].mxu0
      %v4841 = vadd.f32 0.0, %v4840
      %v4842 = vpop.f32.mrb[0].mxu0
      %4843 = vmatprep.mubr.bf16.mxu0 %v4118
      %4844 = vmatmul.mubr.bf16.gmra.mrb[0].mxu0 %v4115
      %v4845 = vpop.f32.mrb[0].mxu0
      %v4846 = vadd.f32 0.0, %v4845
      %v4847 = vpop.f32.mrb[0].mxu0
      %v4848 = vpop.f32.mrb[0].mxu0
      %v4849 = vadd.f32 0.0, %v4848
      %v4850 = vpop.f32.mrb[0].mxu0
      %4851 = vmatprep.mubr.bf16.mxu0 %v4119
      %4852 = vmatmul.mubr.bf16.gmra.mrb[0].mxu0 %v4116
      %v4853 = vpop.f32.mrb[0].mxu0
      %v4854 = vadd.f32 0.0, %v4853
      %v4855 = vpop.f32.mrb[0].mxu0
      %v4856 = vpop.f32.mrb[0].mxu0
      %v4857 = vadd.f32 0.0, %v4856
      %v4858 = vpop.f32.mrb[0].mxu0
      %4859 = vmatprep.mubr.bf16.mxu0 %v4120
      %4860 = vmatmul.mubr.bf16.gmra.mrb[0].mxu0 %v4117
      %v4861 = vpop.f32.mrb[0].mxu0
      %v4862 = vadd.f32 0.0, %v4861
      %v4863 = vpop.f32.mrb[0].mxu0
      %v4864 = vpop.f32.mrb[0].mxu0
      %v4865 = vadd.f32 0.0, %v4864
      %v4866 = vpop.f32.mrb[0].mxu0
      %4867 = vmatprep.mubr.bf16.mxu0 %v4121
      %4868 = vmatmul.mubr.bf16.gmra.mrb[0].mxu0 %v4118
      %v4869 = vpop.f32.mrb[0].mxu0
      %v4870 = vadd.f32 0.0, %v4869
      %v4871 = vpop.f32.mrb[0].mxu0
      %v4872 = vpop.f32.mrb[0].mxu0
      %v4873 = vadd.f32 0.0, %v4872
      %v4874 = vpop.f32.mrb[0].mxu0
      %4875 = vdwg.mxu0
      %vm4930 = vcmask 1046528
      %v4931 = vrot.slane %v4662, 1
      %v4932 = vrot.slane %v4665, 1
      %v4933 = vsel %vm4930, %v4931, %v4932
      %v4934 = vrot.slane %v4670, 1
      %v4935 = vsel %vm4930, %v4932, %v4934
      %v4936 = vrot.slane %v4673, 1
      %v4937 = vsel %vm4930, %v4934, %v4936
      %v4938 = vrot.slane %v4678, 1
      %v4939 = vsel %vm4930, %v4936, %v4938
      %v4940 = vrot.slane %v4681, 1
      %v4941 = vsel %vm4930, %v4938, %v4940
      %v4942 = vrot.slane %v4686, 1
      %v4943 = vsel %vm4930, %v4940, %v4942
      %v4944 = vrot.slane %v4689, 1
      %v4945 = vsel %vm4930, %v4942, %v4944
      %v4946 = vrot.slane %v4694, 1
      %v4947 = vsel %vm4930, %v4944, %v4946
      %v4948 = vrot.slane %v4697, 1
      %v4949 = vsel %vm4930, %v4946, %v4948
      %v4950 = vrot.slane %v4702, 1
      %v4951 = vsel %vm4930, %v4948, %v4950
      %v4952 = vrot.slane %v4705, 1
      %v4953 = vsel %vm4930, %v4950, %v4952
      %v4954 = vrot.slane %v4710, 1
      %v4955 = vsel %vm4930, %v4952, %v4954
      %v4956 = vrot.slane %v4713, 1
      %v4957 = vsel %vm4930, %v4954, %v4956
      %v4958 = vrot.slane %v4718, 1
      %v4959 = vsel %vm4930, %v4956, %v4958
      %v4960 = vrot.slane %v4721, 1
      %v4961 = vsel %vm4930, %v4958, %v4960
      %v4962 = vrot.slane %v4726, 1
      %v4963 = vsel %vm4930, %v4960, %v4962
      %v4964 = vrot.slane %v4729, 1
      %v4965 = vsel %vm4930, %v4962, %v4964
      %v4966 = vrot.slane %v4734, 1
      %v4967 = vsel %vm4930, %v4964, %v4966
      %v4968 = vrot.slane %v4737, 1
      %v4969 = vsel %vm4930, %v4966, %v4968
      %v4970 = vrot.slane %v4742, 1
      %v4971 = vsel %vm4930, %v4968, %v4970
      %v4972 = vrot.slane %v4745, 1
      %v4973 = vsel %vm4930, %v4970, %v4972
      %v4974 = vrot.slane %v4750, 1
      %v4975 = vsel %vm4930, %v4972, %v4974
      %v4976 = vrot.slane %v4753, 1
      %v4977 = vsel %vm4930, %v4974, %v4976
      %v4978 = vrot.slane %v4758, 1
      %v4979 = vsel %vm4930, %v4976, %v4978
      %v4980 = vrot.slane %v4761, 1
      %v4981 = vsel %vm4930, %v4978, %v4980
      %v4982 = vrot.slane %v4766, 1
      %v4983 = vsel %vm4930, %v4980, %v4982
      %v4984 = vrot.slane %v4769, 1
      %v4985 = vsel %vm4930, %v4982, %v4984
      %v4986 = vrot.slane %v4774, 1
      %v4987 = vsel %vm4930, %v4984, %v4986
      %v4988 = vrot.slane %v4777, 1
      %v4989 = vsel %vm4930, %v4986, %v4988
      %v4990 = vrot.slane %v4782, 1
      %v4991 = vsel %vm4930, %v4988, %v4990
      %v4992 = vrot.slane %v4785, 1
      %v4993 = vsel %vm4930, %v4990, %v4992
      %v4994 = vrot.slane %v4790, 1
      %v4995 = vsel %vm4930, %v4992, %v4994
      %v4996 = vrot.slane %v4793, 1
      %v4997 = vsel %vm4930, %v4994, %v4996
      %v4998 = vrot.slane %v4798, 1
      %v4999 = vsel %vm4930, %v4996, %v4998
      %v5000 = vrot.slane %v4801, 1
      %v5001 = vsel %vm4930, %v4998, %v5000
      %v5002 = vrot.slane %v4806, 1
      %v5003 = vsel %vm4930, %v5000, %v5002
      %v5004 = vrot.slane %v4809, 1
      %v5005 = vsel %vm4930, %v5002, %v5004
      %v5006 = vrot.slane %v4814, 1
      %v5007 = vsel %vm4930, %v5004, %v5006
      %v5008 = vrot.slane %v4817, 1
      %v5009 = vsel %vm4930, %v5006, %v5008
      %v5010 = vrot.slane %v4822, 1
      %v5011 = vsel %vm4930, %v5008, %v5010
      %v5012 = vrot.slane %v4825, 1
      %v5013 = vsel %vm4930, %v5010, %v5012
      %v5014 = vrot.slane %v4830, 1
      %v5015 = vsel %vm4930, %v5012, %v5014
      %v5016 = vrot.slane %v4833, 1
      %v5017 = vsel %vm4930, %v5014, %v5016
      %v5018 = vrot.slane %v4838, 1
      %v5019 = vsel %vm4930, %v5016, %v5018
      %v5020 = vrot.slane %v4841, 1
      %v5021 = vsel %vm4930, %v5018, %v5020
      %v5022 = vrot.slane %v4846, 1
      %v5023 = vsel %vm4930, %v5020, %v5022
      %v5024 = vrot.slane %v4849, 1
      %v5025 = vsel %vm4930, %v5022, %v5024
      %v5026 = vrot.slane %v4854, 1
      %v5027 = vsel %vm4930, %v5024, %v5026
      %v5028 = vrot.slane %v4857, 1
      %v5029 = vsel %vm4930, %v5026, %v5028
      %v5030 = vrot.slane %v4862, 1
      %v5031 = vsel %vm4930, %v5028, %v5030
      %v5032 = vrot.slane %v4865, 1
      %v5033 = vsel %vm4930, %v5030, %v5032
      %v5034 = vrot.slane %v4870, 1
      %v5035 = vsel %vm4930, %v5032, %v5034
      %v5036 = vrot.slane %v4873, 1
      %v5037 = vsel %vm4930, %v5034, %v5036
      %v5091 = vadd.f32 %v4285, %v4933
      %v5092 = vadd.f32 %v4288, %v4935
      %v5093 = vadd.f32 %v4293, %v4937
      %v5094 = vadd.f32 %v4296, %v4939
      %v5095 = vadd.f32 %v4301, %v4941
      %v5096 = vadd.f32 %v4304, %v4943
      %v5097 = vadd.f32 %v4309, %v4945
      %v5098 = vadd.f32 %v4312, %v4947
      %v5099 = vadd.f32 %v4317, %v4949
      %v5100 = vadd.f32 %v4320, %v4951
      %v5101 = vadd.f32 %v4325, %v4953
      %v5102 = vadd.f32 %v4328, %v4955
      %v5103 = vadd.f32 %v4333, %v4957
      %v5104 = vadd.f32 %v4336, %v4959
      %v5105 = vadd.f32 %v4341, %v4961
      %v5106 = vadd.f32 %v4344, %v4963
      %v5107 = vadd.f32 %v4349, %v4965
      %v5108 = vadd.f32 %v4352, %v4967
      %v5109 = vadd.f32 %v4357, %v4969
      %v5110 = vadd.f32 %v4360, %v4971
      %v5111 = vadd.f32 %v4365, %v4973
      %v5112 = vadd.f32 %v4368, %v4975
      %v5113 = vadd.f32 %v4373, %v4977
      %v5114 = vadd.f32 %v4376, %v4979
      %v5115 = vadd.f32 %v4381, %v4981
      %v5116 = vadd.f32 %v4384, %v4983
      %v5117 = vadd.f32 %v4389, %v4985
      %v5118 = vadd.f32 %v4392, %v4987
      %v5119 = vadd.f32 %v4397, %v4989
      %v5120 = vadd.f32 %v4400, %v4991
      %v5121 = vadd.f32 %v4405, %v4993
      %v5122 = vadd.f32 %v4408, %v4995
      %v5123 = vadd.f32 %v4413, %v4997
      %v5124 = vadd.f32 %v4416, %v4999
      %v5125 = vadd.f32 %v4421, %v5001
      %v5126 = vadd.f32 %v4424, %v5003
      %v5127 = vadd.f32 %v4429, %v5005
      %v5128 = vadd.f32 %v4432, %v5007
      %v5129 = vadd.f32 %v4437, %v5009
      %v5130 = vadd.f32 %v4440, %v5011
      %v5131 = vadd.f32 %v4445, %v5013
      %v5132 = vadd.f32 %v4448, %v5015
      %v5133 = vadd.f32 %v4453, %v5017
      %v5134 = vadd.f32 %v4456, %v5019
      %v5135 = vadd.f32 %v4461, %v5021
      %v5136 = vadd.f32 %v4464, %v5023
      %v5137 = vadd.f32 %v4469, %v5025
      %v5138 = vadd.f32 %v4472, %v5027
      %v5139 = vadd.f32 %v4477, %v5029
      %v5140 = vadd.f32 %v4480, %v5031
      %v5141 = vadd.f32 %v4485, %v5033
      %v5142 = vadd.f32 %v4488, %v5035
      %v5143 = vadd.f32 %v4493, %v5037
      %v5144 = vld [vmem:[%s4] sm:$0x1]
      %v5146 = vlaneseq
      %v5147 = vshrl.u32 %v5146, 7
      %v5148 = vsub.s32 0, %v5147
      %v5149 = vrot.slane %v5144, %v5148
      %v5151 = vadd.f32 %v5091, %v5149
      %v5152 = vadd.f32 %v5092, %v5149
      %v5153 = vadd.f32 %v5093, %v5149
      %v5154 = vadd.f32 %v5094, %v5149
      %v5155 = vadd.f32 %v5095, %v5149
      %v5156 = vadd.f32 %v5096, %v5149
      %v5157 = vadd.f32 %v5097, %v5149
      %v5158 = vadd.f32 %v5098, %v5149
      %v5159 = vadd.f32 %v5099, %v5149
      %v5160 = vadd.f32 %v5100, %v5149
      %v5161 = vadd.f32 %v5101, %v5149
      %v5162 = vadd.f32 %v5102, %v5149
      %v5163 = vadd.f32 %v5103, %v5149
      %v5164 = vadd.f32 %v5104, %v5149
      %v5165 = vadd.f32 %v5105, %v5149
      %v5166 = vadd.f32 %v5106, %v5149
      %v5167 = vadd.f32 %v5107, %v5149
      %v5168 = vadd.f32 %v5108, %v5149
      %v5169 = vadd.f32 %v5109, %v5149
      %v5170 = vadd.f32 %v5110, %v5149
      %v5171 = vadd.f32 %v5111, %v5149
      %v5172 = vadd.f32 %v5112, %v5149
      %v5173 = vadd.f32 %v5113, %v5149
      %v5174 = vadd.f32 %v5114, %v5149
      %v5175 = vadd.f32 %v5115, %v5149
      %v5176 = vadd.f32 %v5116, %v5149
      %v5177 = vadd.f32 %v5117, %v5149
      %v5178 = vadd.f32 %v5118, %v5149
      %v5179 = vadd.f32 %v5119, %v5149
      %v5180 = vadd.f32 %v5120, %v5149
      %v5181 = vadd.f32 %v5121, %v5149
      %v5182 = vadd.f32 %v5122, %v5149
      %v5183 = vadd.f32 %v5123, %v5149
      %v5184 = vadd.f32 %v5124, %v5149
      %v5185 = vadd.f32 %v5125, %v5149
      %v5186 = vadd.f32 %v5126, %v5149
      %v5187 = vadd.f32 %v5127, %v5149
      %v5188 = vadd.f32 %v5128, %v5149
      %v5189 = vadd.f32 %v5129, %v5149
      %v5190 = vadd.f32 %v5130, %v5149
      %v5191 = vadd.f32 %v5131, %v5149
      %v5192 = vadd.f32 %v5132, %v5149
      %v5193 = vadd.f32 %v5133, %v5149
      %v5194 = vadd.f32 %v5134, %v5149
      %v5195 = vadd.f32 %v5135, %v5149
      %v5196 = vadd.f32 %v5136, %v5149
      %v5197 = vadd.f32 %v5137, %v5149
      %v5198 = vadd.f32 %v5138, %v5149
      %v5199 = vadd.f32 %v5139, %v5149
      %v5200 = vadd.f32 %v5140, %v5149
      %v5201 = vadd.f32 %v5141, %v5149
      %v5202 = vadd.f32 %v5142, %v5149
      %v5203 = vadd.f32 %v5143, %v5149
      %v5204 = vmax.f32 %v5151, 0.0
      %v5205 = vmax.f32 %v5152, 0.0
      %v5206 = vmax.f32 %v5153, 0.0
      %v5207 = vmax.f32 %v5154, 0.0
      %v5208 = vmax.f32 %v5155, 0.0
      %v5209 = vmax.f32 %v5156, 0.0
      %v5210 = vmax.f32 %v5157, 0.0
      %v5211 = vmax.f32 %v5158, 0.0
      %v5212 = vmax.f32 %v5159, 0.0
      %v5213 = vmax.f32 %v5160, 0.0
      %v5214 = vmax.f32 %v5161, 0.0
      %v5215 = vmax.f32 %v5162, 0.0
      %v5216 = vmax.f32 %v5163, 0.0
      %v5217 = vmax.f32 %v5164, 0.0
      %v5218 = vmax.f32 %v5165, 0.0
      %v5219 = vmax.f32 %v5166, 0.0
      %v5220 = vmax.f32 %v5167, 0.0
      %v5221 = vmax.f32 %v5168, 0.0
      %v5222 = vmax.f32 %v5169, 0.0
      %v5223 = vmax.f32 %v5170, 0.0
      %v5224 = vmax.f32 %v5171, 0.0
      %v5225 = vmax.f32 %v5172, 0.0
      %v5226 = vmax.f32 %v5173, 0.0
      %v5227 = vmax.f32 %v5174, 0.0
      %v5228 = vmax.f32 %v5175, 0.0
      %v5229 = vmax.f32 %v5176, 0.0
      %v5230 = vmax.f32 %v5177, 0.0
      %v5231 = vmax.f32 %v5178, 0.0
      %v5232 = vmax.f32 %v5179, 0.0
      %v5233 = vmax.f32 %v5180, 0.0
      %v5234 = vmax.f32 %v5181, 0.0
      %v5235 = vmax.f32 %v5182, 0.0
      %v5236 = vmax.f32 %v5183, 0.0
      %v5237 = vmax.f32 %v5184, 0.0
      %v5238 = vmax.f32 %v5185, 0.0
      %v5239 = vmax.f32 %v5186, 0.0
      %v5240 = vmax.f32 %v5187, 0.0
      %v5241 = vmax.f32 %v5188, 0.0
      %v5242 = vmax.f32 %v5189, 0.0
      %v5243 = vmax.f32 %v5190, 0.0
      %v5244 = vmax.f32 %v5191, 0.0
      %v5245 = vmax.f32 %v5192, 0.0
      %v5246 = vmax.f32 %v5193, 0.0
      %v5247 = vmax.f32 %v5194, 0.0
      %v5248 = vmax.f32 %v5195, 0.0
      %v5249 = vmax.f32 %v5196, 0.0
      %v5250 = vmax.f32 %v5197, 0.0
      %v5251 = vmax.f32 %v5198, 0.0
      %v5252 = vmax.f32 %v5199, 0.0
      %v5253 = vmax.f32 %v5200, 0.0
      %v5254 = vmax.f32 %v5201, 0.0
      %v5255 = vmax.f32 %v5202, 0.0
      %v5256 = vmax.f32 %v5203, 0.0
      %5257 = vst.msk [vmem:[#allocation3] sm:$0xff] %vm3964, %v5204
      %5258 = vst.msk [vmem:[#allocation3 + $0x8] sm:$0xff] %vm3964, %v5205
      %5259 = vst.msk [vmem:[#allocation3 + $0x10] sm:$0xff] %vm3964, %v5206
      %5260 = vst.msk [vmem:[#allocation3 + $0x18] sm:$0xff] %vm3964, %v5207
      %5261 = vst.msk [vmem:[#allocation3 + $0x20] sm:$0xff] %vm3964, %v5208
      %5262 = vst.msk [vmem:[#allocation3 + $0x28] sm:$0xff] %vm3964, %v5209
      %5263 = vst.msk [vmem:[#allocation3 + $0x30] sm:$0xff] %vm3964, %v5210
      %5264 = vst.msk [vmem:[#allocation3 + $0x38] sm:$0xff] %vm3964, %v5211
      %5265 = vst.msk [vmem:[#allocation3 + $0x40] sm:$0xff] %vm3964, %v5212
      %5266 = vst.msk [vmem:[#allocation3 + $0x48] sm:$0xff] %vm3964, %v5213
      %5267 = vst.msk [vmem:[#allocation3 + $0x50] sm:$0xff] %vm3964, %v5214
      %5268 = vst.msk [vmem:[#allocation3 + $0x58] sm:$0xff] %vm3964, %v5215
      %5269 = vst.msk [vmem:[#allocation3 + $0x60] sm:$0xff] %vm3964, %v5216
      %5270 = vst.msk [vmem:[#allocation3 + $0x68] sm:$0xff] %vm3964, %v5217
      %5271 = vst.msk [vmem:[#allocation3 + $0x70] sm:$0xff] %vm3964, %v5218
      %5272 = vst.msk [vmem:[#allocation3 + $0x78] sm:$0xff] %vm3964, %v5219
      %5273 = vst.msk [vmem:[#allocation3 + $0x80] sm:$0xff] %vm3964, %v5220
      %5274 = vst.msk [vmem:[#allocation3 + $0x88] sm:$0xff] %vm3964, %v5221
      %5275 = vst.msk [vmem:[#allocation3 + $0x90] sm:$0xff] %vm3964, %v5222
      %5276 = vst.msk [vmem:[#allocation3 + $0x98] sm:$0xff] %vm3964, %v5223
      %5277 = vst.msk [vmem:[#allocation3 + $0xa0] sm:$0xff] %vm3964, %v5224
      %5278 = vst.msk [vmem:[#allocation3 + $0xa8] sm:$0xff] %vm3964, %v5225
      %5279 = vst.msk [vmem:[#allocation3 + $0xb0] sm:$0xff] %vm3964, %v5226
      %5280 = vst.msk [vmem:[#allocation3 + $0xb8] sm:$0xff] %vm3964, %v5227
      %5281 = vst.msk [vmem:[#allocation3 + $0xc0] sm:$0xff] %vm3964, %v5228
      %5282 = vst.msk [vmem:[#allocation3 + $0xc8] sm:$0xff] %vm3964, %v5229
      %5283 = vst.msk [vmem:[#allocation3 + $0xd0] sm:$0xff] %vm3964, %v5230
      %5284 = vst.msk [vmem:[#allocation3 + $0xd8] sm:$0xff] %vm3964, %v5231
      %5285 = vst.msk [vmem:[#allocation3 + $0xe0] sm:$0xff] %vm3964, %v5232
      %5286 = vst.msk [vmem:[#allocation3 + $0xe8] sm:$0xff] %vm3964, %v5233
      %5287 = vst.msk [vmem:[#allocation3 + $0xf0] sm:$0xff] %vm3964, %v5234
      %5288 = vst.msk [vmem:[#allocation3 + $0xf8] sm:$0xff] %vm3964, %v5235
      %5289 = vst.msk [vmem:[#allocation3 + $0x100] sm:$0xff] %vm3964, %v5236
      %5290 = vst.msk [vmem:[#allocation3 + $0x108] sm:$0xff] %vm3964, %v5237
      %5291 = vst.msk [vmem:[#allocation3 + $0x110] sm:$0xff] %vm3964, %v5238
      %5292 = vst.msk [vmem:[#allocation3 + $0x118] sm:$0xff] %vm3964, %v5239
      %5293 = vst.msk [vmem:[#allocation3 + $0x120] sm:$0xff] %vm3964, %v5240
      %5294 = vst.msk [vmem:[#allocation3 + $0x128] sm:$0xff] %vm3964, %v5241
      %5295 = vst.msk [vmem:[#allocation3 + $0x130] sm:$0xff] %vm3964, %v5242
      %5296 = vst.msk [vmem:[#allocation3 + $0x138] sm:$0xff] %vm3964, %v5243
      %5297 = vst.msk [vmem:[#allocation3 + $0x140] sm:$0xff] %vm3964, %v5244
      %5298 = vst.msk [vmem:[#allocation3 + $0x148] sm:$0xff] %vm3964, %v5245
      %5299 = vst.msk [vmem:[#allocation3 + $0x150] sm:$0xff] %vm3964, %v5246
      %5300 = vst.msk [vmem:[#allocation3 + $0x158] sm:$0xff] %vm3964, %v5247
      %5301 = vst.msk [vmem:[#allocation3 + $0x160] sm:$0xff] %vm3964, %v5248
      %5302 = vst.msk [vmem:[#allocation3 + $0x168] sm:$0xff] %vm3964, %v5249
      %5303 = vst.msk [vmem:[#allocation3 + $0x170] sm:$0xff] %vm3964, %v5250
      %5304 = vst.msk [vmem:[#allocation3 + $0x178] sm:$0xff] %vm3964, %v5251
      %5305 = vst.msk [vmem:[#allocation3 + $0x180] sm:$0xff] %vm3964, %v5252
      %5306 = vst.msk [vmem:[#allocation3 + $0x188] sm:$0xff] %vm3964, %v5253
      %5307 = vst.msk [vmem:[#allocation3 + $0x190] sm:$0xff] %vm3964, %v5254
      %5308 = vst.msk [vmem:[#allocation3 + $0x198] sm:$0xff] %vm3964, %v5255
      %5309 = vst.msk [vmem:[#allocation3 + $0x1a0] sm:$0xff] %vm3964, %v5256
      %v5310 = vld [vmem:[#allocation3] sm:$0xff]
      %v5311 = vld [vmem:[#allocation3 + $0x8] sm:$0xff]
      %v5312 = vld [vmem:[#allocation3 + $0x10] sm:$0xff]
      %v5313 = vld [vmem:[#allocation3 + $0x18] sm:$0xff]
      %v5314 = vld [vmem:[#allocation3 + $0x20] sm:$0xff]
      %v5315 = vld [vmem:[#allocation3 + $0x28] sm:$0xff]
      %v5316 = vld [vmem:[#allocation3 + $0x30] sm:$0xff]
      %v5317 = vld [vmem:[#allocation3 + $0x38] sm:$0xff]
      %v5318 = vld [vmem:[#allocation3 + $0x40] sm:$0xff]
      %v5319 = vld [vmem:[#allocation3 + $0x48] sm:$0xff]
      %v5320 = vld [vmem:[#allocation3 + $0x50] sm:$0xff]
      %v5321 = vld [vmem:[#allocation3 + $0x58] sm:$0xff]
      %v5322 = vld [vmem:[#allocation3 + $0x60] sm:$0xff]
      %v5323 = vld [vmem:[#allocation3 + $0x68] sm:$0xff]
      %v5324 = vld [vmem:[#allocation3 + $0x70] sm:$0xff]
      %v5325 = vld [vmem:[#allocation3 + $0x78] sm:$0xff]
      %v5326 = vld [vmem:[#allocation3 + $0x80] sm:$0xff]
      %v5327 = vld [vmem:[#allocation3 + $0x88] sm:$0xff]
      %v5328 = vld [vmem:[#allocation3 + $0x90] sm:$0xff]
      %v5329 = vld [vmem:[#allocation3 + $0x98] sm:$0xff]
      %v5330 = vld [vmem:[#allocation3 + $0xa0] sm:$0xff]
      %v5331 = vld [vmem:[#allocation3 + $0xa8] sm:$0xff]
      %v5332 = vld [vmem:[#allocation3 + $0xb0] sm:$0xff]
      %v5333 = vld [vmem:[#allocation3 + $0xb8] sm:$0xff]
      %v5334 = vld [vmem:[#allocation3 + $0xc0] sm:$0xff]
      %v5335 = vld [vmem:[#allocation3 + $0xc8] sm:$0xff]
      %v5336 = vld [vmem:[#allocation3 + $0xd0] sm:$0xff]
      %v5337 = vld [vmem:[#allocation3 + $0xd8] sm:$0xff]
      %v5338 = vld [vmem:[#allocation3 + $0xe0] sm:$0xff]
      %v5339 = vld [vmem:[#allocation3 + $0xe8] sm:$0xff]
      %v5340 = vld [vmem:[#allocation3 + $0xf0] sm:$0xff]
      %v5341 = vld [vmem:[#allocation3 + $0xf8] sm:$0xff]
      %v5342 = vld [vmem:[#allocation3 + $0x100] sm:$0xff]
      %v5343 = vld [vmem:[#allocation3 + $0x108] sm:$0xff]
      %v5344 = vld [vmem:[#allocation3 + $0x110] sm:$0xff]
      %v5345 = vld [vmem:[#allocation3 + $0x118] sm:$0xff]
      %v5346 = vld [vmem:[#allocation3 + $0x120] sm:$0xff]
      %v5347 = vld [vmem:[#allocation3 + $0x128] sm:$0xff]
      %v5348 = vld [vmem:[#allocation3 + $0x130] sm:$0xff]
      %v5349 = vld [vmem:[#allocation3 + $0x138] sm:$0xff]
      %v5350 = vld [vmem:[#allocation3 + $0x140] sm:$0xff]
      %v5351 = vld [vmem:[#allocation3 + $0x148] sm:$0xff]
      %v5352 = vld [vmem:[#allocation3 + $0x150] sm:$0xff]
      %v5353 = vld [vmem:[#allocation3 + $0x158] sm:$0xff]
      %v5354 = vld [vmem:[#allocation3 + $0x160] sm:$0xff]
      %v5355 = vld [vmem:[#allocation3 + $0x168] sm:$0xff]
      %v5356 = vld [vmem:[#allocation3 + $0x170] sm:$0xff]
      %v5357 = vld [vmem:[#allocation3 + $0x178] sm:$0xff]
      %v5358 = vld [vmem:[#allocation3 + $0x180] sm:$0xff]
      %v5359 = vld [vmem:[#allocation3 + $0x188] sm:$0xff]
      %v5360 = vld [vmem:[#allocation3 + $0x190] sm:$0xff]
      %v5361 = vld [vmem:[#allocation3 + $0x198] sm:$0xff]
      %v5362 = vld [vmem:[#allocation3 + $0x1a0] sm:$0xff]
      %v5363 = vld [vmem:[#allocation3 + $0x1a8] sm:$0xff]
      %5406 = vrot.lane.b32.xlu0 %v5316, 64
      %v5407 = vpop.permute.xlu0 %5406
      %5408 = vrot.lane.b32.xlu0 %v5317, 64
      %v5409 = vpop.permute.xlu0 %5408
      %5410 = vrot.lane.b32.xlu0 %v5318, 64
      %v5411 = vpop.permute.xlu0 %5410
      %5412 = vrot.lane.b32.xlu0 %v5319, 64
      %v5413 = vpop.permute.xlu0 %5412
      %5414 = vrot.lane.b32.xlu0 %v5320, 64
      %v5415 = vpop.permute.xlu0 %5414
      %5416 = vrot.lane.b32.xlu0 %v5321, 64
      %v5417 = vpop.permute.xlu0 %5416
      %5418 = vrot.lane.b32.xlu0 %v5322, 64
      %v5419 = vpop.permute.xlu0 %5418
      %5420 = vrot.lane.b32.xlu0 %v5323, 64
      %v5421 = vpop.permute.xlu0 %5420
      %5422 = vrot.lane.b32.xlu0 %v5324, 64
      %v5423 = vpop.permute.xlu0 %5422
      %5424 = vrot.lane.b32.xlu0 %v5325, 64
      %v5425 = vpop.permute.xlu0 %5424
      %5426 = vrot.lane.b32.xlu0 %v5326, 64
      %v5427 = vpop.permute.xlu0 %5426
      %5428 = vrot.lane.b32.xlu0 %v5327, 64
      %v5429 = vpop.permute.xlu0 %5428
      %5430 = vrot.lane.b32.xlu0 %v5328, 64
      %v5431 = vpop.permute.xlu0 %5430
      %5432 = vrot.lane.b32.xlu0 %v5329, 64
      %v5433 = vpop.permute.xlu0 %5432
      %5434 = vrot.lane.b32.xlu0 %v5330, 64
      %v5435 = vpop.permute.xlu0 %5434
      %5436 = vrot.lane.b32.xlu0 %v5331, 64
      %v5437 = vpop.permute.xlu0 %5436
      %5438 = vrot.lane.b32.xlu0 %v5332, 64
      %v5439 = vpop.permute.xlu0 %5438
      %5440 = vrot.lane.b32.xlu0 %v5333, 64
      %v5441 = vpop.permute.xlu0 %5440
      %5442 = vrot.lane.b32.xlu0 %v5334, 64
      %v5443 = vpop.permute.xlu0 %5442
      %5444 = vrot.lane.b32.xlu0 %v5335, 64
      %v5445 = vpop.permute.xlu0 %5444
      %5446 = vrot.lane.b32.xlu0 %v5336, 64
      %v5447 = vpop.permute.xlu0 %5446
      %5448 = vrot.lane.b32.xlu0 %v5337, 64
      %v5449 = vpop.permute.xlu0 %5448
      %5450 = vrot.lane.b32.xlu0 %v5338, 64
      %v5451 = vpop.permute.xlu0 %5450
      %5452 = vrot.lane.b32.xlu0 %v5339, 64
      %v5453 = vpop.permute.xlu0 %5452
      %5454 = vrot.lane.b32.xlu0 %v5340, 64
      %v5455 = vpop.permute.xlu0 %5454
      %5456 = vrot.lane.b32.xlu0 %v5341, 64
      %v5457 = vpop.permute.xlu0 %5456
      %5458 = vrot.lane.b32.xlu0 %v5342, 64
      %v5459 = vpop.permute.xlu0 %5458
      %5460 = vrot.lane.b32.xlu0 %v5343, 64
      %v5461 = vpop.permute.xlu0 %5460
      %5462 = vrot.lane.b32.xlu0 %v5344, 64
      %v5463 = vpop.permute.xlu0 %5462
      %5464 = vrot.lane.b32.xlu0 %v5345, 64
      %v5465 = vpop.permute.xlu0 %5464
      %5466 = vrot.lane.b32.xlu0 %v5346, 64
      %v5467 = vpop.permute.xlu0 %5466
      %5468 = vrot.lane.b32.xlu0 %v5347, 64
      %v5469 = vpop.permute.xlu0 %5468
      %5470 = vrot.lane.b32.xlu0 %v5348, 64
      %v5471 = vpop.permute.xlu0 %5470
      %5472 = vrot.lane.b32.xlu0 %v5349, 64
      %v5473 = vpop.permute.xlu0 %5472
      %5474 = vrot.lane.b32.xlu0 %v5350, 64
      %v5475 = vpop.permute.xlu0 %5474
      %5476 = vrot.lane.b32.xlu0 %v5351, 64
      %v5477 = vpop.permute.xlu0 %5476
      %5478 = vrot.lane.b32.xlu0 %v5352, 64
      %v5479 = vpop.permute.xlu0 %5478
      %5480 = vrot.lane.b32.xlu0 %v5353, 64
      %v5481 = vpop.permute.xlu0 %5480
      %5482 = vrot.lane.b32.xlu0 %v5354, 64
      %v5483 = vpop.permute.xlu0 %5482
      %5484 = vrot.lane.b32.xlu0 %v5355, 64
      %v5485 = vpop.permute.xlu0 %5484
      %5486 = vrot.lane.b32.xlu0 %v5356, 64
      %v5487 = vpop.permute.xlu0 %5486
      %5488 = vrot.lane.b32.xlu0 %v5357, 64
      %v5489 = vpop.permute.xlu0 %5488
      %v5532 = vsel %vm3964, %v5310, %v5407
      %v5533 = vsel %vm3964, %v5311, %v5409
      %v5534 = vsel %vm3964, %v5312, %v5411
      %v5535 = vsel %vm3964, %v5313, %v5413
      %v5536 = vsel %vm3964, %v5314, %v5415
      %v5537 = vsel %vm3964, %v5315, %v5417
      %v5538 = vsel %vm3964, %v5316, %v5419
      %v5539 = vsel %vm3964, %v5317, %v5421
      %v5540 = vsel %vm3964, %v5318, %v5423
      %v5541 = vsel %vm3964, %v5319, %v5425
      %v5542 = vsel %vm3964, %v5320, %v5427
      %v5543 = vsel %vm3964, %v5321, %v5429
      %v5544 = vsel %vm3964, %v5322, %v5431
      %v5545 = vsel %vm3964, %v5323, %v5433
      %v5546 = vsel %vm3964, %v5324, %v5435
      %v5547 = vsel %vm3964, %v5325, %v5437
      %v5548 = vsel %vm3964, %v5326, %v5439
      %v5549 = vsel %vm3964, %v5327, %v5441
      %v5550 = vsel %vm3964, %v5328, %v5443
      %v5551 = vsel %vm3964, %v5329, %v5445
      %v5552 = vsel %vm3964, %v5330, %v5447
      %v5553 = vsel %vm3964, %v5331, %v5449
      %v5554 = vsel %vm3964, %v5332, %v5451
      %v5555 = vsel %vm3964, %v5333, %v5453
      %v5556 = vsel %vm3964, %v5334, %v5455
      %v5557 = vsel %vm3964, %v5335, %v5457
      %v5558 = vsel %vm3964, %v5336, %v5459
      %v5559 = vsel %vm3964, %v5337, %v5461
      %v5560 = vsel %vm3964, %v5338, %v5463
      %v5561 = vsel %vm3964, %v5339, %v5465
      %v5562 = vsel %vm3964, %v5340, %v5467
      %v5563 = vsel %vm3964, %v5341, %v5469
      %v5564 = vsel %vm3964, %v5342, %v5471
      %v5565 = vsel %vm3964, %v5343, %v5473
      %v5566 = vsel %vm3964, %v5344, %v5475
      %v5567 = vsel %vm3964, %v5345, %v5477
      %v5568 = vsel %vm3964, %v5346, %v5479
      %v5569 = vsel %vm3964, %v5347, %v5481
      %v5570 = vsel %vm3964, %v5348, %v5483
      %v5571 = vsel %vm3964, %v5349, %v5485
      %v5572 = vsel %vm3964, %v5350, %v5487
      %v5573 = vsel %vm3964, %v5351, %v5489
      %v5574 = vpack.c.bf16 %v5533, %v5532
      %v5575 = vpack.c.bf16 %v5323, %v5322
      %v5576 = vpack.c.bf16 %v5535, %v5534
      %v5577 = vpack.c.bf16 %v5325, %v5324
      %v5578 = vpack.c.bf16 %v5537, %v5536
      %v5579 = vpack.c.bf16 %v5327, %v5326
      %v5580 = vpack.c.bf16 %v5539, %v5538
      %v5581 = vpack.c.bf16 %v5329, %v5328
      %v5582 = vpack.c.bf16 %v5541, %v5540
      %v5583 = vpack.c.bf16 %v5331, %v5330
      %v5584 = vpack.c.bf16 %v5543, %v5542
      %v5585 = vpack.c.bf16 %v5333, %v5332
      %v5586 = vpack.c.bf16 %v5545, %v5544
      %v5587 = vpack.c.bf16 %v5335, %v5334
      %v5588 = vpack.c.bf16 %v5547, %v5546
      %v5589 = vpack.c.bf16 %v5337, %v5336
      %v5590 = vpack.c.bf16 %v5549, %v5548
      %v5591 = vpack.c.bf16 %v5339, %v5338
      %v5592 = vpack.c.bf16 %v5551, %v5550
      %v5593 = vpack.c.bf16 %v5341, %v5340
      %v5594 = vpack.c.bf16 %v5553, %v5552
      %v5595 = vpack.c.bf16 %v5343, %v5342
      %v5596 = vpack.c.bf16 %v5555, %v5554
      %v5597 = vpack.c.bf16 %v5345, %v5344
      %v5598 = vpack.c.bf16 %v5557, %v5556
      %v5599 = vpack.c.bf16 %v5347, %v5346
      %v5600 = vpack.c.bf16 %v5559, %v5558
      %v5601 = vpack.c.bf16 %v5349, %v5348
      %v5602 = vpack.c.bf16 %v5561, %v5560
      %v5603 = vpack.c.bf16 %v5351, %v5350
      %v5604 = vpack.c.bf16 %v5563, %v5562
      %v5605 = vpack.c.bf16 %v5353, %v5352
      %v5606 = vpack.c.bf16 %v5565, %v5564
      %v5607 = vpack.c.bf16 %v5355, %v5354
      %v5608 = vpack.c.bf16 %v5567, %v5566
      %v5609 = vpack.c.bf16 %v5357, %v5356
      %v5610 = vpack.c.bf16 %v5569, %v5568
      %v5611 = vpack.c.bf16 %v5359, %v5358
      %v5612 = vpack.c.bf16 %v5571, %v5570
      %v5613 = vpack.c.bf16 %v5361, %v5360
      %v5614 = vpack.c.bf16 %v5573, %v5572
      %v5615 = vpack.c.bf16 %v5363, %v5362
      %v5616 = vld [vmem:[%s5] sm:$0xf]
      %v5617 = vld [vmem:[%s5 + $0x4] sm:$0xf]
      %v5618 = vld [vmem:[%s5 + $0x8] sm:$0xf]
      %v5619 = vld [vmem:[%s5 + $0xc] sm:$0xf]
      %v5620 = vld [vmem:[%s5 + $0x10] sm:$0xf]
      %v5621 = vld [vmem:[%s5 + $0x14] sm:$0xf]
      %v5622 = vld [vmem:[%s5 + $0x18] sm:$0xf]
      %v5623 = vld [vmem:[%s5 + $0x1c] sm:$0xf]
      %v5624 = vld [vmem:[%s5 + $0x20] sm:$0xf]
      %v5625 = vld [vmem:[%s5 + $0x24] sm:$0xf]
      %v5626 = vld [vmem:[%s5 + $0x28] sm:$0xf]
      %v5627 = vld [vmem:[%s5 + $0x2c] sm:$0xf]
      %v5628 = vld [vmem:[%s5 + $0x30] sm:$0xf]
      %v5629 = vld [vmem:[%s5 + $0x34] sm:$0xf]
      %v5630 = vld [vmem:[%s5 + $0x38] sm:$0xf]
      %v5631 = vld [vmem:[%s5 + $0x3c] sm:$0xf]
      %v5632 = vld [vmem:[%s5 + $0x40] sm:$0xf]
      %v5633 = vld [vmem:[%s5 + $0x44] sm:$0xf]
      %v5634 = vld [vmem:[%s5 + $0x48] sm:$0xf]
      %v5635 = vld [vmem:[%s5 + $0x4c] sm:$0xf]
      %v5636 = vld [vmem:[%s5 + $0x50] sm:$0xf]
      %v5637 = vld [vmem:[%s5 + $0x54] sm:$0xf]
      %v5638 = vld [vmem:[%s5 + $0x58] sm:$0xf]
      %v5639 = vld [vmem:[%s5 + $0x5c] sm:$0xf]
      %v5664 = vunpack.c.l.b16 %v5616
      %v5665 = vunpack.c.l.b16 %v5617
      %v5666 = vunpack.c.l.b16 %v5618
      %v5667 = vunpack.c.l.b16 %v5619
      %v5668 = vunpack.c.l.b16 %v5620
      %v5669 = vunpack.c.l.b16 %v5621
      %v5670 = vunpack.c.l.b16 %v5622
      %v5671 = vunpack.c.l.b16 %v5623
      %v5672 = vunpack.c.l.b16 %v5624
      %v5673 = vunpack.c.l.b16 %v5625
      %v5674 = vunpack.c.l.b16 %v5626
      %v5675 = vunpack.c.l.b16 %v5627
      %v5676 = vunpack.c.l.b16 %v5628
      %v5677 = vunpack.c.l.b16 %v5629
      %v5678 = vunpack.c.l.b16 %v5630
      %v5679 = vunpack.c.l.b16 %v5631
      %v5680 = vunpack.c.l.b16 %v5632
      %v5681 = vunpack.c.l.b16 %v5633
      %v5682 = vunpack.c.l.b16 %v5634
      %v5683 = vunpack.c.l.b16 %v5635
      %v5684 = vunpack.c.l.b16 %v5636
      %v5685 = vunpack.c.l.b16 %v5637
      %v5686 = vunpack.c.l.b16 %v5638
      %v5687 = vunpack.c.l.b16 %v5639
      %v5688 = vpack.c.b16 %v5665, %v5664
      %v5689 = vpack.c.b16 %v5667, %v5666
      %v5690 = vpack.c.b16 %v5669, %v5668
      %v5691 = vpack.c.b16 %v5671, %v5670
      %v5692 = vpack.c.b16 %v5673, %v5672
      %v5693 = vpack.c.b16 %v5675, %v5674
      %v5694 = vpack.c.b16 %v5677, %v5676
      %v5695 = vpack.c.b16 %v5679, %v5678
      %v5696 = vpack.c.b16 %v5681, %v5680
      %v5697 = vpack.c.b16 %v5683, %v5682
      %v5698 = vpack.c.b16 %v5685, %v5684
      %v5699 = vpack.c.b16 %v5687, %v5686
      %v5713 = vsel %vm3964, %v5575, 0
      %v5716 = vsel %vm3964, %v5577, 0
      %v5719 = vsel %vm3964, %v5579, 0
      %v5722 = vsel %vm3964, %v5581, 0
      %v5725 = vsel %vm3964, %v5583, 0
      %v5728 = vsel %vm3964, %v5585, 0
      %v5731 = vsel %vm3964, %v5587, 0
      %v5734 = vsel %vm3964, %v5589, 0
      %v5737 = vsel %vm3964, %v5591, 0
      %v5740 = vsel %vm3964, %v5593, 0
      %v5743 = vsel %vm3964, %v5595, 0
      %v5746 = vsel %vm3964, %v5597, 0
      %v5749 = vsel %vm3964, %v5599, 0
      %v5752 = vsel %vm3964, %v5601, 0
      %v5755 = vsel %vm3964, %v5603, 0
      %v5758 = vsel %vm3964, %v5605, 0
      %v5761 = vsel %vm3964, %v5607, 0
      %v5764 = vsel %vm3964, %v5609, 0
      %v5767 = vsel %vm3964, %v5611, 0
      %v5770 = vsel %vm3964, %v5613, 0
      %v5773 = vsel %vm3964, %v5615, 0
      %5775 = vmatprep.subr.bf16.mxu0 0
      %5776 = vmatpush1.bf16.msra.mxu0 %v5688
      %5777 = vmatprep.subr.bf16.mxu0 0
      %5778 = vmatpush1.bf16.msra.mxu0 %v5689
      %5779 = vmatprep.subr.bf16.mxu0 0
      %5780 = vmatpush1.bf16.msra.mxu0 %v5690
      %5781 = vmatprep.subr.bf16.mxu0 0
      %5782 = vmatpush1.bf16.msra.mxu0 %v5691
      %5783 = vmatprep.subr.bf16.mxu0 0
      %5784 = vmatpush1.bf16.msra.mxu0 %v5692
      %5785 = vmatprep.subr.bf16.mxu0 0
      %5786 = vmatpush1.bf16.msra.mxu0 %v5693
      %5787 = vmatprep.subr.bf16.mxu0 0
      %5788 = vmatpush1.bf16.msra.mxu0 %v5694
      %5789 = vmatprep.subr.bf16.mxu0 0
      %5790 = vmatpush1.bf16.msra.mxu0 %v5695
      %5791 = vmatprep.subr.bf16.mxu0 0
      %5792 = vmatpush1.bf16.msra.mxu0 %v5696
      %5793 = vmatprep.subr.bf16.mxu0 0
      %5794 = vmatpush1.bf16.msra.mxu0 %v5697
      %5795 = vmatprep.subr.bf16.mxu0 0
      %5796 = vmatpush1.bf16.msra.mxu0 %v5698
      %5797 = vmatprep.subr.bf16.mxu0 0
      %5798 = vmatpush1.bf16.msra.mxu0 %v5699
      %5799 = vmatprep.subr.bf16.mxu0 0
      %5800 = vmatpush1.bf16.msra.mxu0 0
      %5801 = vmatprep.subr.bf16.mxu0 0
      %5802 = vmatpush1.bf16.msra.mxu0 0
      %5803 = vmatprep.subr.bf16.mxu0 0
      %5804 = vmatpush1.bf16.msra.mxu0 0
      %5805 = vmatprep.subr.bf16.mxu0 0
      %5806 = vmatpush1.bf16.msra.mxu0 0
      %5807 = vmatprep.mubr.bf16.mxu0 %v5713
      %5808 = vmatmul.mubr.bf16.gmra.mrb[0].mxu0 %v5574
      %v5809 = vpop.f32.mrb[0].mxu0
      %v5810 = vadd.f32 0.0, %v5809
      %v5811 = vpop.f32.mrb[0].mxu0
      %v5812 = vpop.f32.mrb[0].mxu0
      %v5813 = vadd.f32 0.0, %v5812
      %v5814 = vpop.f32.mrb[0].mxu0
      %5815 = vmatprep.mubr.bf16.mxu0 %v5716
      %5816 = vmatmul.mubr.bf16.gmra.mrb[0].mxu0 %v5576
      %v5817 = vpop.f32.mrb[0].mxu0
      %v5818 = vadd.f32 0.0, %v5817
      %v5819 = vpop.f32.mrb[0].mxu0
      %v5820 = vpop.f32.mrb[0].mxu0
      %v5821 = vadd.f32 0.0, %v5820
      %v5822 = vpop.f32.mrb[0].mxu0
      %5823 = vmatprep.mubr.bf16.mxu0 %v5719
      %5824 = vmatmul.mubr.bf16.gmra.mrb[0].mxu0 %v5578
      %v5825 = vpop.f32.mrb[0].mxu0
      %v5826 = vadd.f32 0.0, %v5825
      %v5827 = vpop.f32.mrb[0].mxu0
      %v5828 = vpop.f32.mrb[0].mxu0
      %v5829 = vadd.f32 0.0, %v5828
      %v5830 = vpop.f32.mrb[0].mxu0
      %5831 = vmatprep.mubr.bf16.mxu0 %v5722
      %5832 = vmatmul.mubr.bf16.gmra.mrb[0].mxu0 %v5580
      %v5833 = vpop.f32.mrb[0].mxu0
      %v5834 = vadd.f32 0.0, %v5833
      %v5835 = vpop.f32.mrb[0].mxu0
      %v5836 = vpop.f32.mrb[0].mxu0
      %v5837 = vadd.f32 0.0, %v5836
      %v5838 = vpop.f32.mrb[0].mxu0
      %5839 = vmatprep.mubr.bf16.mxu0 %v5725
      %5840 = vmatmul.mubr.bf16.gmra.mrb[0].mxu0 %v5582
      %v5841 = vpop.f32.mrb[0].mxu0
      %v5842 = vadd.f32 0.0, %v5841
      %v5843 = vpop.f32.mrb[0].mxu0
      %v5844 = vpop.f32.mrb[0].mxu0
      %v5845 = vadd.f32 0.0, %v5844
      %v5846 = vpop.f32.mrb[0].mxu0
      %5847 = vmatprep.mubr.bf16.mxu0 %v5728
      %5848 = vmatmul.mubr.bf16.gmra.mrb[0].mxu0 %v5584
      %v5849 = vpop.f32.mrb[0].mxu0
      %v5850 = vadd.f32 0.0, %v5849
      %v5851 = vpop.f32.mrb[0].mxu0
      %v5852 = vpop.f32.mrb[0].mxu0
      %v5853 = vadd.f32 0.0, %v5852
      %v5854 = vpop.f32.mrb[0].mxu0
      %5855 = vmatprep.mubr.bf16.mxu0 %v5731
      %5856 = vmatmul.mubr.bf16.gmra.mrb[0].mxu0 %v5586
      %v5857 = vpop.f32.mrb[0].mxu0
      %v5858 = vadd.f32 0.0, %v5857
      %v5859 = vpop.f32.mrb[0].mxu0
      %v5860 = vpop.f32.mrb[0].mxu0
      %v5861 = vadd.f32 0.0, %v5860
      %v5862 = vpop.f32.mrb[0].mxu0
      %5863 = vmatprep.mubr.bf16.mxu0 %v5734
      %5864 = vmatmul.mubr.bf16.gmra.mrb[0].mxu0 %v5588
      %v5865 = vpop.f32.mrb[0].mxu0
      %v5866 = vadd.f32 0.0, %v5865
      %v5867 = vpop.f32.mrb[0].mxu0
      %v5868 = vpop.f32.mrb[0].mxu0
      %v5869 = vadd.f32 0.0, %v5868
      %v5870 = vpop.f32.mrb[0].mxu0
      %5871 = vmatprep.mubr.bf16.mxu0 %v5737
      %5872 = vmatmul.mubr.bf16.gmra.mrb[0].mxu0 %v5590
      %v5873 = vpop.f32.mrb[0].mxu0
      %v5874 = vadd.f32 0.0, %v5873
      %v5875 = vpop.f32.mrb[0].mxu0
      %v5876 = vpop.f32.mrb[0].mxu0
      %v5877 = vadd.f32 0.0, %v5876
      %v5878 = vpop.f32.mrb[0].mxu0
      %5879 = vmatprep.mubr.bf16.mxu0 %v5740
      %5880 = vmatmul.mubr.bf16.gmra.mrb[0].mxu0 %v5592
      %v5881 = vpop.f32.mrb[0].mxu0
      %v5882 = vadd.f32 0.0, %v5881
      %v5883 = vpop.f32.mrb[0].mxu0
      %v5884 = vpop.f32.mrb[0].mxu0
      %v5885 = vadd.f32 0.0, %v5884
      %v5886 = vpop.f32.mrb[0].mxu0
      %5887 = vmatprep.mubr.bf16.mxu0 %v5743
      %5888 = vmatmul.mubr.bf16.gmra.mrb[0].mxu0 %v5594
      %v5889 = vpop.f32.mrb[0].mxu0
      %v5890 = vadd.f32 0.0, %v5889
      %v5891 = vpop.f32.mrb[0].mxu0
      %v5892 = vpop.f32.mrb[0].mxu0
      %v5893 = vadd.f32 0.0, %v5892
      %v5894 = vpop.f32.mrb[0].mxu0
      %5895 = vmatprep.mubr.bf16.mxu0 %v5746
      %5896 = vmatmul.mubr.bf16.gmra.mrb[0].mxu0 %v5596
      %v5897 = vpop.f32.mrb[0].mxu0
      %v5898 = vadd.f32 0.0, %v5897
      %v5899 = vpop.f32.mrb[0].mxu0
      %v5900 = vpop.f32.mrb[0].mxu0
      %v5901 = vadd.f32 0.0, %v5900
      %v5902 = vpop.f32.mrb[0].mxu0
      %5903 = vmatprep.mubr.bf16.mxu0 %v5749
      %5904 = vmatmul.mubr.bf16.gmra.mrb[0].mxu0 %v5598
      %v5905 = vpop.f32.mrb[0].mxu0
      %v5906 = vadd.f32 0.0, %v5905
      %v5907 = vpop.f32.mrb[0].mxu0
      %v5908 = vpop.f32.mrb[0].mxu0
      %v5909 = vadd.f32 0.0, %v5908
      %v5910 = vpop.f32.mrb[0].mxu0
      %5911 = vmatprep.mubr.bf16.mxu0 %v5752
      %5912 = vmatmul.mubr.bf16.gmra.mrb[0].mxu0 %v5600
      %v5913 = vpop.f32.mrb[0].mxu0
      %v5914 = vadd.f32 0.0, %v5913
      %v5915 = vpop.f32.mrb[0].mxu0
      %v5916 = vpop.f32.mrb[0].mxu0
      %v5917 = vadd.f32 0.0, %v5916
      %v5918 = vpop.f32.mrb[0].mxu0
      %5919 = vmatprep.mubr.bf16.mxu0 %v5755
      %5920 = vmatmul.mubr.bf16.gmra.mrb[0].mxu0 %v5602
      %v5921 = vpop.f32.mrb[0].mxu0
      %v5922 = vadd.f32 0.0, %v5921
      %v5923 = vpop.f32.mrb[0].mxu0
      %v5924 = vpop.f32.mrb[0].mxu0
      %v5925 = vadd.f32 0.0, %v5924
      %v5926 = vpop.f32.mrb[0].mxu0
      %5927 = vmatprep.mubr.bf16.mxu0 %v5758
      %5928 = vmatmul.mubr.bf16.gmra.mrb[0].mxu0 %v5604
      %v5929 = vpop.f32.mrb[0].mxu0
      %v5930 = vadd.f32 0.0, %v5929
      %v5931 = vpop.f32.mrb[0].mxu0
      %v5932 = vpop.f32.mrb[0].mxu0
      %v5933 = vadd.f32 0.0, %v5932
      %v5934 = vpop.f32.mrb[0].mxu0
      %5935 = vmatprep.mubr.bf16.mxu0 %v5761
      %5936 = vmatmul.mubr.bf16.gmra.mrb[0].mxu0 %v5606
      %v5937 = vpop.f32.mrb[0].mxu0
      %v5938 = vadd.f32 0.0, %v5937
      %v5939 = vpop.f32.mrb[0].mxu0
      %v5940 = vpop.f32.mrb[0].mxu0
      %v5941 = vadd.f32 0.0, %v5940
      %v5942 = vpop.f32.mrb[0].mxu0
      %5943 = vmatprep.mubr.bf16.mxu0 %v5764
      %5944 = vmatmul.mubr.bf16.gmra.mrb[0].mxu0 %v5608
      %v5945 = vpop.f32.mrb[0].mxu0
      %v5946 = vadd.f32 0.0, %v5945
      %v5947 = vpop.f32.mrb[0].mxu0
      %v5948 = vpop.f32.mrb[0].mxu0
      %v5949 = vadd.f32 0.0, %v5948
      %v5950 = vpop.f32.mrb[0].mxu0
      %5951 = vmatprep.mubr.bf16.mxu0 %v5767
      %5952 = vmatmul.mubr.bf16.gmra.mrb[0].mxu0 %v5610
      %v5953 = vpop.f32.mrb[0].mxu0
      %v5954 = vadd.f32 0.0, %v5953
      %v5955 = vpop.f32.mrb[0].mxu0
      %v5956 = vpop.f32.mrb[0].mxu0
      %v5957 = vadd.f32 0.0, %v5956
      %v5958 = vpop.f32.mrb[0].mxu0
      %5959 = vmatprep.mubr.bf16.mxu0 %v5770
      %5960 = vmatmul.mubr.bf16.gmra.mrb[0].mxu0 %v5612
      %v5961 = vpop.f32.mrb[0].mxu0
      %v5962 = vadd.f32 0.0, %v5961
      %v5963 = vpop.f32.mrb[0].mxu0
      %v5964 = vpop.f32.mrb[0].mxu0
      %v5965 = vadd.f32 0.0, %v5964
      %v5966 = vpop.f32.mrb[0].mxu0
      %5967 = vmatprep.mubr.bf16.mxu0 %v5773
      %5968 = vmatmul.mubr.bf16.gmra.mrb[0].mxu0 %v5614
      %v5969 = vpop.f32.mrb[0].mxu0
      %v5970 = vadd.f32 0.0, %v5969
      %v5971 = vpop.f32.mrb[0].mxu0
      %v5972 = vpop.f32.mrb[0].mxu0
      %v5973 = vpop.f32.mrb[0].mxu0
      %5974 = vdwg.mxu0
      %s5975 = scalar_lea.vmem %s5, 96
      %v5976 = vld [vmem:[%s5975] sm:$0xf]
      %v5977 = vld [vmem:[%s5975 + $0x4] sm:$0xf]
      %v5978 = vld [vmem:[%s5975 + $0x8] sm:$0xf]
      %v5979 = vld [vmem:[%s5975 + $0xc] sm:$0xf]
      %v5980 = vld [vmem:[%s5975 + $0x10] sm:$0xf]
      %v5981 = vld [vmem:[%s5975 + $0x14] sm:$0xf]
      %v5982 = vld [vmem:[%s5975 + $0x18] sm:$0xf]
      %v5983 = vld [vmem:[%s5975 + $0x1c] sm:$0xf]
      %v5984 = vld [vmem:[%s5975 + $0x20] sm:$0xf]
      %v5985 = vld [vmem:[%s5975 + $0x24] sm:$0xf]
      %v5986 = vld [vmem:[%s5975 + $0x28] sm:$0xf]
      %v5987 = vld [vmem:[%s5975 + $0x2c] sm:$0xf]
      %v5988 = vld [vmem:[%s5975 + $0x30] sm:$0xf]
      %v5989 = vld [vmem:[%s5975 + $0x34] sm:$0xf]
      %v5990 = vld [vmem:[%s5975 + $0x38] sm:$0xf]
      %v5991 = vld [vmem:[%s5975 + $0x3c] sm:$0xf]
      %v5992 = vld [vmem:[%s5975 + $0x40] sm:$0xf]
      %v5993 = vld [vmem:[%s5975 + $0x44] sm:$0xf]
      %v5994 = vld [vmem:[%s5975 + $0x48] sm:$0xf]
      %v5995 = vld [vmem:[%s5975 + $0x4c] sm:$0xf]
      %v5996 = vld [vmem:[%s5975 + $0x50] sm:$0xf]
      %v5997 = vld [vmem:[%s5975 + $0x54] sm:$0xf]
      %v5998 = vld [vmem:[%s5975 + $0x58] sm:$0xf]
      %v5999 = vld [vmem:[%s5975 + $0x5c] sm:$0xf]
      %v6024 = vunpack.c.l.b16 %v5976
      %v6025 = vunpack.c.l.b16 %v5977
      %v6026 = vunpack.c.l.b16 %v5978
      %v6027 = vunpack.c.l.b16 %v5979
      %v6028 = vunpack.c.l.b16 %v5980
      %v6029 = vunpack.c.l.b16 %v5981
      %v6030 = vunpack.c.l.b16 %v5982
      %v6031 = vunpack.c.l.b16 %v5983
      %v6032 = vunpack.c.l.b16 %v5984
      %v6033 = vunpack.c.l.b16 %v5985
      %v6034 = vunpack.c.l.b16 %v5986
      %v6035 = vunpack.c.l.b16 %v5987
      %v6036 = vunpack.c.l.b16 %v5988
      %v6037 = vunpack.c.l.b16 %v5989
      %v6038 = vunpack.c.l.b16 %v5990
      %v6039 = vunpack.c.l.b16 %v5991
      %v6040 = vunpack.c.l.b16 %v5992
      %v6041 = vunpack.c.l.b16 %v5993
      %v6042 = vunpack.c.l.b16 %v5994
      %v6043 = vunpack.c.l.b16 %v5995
      %v6044 = vunpack.c.l.b16 %v5996
      %v6045 = vunpack.c.l.b16 %v5997
      %v6046 = vunpack.c.l.b16 %v5998
      %v6047 = vunpack.c.l.b16 %v5999
      %v6048 = vpack.c.b16 %v6025, %v6024
      %v6049 = vpack.c.b16 %v6027, %v6026
      %v6050 = vpack.c.b16 %v6029, %v6028
      %v6051 = vpack.c.b16 %v6031, %v6030
      %v6052 = vpack.c.b16 %v6033, %v6032
      %v6053 = vpack.c.b16 %v6035, %v6034
      %v6054 = vpack.c.b16 %v6037, %v6036
      %v6055 = vpack.c.b16 %v6039, %v6038
      %v6056 = vpack.c.b16 %v6041, %v6040
      %v6057 = vpack.c.b16 %v6043, %v6042
      %v6058 = vpack.c.b16 %v6045, %v6044
      %v6059 = vpack.c.b16 %v6047, %v6046
      %6072 = vmatprep.subr.bf16.mxu0 0
      %6073 = vmatpush1.bf16.msra.mxu0 %v6048
      %6074 = vmatprep.subr.bf16.mxu0 0
      %6075 = vmatpush1.bf16.msra.mxu0 %v6049
      %6076 = vmatprep.subr.bf16.mxu0 0
      %6077 = vmatpush1.bf16.msra.mxu0 %v6050
      %6078 = vmatprep.subr.bf16.mxu0 0
      %6079 = vmatpush1.bf16.msra.mxu0 %v6051
      %6080 = vmatprep.subr.bf16.mxu0 0
      %6081 = vmatpush1.bf16.msra.mxu0 %v6052
      %6082 = vmatprep.subr.bf16.mxu0 0
      %6083 = vmatpush1.bf16.msra.mxu0 %v6053
      %6084 = vmatprep.subr.bf16.mxu0 0
      %6085 = vmatpush1.bf16.msra.mxu0 %v6054
      %6086 = vmatprep.subr.bf16.mxu0 0
      %6087 = vmatpush1.bf16.msra.mxu0 %v6055
      %6088 = vmatprep.subr.bf16.mxu0 0
      %6089 = vmatpush1.bf16.msra.mxu0 %v6056
      %6090 = vmatprep.subr.bf16.mxu0 0
      %6091 = vmatpush1.bf16.msra.mxu0 %v6057
      %6092 = vmatprep.subr.bf16.mxu0 0
      %6093 = vmatpush1.bf16.msra.mxu0 %v6058
      %6094 = vmatprep.subr.bf16.mxu0 0
      %6095 = vmatpush1.bf16.msra.mxu0 %v6059
      %6096 = vmatprep.subr.bf16.mxu0 0
      %6097 = vmatpush1.bf16.msra.mxu0 0
      %6098 = vmatprep.subr.bf16.mxu0 0
      %6099 = vmatpush1.bf16.msra.mxu0 0
      %6100 = vmatprep.subr.bf16.mxu0 0
      %6101 = vmatpush1.bf16.msra.mxu0 0
      %6102 = vmatprep.subr.bf16.mxu0 0
      %6103 = vmatpush1.bf16.msra.mxu0 0
      %6104 = vmatprep.mubr.bf16.mxu0 %v5713
      %6105 = vmatmul.mubr.bf16.gmra.mrb[0].mxu0 %v5574
      %v6106 = vpop.f32.mrb[0].mxu0
      %v6107 = vadd.f32 0.0, %v6106
      %v6108 = vpop.f32.mrb[0].mxu0
      %v6109 = vpop.f32.mrb[0].mxu0
      %v6110 = vadd.f32 0.0, %v6109
      %v6111 = vpop.f32.mrb[0].mxu0
      %6112 = vmatprep.mubr.bf16.mxu0 %v5716
      %6113 = vmatmul.mubr.bf16.gmra.mrb[0].mxu0 %v5576
      %v6114 = vpop.f32.mrb[0].mxu0
      %v6115 = vadd.f32 0.0, %v6114
      %v6116 = vpop.f32.mrb[0].mxu0
      %v6117 = vpop.f32.mrb[0].mxu0
      %v6118 = vadd.f32 0.0, %v6117
      %v6119 = vpop.f32.mrb[0].mxu0
      %6120 = vmatprep.mubr.bf16.mxu0 %v5719
      %6121 = vmatmul.mubr.bf16.gmra.mrb[0].mxu0 %v5578
      %v6122 = vpop.f32.mrb[0].mxu0
      %v6123 = vadd.f32 0.0, %v6122
      %v6124 = vpop.f32.mrb[0].mxu0
      %v6125 = vpop.f32.mrb[0].mxu0
      %v6126 = vadd.f32 0.0, %v6125
      %v6127 = vpop.f32.mrb[0].mxu0
      %6128 = vmatprep.mubr.bf16.mxu0 %v5722
      %6129 = vmatmul.mubr.bf16.gmra.mrb[0].mxu0 %v5580
      %v6130 = vpop.f32.mrb[0].mxu0
      %v6131 = vadd.f32 0.0, %v6130
      %v6132 = vpop.f32.mrb[0].mxu0
      %v6133 = vpop.f32.mrb[0].mxu0
      %v6134 = vadd.f32 0.0, %v6133
      %v6135 = vpop.f32.mrb[0].mxu0
      %6136 = vmatprep.mubr.bf16.mxu0 %v5725
      %6137 = vmatmul.mubr.bf16.gmra.mrb[0].mxu0 %v5582
      %v6138 = vpop.f32.mrb[0].mxu0
      %v6139 = vadd.f32 0.0, %v6138
      %v6140 = vpop.f32.mrb[0].mxu0
      %v6141 = vpop.f32.mrb[0].mxu0
      %v6142 = vadd.f32 0.0, %v6141
      %v6143 = vpop.f32.mrb[0].mxu0
      %6144 = vmatprep.mubr.bf16.mxu0 %v5728
      %6145 = vmatmul.mubr.bf16.gmra.mrb[0].mxu0 %v5584
      %v6146 = vpop.f32.mrb[0].mxu0
      %v6147 = vadd.f32 0.0, %v6146
      %v6148 = vpop.f32.mrb[0].mxu0
      %v6149 = vpop.f32.mrb[0].mxu0
      %v6150 = vadd.f32 0.0, %v6149
      %v6151 = vpop.f32.mrb[0].mxu0
      %6152 = vmatprep.mubr.bf16.mxu0 %v5731
      %6153 = vmatmul.mubr.bf16.gmra.mrb[0].mxu0 %v5586
      %v6154 = vpop.f32.mrb[0].mxu0
      %v6155 = vadd.f32 0.0, %v6154
      %v6156 = vpop.f32.mrb[0].mxu0
      %v6157 = vpop.f32.mrb[0].mxu0
      %v6158 = vadd.f32 0.0, %v6157
      %v6159 = vpop.f32.mrb[0].mxu0
      %6160 = vmatprep.mubr.bf16.mxu0 %v5734
      %6161 = vmatmul.mubr.bf16.gmra.mrb[0].mxu0 %v5588
      %v6162 = vpop.f32.mrb[0].mxu0
      %v6163 = vadd.f32 0.0, %v6162
      %v6164 = vpop.f32.mrb[0].mxu0
      %v6165 = vpop.f32.mrb[0].mxu0
      %v6166 = vadd.f32 0.0, %v6165
      %v6167 = vpop.f32.mrb[0].mxu0
      %6168 = vmatprep.mubr.bf16.mxu0 %v5737
      %6169 = vmatmul.mubr.bf16.gmra.mrb[0].mxu0 %v5590
      %v6170 = vpop.f32.mrb[0].mxu0
      %v6171 = vadd.f32 0.0, %v6170
      %v6172 = vpop.f32.mrb[0].mxu0
      %v6173 = vpop.f32.mrb[0].mxu0
      %v6174 = vadd.f32 0.0, %v6173
      %v6175 = vpop.f32.mrb[0].mxu0
      %6176 = vmatprep.mubr.bf16.mxu0 %v5740
      %6177 = vmatmul.mubr.bf16.gmra.mrb[0].mxu0 %v5592
      %v6178 = vpop.f32.mrb[0].mxu0
      %v6179 = vadd.f32 0.0, %v6178
      %v6180 = vpop.f32.mrb[0].mxu0
      %v6181 = vpop.f32.mrb[0].mxu0
      %v6182 = vadd.f32 0.0, %v6181
      %v6183 = vpop.f32.mrb[0].mxu0
      %6184 = vmatprep.mubr.bf16.mxu0 %v5743
      %6185 = vmatmul.mubr.bf16.gmra.mrb[0].mxu0 %v5594
      %v6186 = vpop.f32.mrb[0].mxu0
      %v6187 = vadd.f32 0.0, %v6186
      %v6188 = vpop.f32.mrb[0].mxu0
      %v6189 = vpop.f32.mrb[0].mxu0
      %v6190 = vadd.f32 0.0, %v6189
      %v6191 = vpop.f32.mrb[0].mxu0
      %6192 = vmatprep.mubr.bf16.mxu0 %v5746
      %6193 = vmatmul.mubr.bf16.gmra.mrb[0].mxu0 %v5596
      %v6194 = vpop.f32.mrb[0].mxu0
      %v6195 = vadd.f32 0.0, %v6194
      %v6196 = vpop.f32.mrb[0].mxu0
      %v6197 = vpop.f32.mrb[0].mxu0
      %v6198 = vadd.f32 0.0, %v6197
      %v6199 = vpop.f32.mrb[0].mxu0
      %6200 = vmatprep.mubr.bf16.mxu0 %v5749
      %6201 = vmatmul.mubr.bf16.gmra.mrb[0].mxu0 %v5598
      %v6202 = vpop.f32.mrb[0].mxu0
      %v6203 = vadd.f32 0.0, %v6202
      %v6204 = vpop.f32.mrb[0].mxu0
      %v6205 = vpop.f32.mrb[0].mxu0
      %v6206 = vadd.f32 0.0, %v6205
      %v6207 = vpop.f32.mrb[0].mxu0
      %6208 = vmatprep.mubr.bf16.mxu0 %v5752
      %6209 = vmatmul.mubr.bf16.gmra.mrb[0].mxu0 %v5600
      %v6210 = vpop.f32.mrb[0].mxu0
      %v6211 = vadd.f32 0.0, %v6210
      %v6212 = vpop.f32.mrb[0].mxu0
      %v6213 = vpop.f32.mrb[0].mxu0
      %v6214 = vadd.f32 0.0, %v6213
      %v6215 = vpop.f32.mrb[0].mxu0
      %6216 = vmatprep.mubr.bf16.mxu0 %v5755
      %6217 = vmatmul.mubr.bf16.gmra.mrb[0].mxu0 %v5602
      %v6218 = vpop.f32.mrb[0].mxu0
      %v6219 = vadd.f32 0.0, %v6218
      %v6220 = vpop.f32.mrb[0].mxu0
      %v6221 = vpop.f32.mrb[0].mxu0
      %v6222 = vadd.f32 0.0, %v6221
      %v6223 = vpop.f32.mrb[0].mxu0
      %6224 = vmatprep.mubr.bf16.mxu0 %v5758
      %6225 = vmatmul.mubr.bf16.gmra.mrb[0].mxu0 %v5604
      %v6226 = vpop.f32.mrb[0].mxu0
      %v6227 = vadd.f32 0.0, %v6226
      %v6228 = vpop.f32.mrb[0].mxu0
      %v6229 = vpop.f32.mrb[0].mxu0
      %v6230 = vadd.f32 0.0, %v6229
      %v6231 = vpop.f32.mrb[0].mxu0
      %6232 = vmatprep.mubr.bf16.mxu0 %v5761
      %6233 = vmatmul.mubr.bf16.gmra.mrb[0].mxu0 %v5606
      %v6234 = vpop.f32.mrb[0].mxu0
      %v6235 = vadd.f32 0.0, %v6234
      %v6236 = vpop.f32.mrb[0].mxu0
      %v6237 = vpop.f32.mrb[0].mxu0
      %v6238 = vadd.f32 0.0, %v6237
      %v6239 = vpop.f32.mrb[0].mxu0
      %6240 = vmatprep.mubr.bf16.mxu0 %v5764
      %6241 = vmatmul.mubr.bf16.gmra.mrb[0].mxu0 %v5608
      %v6242 = vpop.f32.mrb[0].mxu0
      %v6243 = vadd.f32 0.0, %v6242
      %v6244 = vpop.f32.mrb[0].mxu0
      %v6245 = vpop.f32.mrb[0].mxu0
      %v6246 = vadd.f32 0.0, %v6245
      %v6247 = vpop.f32.mrb[0].mxu0
      %6248 = vmatprep.mubr.bf16.mxu0 %v5767
      %6249 = vmatmul.mubr.bf16.gmra.mrb[0].mxu0 %v5610
      %v6250 = vpop.f32.mrb[0].mxu0
      %v6251 = vadd.f32 0.0, %v6250
      %v6252 = vpop.f32.mrb[0].mxu0
      %v6253 = vpop.f32.mrb[0].mxu0
      %v6254 = vadd.f32 0.0, %v6253
      %v6255 = vpop.f32.mrb[0].mxu0
      %6256 = vmatprep.mubr.bf16.mxu0 %v5770
      %6257 = vmatmul.mubr.bf16.gmra.mrb[0].mxu0 %v5612
      %v6258 = vpop.f32.mrb[0].mxu0
      %v6259 = vadd.f32 0.0, %v6258
      %v6260 = vpop.f32.mrb[0].mxu0
      %v6261 = vpop.f32.mrb[0].mxu0
      %v6262 = vadd.f32 0.0, %v6261
      %v6263 = vpop.f32.mrb[0].mxu0
      %6264 = vmatprep.mubr.bf16.mxu0 %v5773
      %6265 = vmatmul.mubr.bf16.gmra.mrb[0].mxu0 %v5614
      %v6266 = vpop.f32.mrb[0].mxu0
      %v6267 = vadd.f32 0.0, %v6266
      %v6268 = vpop.f32.mrb[0].mxu0
      %v6269 = vpop.f32.mrb[0].mxu0
      %v6270 = vadd.f32 0.0, %v6269
      %v6271 = vpop.f32.mrb[0].mxu0
      %6272 = vdwg.mxu0
      %s6273 = scalar_lea.vmem %s5, 192
      %v6274 = vld [vmem:[%s6273] sm:$0xf]
      %v6275 = vld [vmem:[%s6273 + $0x4] sm:$0xf]
      %v6276 = vld [vmem:[%s6273 + $0x8] sm:$0xf]
      %v6277 = vld [vmem:[%s6273 + $0xc] sm:$0xf]
      %v6278 = vld [vmem:[%s6273 + $0x10] sm:$0xf]
      %v6279 = vld [vmem:[%s6273 + $0x14] sm:$0xf]
      %v6280 = vld [vmem:[%s6273 + $0x18] sm:$0xf]
      %v6281 = vld [vmem:[%s6273 + $0x1c] sm:$0xf]
      %v6282 = vld [vmem:[%s6273 + $0x20] sm:$0xf]
      %v6283 = vld [vmem:[%s6273 + $0x24] sm:$0xf]
      %v6284 = vld [vmem:[%s6273 + $0x28] sm:$0xf]
      %v6285 = vld [vmem:[%s6273 + $0x2c] sm:$0xf]
      %v6286 = vld [vmem:[%s6273 + $0x30] sm:$0xf]
      %v6287 = vld [vmem:[%s6273 + $0x34] sm:$0xf]
      %v6288 = vld [vmem:[%s6273 + $0x38] sm:$0xf]
      %v6289 = vld [vmem:[%s6273 + $0x3c] sm:$0xf]
      %v6290 = vld [vmem:[%s6273 + $0x40] sm:$0xf]
      %v6291 = vld [vmem:[%s6273 + $0x44] sm:$0xf]
      %v6292 = vld [vmem:[%s6273 + $0x48] sm:$0xf]
      %v6293 = vld [vmem:[%s6273 + $0x4c] sm:$0xf]
      %v6294 = vld [vmem:[%s6273 + $0x50] sm:$0xf]
      %v6295 = vld [vmem:[%s6273 + $0x54] sm:$0xf]
      %v6296 = vld [vmem:[%s6273 + $0x58] sm:$0xf]
      %v6297 = vld [vmem:[%s6273 + $0x5c] sm:$0xf]
      %v6322 = vunpack.c.l.b16 %v6274
      %v6323 = vunpack.c.l.b16 %v6275
      %v6324 = vunpack.c.l.b16 %v6276
      %v6325 = vunpack.c.l.b16 %v6277
      %v6326 = vunpack.c.l.b16 %v6278
      %v6327 = vunpack.c.l.b16 %v6279
      %v6328 = vunpack.c.l.b16 %v6280
      %v6329 = vunpack.c.l.b16 %v6281
      %v6330 = vunpack.c.l.b16 %v6282
      %v6331 = vunpack.c.l.b16 %v6283
      %v6332 = vunpack.c.l.b16 %v6284
      %v6333 = vunpack.c.l.b16 %v6285
      %v6334 = vunpack.c.l.b16 %v6286
      %v6335 = vunpack.c.l.b16 %v6287
      %v6336 = vunpack.c.l.b16 %v6288
      %v6337 = vunpack.c.l.b16 %v6289
      %v6338 = vunpack.c.l.b16 %v6290
      %v6339 = vunpack.c.l.b16 %v6291
      %v6340 = vunpack.c.l.b16 %v6292
      %v6341 = vunpack.c.l.b16 %v6293
      %v6342 = vunpack.c.l.b16 %v6294
      %v6343 = vunpack.c.l.b16 %v6295
      %v6344 = vunpack.c.l.b16 %v6296
      %v6345 = vunpack.c.l.b16 %v6297
      %v6346 = vpack.c.b16 %v6323, %v6322
      %v6347 = vpack.c.b16 %v6325, %v6324
      %v6348 = vpack.c.b16 %v6327, %v6326
      %v6349 = vpack.c.b16 %v6329, %v6328
      %v6350 = vpack.c.b16 %v6331, %v6330
      %v6351 = vpack.c.b16 %v6333, %v6332
      %v6352 = vpack.c.b16 %v6335, %v6334
      %v6353 = vpack.c.b16 %v6337, %v6336
      %v6354 = vpack.c.b16 %v6339, %v6338
      %v6355 = vpack.c.b16 %v6341, %v6340
      %v6356 = vpack.c.b16 %v6343, %v6342
      %v6357 = vpack.c.b16 %v6345, %v6344
      %6370 = vmatprep.subr.bf16.mxu0 0
      %6371 = vmatpush1.bf16.msra.mxu0 %v6346
      %6372 = vmatprep.subr.bf16.mxu0 0
      %6373 = vmatpush1.bf16.msra.mxu0 %v6347
      %6374 = vmatprep.subr.bf16.mxu0 0
      %6375 = vmatpush1.bf16.msra.mxu0 %v6348
      %6376 = vmatprep.subr.bf16.mxu0 0
      %6377 = vmatpush1.bf16.msra.mxu0 %v6349
      %6378 = vmatprep.subr.bf16.mxu0 0
      %6379 = vmatpush1.bf16.msra.mxu0 %v6350
      %6380 = vmatprep.subr.bf16.mxu0 0
      %6381 = vmatpush1.bf16.msra.mxu0 %v6351
      %6382 = vmatprep.subr.bf16.mxu0 0
      %6383 = vmatpush1.bf16.msra.mxu0 %v6352
      %6384 = vmatprep.subr.bf16.mxu0 0
      %6385 = vmatpush1.bf16.msra.mxu0 %v6353
      %6386 = vmatprep.subr.bf16.mxu0 0
      %6387 = vmatpush1.bf16.msra.mxu0 %v6354
      %6388 = vmatprep.subr.bf16.mxu0 0
      %6389 = vmatpush1.bf16.msra.mxu0 %v6355
      %6390 = vmatprep.subr.bf16.mxu0 0
      %6391 = vmatpush1.bf16.msra.mxu0 %v6356
      %6392 = vmatprep.subr.bf16.mxu0 0
      %6393 = vmatpush1.bf16.msra.mxu0 %v6357
      %6394 = vmatprep.subr.bf16.mxu0 0
      %6395 = vmatpush1.bf16.msra.mxu0 0
      %6396 = vmatprep.subr.bf16.mxu0 0
      %6397 = vmatpush1.bf16.msra.mxu0 0
      %6398 = vmatprep.subr.bf16.mxu0 0
      %6399 = vmatpush1.bf16.msra.mxu0 0
      %6400 = vmatprep.subr.bf16.mxu0 0
      %6401 = vmatpush1.bf16.msra.mxu0 0
      %6402 = vmatprep.mubr.bf16.mxu0 %v5713
      %6403 = vmatmul.mubr.bf16.gmra.mrb[0].mxu0 %v5574
      %v6404 = vpop.f32.mrb[0].mxu0
      %v6405 = vadd.f32 0.0, %v6404
      %v6406 = vpop.f32.mrb[0].mxu0
      %v6407 = vpop.f32.mrb[0].mxu0
      %v6408 = vadd.f32 0.0, %v6407
      %v6409 = vpop.f32.mrb[0].mxu0
      %6410 = vmatprep.mubr.bf16.mxu0 %v5716
      %6411 = vmatmul.mubr.bf16.gmra.mrb[0].mxu0 %v5576
      %v6412 = vpop.f32.mrb[0].mxu0
      %v6413 = vadd.f32 0.0, %v6412
      %v6414 = vpop.f32.mrb[0].mxu0
      %v6415 = vpop.f32.mrb[0].mxu0
      %v6416 = vadd.f32 0.0, %v6415
      %v6417 = vpop.f32.mrb[0].mxu0
      %6418 = vmatprep.mubr.bf16.mxu0 %v5719
      %6419 = vmatmul.mubr.bf16.gmra.mrb[0].mxu0 %v5578
      %v6420 = vpop.f32.mrb[0].mxu0
      %v6421 = vadd.f32 0.0, %v6420
      %v6422 = vpop.f32.mrb[0].mxu0
      %v6423 = vpop.f32.mrb[0].mxu0
      %v6424 = vadd.f32 0.0, %v6423
      %v6425 = vpop.f32.mrb[0].mxu0
      %6426 = vmatprep.mubr.bf16.mxu0 %v5722
      %6427 = vmatmul.mubr.bf16.gmra.mrb[0].mxu0 %v5580
      %v6428 = vpop.f32.mrb[0].mxu0
      %v6429 = vadd.f32 0.0, %v6428
      %v6430 = vpop.f32.mrb[0].mxu0
      %v6431 = vpop.f32.mrb[0].mxu0
      %v6432 = vadd.f32 0.0, %v6431
      %v6433 = vpop.f32.mrb[0].mxu0
      %6434 = vmatprep.mubr.bf16.mxu0 %v5725
      %6435 = vmatmul.mubr.bf16.gmra.mrb[0].mxu0 %v5582
      %v6436 = vpop.f32.mrb[0].mxu0
      %v6437 = vadd.f32 0.0, %v6436
      %v6438 = vpop.f32.mrb[0].mxu0
      %v6439 = vpop.f32.mrb[0].mxu0
      %v6440 = vadd.f32 0.0, %v6439
      %v6441 = vpop.f32.mrb[0].mxu0
      %6442 = vmatprep.mubr.bf16.mxu0 %v5728
      %6443 = vmatmul.mubr.bf16.gmra.mrb[0].mxu0 %v5584
      %v6444 = vpop.f32.mrb[0].mxu0
      %v6445 = vadd.f32 0.0, %v6444
      %v6446 = vpop.f32.mrb[0].mxu0
      %v6447 = vpop.f32.mrb[0].mxu0
      %v6448 = vadd.f32 0.0, %v6447
      %v6449 = vpop.f32.mrb[0].mxu0
      %6450 = vmatprep.mubr.bf16.mxu0 %v5731
      %6451 = vmatmul.mubr.bf16.gmra.mrb[0].mxu0 %v5586
      %v6452 = vpop.f32.mrb[0].mxu0
      %v6453 = vadd.f32 0.0, %v6452
      %v6454 = vpop.f32.mrb[0].mxu0
      %v6455 = vpop.f32.mrb[0].mxu0
      %v6456 = vadd.f32 0.0, %v6455
      %v6457 = vpop.f32.mrb[0].mxu0
      %6458 = vmatprep.mubr.bf16.mxu0 %v5734
      %6459 = vmatmul.mubr.bf16.gmra.mrb[0].mxu0 %v5588
      %v6460 = vpop.f32.mrb[0].mxu0
      %v6461 = vadd.f32 0.0, %v6460
      %v6462 = vpop.f32.mrb[0].mxu0
      %v6463 = vpop.f32.mrb[0].mxu0
      %v6464 = vadd.f32 0.0, %v6463
      %v6465 = vpop.f32.mrb[0].mxu0
      %6466 = vmatprep.mubr.bf16.mxu0 %v5737
      %6467 = vmatmul.mubr.bf16.gmra.mrb[0].mxu0 %v5590
      %v6468 = vpop.f32.mrb[0].mxu0
      %v6469 = vadd.f32 0.0, %v6468
      %v6470 = vpop.f32.mrb[0].mxu0
      %v6471 = vpop.f32.mrb[0].mxu0
      %v6472 = vadd.f32 0.0, %v6471
      %v6473 = vpop.f32.mrb[0].mxu0
      %6474 = vmatprep.mubr.bf16.mxu0 %v5740
      %6475 = vmatmul.mubr.bf16.gmra.mrb[0].mxu0 %v5592
      %v6476 = vpop.f32.mrb[0].mxu0
      %v6477 = vadd.f32 0.0, %v6476
      %v6478 = vpop.f32.mrb[0].mxu0
      %v6479 = vpop.f32.mrb[0].mxu0
      %v6480 = vadd.f32 0.0, %v6479
      %v6481 = vpop.f32.mrb[0].mxu0
      %6482 = vmatprep.mubr.bf16.mxu0 %v5743
      %6483 = vmatmul.mubr.bf16.gmra.mrb[0].mxu0 %v5594
      %v6484 = vpop.f32.mrb[0].mxu0
      %v6485 = vadd.f32 0.0, %v6484
      %v6486 = vpop.f32.mrb[0].mxu0
      %v6487 = vpop.f32.mrb[0].mxu0
      %v6488 = vadd.f32 0.0, %v6487
      %v6489 = vpop.f32.mrb[0].mxu0
      %6490 = vmatprep.mubr.bf16.mxu0 %v5746
      %6491 = vmatmul.mubr.bf16.gmra.mrb[0].mxu0 %v5596
      %v6492 = vpop.f32.mrb[0].mxu0
      %v6493 = vadd.f32 0.0, %v6492
      %v6494 = vpop.f32.mrb[0].mxu0
      %v6495 = vpop.f32.mrb[0].mxu0
      %v6496 = vadd.f32 0.0, %v6495
      %v6497 = vpop.f32.mrb[0].mxu0
      %6498 = vmatprep.mubr.bf16.mxu0 %v5749
      %6499 = vmatmul.mubr.bf16.gmra.mrb[0].mxu0 %v5598
      %v6500 = vpop.f32.mrb[0].mxu0
      %v6501 = vadd.f32 0.0, %v6500
      %v6502 = vpop.f32.mrb[0].mxu0
      %v6503 = vpop.f32.mrb[0].mxu0
      %v6504 = vadd.f32 0.0, %v6503
      %v6505 = vpop.f32.mrb[0].mxu0
      %6506 = vmatprep.mubr.bf16.mxu0 %v5752
      %6507 = vmatmul.mubr.bf16.gmra.mrb[0].mxu0 %v5600
      %v6508 = vpop.f32.mrb[0].mxu0
      %v6509 = vadd.f32 0.0, %v6508
      %v6510 = vpop.f32.mrb[0].mxu0
      %v6511 = vpop.f32.mrb[0].mxu0
      %v6512 = vadd.f32 0.0, %v6511
      %v6513 = vpop.f32.mrb[0].mxu0
      %6514 = vmatprep.mubr.bf16.mxu0 %v5755
      %6515 = vmatmul.mubr.bf16.gmra.mrb[0].mxu0 %v5602
      %v6516 = vpop.f32.mrb[0].mxu0
      %v6517 = vadd.f32 0.0, %v6516
      %v6518 = vpop.f32.mrb[0].mxu0
      %v6519 = vpop.f32.mrb[0].mxu0
      %v6520 = vadd.f32 0.0, %v6519
      %v6521 = vpop.f32.mrb[0].mxu0
      %6522 = vmatprep.mubr.bf16.mxu0 %v5758
      %6523 = vmatmul.mubr.bf16.gmra.mrb[0].mxu0 %v5604
      %v6524 = vpop.f32.mrb[0].mxu0
      %v6525 = vadd.f32 0.0, %v6524
      %v6526 = vpop.f32.mrb[0].mxu0
      %v6527 = vpop.f32.mrb[0].mxu0
      %v6528 = vadd.f32 0.0, %v6527
      %v6529 = vpop.f32.mrb[0].mxu0
      %6530 = vmatprep.mubr.bf16.mxu0 %v5761
      %6531 = vmatmul.mubr.bf16.gmra.mrb[0].mxu0 %v5606
      %v6532 = vpop.f32.mrb[0].mxu0
      %v6533 = vadd.f32 0.0, %v6532
      %v6534 = vpop.f32.mrb[0].mxu0
      %v6535 = vpop.f32.mrb[0].mxu0
      %v6536 = vadd.f32 0.0, %v6535
      %v6537 = vpop.f32.mrb[0].mxu0
      %6538 = vmatprep.mubr.bf16.mxu0 %v5764
      %6539 = vmatmul.mubr.bf16.gmra.mrb[0].mxu0 %v5608
      %v6540 = vpop.f32.mrb[0].mxu0
      %v6541 = vadd.f32 0.0, %v6540
      %v6542 = vpop.f32.mrb[0].mxu0
      %v6543 = vpop.f32.mrb[0].mxu0
      %v6544 = vadd.f32 0.0, %v6543
      %v6545 = vpop.f32.mrb[0].mxu0
      %6546 = vmatprep.mubr.bf16.mxu0 %v5767
      %6547 = vmatmul.mubr.bf16.gmra.mrb[0].mxu0 %v5610
      %v6548 = vpop.f32.mrb[0].mxu0
      %v6549 = vadd.f32 0.0, %v6548
      %v6550 = vpop.f32.mrb[0].mxu0
      %v6551 = vpop.f32.mrb[0].mxu0
      %v6552 = vadd.f32 0.0, %v6551
      %v6553 = vpop.f32.mrb[0].mxu0
      %6554 = vmatprep.mubr.bf16.mxu0 %v5770
      %6555 = vmatmul.mubr.bf16.gmra.mrb[0].mxu0 %v5612
      %v6556 = vpop.f32.mrb[0].mxu0
      %v6557 = vadd.f32 0.0, %v6556
      %v6558 = vpop.f32.mrb[0].mxu0
      %v6559 = vpop.f32.mrb[0].mxu0
      %v6560 = vadd.f32 0.0, %v6559
      %v6561 = vpop.f32.mrb[0].mxu0
      %6562 = vmatprep.mubr.bf16.mxu0 %v5773
      %6563 = vmatmul.mubr.bf16.gmra.mrb[0].mxu0 %v5614
      %v6564 = vpop.f32.mrb[0].mxu0
      %v6565 = vadd.f32 0.0, %v6564
      %v6566 = vpop.f32.mrb[0].mxu0
      %v6567 = vpop.f32.mrb[0].mxu0
      %v6568 = vadd.f32 0.0, %v6567
      %v6569 = vpop.f32.mrb[0].mxu0
      %6570 = vdwg.mxu0
      %v6613 = vrot.slane %v6107, 1
      %v6614 = vrot.slane %v6110, 1
      %v6615 = vsel %vm4930, %v6613, %v6614
      %v6616 = vrot.slane %v6115, 1
      %v6617 = vsel %vm4930, %v6614, %v6616
      %v6618 = vrot.slane %v6118, 1
      %v6619 = vsel %vm4930, %v6616, %v6618
      %v6620 = vrot.slane %v6123, 1
      %v6621 = vsel %vm4930, %v6618, %v6620
      %v6622 = vrot.slane %v6126, 1
      %v6623 = vsel %vm4930, %v6620, %v6622
      %v6624 = vrot.slane %v6131, 1
      %v6625 = vsel %vm4930, %v6622, %v6624
      %v6626 = vrot.slane %v6134, 1
      %v6627 = vsel %vm4930, %v6624, %v6626
      %v6628 = vrot.slane %v6139, 1
      %v6629 = vsel %vm4930, %v6626, %v6628
      %v6630 = vrot.slane %v6142, 1
      %v6631 = vsel %vm4930, %v6628, %v6630
      %v6632 = vrot.slane %v6147, 1
      %v6633 = vsel %vm4930, %v6630, %v6632
      %v6634 = vrot.slane %v6150, 1
      %v6635 = vsel %vm4930, %v6632, %v6634
      %v6636 = vrot.slane %v6155, 1
      %v6637 = vsel %vm4930, %v6634, %v6636
      %v6638 = vrot.slane %v6158, 1
      %v6639 = vsel %vm4930, %v6636, %v6638
      %v6640 = vrot.slane %v6163, 1
      %v6641 = vsel %vm4930, %v6638, %v6640
      %v6642 = vrot.slane %v6166, 1
      %v6643 = vsel %vm4930, %v6640, %v6642
      %v6644 = vrot.slane %v6171, 1
      %v6645 = vsel %vm4930, %v6642, %v6644
      %v6646 = vrot.slane %v6174, 1
      %v6647 = vsel %vm4930, %v6644, %v6646
      %v6648 = vrot.slane %v6179, 1
      %v6649 = vsel %vm4930, %v6646, %v6648
      %v6650 = vrot.slane %v6182, 1
      %v6651 = vsel %vm4930, %v6648, %v6650
      %v6652 = vrot.slane %v6187, 1
      %v6653 = vsel %vm4930, %v6650, %v6652
      %v6654 = vrot.slane %v6190, 1
      %v6655 = vsel %vm4930, %v6652, %v6654
      %v6656 = vrot.slane %v6195, 1
      %v6657 = vsel %vm4930, %v6654, %v6656
      %v6658 = vrot.slane %v6198, 1
      %v6659 = vsel %vm4930, %v6656, %v6658
      %v6660 = vrot.slane %v6203, 1
      %v6661 = vsel %vm4930, %v6658, %v6660
      %v6662 = vrot.slane %v6206, 1
      %v6663 = vsel %vm4930, %v6660, %v6662
      %v6664 = vrot.slane %v6211, 1
      %v6665 = vsel %vm4930, %v6662, %v6664
      %v6666 = vrot.slane %v6214, 1
      %v6667 = vsel %vm4930, %v6664, %v6666
      %v6668 = vrot.slane %v6219, 1
      %v6669 = vsel %vm4930, %v6666, %v6668
      %v6670 = vrot.slane %v6222, 1
      %v6671 = vsel %vm4930, %v6668, %v6670
      %v6672 = vrot.slane %v6227, 1
      %v6673 = vsel %vm4930, %v6670, %v6672
      %v6674 = vrot.slane %v6230, 1
      %v6675 = vsel %vm4930, %v6672, %v6674
      %v6676 = vrot.slane %v6235, 1
      %v6677 = vsel %vm4930, %v6674, %v6676
      %v6678 = vrot.slane %v6238, 1
      %v6679 = vsel %vm4930, %v6676, %v6678
      %v6680 = vrot.slane %v6243, 1
      %v6681 = vsel %vm4930, %v6678, %v6680
      %v6682 = vrot.slane %v6246, 1
      %v6683 = vsel %vm4930, %v6680, %v6682
      %v6684 = vrot.slane %v6251, 1
      %v6685 = vsel %vm4930, %v6682, %v6684
      %v6686 = vrot.slane %v6254, 1
      %v6687 = vsel %vm4930, %v6684, %v6686
      %v6688 = vrot.slane %v6259, 1
      %v6689 = vsel %vm4930, %v6686, %v6688
      %v6690 = vrot.slane %v6262, 1
      %v6691 = vsel %vm4930, %v6688, %v6690
      %v6692 = vrot.slane %v6267, 1
      %v6693 = vsel %vm4930, %v6690, %v6692
      %v6694 = vrot.slane %v6270, 1
      %v6695 = vsel %vm4930, %v6692, %v6694
      %v6737 = vadd.f32 %v5810, %v6615
      %v6738 = vadd.f32 %v5813, %v6617
      %v6739 = vadd.f32 %v5818, %v6619
      %v6740 = vadd.f32 %v5821, %v6621
      %v6741 = vadd.f32 %v5826, %v6623
      %v6742 = vadd.f32 %v5829, %v6625
      %v6743 = vadd.f32 %v5834, %v6627
      %v6744 = vadd.f32 %v5837, %v6629
      %v6745 = vadd.f32 %v5842, %v6631
      %v6746 = vadd.f32 %v5845, %v6633
      %v6747 = vadd.f32 %v5850, %v6635
      %v6748 = vadd.f32 %v5853, %v6637
      %v6749 = vadd.f32 %v5858, %v6639
      %v6750 = vadd.f32 %v5861, %v6641
      %v6751 = vadd.f32 %v5866, %v6643
      %v6752 = vadd.f32 %v5869, %v6645
      %v6753 = vadd.f32 %v5874, %v6647
      %v6754 = vadd.f32 %v5877, %v6649
      %v6755 = vadd.f32 %v5882, %v6651
      %v6756 = vadd.f32 %v5885, %v6653
      %v6757 = vadd.f32 %v5890, %v6655
      %v6758 = vadd.f32 %v5893, %v6657
      %v6759 = vadd.f32 %v5898, %v6659
      %v6760 = vadd.f32 %v5901, %v6661
      %v6761 = vadd.f32 %v5906, %v6663
      %v6762 = vadd.f32 %v5909, %v6665
      %v6763 = vadd.f32 %v5914, %v6667
      %v6764 = vadd.f32 %v5917, %v6669
      %v6765 = vadd.f32 %v5922, %v6671
      %v6766 = vadd.f32 %v5925, %v6673
      %v6767 = vadd.f32 %v5930, %v6675
      %v6768 = vadd.f32 %v5933, %v6677
      %v6769 = vadd.f32 %v5938, %v6679
      %v6770 = vadd.f32 %v5941, %v6681
      %v6771 = vadd.f32 %v5946, %v6683
      %v6772 = vadd.f32 %v5949, %v6685
      %v6773 = vadd.f32 %v5954, %v6687
      %v6774 = vadd.f32 %v5957, %v6689
      %v6775 = vadd.f32 %v5962, %v6691
      %v6776 = vadd.f32 %v5965, %v6693
      %v6777 = vadd.f32 %v5970, %v6695
      %vm6820 = vcmask 1045504
      %v6821 = vrot.slane %v6405, 2
      %v6822 = vrot.slane %v6408, 2
      %v6823 = vsel %vm6820, %v6821, %v6822
      %v6824 = vrot.slane %v6413, 2
      %v6825 = vsel %vm6820, %v6822, %v6824
      %v6826 = vrot.slane %v6416, 2
      %v6827 = vsel %vm6820, %v6824, %v6826
      %v6828 = vrot.slane %v6421, 2
      %v6829 = vsel %vm6820, %v6826, %v6828
      %v6830 = vrot.slane %v6424, 2
      %v6831 = vsel %vm6820, %v6828, %v6830
      %v6832 = vrot.slane %v6429, 2
      %v6833 = vsel %vm6820, %v6830, %v6832
      %v6834 = vrot.slane %v6432, 2
      %v6835 = vsel %vm6820, %v6832, %v6834
      %v6836 = vrot.slane %v6437, 2
      %v6837 = vsel %vm6820, %v6834, %v6836
      %v6838 = vrot.slane %v6440, 2
      %v6839 = vsel %vm6820, %v6836, %v6838
      %v6840 = vrot.slane %v6445, 2
      %v6841 = vsel %vm6820, %v6838, %v6840
      %v6842 = vrot.slane %v6448, 2
      %v6843 = vsel %vm6820, %v6840, %v6842
      %v6844 = vrot.slane %v6453, 2
      %v6845 = vsel %vm6820, %v6842, %v6844
      %v6846 = vrot.slane %v6456, 2
      %v6847 = vsel %vm6820, %v6844, %v6846
      %v6848 = vrot.slane %v6461, 2
      %v6849 = vsel %vm6820, %v6846, %v6848
      %v6850 = vrot.slane %v6464, 2
      %v6851 = vsel %vm6820, %v6848, %v6850
      %v6852 = vrot.slane %v6469, 2
      %v6853 = vsel %vm6820, %v6850, %v6852
      %v6854 = vrot.slane %v6472, 2
      %v6855 = vsel %vm6820, %v6852, %v6854
      %v6856 = vrot.slane %v6477, 2
      %v6857 = vsel %vm6820, %v6854, %v6856
      %v6858 = vrot.slane %v6480, 2
      %v6859 = vsel %vm6820, %v6856, %v6858
      %v6860 = vrot.slane %v6485, 2
      %v6861 = vsel %vm6820, %v6858, %v6860
      %v6862 = vrot.slane %v6488, 2
      %v6863 = vsel %vm6820, %v6860, %v6862
      %v6864 = vrot.slane %v6493, 2
      %v6865 = vsel %vm6820, %v6862, %v6864
      %v6866 = vrot.slane %v6496, 2
      %v6867 = vsel %vm6820, %v6864, %v6866
      %v6868 = vrot.slane %v6501, 2
      %v6869 = vsel %vm6820, %v6866, %v6868
      %v6870 = vrot.slane %v6504, 2
      %v6871 = vsel %vm6820, %v6868, %v6870
      %v6872 = vrot.slane %v6509, 2
      %v6873 = vsel %vm6820, %v6870, %v6872
      %v6874 = vrot.slane %v6512, 2
      %v6875 = vsel %vm6820, %v6872, %v6874
      %v6876 = vrot.slane %v6517, 2
      %v6877 = vsel %vm6820, %v6874, %v6876
      %v6878 = vrot.slane %v6520, 2
      %v6879 = vsel %vm6820, %v6876, %v6878
      %v6880 = vrot.slane %v6525, 2
      %v6881 = vsel %vm6820, %v6878, %v6880
      %v6882 = vrot.slane %v6528, 2
      %v6883 = vsel %vm6820, %v6880, %v6882
      %v6884 = vrot.slane %v6533, 2
      %v6885 = vsel %vm6820, %v6882, %v6884
      %v6886 = vrot.slane %v6536, 2
      %v6887 = vsel %vm6820, %v6884, %v6886
      %v6888 = vrot.slane %v6541, 2
      %v6889 = vsel %vm6820, %v6886, %v6888
      %v6890 = vrot.slane %v6544, 2
      %v6891 = vsel %vm6820, %v6888, %v6890
      %v6892 = vrot.slane %v6549, 2
      %v6893 = vsel %vm6820, %v6890, %v6892
      %v6894 = vrot.slane %v6552, 2
      %v6895 = vsel %vm6820, %v6892, %v6894
      %v6896 = vrot.slane %v6557, 2
      %v6897 = vsel %vm6820, %v6894, %v6896
      %v6898 = vrot.slane %v6560, 2
      %v6899 = vsel %vm6820, %v6896, %v6898
      %v6900 = vrot.slane %v6565, 2
      %v6901 = vsel %vm6820, %v6898, %v6900
      %v6902 = vrot.slane %v6568, 2
      %v6903 = vsel %vm6820, %v6900, %v6902
      %v6945 = vadd.f32 %v6737, %v6823
      %v6946 = vadd.f32 %v6738, %v6825
      %v6947 = vadd.f32 %v6739, %v6827
      %v6948 = vadd.f32 %v6740, %v6829
      %v6949 = vadd.f32 %v6741, %v6831
      %v6950 = vadd.f32 %v6742, %v6833
      %v6951 = vadd.f32 %v6743, %v6835
      %v6952 = vadd.f32 %v6744, %v6837
      %v6953 = vadd.f32 %v6745, %v6839
      %v6954 = vadd.f32 %v6746, %v6841
      %v6955 = vadd.f32 %v6747, %v6843
      %v6956 = vadd.f32 %v6748, %v6845
      %v6957 = vadd.f32 %v6749, %v6847
      %v6958 = vadd.f32 %v6750, %v6849
      %v6959 = vadd.f32 %v6751, %v6851
      %v6960 = vadd.f32 %v6752, %v6853
      %v6961 = vadd.f32 %v6753, %v6855
      %v6962 = vadd.f32 %v6754, %v6857
      %v6963 = vadd.f32 %v6755, %v6859
      %v6964 = vadd.f32 %v6756, %v6861
      %v6965 = vadd.f32 %v6757, %v6863
      %v6966 = vadd.f32 %v6758, %v6865
      %v6967 = vadd.f32 %v6759, %v6867
      %v6968 = vadd.f32 %v6760, %v6869
      %v6969 = vadd.f32 %v6761, %v6871
      %v6970 = vadd.f32 %v6762, %v6873
      %v6971 = vadd.f32 %v6763, %v6875
      %v6972 = vadd.f32 %v6764, %v6877
      %v6973 = vadd.f32 %v6765, %v6879
      %v6974 = vadd.f32 %v6766, %v6881
      %v6975 = vadd.f32 %v6767, %v6883
      %v6976 = vadd.f32 %v6768, %v6885
      %v6977 = vadd.f32 %v6769, %v6887
      %v6978 = vadd.f32 %v6770, %v6889
      %v6979 = vadd.f32 %v6771, %v6891
      %v6980 = vadd.f32 %v6772, %v6893
      %v6981 = vadd.f32 %v6773, %v6895
      %v6982 = vadd.f32 %v6774, %v6897
      %v6983 = vadd.f32 %v6775, %v6899
      %v6984 = vadd.f32 %v6776, %v6901
      %v6985 = vadd.f32 %v6777, %v6903
      %v6986 = vld [vmem:[%s6] sm:$0x1]
      %v6988 = vlaneseq
      %v6989 = vshrl.u32 %v6988, 7
      %v6990 = vsub.s32 0, %v6989
      %v6991 = vrot.slane %v6986, %v6990
      %v6993 = vadd.f32 %v6945, %v6991
      %v6994 = vadd.f32 %v6946, %v6991
      %v6995 = vadd.f32 %v6947, %v6991
      %v6996 = vadd.f32 %v6948, %v6991
      %v6997 = vadd.f32 %v6949, %v6991
      %v6998 = vadd.f32 %v6950, %v6991
      %v6999 = vadd.f32 %v6951, %v6991
      %v7000 = vadd.f32 %v6952, %v6991
      %v7001 = vadd.f32 %v6953, %v6991
      %v7002 = vadd.f32 %v6954, %v6991
      %v7003 = vadd.f32 %v6955, %v6991
      %v7004 = vadd.f32 %v6956, %v6991
      %v7005 = vadd.f32 %v6957, %v6991
      %v7006 = vadd.f32 %v6958, %v6991
      %v7007 = vadd.f32 %v6959, %v6991
      %v7008 = vadd.f32 %v6960, %v6991
      %v7009 = vadd.f32 %v6961, %v6991
      %v7010 = vadd.f32 %v6962, %v6991
      %v7011 = vadd.f32 %v6963, %v6991
      %v7012 = vadd.f32 %v6964, %v6991
      %v7013 = vadd.f32 %v6965, %v6991
      %v7014 = vadd.f32 %v6966, %v6991
      %v7015 = vadd.f32 %v6967, %v6991
      %v7016 = vadd.f32 %v6968, %v6991
      %v7017 = vadd.f32 %v6969, %v6991
      %v7018 = vadd.f32 %v6970, %v6991
      %v7019 = vadd.f32 %v6971, %v6991
      %v7020 = vadd.f32 %v6972, %v6991
      %v7021 = vadd.f32 %v6973, %v6991
      %v7022 = vadd.f32 %v6974, %v6991
      %v7023 = vadd.f32 %v6975, %v6991
      %v7024 = vadd.f32 %v6976, %v6991
      %v7025 = vadd.f32 %v6977, %v6991
      %v7026 = vadd.f32 %v6978, %v6991
      %v7027 = vadd.f32 %v6979, %v6991
      %v7028 = vadd.f32 %v6980, %v6991
      %v7029 = vadd.f32 %v6981, %v6991
      %v7030 = vadd.f32 %v6982, %v6991
      %v7031 = vadd.f32 %v6983, %v6991
      %v7032 = vadd.f32 %v6984, %v6991
      %v7033 = vadd.f32 %v6985, %v6991
      %v7034 = vmax.f32 %v6993, 0.0
      %v7035 = vmax.f32 %v6994, 0.0
      %v7036 = vmax.f32 %v6995, 0.0
      %v7037 = vmax.f32 %v6996, 0.0
      %v7038 = vmax.f32 %v6997, 0.0
      %v7039 = vmax.f32 %v6998, 0.0
      %v7040 = vmax.f32 %v6999, 0.0
      %v7041 = vmax.f32 %v7000, 0.0
      %v7042 = vmax.f32 %v7001, 0.0
      %v7043 = vmax.f32 %v7002, 0.0
      %v7044 = vmax.f32 %v7003, 0.0
      %v7045 = vmax.f32 %v7004, 0.0
      %v7046 = vmax.f32 %v7005, 0.0
      %v7047 = vmax.f32 %v7006, 0.0
      %v7048 = vmax.f32 %v7007, 0.0
      %v7049 = vmax.f32 %v7008, 0.0
      %v7050 = vmax.f32 %v7009, 0.0
      %v7051 = vmax.f32 %v7010, 0.0
      %v7052 = vmax.f32 %v7011, 0.0
      %v7053 = vmax.f32 %v7012, 0.0
      %v7054 = vmax.f32 %v7013, 0.0
      %v7055 = vmax.f32 %v7014, 0.0
      %v7056 = vmax.f32 %v7015, 0.0
      %v7057 = vmax.f32 %v7016, 0.0
      %v7058 = vmax.f32 %v7017, 0.0
      %v7059 = vmax.f32 %v7018, 0.0
      %v7060 = vmax.f32 %v7019, 0.0
      %v7061 = vmax.f32 %v7020, 0.0
      %v7062 = vmax.f32 %v7021, 0.0
      %v7063 = vmax.f32 %v7022, 0.0
      %v7064 = vmax.f32 %v7023, 0.0
      %v7065 = vmax.f32 %v7024, 0.0
      %v7066 = vmax.f32 %v7025, 0.0
      %v7067 = vmax.f32 %v7026, 0.0
      %v7068 = vmax.f32 %v7027, 0.0
      %v7069 = vmax.f32 %v7028, 0.0
      %v7070 = vmax.f32 %v7029, 0.0
      %v7071 = vmax.f32 %v7030, 0.0
      %v7072 = vmax.f32 %v7031, 0.0
      %v7073 = vmax.f32 %v7032, 0.0
      %v7074 = vmax.f32 %v7033, 0.0
      %7075 = vst.msk [vmem:[#allocation4] sm:$0xff] %vm3964, %v7034
      %7076 = vst.msk [vmem:[#allocation4 + $0x8] sm:$0xff] %vm3964, %v7035
      %7077 = vst.msk [vmem:[#allocation4 + $0x10] sm:$0xff] %vm3964, %v7036
      %7078 = vst.msk [vmem:[#allocation4 + $0x18] sm:$0xff] %vm3964, %v7037
      %7079 = vst.msk [vmem:[#allocation4 + $0x20] sm:$0xff] %vm3964, %v7038
      %7080 = vst.msk [vmem:[#allocation4 + $0x28] sm:$0xff] %vm3964, %v7039
      %7081 = vst.msk [vmem:[#allocation4 + $0x30] sm:$0xff] %vm3964, %v7040
      %7082 = vst.msk [vmem:[#allocation4 + $0x38] sm:$0xff] %vm3964, %v7041
      %7083 = vst.msk [vmem:[#allocation4 + $0x40] sm:$0xff] %vm3964, %v7042
      %7084 = vst.msk [vmem:[#allocation4 + $0x48] sm:$0xff] %vm3964, %v7043
      %7085 = vst.msk [vmem:[#allocation4 + $0x50] sm:$0xff] %vm3964, %v7044
      %7086 = vst.msk [vmem:[#allocation4 + $0x58] sm:$0xff] %vm3964, %v7045
      %7087 = vst.msk [vmem:[#allocation4 + $0x60] sm:$0xff] %vm3964, %v7046
      %7088 = vst.msk [vmem:[#allocation4 + $0x68] sm:$0xff] %vm3964, %v7047
      %7089 = vst.msk [vmem:[#allocation4 + $0x70] sm:$0xff] %vm3964, %v7048
      %7090 = vst.msk [vmem:[#allocation4 + $0x78] sm:$0xff] %vm3964, %v7049
      %7091 = vst.msk [vmem:[#allocation4 + $0x80] sm:$0xff] %vm3964, %v7050
      %7092 = vst.msk [vmem:[#allocation4 + $0x88] sm:$0xff] %vm3964, %v7051
      %7093 = vst.msk [vmem:[#allocation4 + $0x90] sm:$0xff] %vm3964, %v7052
      %7094 = vst.msk [vmem:[#allocation4 + $0x98] sm:$0xff] %vm3964, %v7053
      %7095 = vst.msk [vmem:[#allocation4 + $0xa0] sm:$0xff] %vm3964, %v7054
      %7096 = vst.msk [vmem:[#allocation4 + $0xa8] sm:$0xff] %vm3964, %v7055
      %7097 = vst.msk [vmem:[#allocation4 + $0xb0] sm:$0xff] %vm3964, %v7056
      %7098 = vst.msk [vmem:[#allocation4 + $0xb8] sm:$0xff] %vm3964, %v7057
      %7099 = vst.msk [vmem:[#allocation4 + $0xc0] sm:$0xff] %vm3964, %v7058
      %7100 = vst.msk [vmem:[#allocation4 + $0xc8] sm:$0xff] %vm3964, %v7059
      %7101 = vst.msk [vmem:[#allocation4 + $0xd0] sm:$0xff] %vm3964, %v7060
      %7102 = vst.msk [vmem:[#allocation4 + $0xd8] sm:$0xff] %vm3964, %v7061
      %7103 = vst.msk [vmem:[#allocation4 + $0xe0] sm:$0xff] %vm3964, %v7062
      %7104 = vst.msk [vmem:[#allocation4 + $0xe8] sm:$0xff] %vm3964, %v7063
      %7105 = vst.msk [vmem:[#allocation4 + $0xf0] sm:$0xff] %vm3964, %v7064
      %7106 = vst.msk [vmem:[#allocation4 + $0xf8] sm:$0xff] %vm3964, %v7065
      %7107 = vst.msk [vmem:[#allocation4 + $0x100] sm:$0xff] %vm3964, %v7066
      %7108 = vst.msk [vmem:[#allocation4 + $0x108] sm:$0xff] %vm3964, %v7067
      %7109 = vst.msk [vmem:[#allocation4 + $0x110] sm:$0xff] %vm3964, %v7068
      %7110 = vst.msk [vmem:[#allocation4 + $0x118] sm:$0xff] %vm3964, %v7069
      %7111 = vst.msk [vmem:[#allocation4 + $0x120] sm:$0xff] %vm3964, %v7070
      %7112 = vst.msk [vmem:[#allocation4 + $0x128] sm:$0xff] %vm3964, %v7071
      %7113 = vst.msk [vmem:[#allocation4 + $0x130] sm:$0xff] %vm3964, %v7072
      %7114 = vst.msk [vmem:[#allocation4 + $0x138] sm:$0xff] %vm3964, %v7073
      %7115 = vst.msk [vmem:[#allocation4 + $0x140] sm:$0xff] %vm3964, %v7074
      %v7116 = vld [vmem:[#allocation4] sm:$0xff]
      %v7117 = vld [vmem:[#allocation4 + $0x8] sm:$0xff]
      %v7118 = vld [vmem:[#allocation4 + $0x10] sm:$0xff]
      %v7119 = vld [vmem:[#allocation4 + $0x18] sm:$0xff]
      %v7120 = vld [vmem:[#allocation4 + $0x20] sm:$0xff]
      %v7121 = vld [vmem:[#allocation4 + $0x28] sm:$0xff]
      %v7122 = vld [vmem:[#allocation4 + $0x30] sm:$0xff]
      %v7123 = vld [vmem:[#allocation4 + $0x38] sm:$0xff]
      %v7124 = vld [vmem:[#allocation4 + $0x40] sm:$0xff]
      %v7125 = vld [vmem:[#allocation4 + $0x48] sm:$0xff]
      %v7126 = vld [vmem:[#allocation4 + $0x50] sm:$0xff]
      %v7127 = vld [vmem:[#allocation4 + $0x58] sm:$0xff]
      %v7128 = vld [vmem:[#allocation4 + $0x60] sm:$0xff]
      %v7129 = vld [vmem:[#allocation4 + $0x68] sm:$0xff]
      %v7130 = vld [vmem:[#allocation4 + $0x70] sm:$0xff]
      %v7131 = vld [vmem:[#allocation4 + $0x78] sm:$0xff]
      %v7132 = vld [vmem:[#allocation4 + $0x80] sm:$0xff]
      %v7133 = vld [vmem:[#allocation4 + $0x88] sm:$0xff]
      %v7134 = vld [vmem:[#allocation4 + $0x90] sm:$0xff]
      %v7135 = vld [vmem:[#allocation4 + $0x98] sm:$0xff]
      %v7136 = vld [vmem:[#allocation4 + $0xa0] sm:$0xff]
      %v7137 = vld [vmem:[#allocation4 + $0xa8] sm:$0xff]
      %v7138 = vld [vmem:[#allocation4 + $0xb0] sm:$0xff]
      %v7139 = vld [vmem:[#allocation4 + $0xb8] sm:$0xff]
      %v7140 = vld [vmem:[#allocation4 + $0xc0] sm:$0xff]
      %v7141 = vld [vmem:[#allocation4 + $0xc8] sm:$0xff]
      %v7142 = vld [vmem:[#allocation4 + $0xd0] sm:$0xff]
      %v7143 = vld [vmem:[#allocation4 + $0xd8] sm:$0xff]
      %v7144 = vld [vmem:[#allocation4 + $0xe0] sm:$0xff]
      %v7145 = vld [vmem:[#allocation4 + $0xe8] sm:$0xff]
      %v7146 = vld [vmem:[#allocation4 + $0xf0] sm:$0xff]
      %v7147 = vld [vmem:[#allocation4 + $0xf8] sm:$0xff]
      %v7148 = vld [vmem:[#allocation4 + $0x100] sm:$0xff]
      %v7149 = vld [vmem:[#allocation4 + $0x108] sm:$0xff]
      %v7150 = vld [vmem:[#allocation4 + $0x110] sm:$0xff]
      %v7151 = vld [vmem:[#allocation4 + $0x118] sm:$0xff]
      %v7152 = vld [vmem:[#allocation4 + $0x120] sm:$0xff]
      %v7153 = vld [vmem:[#allocation4 + $0x128] sm:$0xff]
      %v7154 = vld [vmem:[#allocation4 + $0x130] sm:$0xff]
      %v7155 = vld [vmem:[#allocation4 + $0x138] sm:$0xff]
      %v7156 = vld [vmem:[#allocation4 + $0x140] sm:$0xff]
      %v7157 = vld [vmem:[#allocation4 + $0x148] sm:$0xff]
      %7188 = vrot.lane.b32.xlu0 %v7122, 64
      %v7189 = vpop.permute.xlu0 %7188
      %7190 = vrot.lane.b32.xlu0 %v7123, 64
      %v7191 = vpop.permute.xlu0 %7190
      %7192 = vrot.lane.b32.xlu0 %v7124, 64
      %v7193 = vpop.permute.xlu0 %7192
      %7194 = vrot.lane.b32.xlu0 %v7125, 64
      %v7195 = vpop.permute.xlu0 %7194
      %7196 = vrot.lane.b32.xlu0 %v7126, 64
      %v7197 = vpop.permute.xlu0 %7196
      %7198 = vrot.lane.b32.xlu0 %v7127, 64
      %v7199 = vpop.permute.xlu0 %7198
      %7200 = vrot.lane.b32.xlu0 %v7128, 64
      %v7201 = vpop.permute.xlu0 %7200
      %7202 = vrot.lane.b32.xlu0 %v7129, 64
      %v7203 = vpop.permute.xlu0 %7202
      %7204 = vrot.lane.b32.xlu0 %v7130, 64
      %v7205 = vpop.permute.xlu0 %7204
      %7206 = vrot.lane.b32.xlu0 %v7131, 64
      %v7207 = vpop.permute.xlu0 %7206
      %7208 = vrot.lane.b32.xlu0 %v7132, 64
      %v7209 = vpop.permute.xlu0 %7208
      %7210 = vrot.lane.b32.xlu0 %v7133, 64
      %v7211 = vpop.permute.xlu0 %7210
      %7212 = vrot.lane.b32.xlu0 %v7134, 64
      %v7213 = vpop.permute.xlu0 %7212
      %7214 = vrot.lane.b32.xlu0 %v7135, 64
      %v7215 = vpop.permute.xlu0 %7214
      %7216 = vrot.lane.b32.xlu0 %v7136, 64
      %v7217 = vpop.permute.xlu0 %7216
      %7218 = vrot.lane.b32.xlu0 %v7137, 64
      %v7219 = vpop.permute.xlu0 %7218
      %7220 = vrot.lane.b32.xlu0 %v7138, 64
      %v7221 = vpop.permute.xlu0 %7220
      %7222 = vrot.lane.b32.xlu0 %v7139, 64
      %v7223 = vpop.permute.xlu0 %7222
      %7224 = vrot.lane.b32.xlu0 %v7140, 64
      %v7225 = vpop.permute.xlu0 %7224
      %7226 = vrot.lane.b32.xlu0 %v7141, 64
      %v7227 = vpop.permute.xlu0 %7226
      %7228 = vrot.lane.b32.xlu0 %v7142, 64
      %v7229 = vpop.permute.xlu0 %7228
      %7230 = vrot.lane.b32.xlu0 %v7143, 64
      %v7231 = vpop.permute.xlu0 %7230
      %7232 = vrot.lane.b32.xlu0 %v7144, 64
      %v7233 = vpop.permute.xlu0 %7232
      %7234 = vrot.lane.b32.xlu0 %v7145, 64
      %v7235 = vpop.permute.xlu0 %7234
      %7236 = vrot.lane.b32.xlu0 %v7146, 64
      %v7237 = vpop.permute.xlu0 %7236
      %7238 = vrot.lane.b32.xlu0 %v7147, 64
      %v7239 = vpop.permute.xlu0 %7238
      %7240 = vrot.lane.b32.xlu0 %v7148, 64
      %v7241 = vpop.permute.xlu0 %7240
      %7242 = vrot.lane.b32.xlu0 %v7149, 64
      %v7243 = vpop.permute.xlu0 %7242
      %7244 = vrot.lane.b32.xlu0 %v7150, 64
      %v7245 = vpop.permute.xlu0 %7244
      %7246 = vrot.lane.b32.xlu0 %v7151, 64
      %v7247 = vpop.permute.xlu0 %7246
      %v7278 = vsel %vm3964, %v7116, %v7189
      %v7279 = vsel %vm3964, %v7117, %v7191
      %v7280 = vsel %vm3964, %v7118, %v7193
      %v7281 = vsel %vm3964, %v7119, %v7195
      %v7282 = vsel %vm3964, %v7120, %v7197
      %v7283 = vsel %vm3964, %v7121, %v7199
      %v7284 = vsel %vm3964, %v7122, %v7201
      %v7285 = vsel %vm3964, %v7123, %v7203
      %v7286 = vsel %vm3964, %v7124, %v7205
      %v7287 = vsel %vm3964, %v7125, %v7207
      %v7288 = vsel %vm3964, %v7126, %v7209
      %v7289 = vsel %vm3964, %v7127, %v7211
      %v7290 = vsel %vm3964, %v7128, %v7213
      %v7291 = vsel %vm3964, %v7129, %v7215
      %v7292 = vsel %vm3964, %v7130, %v7217
      %v7293 = vsel %vm3964, %v7131, %v7219
      %v7294 = vsel %vm3964, %v7132, %v7221
      %v7295 = vsel %vm3964, %v7133, %v7223
      %v7296 = vsel %vm3964, %v7134, %v7225
      %v7297 = vsel %vm3964, %v7135, %v7227
      %v7298 = vsel %vm3964, %v7136, %v7229
      %v7299 = vsel %vm3964, %v7137, %v7231
      %v7300 = vsel %vm3964, %v7138, %v7233
      %v7301 = vsel %vm3964, %v7139, %v7235
      %v7302 = vsel %vm3964, %v7140, %v7237
      %v7303 = vsel %vm3964, %v7141, %v7239
      %v7304 = vsel %vm3964, %v7142, %v7241
      %v7305 = vsel %vm3964, %v7143, %v7243
      %v7306 = vsel %vm3964, %v7144, %v7245
      %v7307 = vsel %vm3964, %v7145, %v7247
      %v7308 = vpack.c.bf16 %v7279, %v7278
      %v7309 = vpack.c.bf16 %v7129, %v7128
      %v7310 = vpack.c.bf16 %v7281, %v7280
      %v7311 = vpack.c.bf16 %v7131, %v7130
      %v7312 = vpack.c.bf16 %v7283, %v7282
      %v7313 = vpack.c.bf16 %v7133, %v7132
      %v7314 = vpack.c.bf16 %v7285, %v7284
      %v7315 = vpack.c.bf16 %v7135, %v7134
      %v7316 = vpack.c.bf16 %v7287, %v7286
      %v7317 = vpack.c.bf16 %v7137, %v7136
      %v7318 = vpack.c.bf16 %v7289, %v7288
      %v7319 = vpack.c.bf16 %v7139, %v7138
      %v7320 = vpack.c.bf16 %v7291, %v7290
      %v7321 = vpack.c.bf16 %v7141, %v7140
      %v7322 = vpack.c.bf16 %v7293, %v7292
      %v7323 = vpack.c.bf16 %v7143, %v7142
      %v7324 = vpack.c.bf16 %v7295, %v7294
      %v7325 = vpack.c.bf16 %v7145, %v7144
      %v7326 = vpack.c.bf16 %v7297, %v7296
      %v7327 = vpack.c.bf16 %v7147, %v7146
      %v7328 = vpack.c.bf16 %v7299, %v7298
      %v7329 = vpack.c.bf16 %v7149, %v7148
      %v7330 = vpack.c.bf16 %v7301, %v7300
      %v7331 = vpack.c.bf16 %v7151, %v7150
      %v7332 = vpack.c.bf16 %v7303, %v7302
      %v7333 = vpack.c.bf16 %v7153, %v7152
      %v7334 = vpack.c.bf16 %v7305, %v7304
      %v7335 = vpack.c.bf16 %v7155, %v7154
      %v7336 = vpack.c.bf16 %v7307, %v7306
      %v7337 = vpack.c.bf16 %v7157, %v7156
      %v7338 = vld [vmem:[%s7] sm:$0xf]
      %v7339 = vld [vmem:[%s7 + $0x4] sm:$0xf]
      %v7340 = vld [vmem:[%s7 + $0x8] sm:$0xf]
      %v7341 = vld [vmem:[%s7 + $0xc] sm:$0xf]
      %v7342 = vld [vmem:[%s7 + $0x10] sm:$0xf]
      %v7343 = vld [vmem:[%s7 + $0x14] sm:$0xf]
      %v7344 = vld [vmem:[%s7 + $0x18] sm:$0xf]
      %v7345 = vld [vmem:[%s7 + $0x1c] sm:$0xf]
      %v7346 = vld [vmem:[%s7 + $0x20] sm:$0xf]
      %v7347 = vld [vmem:[%s7 + $0x24] sm:$0xf]
      %v7348 = vld [vmem:[%s7 + $0x28] sm:$0xf]
      %v7349 = vld [vmem:[%s7 + $0x2c] sm:$0xf]
      %v7350 = vld [vmem:[%s7 + $0x30] sm:$0xf]
      %v7351 = vld [vmem:[%s7 + $0x34] sm:$0xf]
      %v7352 = vld [vmem:[%s7 + $0x38] sm:$0xf]
      %v7353 = vld [vmem:[%s7 + $0x3c] sm:$0xf]
      %v7354 = vld [vmem:[%s7 + $0x40] sm:$0xf]
      %v7355 = vld [vmem:[%s7 + $0x44] sm:$0xf]
      %v7356 = vld [vmem:[%s7 + $0x48] sm:$0xf]
      %v7357 = vld [vmem:[%s7 + $0x4c] sm:$0xf]
      %v7358 = vld [vmem:[%s7 + $0x50] sm:$0xf]
      %v7359 = vld [vmem:[%s7 + $0x54] sm:$0xf]
      %v7360 = vld [vmem:[%s7 + $0x58] sm:$0xf]
      %v7361 = vld [vmem:[%s7 + $0x5c] sm:$0xf]
      %v7386 = vunpack.c.l.b16 %v7338
      %v7387 = vunpack.c.l.b16 %v7339
      %v7388 = vunpack.c.l.b16 %v7340
      %v7389 = vunpack.c.l.b16 %v7341
      %v7390 = vunpack.c.l.b16 %v7342
      %v7391 = vunpack.c.l.b16 %v7343
      %v7392 = vunpack.c.l.b16 %v7344
      %v7393 = vunpack.c.l.b16 %v7345
      %v7394 = vunpack.c.l.b16 %v7346
      %v7395 = vunpack.c.l.b16 %v7347
      %v7396 = vunpack.c.l.b16 %v7348
      %v7397 = vunpack.c.l.b16 %v7349
      %v7398 = vunpack.c.l.b16 %v7350
      %v7399 = vunpack.c.l.b16 %v7351
      %v7400 = vunpack.c.l.b16 %v7352
      %v7401 = vunpack.c.l.b16 %v7353
      %v7402 = vunpack.c.l.b16 %v7354
      %v7403 = vunpack.c.l.b16 %v7355
      %v7404 = vunpack.c.l.b16 %v7356
      %v7405 = vunpack.c.l.b16 %v7357
      %v7406 = vunpack.c.l.b16 %v7358
      %v7407 = vunpack.c.l.b16 %v7359
      %v7408 = vunpack.c.l.b16 %v7360
      %v7409 = vunpack.c.l.b16 %v7361
      %v7410 = vpack.c.b16 %v7387, %v7386
      %v7411 = vpack.c.b16 %v7389, %v7388
      %v7412 = vpack.c.b16 %v7391, %v7390
      %v7413 = vpack.c.b16 %v7393, %v7392
      %v7414 = vpack.c.b16 %v7395, %v7394
      %v7415 = vpack.c.b16 %v7397, %v7396
      %v7416 = vpack.c.b16 %v7399, %v7398
      %v7417 = vpack.c.b16 %v7401, %v7400
      %v7418 = vpack.c.b16 %v7403, %v7402
      %v7419 = vpack.c.b16 %v7405, %v7404
      %v7420 = vpack.c.b16 %v7407, %v7406
      %v7421 = vpack.c.b16 %v7409, %v7408
      %v7435 = vsel %vm3964, %v7309, 0
      %v7438 = vsel %vm3964, %v7311, 0
      %v7441 = vsel %vm3964, %v7313, 0
      %v7444 = vsel %vm3964, %v7315, 0
      %v7447 = vsel %vm3964, %v7317, 0
      %v7450 = vsel %vm3964, %v7319, 0
      %v7453 = vsel %vm3964, %v7321, 0
      %v7456 = vsel %vm3964, %v7323, 0
      %v7459 = vsel %vm3964, %v7325, 0
      %v7462 = vsel %vm3964, %v7327, 0
      %v7465 = vsel %vm3964, %v7329, 0
      %v7468 = vsel %vm3964, %v7331, 0
      %v7471 = vsel %vm3964, %v7333, 0
      %v7474 = vsel %vm3964, %v7335, 0
      %v7477 = vsel %vm3964, %v7337, 0
      %7479 = vmatprep.subr.bf16.mxu0 0
      %7480 = vmatpush1.bf16.msra.mxu0 %v7410
      %7481 = vmatprep.subr.bf16.mxu0 0
      %7482 = vmatpush1.bf16.msra.mxu0 %v7411
      %7483 = vmatprep.subr.bf16.mxu0 0
      %7484 = vmatpush1.bf16.msra.mxu0 %v7412
      %7485 = vmatprep.subr.bf16.mxu0 0
      %7486 = vmatpush1.bf16.msra.mxu0 %v7413
      %7487 = vmatprep.subr.bf16.mxu0 0
      %7488 = vmatpush1.bf16.msra.mxu0 %v7414
      %7489 = vmatprep.subr.bf16.mxu0 0
      %7490 = vmatpush1.bf16.msra.mxu0 %v7415
      %7491 = vmatprep.subr.bf16.mxu0 0
      %7492 = vmatpush1.bf16.msra.mxu0 %v7416
      %7493 = vmatprep.subr.bf16.mxu0 0
      %7494 = vmatpush1.bf16.msra.mxu0 %v7417
      %7495 = vmatprep.subr.bf16.mxu0 0
      %7496 = vmatpush1.bf16.msra.mxu0 %v7418
      %7497 = vmatprep.subr.bf16.mxu0 0
      %7498 = vmatpush1.bf16.msra.mxu0 %v7419
      %7499 = vmatprep.subr.bf16.mxu0 0
      %7500 = vmatpush1.bf16.msra.mxu0 %v7420
      %7501 = vmatprep.subr.bf16.mxu0 0
      %7502 = vmatpush1.bf16.msra.mxu0 %v7421
      %7503 = vmatprep.subr.bf16.mxu0 0
      %7504 = vmatpush1.bf16.msra.mxu0 0
      %7505 = vmatprep.subr.bf16.mxu0 0
      %7506 = vmatpush1.bf16.msra.mxu0 0
      %7507 = vmatprep.subr.bf16.mxu0 0
      %7508 = vmatpush1.bf16.msra.mxu0 0
      %7509 = vmatprep.subr.bf16.mxu0 0
      %7510 = vmatpush1.bf16.msra.mxu0 0
      %7511 = vmatprep.mubr.bf16.mxu0 %v7435
      %7512 = vmatmul.mubr.bf16.gmra.mrb[0].mxu0 %v7308
      %v7513 = vpop.f32.mrb[0].mxu0
      %v7514 = vadd.f32 0.0, %v7513
      %v7515 = vpop.f32.mrb[0].mxu0
      %v7516 = vpop.f32.mrb[0].mxu0
      %v7517 = vadd.f32 0.0, %v7516
      %v7518 = vpop.f32.mrb[0].mxu0
      %7519 = vmatprep.mubr.bf16.mxu0 %v7438
      %7520 = vmatmul.mubr.bf16.gmra.mrb[0].mxu0 %v7310
      %v7521 = vpop.f32.mrb[0].mxu0
      %v7522 = vadd.f32 0.0, %v7521
      %v7523 = vpop.f32.mrb[0].mxu0
      %v7524 = vpop.f32.mrb[0].mxu0
      %v7525 = vadd.f32 0.0, %v7524
      %v7526 = vpop.f32.mrb[0].mxu0
      %7527 = vmatprep.mubr.bf16.mxu0 %v7441
      %7528 = vmatmul.mubr.bf16.gmra.mrb[0].mxu0 %v7312
      %v7529 = vpop.f32.mrb[0].mxu0
      %v7530 = vadd.f32 0.0, %v7529
      %v7531 = vpop.f32.mrb[0].mxu0
      %v7532 = vpop.f32.mrb[0].mxu0
      %v7533 = vadd.f32 0.0, %v7532
      %v7534 = vpop.f32.mrb[0].mxu0
      %7535 = vmatprep.mubr.bf16.mxu0 %v7444
      %7536 = vmatmul.mubr.bf16.gmra.mrb[0].mxu0 %v7314
      %v7537 = vpop.f32.mrb[0].mxu0
      %v7538 = vadd.f32 0.0, %v7537
      %v7539 = vpop.f32.mrb[0].mxu0
      %v7540 = vpop.f32.mrb[0].mxu0
      %v7541 = vadd.f32 0.0, %v7540
      %v7542 = vpop.f32.mrb[0].mxu0
      %7543 = vmatprep.mubr.bf16.mxu0 %v7447
      %7544 = vmatmul.mubr.bf16.gmra.mrb[0].mxu0 %v7316
      %v7545 = vpop.f32.mrb[0].mxu0
      %v7546 = vadd.f32 0.0, %v7545
      %v7547 = vpop.f32.mrb[0].mxu0
      %v7548 = vpop.f32.mrb[0].mxu0
      %v7549 = vadd.f32 0.0, %v7548
      %v7550 = vpop.f32.mrb[0].mxu0
      %7551 = vmatprep.mubr.bf16.mxu0 %v7450
      %7552 = vmatmul.mubr.bf16.gmra.mrb[0].mxu0 %v7318
      %v7553 = vpop.f32.mrb[0].mxu0
      %v7554 = vadd.f32 0.0, %v7553
      %v7555 = vpop.f32.mrb[0].mxu0
      %v7556 = vpop.f32.mrb[0].mxu0
      %v7557 = vadd.f32 0.0, %v7556
      %v7558 = vpop.f32.mrb[0].mxu0
      %7559 = vmatprep.mubr.bf16.mxu0 %v7453
      %7560 = vmatmul.mubr.bf16.gmra.mrb[0].mxu0 %v7320
      %v7561 = vpop.f32.mrb[0].mxu0
      %v7562 = vadd.f32 0.0, %v7561
      %v7563 = vpop.f32.mrb[0].mxu0
      %v7564 = vpop.f32.mrb[0].mxu0
      %v7565 = vadd.f32 0.0, %v7564
      %v7566 = vpop.f32.mrb[0].mxu0
      %7567 = vmatprep.mubr.bf16.mxu0 %v7456
      %7568 = vmatmul.mubr.bf16.gmra.mrb[0].mxu0 %v7322
      %v7569 = vpop.f32.mrb[0].mxu0
      %v7570 = vadd.f32 0.0, %v7569
      %v7571 = vpop.f32.mrb[0].mxu0
      %v7572 = vpop.f32.mrb[0].mxu0
      %v7573 = vadd.f32 0.0, %v7572
      %v7574 = vpop.f32.mrb[0].mxu0
      %7575 = vmatprep.mubr.bf16.mxu0 %v7459
      %7576 = vmatmul.mubr.bf16.gmra.mrb[0].mxu0 %v7324
      %v7577 = vpop.f32.mrb[0].mxu0
      %v7578 = vadd.f32 0.0, %v7577
      %v7579 = vpop.f32.mrb[0].mxu0
      %v7580 = vpop.f32.mrb[0].mxu0
      %v7581 = vadd.f32 0.0, %v7580
      %v7582 = vpop.f32.mrb[0].mxu0
      %7583 = vmatprep.mubr.bf16.mxu0 %v7462
      %7584 = vmatmul.mubr.bf16.gmra.mrb[0].mxu0 %v7326
      %v7585 = vpop.f32.mrb[0].mxu0
      %v7586 = vadd.f32 0.0, %v7585
      %v7587 = vpop.f32.mrb[0].mxu0
      %v7588 = vpop.f32.mrb[0].mxu0
      %v7589 = vadd.f32 0.0, %v7588
      %v7590 = vpop.f32.mrb[0].mxu0
      %7591 = vmatprep.mubr.bf16.mxu0 %v7465
      %7592 = vmatmul.mubr.bf16.gmra.mrb[0].mxu0 %v7328
      %v7593 = vpop.f32.mrb[0].mxu0
      %v7594 = vadd.f32 0.0, %v7593
      %v7595 = vpop.f32.mrb[0].mxu0
      %v7596 = vpop.f32.mrb[0].mxu0
      %v7597 = vadd.f32 0.0, %v7596
      %v7598 = vpop.f32.mrb[0].mxu0
      %7599 = vmatprep.mubr.bf16.mxu0 %v7468
      %7600 = vmatmul.mubr.bf16.gmra.mrb[0].mxu0 %v7330
      %v7601 = vpop.f32.mrb[0].mxu0
      %v7602 = vadd.f32 0.0, %v7601
      %v7603 = vpop.f32.mrb[0].mxu0
      %v7604 = vpop.f32.mrb[0].mxu0
      %v7605 = vadd.f32 0.0, %v7604
      %v7606 = vpop.f32.mrb[0].mxu0
      %7607 = vmatprep.mubr.bf16.mxu0 %v7471
      %7608 = vmatmul.mubr.bf16.gmra.mrb[0].mxu0 %v7332
      %v7609 = vpop.f32.mrb[0].mxu0
      %v7610 = vadd.f32 0.0, %v7609
      %v7611 = vpop.f32.mrb[0].mxu0
      %v7612 = vpop.f32.mrb[0].mxu0
      %v7613 = vadd.f32 0.0, %v7612
      %v7614 = vpop.f32.mrb[0].mxu0
      %7615 = vmatprep.mubr.bf16.mxu0 %v7474
      %7616 = vmatmul.mubr.bf16.gmra.mrb[0].mxu0 %v7334
      %v7617 = vpop.f32.mrb[0].mxu0
      %v7618 = vadd.f32 0.0, %v7617
      %v7619 = vpop.f32.mrb[0].mxu0
      %v7620 = vpop.f32.mrb[0].mxu0
      %v7621 = vadd.f32 0.0, %v7620
      %v7622 = vpop.f32.mrb[0].mxu0
      %7623 = vmatprep.mubr.bf16.mxu0 %v7477
      %7624 = vmatmul.mubr.bf16.gmra.mrb[0].mxu0 %v7336
      %v7625 = vpop.f32.mrb[0].mxu0
      %v7626 = vadd.f32 0.0, %v7625
      %v7627 = vpop.f32.mrb[0].mxu0
      %v7628 = vpop.f32.mrb[0].mxu0
      %v7629 = vpop.f32.mrb[0].mxu0
      %7630 = vdwg.mxu0
      %s7631 = scalar_lea.vmem %s7, 96
      %v7632 = vld [vmem:[%s7631] sm:$0xf]
      %v7633 = vld [vmem:[%s7631 + $0x4] sm:$0xf]
      %v7634 = vld [vmem:[%s7631 + $0x8] sm:$0xf]
      %v7635 = vld [vmem:[%s7631 + $0xc] sm:$0xf]
      %v7636 = vld [vmem:[%s7631 + $0x10] sm:$0xf]
      %v7637 = vld [vmem:[%s7631 + $0x14] sm:$0xf]
      %v7638 = vld [vmem:[%s7631 + $0x18] sm:$0xf]
      %v7639 = vld [vmem:[%s7631 + $0x1c] sm:$0xf]
      %v7640 = vld [vmem:[%s7631 + $0x20] sm:$0xf]
      %v7641 = vld [vmem:[%s7631 + $0x24] sm:$0xf]
      %v7642 = vld [vmem:[%s7631 + $0x28] sm:$0xf]
      %v7643 = vld [vmem:[%s7631 + $0x2c] sm:$0xf]
      %v7644 = vld [vmem:[%s7631 + $0x30] sm:$0xf]
      %v7645 = vld [vmem:[%s7631 + $0x34] sm:$0xf]
      %v7646 = vld [vmem:[%s7631 + $0x38] sm:$0xf]
      %v7647 = vld [vmem:[%s7631 + $0x3c] sm:$0xf]
      %v7648 = vld [vmem:[%s7631 + $0x40] sm:$0xf]
      %v7649 = vld [vmem:[%s7631 + $0x44] sm:$0xf]
      %v7650 = vld [vmem:[%s7631 + $0x48] sm:$0xf]
      %v7651 = vld [vmem:[%s7631 + $0x4c] sm:$0xf]
      %v7652 = vld [vmem:[%s7631 + $0x50] sm:$0xf]
      %v7653 = vld [vmem:[%s7631 + $0x54] sm:$0xf]
      %v7654 = vld [vmem:[%s7631 + $0x58] sm:$0xf]
      %v7655 = vld [vmem:[%s7631 + $0x5c] sm:$0xf]
      %v7680 = vunpack.c.l.b16 %v7632
      %v7681 = vunpack.c.l.b16 %v7633
      %v7682 = vunpack.c.l.b16 %v7634
      %v7683 = vunpack.c.l.b16 %v7635
      %v7684 = vunpack.c.l.b16 %v7636
      %v7685 = vunpack.c.l.b16 %v7637
      %v7686 = vunpack.c.l.b16 %v7638
      %v7687 = vunpack.c.l.b16 %v7639
      %v7688 = vunpack.c.l.b16 %v7640
      %v7689 = vunpack.c.l.b16 %v7641
      %v7690 = vunpack.c.l.b16 %v7642
      %v7691 = vunpack.c.l.b16 %v7643
      %v7692 = vunpack.c.l.b16 %v7644
      %v7693 = vunpack.c.l.b16 %v7645
      %v7694 = vunpack.c.l.b16 %v7646
      %v7695 = vunpack.c.l.b16 %v7647
      %v7696 = vunpack.c.l.b16 %v7648
      %v7697 = vunpack.c.l.b16 %v7649
      %v7698 = vunpack.c.l.b16 %v7650
      %v7699 = vunpack.c.l.b16 %v7651
      %v7700 = vunpack.c.l.b16 %v7652
      %v7701 = vunpack.c.l.b16 %v7653
      %v7702 = vunpack.c.l.b16 %v7654
      %v7703 = vunpack.c.l.b16 %v7655
      %v7704 = vpack.c.b16 %v7681, %v7680
      %v7705 = vpack.c.b16 %v7683, %v7682
      %v7706 = vpack.c.b16 %v7685, %v7684
      %v7707 = vpack.c.b16 %v7687, %v7686
      %v7708 = vpack.c.b16 %v7689, %v7688
      %v7709 = vpack.c.b16 %v7691, %v7690
      %v7710 = vpack.c.b16 %v7693, %v7692
      %v7711 = vpack.c.b16 %v7695, %v7694
      %v7712 = vpack.c.b16 %v7697, %v7696
      %v7713 = vpack.c.b16 %v7699, %v7698
      %v7714 = vpack.c.b16 %v7701, %v7700
      %v7715 = vpack.c.b16 %v7703, %v7702
      %7728 = vmatprep.subr.bf16.mxu0 0
      %7729 = vmatpush1.bf16.msra.mxu0 %v7704
      %7730 = vmatprep.subr.bf16.mxu0 0
      %7731 = vmatpush1.bf16.msra.mxu0 %v7705
      %7732 = vmatprep.subr.bf16.mxu0 0
      %7733 = vmatpush1.bf16.msra.mxu0 %v7706
      %7734 = vmatprep.subr.bf16.mxu0 0
      %7735 = vmatpush1.bf16.msra.mxu0 %v7707
      %7736 = vmatprep.subr.bf16.mxu0 0
      %7737 = vmatpush1.bf16.msra.mxu0 %v7708
      %7738 = vmatprep.subr.bf16.mxu0 0
      %7739 = vmatpush1.bf16.msra.mxu0 %v7709
      %7740 = vmatprep.subr.bf16.mxu0 0
      %7741 = vmatpush1.bf16.msra.mxu0 %v7710
      %7742 = vmatprep.subr.bf16.mxu0 0
      %7743 = vmatpush1.bf16.msra.mxu0 %v7711
      %7744 = vmatprep.subr.bf16.mxu0 0
      %7745 = vmatpush1.bf16.msra.mxu0 %v7712
      %7746 = vmatprep.subr.bf16.mxu0 0
      %7747 = vmatpush1.bf16.msra.mxu0 %v7713
      %7748 = vmatprep.subr.bf16.mxu0 0
      %7749 = vmatpush1.bf16.msra.mxu0 %v7714
      %7750 = vmatprep.subr.bf16.mxu0 0
      %7751 = vmatpush1.bf16.msra.mxu0 %v7715
      %7752 = vmatprep.subr.bf16.mxu0 0
      %7753 = vmatpush1.bf16.msra.mxu0 0
      %7754 = vmatprep.subr.bf16.mxu0 0
      %7755 = vmatpush1.bf16.msra.mxu0 0
      %7756 = vmatprep.subr.bf16.mxu0 0
      %7757 = vmatpush1.bf16.msra.mxu0 0
      %7758 = vmatprep.subr.bf16.mxu0 0
      %7759 = vmatpush1.bf16.msra.mxu0 0
      %7760 = vmatprep.mubr.bf16.mxu0 %v7435
      %7761 = vmatmul.mubr.bf16.gmra.mrb[0].mxu0 %v7308
      %v7762 = vpop.f32.mrb[0].mxu0
      %v7763 = vadd.f32 0.0, %v7762
      %v7764 = vpop.f32.mrb[0].mxu0
      %v7765 = vpop.f32.mrb[0].mxu0
      %v7766 = vadd.f32 0.0, %v7765
      %v7767 = vpop.f32.mrb[0].mxu0
      %7768 = vmatprep.mubr.bf16.mxu0 %v7438
      %7769 = vmatmul.mubr.bf16.gmra.mrb[0].mxu0 %v7310
      %v7770 = vpop.f32.mrb[0].mxu0
      %v7771 = vadd.f32 0.0, %v7770
      %v7772 = vpop.f32.mrb[0].mxu0
      %v7773 = vpop.f32.mrb[0].mxu0
      %v7774 = vadd.f32 0.0, %v7773
      %v7775 = vpop.f32.mrb[0].mxu0
      %7776 = vmatprep.mubr.bf16.mxu0 %v7441
      %7777 = vmatmul.mubr.bf16.gmra.mrb[0].mxu0 %v7312
      %v7778 = vpop.f32.mrb[0].mxu0
      %v7779 = vadd.f32 0.0, %v7778
      %v7780 = vpop.f32.mrb[0].mxu0
      %v7781 = vpop.f32.mrb[0].mxu0
      %v7782 = vadd.f32 0.0, %v7781
      %v7783 = vpop.f32.mrb[0].mxu0
      %7784 = vmatprep.mubr.bf16.mxu0 %v7444
      %7785 = vmatmul.mubr.bf16.gmra.mrb[0].mxu0 %v7314
      %v7786 = vpop.f32.mrb[0].mxu0
      %v7787 = vadd.f32 0.0, %v7786
      %v7788 = vpop.f32.mrb[0].mxu0
      %v7789 = vpop.f32.mrb[0].mxu0
      %v7790 = vadd.f32 0.0, %v7789
      %v7791 = vpop.f32.mrb[0].mxu0
      %7792 = vmatprep.mubr.bf16.mxu0 %v7447
      %7793 = vmatmul.mubr.bf16.gmra.mrb[0].mxu0 %v7316
      %v7794 = vpop.f32.mrb[0].mxu0
      %v7795 = vadd.f32 0.0, %v7794
      %v7796 = vpop.f32.mrb[0].mxu0
      %v7797 = vpop.f32.mrb[0].mxu0
      %v7798 = vadd.f32 0.0, %v7797
      %v7799 = vpop.f32.mrb[0].mxu0
      %7800 = vmatprep.mubr.bf16.mxu0 %v7450
      %7801 = vmatmul.mubr.bf16.gmra.mrb[0].mxu0 %v7318
      %v7802 = vpop.f32.mrb[0].mxu0
      %v7803 = vadd.f32 0.0, %v7802
      %v7804 = vpop.f32.mrb[0].mxu0
      %v7805 = vpop.f32.mrb[0].mxu0
      %v7806 = vadd.f32 0.0, %v7805
      %v7807 = vpop.f32.mrb[0].mxu0
      %7808 = vmatprep.mubr.bf16.mxu0 %v7453
      %7809 = vmatmul.mubr.bf16.gmra.mrb[0].mxu0 %v7320
      %v7810 = vpop.f32.mrb[0].mxu0
      %v7811 = vadd.f32 0.0, %v7810
      %v7812 = vpop.f32.mrb[0].mxu0
      %v7813 = vpop.f32.mrb[0].mxu0
      %v7814 = vadd.f32 0.0, %v7813
      %v7815 = vpop.f32.mrb[0].mxu0
      %7816 = vmatprep.mubr.bf16.mxu0 %v7456
      %7817 = vmatmul.mubr.bf16.gmra.mrb[0].mxu0 %v7322
      %v7818 = vpop.f32.mrb[0].mxu0
      %v7819 = vadd.f32 0.0, %v7818
      %v7820 = vpop.f32.mrb[0].mxu0
      %v7821 = vpop.f32.mrb[0].mxu0
      %v7822 = vadd.f32 0.0, %v7821
      %v7823 = vpop.f32.mrb[0].mxu0
      %7824 = vmatprep.mubr.bf16.mxu0 %v7459
      %7825 = vmatmul.mubr.bf16.gmra.mrb[0].mxu0 %v7324
      %v7826 = vpop.f32.mrb[0].mxu0
      %v7827 = vadd.f32 0.0, %v7826
      %v7828 = vpop.f32.mrb[0].mxu0
      %v7829 = vpop.f32.mrb[0].mxu0
      %v7830 = vadd.f32 0.0, %v7829
      %v7831 = vpop.f32.mrb[0].mxu0
      %7832 = vmatprep.mubr.bf16.mxu0 %v7462
      %7833 = vmatmul.mubr.bf16.gmra.mrb[0].mxu0 %v7326
      %v7834 = vpop.f32.mrb[0].mxu0
      %v7835 = vadd.f32 0.0, %v7834
      %v7836 = vpop.f32.mrb[0].mxu0
      %v7837 = vpop.f32.mrb[0].mxu0
      %v7838 = vadd.f32 0.0, %v7837
      %v7839 = vpop.f32.mrb[0].mxu0
      %7840 = vmatprep.mubr.bf16.mxu0 %v7465
      %7841 = vmatmul.mubr.bf16.gmra.mrb[0].mxu0 %v7328
      %v7842 = vpop.f32.mrb[0].mxu0
      %v7843 = vadd.f32 0.0, %v7842
      %v7844 = vpop.f32.mrb[0].mxu0
      %v7845 = vpop.f32.mrb[0].mxu0
      %v7846 = vadd.f32 0.0, %v7845
      %v7847 = vpop.f32.mrb[0].mxu0
      %7848 = vmatprep.mubr.bf16.mxu0 %v7468
      %7849 = vmatmul.mubr.bf16.gmra.mrb[0].mxu0 %v7330
      %v7850 = vpop.f32.mrb[0].mxu0
      %v7851 = vadd.f32 0.0, %v7850
      %v7852 = vpop.f32.mrb[0].mxu0
      %v7853 = vpop.f32.mrb[0].mxu0
      %v7854 = vadd.f32 0.0, %v7853
      %v7855 = vpop.f32.mrb[0].mxu0
      %7856 = vmatprep.mubr.bf16.mxu0 %v7471
      %7857 = vmatmul.mubr.bf16.gmra.mrb[0].mxu0 %v7332
      %v7858 = vpop.f32.mrb[0].mxu0
      %v7859 = vadd.f32 0.0, %v7858
      %v7860 = vpop.f32.mrb[0].mxu0
      %v7861 = vpop.f32.mrb[0].mxu0
      %v7862 = vadd.f32 0.0, %v7861
      %v7863 = vpop.f32.mrb[0].mxu0
      %7864 = vmatprep.mubr.bf16.mxu0 %v7474
      %7865 = vmatmul.mubr.bf16.gmra.mrb[0].mxu0 %v7334
      %v7866 = vpop.f32.mrb[0].mxu0
      %v7867 = vadd.f32 0.0, %v7866
      %v7868 = vpop.f32.mrb[0].mxu0
      %v7869 = vpop.f32.mrb[0].mxu0
      %v7870 = vadd.f32 0.0, %v7869
      %v7871 = vpop.f32.mrb[0].mxu0
      %7872 = vmatprep.mubr.bf16.mxu0 %v7477
      %7873 = vmatmul.mubr.bf16.gmra.mrb[0].mxu0 %v7336
      %v7874 = vpop.f32.mrb[0].mxu0
      %v7875 = vadd.f32 0.0, %v7874
      %v7876 = vpop.f32.mrb[0].mxu0
      %v7877 = vpop.f32.mrb[0].mxu0
      %v7878 = vadd.f32 0.0, %v7877
      %v7879 = vpop.f32.mrb[0].mxu0
      %7880 = vdwg.mxu0
      %s7881 = scalar_lea.vmem %s7, 192
      %v7882 = vld [vmem:[%s7881] sm:$0xf]
      %v7883 = vld [vmem:[%s7881 + $0x4] sm:$0xf]
      %v7884 = vld [vmem:[%s7881 + $0x8] sm:$0xf]
      %v7885 = vld [vmem:[%s7881 + $0xc] sm:$0xf]
      %v7886 = vld [vmem:[%s7881 + $0x10] sm:$0xf]
      %v7887 = vld [vmem:[%s7881 + $0x14] sm:$0xf]
      %v7888 = vld [vmem:[%s7881 + $0x18] sm:$0xf]
      %v7889 = vld [vmem:[%s7881 + $0x1c] sm:$0xf]
      %v7890 = vld [vmem:[%s7881 + $0x20] sm:$0xf]
      %v7891 = vld [vmem:[%s7881 + $0x24] sm:$0xf]
      %v7892 = vld [vmem:[%s7881 + $0x28] sm:$0xf]
      %v7893 = vld [vmem:[%s7881 + $0x2c] sm:$0xf]
      %v7894 = vld [vmem:[%s7881 + $0x30] sm:$0xf]
      %v7895 = vld [vmem:[%s7881 + $0x34] sm:$0xf]
      %v7896 = vld [vmem:[%s7881 + $0x38] sm:$0xf]
      %v7897 = vld [vmem:[%s7881 + $0x3c] sm:$0xf]
      %v7898 = vld [vmem:[%s7881 + $0x40] sm:$0xf]
      %v7899 = vld [vmem:[%s7881 + $0x44] sm:$0xf]
      %v7900 = vld [vmem:[%s7881 + $0x48] sm:$0xf]
      %v7901 = vld [vmem:[%s7881 + $0x4c] sm:$0xf]
      %v7902 = vld [vmem:[%s7881 + $0x50] sm:$0xf]
      %v7903 = vld [vmem:[%s7881 + $0x54] sm:$0xf]
      %v7904 = vld [vmem:[%s7881 + $0x58] sm:$0xf]
      %v7905 = vld [vmem:[%s7881 + $0x5c] sm:$0xf]
      %v7930 = vunpack.c.l.b16 %v7882
      %v7931 = vunpack.c.l.b16 %v7883
      %v7932 = vunpack.c.l.b16 %v7884
      %v7933 = vunpack.c.l.b16 %v7885
      %v7934 = vunpack.c.l.b16 %v7886
      %v7935 = vunpack.c.l.b16 %v7887
      %v7936 = vunpack.c.l.b16 %v7888
      %v7937 = vunpack.c.l.b16 %v7889
      %v7938 = vunpack.c.l.b16 %v7890
      %v7939 = vunpack.c.l.b16 %v7891
      %v7940 = vunpack.c.l.b16 %v7892
      %v7941 = vunpack.c.l.b16 %v7893
      %v7942 = vunpack.c.l.b16 %v7894
      %v7943 = vunpack.c.l.b16 %v7895
      %v7944 = vunpack.c.l.b16 %v7896
      %v7945 = vunpack.c.l.b16 %v7897
      %v7946 = vunpack.c.l.b16 %v7898
      %v7947 = vunpack.c.l.b16 %v7899
      %v7948 = vunpack.c.l.b16 %v7900
      %v7949 = vunpack.c.l.b16 %v7901
      %v7950 = vunpack.c.l.b16 %v7902
      %v7951 = vunpack.c.l.b16 %v7903
      %v7952 = vunpack.c.l.b16 %v7904
      %v7953 = vunpack.c.l.b16 %v7905
      %v7954 = vpack.c.b16 %v7931, %v7930
      %v7955 = vpack.c.b16 %v7933, %v7932
      %v7956 = vpack.c.b16 %v7935, %v7934
      %v7957 = vpack.c.b16 %v7937, %v7936
      %v7958 = vpack.c.b16 %v7939, %v7938
      %v7959 = vpack.c.b16 %v7941, %v7940
      %v7960 = vpack.c.b16 %v7943, %v7942
      %v7961 = vpack.c.b16 %v7945, %v7944
      %v7962 = vpack.c.b16 %v7947, %v7946
      %v7963 = vpack.c.b16 %v7949, %v7948
      %v7964 = vpack.c.b16 %v7951, %v7950
      %v7965 = vpack.c.b16 %v7953, %v7952
      %7978 = vmatprep.subr.bf16.mxu0 0
      %7979 = vmatpush1.bf16.msra.mxu0 %v7954
      %7980 = vmatprep.subr.bf16.mxu0 0
      %7981 = vmatpush1.bf16.msra.mxu0 %v7955
      %7982 = vmatprep.subr.bf16.mxu0 0
      %7983 = vmatpush1.bf16.msra.mxu0 %v7956
      %7984 = vmatprep.subr.bf16.mxu0 0
      %7985 = vmatpush1.bf16.msra.mxu0 %v7957
      %7986 = vmatprep.subr.bf16.mxu0 0
      %7987 = vmatpush1.bf16.msra.mxu0 %v7958
      %7988 = vmatprep.subr.bf16.mxu0 0
      %7989 = vmatpush1.bf16.msra.mxu0 %v7959
      %7990 = vmatprep.subr.bf16.mxu0 0
      %7991 = vmatpush1.bf16.msra.mxu0 %v7960
      %7992 = vmatprep.subr.bf16.mxu0 0
      %7993 = vmatpush1.bf16.msra.mxu0 %v7961
      %7994 = vmatprep.subr.bf16.mxu0 0
      %7995 = vmatpush1.bf16.msra.mxu0 %v7962
      %7996 = vmatprep.subr.bf16.mxu0 0
      %7997 = vmatpush1.bf16.msra.mxu0 %v7963
      %7998 = vmatprep.subr.bf16.mxu0 0
      %7999 = vmatpush1.bf16.msra.mxu0 %v7964
      %8000 = vmatprep.subr.bf16.mxu0 0
      %8001 = vmatpush1.bf16.msra.mxu0 %v7965
      %8002 = vmatprep.subr.bf16.mxu0 0
      %8003 = vmatpush1.bf16.msra.mxu0 0
      %8004 = vmatprep.subr.bf16.mxu0 0
      %8005 = vmatpush1.bf16.msra.mxu0 0
      %8006 = vmatprep.subr.bf16.mxu0 0
      %8007 = vmatpush1.bf16.msra.mxu0 0
      %8008 = vmatprep.subr.bf16.mxu0 0
      %8009 = vmatpush1.bf16.msra.mxu0 0
      %8010 = vmatprep.mubr.bf16.mxu0 %v7435
      %8011 = vmatmul.mubr.bf16.gmra.mrb[0].mxu0 %v7308
      %v8012 = vpop.f32.mrb[0].mxu0
      %v8013 = vadd.f32 0.0, %v8012
      %v8014 = vpop.f32.mrb[0].mxu0
      %v8015 = vpop.f32.mrb[0].mxu0
      %v8016 = vadd.f32 0.0, %v8015
      %v8017 = vpop.f32.mrb[0].mxu0
      %8018 = vmatprep.mubr.bf16.mxu0 %v7438
      %8019 = vmatmul.mubr.bf16.gmra.mrb[0].mxu0 %v7310
      %v8020 = vpop.f32.mrb[0].mxu0
      %v8021 = vadd.f32 0.0, %v8020
      %v8022 = vpop.f32.mrb[0].mxu0
      %v8023 = vpop.f32.mrb[0].mxu0
      %v8024 = vadd.f32 0.0, %v8023
      %v8025 = vpop.f32.mrb[0].mxu0
      %8026 = vmatprep.mubr.bf16.mxu0 %v7441
      %8027 = vmatmul.mubr.bf16.gmra.mrb[0].mxu0 %v7312
      %v8028 = vpop.f32.mrb[0].mxu0
      %v8029 = vadd.f32 0.0, %v8028
      %v8030 = vpop.f32.mrb[0].mxu0
      %v8031 = vpop.f32.mrb[0].mxu0
      %v8032 = vadd.f32 0.0, %v8031
      %v8033 = vpop.f32.mrb[0].mxu0
      %8034 = vmatprep.mubr.bf16.mxu0 %v7444
      %8035 = vmatmul.mubr.bf16.gmra.mrb[0].mxu0 %v7314
      %v8036 = vpop.f32.mrb[0].mxu0
      %v8037 = vadd.f32 0.0, %v8036
      %v8038 = vpop.f32.mrb[0].mxu0
      %v8039 = vpop.f32.mrb[0].mxu0
      %v8040 = vadd.f32 0.0, %v8039
      %v8041 = vpop.f32.mrb[0].mxu0
      %8042 = vmatprep.mubr.bf16.mxu0 %v7447
      %8043 = vmatmul.mubr.bf16.gmra.mrb[0].mxu0 %v7316
      %v8044 = vpop.f32.mrb[0].mxu0
      %v8045 = vadd.f32 0.0, %v8044
      %v8046 = vpop.f32.mrb[0].mxu0
      %v8047 = vpop.f32.mrb[0].mxu0
      %v8048 = vadd.f32 0.0, %v8047
      %v8049 = vpop.f32.mrb[0].mxu0
      %8050 = vmatprep.mubr.bf16.mxu0 %v7450
      %8051 = vmatmul.mubr.bf16.gmra.mrb[0].mxu0 %v7318
      %v8052 = vpop.f32.mrb[0].mxu0
      %v8053 = vadd.f32 0.0, %v8052
      %v8054 = vpop.f32.mrb[0].mxu0
      %v8055 = vpop.f32.mrb[0].mxu0
      %v8056 = vadd.f32 0.0, %v8055
      %v8057 = vpop.f32.mrb[0].mxu0
      %8058 = vmatprep.mubr.bf16.mxu0 %v7453
      %8059 = vmatmul.mubr.bf16.gmra.mrb[0].mxu0 %v7320
      %v8060 = vpop.f32.mrb[0].mxu0
      %v8061 = vadd.f32 0.0, %v8060
      %v8062 = vpop.f32.mrb[0].mxu0
      %v8063 = vpop.f32.mrb[0].mxu0
      %v8064 = vadd.f32 0.0, %v8063
      %v8065 = vpop.f32.mrb[0].mxu0
      %8066 = vmatprep.mubr.bf16.mxu0 %v7456
      %8067 = vmatmul.mubr.bf16.gmra.mrb[0].mxu0 %v7322
      %v8068 = vpop.f32.mrb[0].mxu0
      %v8069 = vadd.f32 0.0, %v8068
      %v8070 = vpop.f32.mrb[0].mxu0
      %v8071 = vpop.f32.mrb[0].mxu0
      %v8072 = vadd.f32 0.0, %v8071
      %v8073 = vpop.f32.mrb[0].mxu0
      %8074 = vmatprep.mubr.bf16.mxu0 %v7459
      %8075 = vmatmul.mubr.bf16.gmra.mrb[0].mxu0 %v7324
      %v8076 = vpop.f32.mrb[0].mxu0
      %v8077 = vadd.f32 0.0, %v8076
      %v8078 = vpop.f32.mrb[0].mxu0
      %v8079 = vpop.f32.mrb[0].mxu0
      %v8080 = vadd.f32 0.0, %v8079
      %v8081 = vpop.f32.mrb[0].mxu0
      %8082 = vmatprep.mubr.bf16.mxu0 %v7462
      %8083 = vmatmul.mubr.bf16.gmra.mrb[0].mxu0 %v7326
      %v8084 = vpop.f32.mrb[0].mxu0
      %v8085 = vadd.f32 0.0, %v8084
      %v8086 = vpop.f32.mrb[0].mxu0
      %v8087 = vpop.f32.mrb[0].mxu0
      %v8088 = vadd.f32 0.0, %v8087
      %v8089 = vpop.f32.mrb[0].mxu0
      %8090 = vmatprep.mubr.bf16.mxu0 %v7465
      %8091 = vmatmul.mubr.bf16.gmra.mrb[0].mxu0 %v7328
      %v8092 = vpop.f32.mrb[0].mxu0
      %v8093 = vadd.f32 0.0, %v8092
      %v8094 = vpop.f32.mrb[0].mxu0
      %v8095 = vpop.f32.mrb[0].mxu0
      %v8096 = vadd.f32 0.0, %v8095
      %v8097 = vpop.f32.mrb[0].mxu0
      %8098 = vmatprep.mubr.bf16.mxu0 %v7468
      %8099 = vmatmul.mubr.bf16.gmra.mrb[0].mxu0 %v7330
      %v8100 = vpop.f32.mrb[0].mxu0
      %v8101 = vadd.f32 0.0, %v8100
      %v8102 = vpop.f32.mrb[0].mxu0
      %v8103 = vpop.f32.mrb[0].mxu0
      %v8104 = vadd.f32 0.0, %v8103
      %v8105 = vpop.f32.mrb[0].mxu0
      %8106 = vmatprep.mubr.bf16.mxu0 %v7471
      %8107 = vmatmul.mubr.bf16.gmra.mrb[0].mxu0 %v7332
      %v8108 = vpop.f32.mrb[0].mxu0
      %v8109 = vadd.f32 0.0, %v8108
      %v8110 = vpop.f32.mrb[0].mxu0
      %v8111 = vpop.f32.mrb[0].mxu0
      %v8112 = vadd.f32 0.0, %v8111
      %v8113 = vpop.f32.mrb[0].mxu0
      %8114 = vmatprep.mubr.bf16.mxu0 %v7474
      %8115 = vmatmul.mubr.bf16.gmra.mrb[0].mxu0 %v7334
      %v8116 = vpop.f32.mrb[0].mxu0
      %v8117 = vadd.f32 0.0, %v8116
      %v8118 = vpop.f32.mrb[0].mxu0
      %v8119 = vpop.f32.mrb[0].mxu0
      %v8120 = vadd.f32 0.0, %v8119
      %v8121 = vpop.f32.mrb[0].mxu0
      %8122 = vmatprep.mubr.bf16.mxu0 %v7477
      %8123 = vmatmul.mubr.bf16.gmra.mrb[0].mxu0 %v7336
      %v8124 = vpop.f32.mrb[0].mxu0
      %v8125 = vadd.f32 0.0, %v8124
      %v8126 = vpop.f32.mrb[0].mxu0
      %v8127 = vpop.f32.mrb[0].mxu0
      %v8128 = vadd.f32 0.0, %v8127
      %v8129 = vpop.f32.mrb[0].mxu0
      %8130 = vdwg.mxu0
      %v8161 = vrot.slane %v7763, 1
      %v8162 = vrot.slane %v7766, 1
      %v8163 = vsel %vm4930, %v8161, %v8162
      %v8164 = vrot.slane %v7771, 1
      %v8165 = vsel %vm4930, %v8162, %v8164
      %v8166 = vrot.slane %v7774, 1
      %v8167 = vsel %vm4930, %v8164, %v8166
      %v8168 = vrot.slane %v7779, 1
      %v8169 = vsel %vm4930, %v8166, %v8168
      %v8170 = vrot.slane %v7782, 1
      %v8171 = vsel %vm4930, %v8168, %v8170
      %v8172 = vrot.slane %v7787, 1
      %v8173 = vsel %vm4930, %v8170, %v8172
      %v8174 = vrot.slane %v7790, 1
      %v8175 = vsel %vm4930, %v8172, %v8174
      %v8176 = vrot.slane %v7795, 1
      %v8177 = vsel %vm4930, %v8174, %v8176
      %v8178 = vrot.slane %v7798, 1
      %v8179 = vsel %vm4930, %v8176, %v8178
      %v8180 = vrot.slane %v7803, 1
      %v8181 = vsel %vm4930, %v8178, %v8180
      %v8182 = vrot.slane %v7806, 1
      %v8183 = vsel %vm4930, %v8180, %v8182
      %v8184 = vrot.slane %v7811, 1
      %v8185 = vsel %vm4930, %v8182, %v8184
      %v8186 = vrot.slane %v7814, 1
      %v8187 = vsel %vm4930, %v8184, %v8186
      %v8188 = vrot.slane %v7819, 1
      %v8189 = vsel %vm4930, %v8186, %v8188
      %v8190 = vrot.slane %v7822, 1
      %v8191 = vsel %vm4930, %v8188, %v8190
      %v8192 = vrot.slane %v7827, 1
      %v8193 = vsel %vm4930, %v8190, %v8192
      %v8194 = vrot.slane %v7830, 1
      %v8195 = vsel %vm4930, %v8192, %v8194
      %v8196 = vrot.slane %v7835, 1
      %v8197 = vsel %vm4930, %v8194, %v8196
      %v8198 = vrot.slane %v7838, 1
      %v8199 = vsel %vm4930, %v8196, %v8198
      %v8200 = vrot.slane %v7843, 1
      %v8201 = vsel %vm4930, %v8198, %v8200
      %v8202 = vrot.slane %v7846, 1
      %v8203 = vsel %vm4930, %v8200, %v8202
      %v8204 = vrot.slane %v7851, 1
      %v8205 = vsel %vm4930, %v8202, %v8204
      %v8206 = vrot.slane %v7854, 1
      %v8207 = vsel %vm4930, %v8204, %v8206
      %v8208 = vrot.slane %v7859, 1
      %v8209 = vsel %vm4930, %v8206, %v8208
      %v8210 = vrot.slane %v7862, 1
      %v8211 = vsel %vm4930, %v8208, %v8210
      %v8212 = vrot.slane %v7867, 1
      %v8213 = vsel %vm4930, %v8210, %v8212
      %v8214 = vrot.slane %v7870, 1
      %v8215 = vsel %vm4930, %v8212, %v8214
      %v8216 = vrot.slane %v7875, 1
      %v8217 = vsel %vm4930, %v8214, %v8216
      %v8218 = vrot.slane %v7878, 1
      %v8219 = vsel %vm4930, %v8216, %v8218
      %v8249 = vadd.f32 %v7514, %v8163
      %v8250 = vadd.f32 %v7517, %v8165
      %v8251 = vadd.f32 %v7522, %v8167
      %v8252 = vadd.f32 %v7525, %v8169
      %v8253 = vadd.f32 %v7530, %v8171
      %v8254 = vadd.f32 %v7533, %v8173
      %v8255 = vadd.f32 %v7538, %v8175
      %v8256 = vadd.f32 %v7541, %v8177
      %v8257 = vadd.f32 %v7546, %v8179
      %v8258 = vadd.f32 %v7549, %v8181
      %v8259 = vadd.f32 %v7554, %v8183
      %v8260 = vadd.f32 %v7557, %v8185
      %v8261 = vadd.f32 %v7562, %v8187
      %v8262 = vadd.f32 %v7565, %v8189
      %v8263 = vadd.f32 %v7570, %v8191
      %v8264 = vadd.f32 %v7573, %v8193
      %v8265 = vadd.f32 %v7578, %v8195
      %v8266 = vadd.f32 %v7581, %v8197
      %v8267 = vadd.f32 %v7586, %v8199
      %v8268 = vadd.f32 %v7589, %v8201
      %v8269 = vadd.f32 %v7594, %v8203
      %v8270 = vadd.f32 %v7597, %v8205
      %v8271 = vadd.f32 %v7602, %v8207
      %v8272 = vadd.f32 %v7605, %v8209
      %v8273 = vadd.f32 %v7610, %v8211
      %v8274 = vadd.f32 %v7613, %v8213
      %v8275 = vadd.f32 %v7618, %v8215
      %v8276 = vadd.f32 %v7621, %v8217
      %v8277 = vadd.f32 %v7626, %v8219
      %v8308 = vrot.slane %v8013, 2
      %v8309 = vrot.slane %v8016, 2
      %v8310 = vsel %vm6820, %v8308, %v8309
      %v8311 = vrot.slane %v8021, 2
      %v8312 = vsel %vm6820, %v8309, %v8311
      %v8313 = vrot.slane %v8024, 2
      %v8314 = vsel %vm6820, %v8311, %v8313
      %v8315 = vrot.slane %v8029, 2
      %v8316 = vsel %vm6820, %v8313, %v8315
      %v8317 = vrot.slane %v8032, 2
      %v8318 = vsel %vm6820, %v8315, %v8317
      %v8319 = vrot.slane %v8037, 2
      %v8320 = vsel %vm6820, %v8317, %v8319
      %v8321 = vrot.slane %v8040, 2
      %v8322 = vsel %vm6820, %v8319, %v8321
      %v8323 = vrot.slane %v8045, 2
      %v8324 = vsel %vm6820, %v8321, %v8323
      %v8325 = vrot.slane %v8048, 2
      %v8326 = vsel %vm6820, %v8323, %v8325
      %v8327 = vrot.slane %v8053, 2
      %v8328 = vsel %vm6820, %v8325, %v8327
      %v8329 = vrot.slane %v8056, 2
      %v8330 = vsel %vm6820, %v8327, %v8329
      %v8331 = vrot.slane %v8061, 2
      %v8332 = vsel %vm6820, %v8329, %v8331
      %v8333 = vrot.slane %v8064, 2
      %v8334 = vsel %vm6820, %v8331, %v8333
      %v8335 = vrot.slane %v8069, 2
      %v8336 = vsel %vm6820, %v8333, %v8335
      %v8337 = vrot.slane %v8072, 2
      %v8338 = vsel %vm6820, %v8335, %v8337
      %v8339 = vrot.slane %v8077, 2
      %v8340 = vsel %vm6820, %v8337, %v8339
      %v8341 = vrot.slane %v8080, 2
      %v8342 = vsel %vm6820, %v8339, %v8341
      %v8343 = vrot.slane %v8085, 2
      %v8344 = vsel %vm6820, %v8341, %v8343
      %v8345 = vrot.slane %v8088, 2
      %v8346 = vsel %vm6820, %v8343, %v8345
      %v8347 = vrot.slane %v8093, 2
      %v8348 = vsel %vm6820, %v8345, %v8347
      %v8349 = vrot.slane %v8096, 2
      %v8350 = vsel %vm6820, %v8347, %v8349
      %v8351 = vrot.slane %v8101, 2
      %v8352 = vsel %vm6820, %v8349, %v8351
      %v8353 = vrot.slane %v8104, 2
      %v8354 = vsel %vm6820, %v8351, %v8353
      %v8355 = vrot.slane %v8109, 2
      %v8356 = vsel %vm6820, %v8353, %v8355
      %v8357 = vrot.slane %v8112, 2
      %v8358 = vsel %vm6820, %v8355, %v8357
      %v8359 = vrot.slane %v8117, 2
      %v8360 = vsel %vm6820, %v8357, %v8359
      %v8361 = vrot.slane %v8120, 2
      %v8362 = vsel %vm6820, %v8359, %v8361
      %v8363 = vrot.slane %v8125, 2
      %v8364 = vsel %vm6820, %v8361, %v8363
      %v8365 = vrot.slane %v8128, 2
      %v8366 = vsel %vm6820, %v8363, %v8365
      %v8396 = vadd.f32 %v8249, %v8310
      %v8397 = vadd.f32 %v8250, %v8312
      %v8398 = vadd.f32 %v8251, %v8314
      %v8399 = vadd.f32 %v8252, %v8316
      %v8400 = vadd.f32 %v8253, %v8318
      %v8401 = vadd.f32 %v8254, %v8320
      %v8402 = vadd.f32 %v8255, %v8322
      %v8403 = vadd.f32 %v8256, %v8324
      %v8404 = vadd.f32 %v8257, %v8326
      %v8405 = vadd.f32 %v8258, %v8328
      %v8406 = vadd.f32 %v8259, %v8330
      %v8407 = vadd.f32 %v8260, %v8332
      %v8408 = vadd.f32 %v8261, %v8334
      %v8409 = vadd.f32 %v8262, %v8336
      %v8410 = vadd.f32 %v8263, %v8338
      %v8411 = vadd.f32 %v8264, %v8340
      %v8412 = vadd.f32 %v8265, %v8342
      %v8413 = vadd.f32 %v8266, %v8344
      %v8414 = vadd.f32 %v8267, %v8346
      %v8415 = vadd.f32 %v8268, %v8348
      %v8416 = vadd.f32 %v8269, %v8350
      %v8417 = vadd.f32 %v8270, %v8352
      %v8418 = vadd.f32 %v8271, %v8354
      %v8419 = vadd.f32 %v8272, %v8356
      %v8420 = vadd.f32 %v8273, %v8358
      %v8421 = vadd.f32 %v8274, %v8360
      %v8422 = vadd.f32 %v8275, %v8362
      %v8423 = vadd.f32 %v8276, %v8364
      %v8424 = vadd.f32 %v8277, %v8366
      %v8425 = vld [vmem:[%s8] sm:$0x1]
      %v8427 = vlaneseq
      %v8428 = vshrl.u32 %v8427, 7
      %v8429 = vsub.s32 0, %v8428
      %v8430 = vrot.slane %v8425, %v8429
      %v8432 = vadd.f32 %v8396, %v8430
      %v8433 = vadd.f32 %v8397, %v8430
      %v8434 = vadd.f32 %v8398, %v8430
      %v8435 = vadd.f32 %v8399, %v8430
      %v8436 = vadd.f32 %v8400, %v8430
      %v8437 = vadd.f32 %v8401, %v8430
      %v8438 = vadd.f32 %v8402, %v8430
      %v8439 = vadd.f32 %v8403, %v8430
      %v8440 = vadd.f32 %v8404, %v8430
      %v8441 = vadd.f32 %v8405, %v8430
      %v8442 = vadd.f32 %v8406, %v8430
      %v8443 = vadd.f32 %v8407, %v8430
      %v8444 = vadd.f32 %v8408, %v8430
      %v8445 = vadd.f32 %v8409, %v8430
      %v8446 = vadd.f32 %v8410, %v8430
      %v8447 = vadd.f32 %v8411, %v8430
      %v8448 = vadd.f32 %v8412, %v8430
      %v8449 = vadd.f32 %v8413, %v8430
      %v8450 = vadd.f32 %v8414, %v8430
      %v8451 = vadd.f32 %v8415, %v8430
      %v8452 = vadd.f32 %v8416, %v8430
      %v8453 = vadd.f32 %v8417, %v8430
      %v8454 = vadd.f32 %v8418, %v8430
      %v8455 = vadd.f32 %v8419, %v8430
      %v8456 = vadd.f32 %v8420, %v8430
      %v8457 = vadd.f32 %v8421, %v8430
      %v8458 = vadd.f32 %v8422, %v8430
      %v8459 = vadd.f32 %v8423, %v8430
      %v8460 = vadd.f32 %v8424, %v8430
      %v8461 = vmax.f32 %v8432, 0.0
      %v8462 = vmax.f32 %v8433, 0.0
      %v8463 = vmax.f32 %v8434, 0.0
      %v8464 = vmax.f32 %v8435, 0.0
      %v8465 = vmax.f32 %v8436, 0.0
      %v8466 = vmax.f32 %v8437, 0.0
      %v8467 = vmax.f32 %v8438, 0.0
      %v8468 = vmax.f32 %v8439, 0.0
      %v8469 = vmax.f32 %v8440, 0.0
      %v8470 = vmax.f32 %v8441, 0.0
      %v8471 = vmax.f32 %v8442, 0.0
      %v8472 = vmax.f32 %v8443, 0.0
      %v8473 = vmax.f32 %v8444, 0.0
      %v8474 = vmax.f32 %v8445, 0.0
      %v8475 = vmax.f32 %v8446, 0.0
      %v8476 = vmax.f32 %v8447, 0.0
      %v8477 = vmax.f32 %v8448, 0.0
      %v8478 = vmax.f32 %v8449, 0.0
      %v8479 = vmax.f32 %v8450, 0.0
      %v8480 = vmax.f32 %v8451, 0.0
      %v8481 = vmax.f32 %v8452, 0.0
      %v8482 = vmax.f32 %v8453, 0.0
      %v8483 = vmax.f32 %v8454, 0.0
      %v8484 = vmax.f32 %v8455, 0.0
      %v8485 = vmax.f32 %v8456, 0.0
      %v8486 = vmax.f32 %v8457, 0.0
      %v8487 = vmax.f32 %v8458, 0.0
      %v8488 = vmax.f32 %v8459, 0.0
      %v8489 = vmax.f32 %v8460, 0.0
      %8490 = vst.msk [vmem:[#allocation5] sm:$0xff] %vm3964, %v8461
      %8491 = vst.msk [vmem:[#allocation5 + $0x8] sm:$0xff] %vm3964, %v8462
      %8492 = vst.msk [vmem:[#allocation5 + $0x10] sm:$0xff] %vm3964, %v8463
      %8493 = vst.msk [vmem:[#allocation5 + $0x18] sm:$0xff] %vm3964, %v8464
      %8494 = vst.msk [vmem:[#allocation5 + $0x20] sm:$0xff] %vm3964, %v8465
      %8495 = vst.msk [vmem:[#allocation5 + $0x28] sm:$0xff] %vm3964, %v8466
      %8496 = vst.msk [vmem:[#allocation5 + $0x30] sm:$0xff] %vm3964, %v8467
      %8497 = vst.msk [vmem:[#allocation5 + $0x38] sm:$0xff] %vm3964, %v8468
      %8498 = vst.msk [vmem:[#allocation5 + $0x40] sm:$0xff] %vm3964, %v8469
      %8499 = vst.msk [vmem:[#allocation5 + $0x48] sm:$0xff] %vm3964, %v8470
      %8500 = vst.msk [vmem:[#allocation5 + $0x50] sm:$0xff] %vm3964, %v8471
      %8501 = vst.msk [vmem:[#allocation5 + $0x58] sm:$0xff] %vm3964, %v8472
      %8502 = vst.msk [vmem:[#allocation5 + $0x60] sm:$0xff] %vm3964, %v8473
      %8503 = vst.msk [vmem:[#allocation5 + $0x68] sm:$0xff] %vm3964, %v8474
      %8504 = vst.msk [vmem:[#allocation5 + $0x70] sm:$0xff] %vm3964, %v8475
      %8505 = vst.msk [vmem:[#allocation5 + $0x78] sm:$0xff] %vm3964, %v8476
      %8506 = vst.msk [vmem:[#allocation5 + $0x80] sm:$0xff] %vm3964, %v8477
      %8507 = vst.msk [vmem:[#allocation5 + $0x88] sm:$0xff] %vm3964, %v8478
      %8508 = vst.msk [vmem:[#allocation5 + $0x90] sm:$0xff] %vm3964, %v8479
      %8509 = vst.msk [vmem:[#allocation5 + $0x98] sm:$0xff] %vm3964, %v8480
      %8510 = vst.msk [vmem:[#allocation5 + $0xa0] sm:$0xff] %vm3964, %v8481
      %8511 = vst.msk [vmem:[#allocation5 + $0xa8] sm:$0xff] %vm3964, %v8482
      %8512 = vst.msk [vmem:[#allocation5 + $0xb0] sm:$0xff] %vm3964, %v8483
      %8513 = vst.msk [vmem:[#allocation5 + $0xb8] sm:$0xff] %vm3964, %v8484
      %8514 = vst.msk [vmem:[#allocation5 + $0xc0] sm:$0xff] %vm3964, %v8485
      %8515 = vst.msk [vmem:[#allocation5 + $0xc8] sm:$0xff] %vm3964, %v8486
      %8516 = vst.msk [vmem:[#allocation5 + $0xd0] sm:$0xff] %vm3964, %v8487
      %8517 = vst.msk [vmem:[#allocation5 + $0xd8] sm:$0xff] %vm3964, %v8488
      %8518 = vst.msk [vmem:[#allocation5 + $0xe0] sm:$0xff] %vm3964, %v8489
      %v8519 = vld [vmem:[#allocation5] sm:$0xff]
      %v8520 = vld [vmem:[#allocation5 + $0x8] sm:$0xff]
      %v8521 = vld [vmem:[#allocation5 + $0x10] sm:$0xff]
      %v8522 = vld [vmem:[#allocation5 + $0x18] sm:$0xff]
      %v8523 = vld [vmem:[#allocation5 + $0x20] sm:$0xff]
      %v8524 = vld [vmem:[#allocation5 + $0x28] sm:$0xff]
      %v8525 = vld [vmem:[#allocation5 + $0x30] sm:$0xff]
      %v8526 = vld [vmem:[#allocation5 + $0x38] sm:$0xff]
      %v8527 = vld [vmem:[#allocation5 + $0x40] sm:$0xff]
      %v8528 = vld [vmem:[#allocation5 + $0x48] sm:$0xff]
      %v8529 = vld [vmem:[#allocation5 + $0x50] sm:$0xff]
      %v8530 = vld [vmem:[#allocation5 + $0x58] sm:$0xff]
      %v8531 = vld [vmem:[#allocation5 + $0x60] sm:$0xff]
      %v8532 = vld [vmem:[#allocation5 + $0x68] sm:$0xff]
      %v8533 = vld [vmem:[#allocation5 + $0x70] sm:$0xff]
      %v8534 = vld [vmem:[#allocation5 + $0x78] sm:$0xff]
      %v8535 = vld [vmem:[#allocation5 + $0x80] sm:$0xff]
      %v8536 = vld [vmem:[#allocation5 + $0x88] sm:$0xff]
      %v8537 = vld [vmem:[#allocation5 + $0x90] sm:$0xff]
      %v8538 = vld [vmem:[#allocation5 + $0x98] sm:$0xff]
      %v8539 = vld [vmem:[#allocation5 + $0xa0] sm:$0xff]
      %v8540 = vld [vmem:[#allocation5 + $0xa8] sm:$0xff]
      %v8541 = vld [vmem:[#allocation5 + $0xb0] sm:$0xff]
      %v8542 = vld [vmem:[#allocation5 + $0xb8] sm:$0xff]
      %v8543 = vld [vmem:[#allocation5 + $0xc0] sm:$0xff]
      %v8544 = vld [vmem:[#allocation5 + $0xc8] sm:$0xff]
      %v8545 = vld [vmem:[#allocation5 + $0xd0] sm:$0xff]
      %v8546 = vld [vmem:[#allocation5 + $0xd8] sm:$0xff]
      %v8547 = vld [vmem:[#allocation5 + $0xe0] sm:$0xff]
      %v8548 = vld [vmem:[#allocation5 + $0xe8] sm:$0xff]
      %8567 = vrot.lane.b32.xlu0 %v8525, 64
      %v8568 = vpop.permute.xlu0 %8567
      %8569 = vrot.lane.b32.xlu0 %v8526, 64
      %v8570 = vpop.permute.xlu0 %8569
      %8571 = vrot.lane.b32.xlu0 %v8527, 64
      %v8572 = vpop.permute.xlu0 %8571
      %8573 = vrot.lane.b32.xlu0 %v8528, 64
      %v8574 = vpop.permute.xlu0 %8573
      %8575 = vrot.lane.b32.xlu0 %v8529, 64
      %v8576 = vpop.permute.xlu0 %8575
      %8577 = vrot.lane.b32.xlu0 %v8530, 64
      %v8578 = vpop.permute.xlu0 %8577
      %8579 = vrot.lane.b32.xlu0 %v8531, 64
      %v8580 = vpop.permute.xlu0 %8579
      %8581 = vrot.lane.b32.xlu0 %v8532, 64
      %v8582 = vpop.permute.xlu0 %8581
      %8583 = vrot.lane.b32.xlu0 %v8533, 64
      %v8584 = vpop.permute.xlu0 %8583
      %8585 = vrot.lane.b32.xlu0 %v8534, 64
      %v8586 = vpop.permute.xlu0 %8585
      %8587 = vrot.lane.b32.xlu0 %v8535, 64
      %v8588 = vpop.permute.xlu0 %8587
      %8589 = vrot.lane.b32.xlu0 %v8536, 64
      %v8590 = vpop.permute.xlu0 %8589
      %8591 = vrot.lane.b32.xlu0 %v8537, 64
      %v8592 = vpop.permute.xlu0 %8591
      %8593 = vrot.lane.b32.xlu0 %v8538, 64
      %v8594 = vpop.permute.xlu0 %8593
      %8595 = vrot.lane.b32.xlu0 %v8539, 64
      %v8596 = vpop.permute.xlu0 %8595
      %8597 = vrot.lane.b32.xlu0 %v8540, 64
      %v8598 = vpop.permute.xlu0 %8597
      %8599 = vrot.lane.b32.xlu0 %v8541, 64
      %v8600 = vpop.permute.xlu0 %8599
      %8601 = vrot.lane.b32.xlu0 %v8542, 64
      %v8602 = vpop.permute.xlu0 %8601
      %v8621 = vsel %vm3964, %v8519, %v8568
      %v8622 = vsel %vm3964, %v8520, %v8570
      %v8623 = vsel %vm3964, %v8521, %v8572
      %v8624 = vsel %vm3964, %v8522, %v8574
      %v8625 = vsel %vm3964, %v8523, %v8576
      %v8626 = vsel %vm3964, %v8524, %v8578
      %v8627 = vsel %vm3964, %v8525, %v8580
      %v8628 = vsel %vm3964, %v8526, %v8582
      %v8629 = vsel %vm3964, %v8527, %v8584
      %v8630 = vsel %vm3964, %v8528, %v8586
      %v8631 = vsel %vm3964, %v8529, %v8588
      %v8632 = vsel %vm3964, %v8530, %v8590
      %v8633 = vsel %vm3964, %v8531, %v8592
      %v8634 = vsel %vm3964, %v8532, %v8594
      %v8635 = vsel %vm3964, %v8533, %v8596
      %v8636 = vsel %vm3964, %v8534, %v8598
      %v8637 = vsel %vm3964, %v8535, %v8600
      %v8638 = vsel %vm3964, %v8536, %v8602
      %v8639 = vpack.c.bf16 %v8622, %v8621
      %v8640 = vpack.c.bf16 %v8532, %v8531
      %v8641 = vpack.c.bf16 %v8624, %v8623
      %v8642 = vpack.c.bf16 %v8534, %v8533
      %v8643 = vpack.c.bf16 %v8626, %v8625
      %v8644 = vpack.c.bf16 %v8536, %v8535
      %v8645 = vpack.c.bf16 %v8628, %v8627
      %v8646 = vpack.c.bf16 %v8538, %v8537
      %v8647 = vpack.c.bf16 %v8630, %v8629
      %v8648 = vpack.c.bf16 %v8540, %v8539
      %v8649 = vpack.c.bf16 %v8632, %v8631
      %v8650 = vpack.c.bf16 %v8542, %v8541
      %v8651 = vpack.c.bf16 %v8634, %v8633
      %v8652 = vpack.c.bf16 %v8544, %v8543
      %v8653 = vpack.c.bf16 %v8636, %v8635
      %v8654 = vpack.c.bf16 %v8546, %v8545
      %v8655 = vpack.c.bf16 %v8638, %v8637
      %v8656 = vpack.c.bf16 %v8548, %v8547
      %v8657 = vld [vmem:[%s9] sm:$0xf]
      %v8658 = vld [vmem:[%s9 + $0x4] sm:$0xf]
      %v8659 = vld [vmem:[%s9 + $0x8] sm:$0xf]
      %v8660 = vld [vmem:[%s9 + $0xc] sm:$0xf]
      %v8661 = vld [vmem:[%s9 + $0x10] sm:$0xf]
      %v8662 = vld [vmem:[%s9 + $0x14] sm:$0xf]
      %v8663 = vld [vmem:[%s9 + $0x18] sm:$0xf]
      %v8664 = vld [vmem:[%s9 + $0x1c] sm:$0xf]
      %v8665 = vld [vmem:[%s9 + $0x20] sm:$0xf]
      %v8666 = vld [vmem:[%s9 + $0x24] sm:$0xf]
      %v8667 = vld [vmem:[%s9 + $0x28] sm:$0xf]
      %v8668 = vld [vmem:[%s9 + $0x2c] sm:$0xf]
      %v8669 = vld [vmem:[%s9 + $0x30] sm:$0xf]
      %v8670 = vld [vmem:[%s9 + $0x34] sm:$0xf]
      %v8671 = vld [vmem:[%s9 + $0x38] sm:$0xf]
      %v8672 = vld [vmem:[%s9 + $0x3c] sm:$0xf]
      %v8673 = vld [vmem:[%s9 + $0x40] sm:$0xf]
      %v8674 = vld [vmem:[%s9 + $0x44] sm:$0xf]
      %v8675 = vld [vmem:[%s9 + $0x48] sm:$0xf]
      %v8676 = vld [vmem:[%s9 + $0x4c] sm:$0xf]
      %v8677 = vld [vmem:[%s9 + $0x50] sm:$0xf]
      %v8678 = vld [vmem:[%s9 + $0x54] sm:$0xf]
      %v8679 = vld [vmem:[%s9 + $0x58] sm:$0xf]
      %v8680 = vld [vmem:[%s9 + $0x5c] sm:$0xf]
      %v8705 = vunpack.c.l.b16 %v8657
      %v8706 = vunpack.c.l.b16 %v8658
      %v8707 = vunpack.c.l.b16 %v8659
      %v8708 = vunpack.c.l.b16 %v8660
      %v8709 = vunpack.c.l.b16 %v8661
      %v8710 = vunpack.c.l.b16 %v8662
      %v8711 = vunpack.c.l.b16 %v8663
      %v8712 = vunpack.c.l.b16 %v8664
      %v8713 = vunpack.c.l.b16 %v8665
      %v8714 = vunpack.c.l.b16 %v8666
      %v8715 = vunpack.c.l.b16 %v8667
      %v8716 = vunpack.c.l.b16 %v8668
      %v8717 = vunpack.c.l.b16 %v8669
      %v8718 = vunpack.c.l.b16 %v8670
      %v8719 = vunpack.c.l.b16 %v8671
      %v8720 = vunpack.c.l.b16 %v8672
      %v8721 = vunpack.c.l.b16 %v8673
      %v8722 = vunpack.c.l.b16 %v8674
      %v8723 = vunpack.c.l.b16 %v8675
      %v8724 = vunpack.c.l.b16 %v8676
      %v8725 = vunpack.c.l.b16 %v8677
      %v8726 = vunpack.c.l.b16 %v8678
      %v8727 = vunpack.c.l.b16 %v8679
      %v8728 = vunpack.c.l.b16 %v8680
      %v8729 = vpack.c.b16 %v8706, %v8705
      %v8730 = vpack.c.b16 %v8708, %v8707
      %v8731 = vpack.c.b16 %v8710, %v8709
      %v8732 = vpack.c.b16 %v8712, %v8711
      %v8733 = vpack.c.b16 %v8714, %v8713
      %v8734 = vpack.c.b16 %v8716, %v8715
      %v8735 = vpack.c.b16 %v8718, %v8717
      %v8736 = vpack.c.b16 %v8720, %v8719
      %v8737 = vpack.c.b16 %v8722, %v8721
      %v8738 = vpack.c.b16 %v8724, %v8723
      %v8739 = vpack.c.b16 %v8726, %v8725
      %v8740 = vpack.c.b16 %v8728, %v8727
      %v8754 = vsel %vm3964, %v8640, 0
      %v8757 = vsel %vm3964, %v8642, 0
      %v8760 = vsel %vm3964, %v8644, 0
      %v8763 = vsel %vm3964, %v8646, 0
      %v8766 = vsel %vm3964, %v8648, 0
      %v8769 = vsel %vm3964, %v8650, 0
      %v8772 = vsel %vm3964, %v8652, 0
      %v8775 = vsel %vm3964, %v8654, 0
      %v8778 = vsel %vm3964, %v8656, 0
      %8780 = vmatprep.subr.bf16.mxu0 0
      %8781 = vmatpush1.bf16.msra.mxu0 %v8729
      %8782 = vmatprep.subr.bf16.mxu0 0
      %8783 = vmatpush1.bf16.msra.mxu0 %v8730
      %8784 = vmatprep.subr.bf16.mxu0 0
      %8785 = vmatpush1.bf16.msra.mxu0 %v8731
      %8786 = vmatprep.subr.bf16.mxu0 0
      %8787 = vmatpush1.bf16.msra.mxu0 %v8732
      %8788 = vmatprep.subr.bf16.mxu0 0
      %8789 = vmatpush1.bf16.msra.mxu0 %v8733
      %8790 = vmatprep.subr.bf16.mxu0 0
      %8791 = vmatpush1.bf16.msra.mxu0 %v8734
      %8792 = vmatprep.subr.bf16.mxu0 0
      %8793 = vmatpush1.bf16.msra.mxu0 %v8735
      %8794 = vmatprep.subr.bf16.mxu0 0
      %8795 = vmatpush1.bf16.msra.mxu0 %v8736
      %8796 = vmatprep.subr.bf16.mxu0 0
      %8797 = vmatpush1.bf16.msra.mxu0 %v8737
      %8798 = vmatprep.subr.bf16.mxu0 0
      %8799 = vmatpush1.bf16.msra.mxu0 %v8738
      %8800 = vmatprep.subr.bf16.mxu0 0
      %8801 = vmatpush1.bf16.msra.mxu0 %v8739
      %8802 = vmatprep.subr.bf16.mxu0 0
      %8803 = vmatpush1.bf16.msra.mxu0 %v8740
      %8804 = vmatprep.subr.bf16.mxu0 0
      %8805 = vmatpush1.bf16.msra.mxu0 0
      %8806 = vmatprep.subr.bf16.mxu0 0
      %8807 = vmatpush1.bf16.msra.mxu0 0
      %8808 = vmatprep.subr.bf16.mxu0 0
      %8809 = vmatpush1.bf16.msra.mxu0 0
      %8810 = vmatprep.subr.bf16.mxu0 0
      %8811 = vmatpush1.bf16.msra.mxu0 0
      %8812 = vmatprep.mubr.bf16.mxu0 %v8754
      %8813 = vmatmul.mubr.bf16.gmra.mrb[0].mxu0 %v8639
      %v8814 = vpop.f32.mrb[0].mxu0
      %v8815 = vadd.f32 0.0, %v8814
      %v8816 = vpop.f32.mrb[0].mxu0
      %v8817 = vpop.f32.mrb[0].mxu0
      %v8818 = vadd.f32 0.0, %v8817
      %v8819 = vpop.f32.mrb[0].mxu0
      %8820 = vmatprep.mubr.bf16.mxu0 %v8757
      %8821 = vmatmul.mubr.bf16.gmra.mrb[0].mxu0 %v8641
      %v8822 = vpop.f32.mrb[0].mxu0
      %v8823 = vadd.f32 0.0, %v8822
      %v8824 = vpop.f32.mrb[0].mxu0
      %v8825 = vpop.f32.mrb[0].mxu0
      %v8826 = vadd.f32 0.0, %v8825
      %v8827 = vpop.f32.mrb[0].mxu0
      %8828 = vmatprep.mubr.bf16.mxu0 %v8760
      %8829 = vmatmul.mubr.bf16.gmra.mrb[0].mxu0 %v8643
      %v8830 = vpop.f32.mrb[0].mxu0
      %v8831 = vadd.f32 0.0, %v8830
      %v8832 = vpop.f32.mrb[0].mxu0
      %v8833 = vpop.f32.mrb[0].mxu0
      %v8834 = vadd.f32 0.0, %v8833
      %v8835 = vpop.f32.mrb[0].mxu0
      %8836 = vmatprep.mubr.bf16.mxu0 %v8763
      %8837 = vmatmul.mubr.bf16.gmra.mrb[0].mxu0 %v8645
      %v8838 = vpop.f32.mrb[0].mxu0
      %v8839 = vadd.f32 0.0, %v8838
      %v8840 = vpop.f32.mrb[0].mxu0
      %v8841 = vpop.f32.mrb[0].mxu0
      %v8842 = vadd.f32 0.0, %v8841
      %v8843 = vpop.f32.mrb[0].mxu0
      %8844 = vmatprep.mubr.bf16.mxu0 %v8766
      %8845 = vmatmul.mubr.bf16.gmra.mrb[0].mxu0 %v8647
      %v8846 = vpop.f32.mrb[0].mxu0
      %v8847 = vadd.f32 0.0, %v8846
      %v8848 = vpop.f32.mrb[0].mxu0
      %v8849 = vpop.f32.mrb[0].mxu0
      %v8850 = vadd.f32 0.0, %v8849
      %v8851 = vpop.f32.mrb[0].mxu0
      %8852 = vmatprep.mubr.bf16.mxu0 %v8769
      %8853 = vmatmul.mubr.bf16.gmra.mrb[0].mxu0 %v8649
      %v8854 = vpop.f32.mrb[0].mxu0
      %v8855 = vadd.f32 0.0, %v8854
      %v8856 = vpop.f32.mrb[0].mxu0
      %v8857 = vpop.f32.mrb[0].mxu0
      %v8858 = vadd.f32 0.0, %v8857
      %v8859 = vpop.f32.mrb[0].mxu0
      %8860 = vmatprep.mubr.bf16.mxu0 %v8772
      %8861 = vmatmul.mubr.bf16.gmra.mrb[0].mxu0 %v8651
      %v8862 = vpop.f32.mrb[0].mxu0
      %v8863 = vadd.f32 0.0, %v8862
      %v8864 = vpop.f32.mrb[0].mxu0
      %v8865 = vpop.f32.mrb[0].mxu0
      %v8866 = vadd.f32 0.0, %v8865
      %v8867 = vpop.f32.mrb[0].mxu0
      %8868 = vmatprep.mubr.bf16.mxu0 %v8775
      %8869 = vmatmul.mubr.bf16.gmra.mrb[0].mxu0 %v8653
      %v8870 = vpop.f32.mrb[0].mxu0
      %v8871 = vadd.f32 0.0, %v8870
      %v8872 = vpop.f32.mrb[0].mxu0
      %v8873 = vpop.f32.mrb[0].mxu0
      %v8874 = vadd.f32 0.0, %v8873
      %v8875 = vpop.f32.mrb[0].mxu0
      %8876 = vmatprep.mubr.bf16.mxu0 %v8778
      %8877 = vmatmul.mubr.bf16.gmra.mrb[0].mxu0 %v8655
      %v8878 = vpop.f32.mrb[0].mxu0
      %v8879 = vadd.f32 0.0, %v8878
      %v8880 = vpop.f32.mrb[0].mxu0
      %v8881 = vpop.f32.mrb[0].mxu0
      %v8882 = vpop.f32.mrb[0].mxu0
      %8883 = vdwg.mxu0
      %s8884 = scalar_lea.vmem %s9, 96
      %v8885 = vld [vmem:[%s8884] sm:$0xf]
      %v8886 = vld [vmem:[%s8884 + $0x4] sm:$0xf]
      %v8887 = vld [vmem:[%s8884 + $0x8] sm:$0xf]
      %v8888 = vld [vmem:[%s8884 + $0xc] sm:$0xf]
      %v8889 = vld [vmem:[%s8884 + $0x10] sm:$0xf]
      %v8890 = vld [vmem:[%s8884 + $0x14] sm:$0xf]
      %v8891 = vld [vmem:[%s8884 + $0x18] sm:$0xf]
      %v8892 = vld [vmem:[%s8884 + $0x1c] sm:$0xf]
      %v8893 = vld [vmem:[%s8884 + $0x20] sm:$0xf]
      %v8894 = vld [vmem:[%s8884 + $0x24] sm:$0xf]
      %v8895 = vld [vmem:[%s8884 + $0x28] sm:$0xf]
      %v8896 = vld [vmem:[%s8884 + $0x2c] sm:$0xf]
      %v8897 = vld [vmem:[%s8884 + $0x30] sm:$0xf]
      %v8898 = vld [vmem:[%s8884 + $0x34] sm:$0xf]
      %v8899 = vld [vmem:[%s8884 + $0x38] sm:$0xf]
      %v8900 = vld [vmem:[%s8884 + $0x3c] sm:$0xf]
      %v8901 = vld [vmem:[%s8884 + $0x40] sm:$0xf]
      %v8902 = vld [vmem:[%s8884 + $0x44] sm:$0xf]
      %v8903 = vld [vmem:[%s8884 + $0x48] sm:$0xf]
      %v8904 = vld [vmem:[%s8884 + $0x4c] sm:$0xf]
      %v8905 = vld [vmem:[%s8884 + $0x50] sm:$0xf]
      %v8906 = vld [vmem:[%s8884 + $0x54] sm:$0xf]
      %v8907 = vld [vmem:[%s8884 + $0x58] sm:$0xf]
      %v8908 = vld [vmem:[%s8884 + $0x5c] sm:$0xf]
      %v8933 = vunpack.c.l.b16 %v8885
      %v8934 = vunpack.c.l.b16 %v8886
      %v8935 = vunpack.c.l.b16 %v8887
      %v8936 = vunpack.c.l.b16 %v8888
      %v8937 = vunpack.c.l.b16 %v8889
      %v8938 = vunpack.c.l.b16 %v8890
      %v8939 = vunpack.c.l.b16 %v8891
      %v8940 = vunpack.c.l.b16 %v8892
      %v8941 = vunpack.c.l.b16 %v8893
      %v8942 = vunpack.c.l.b16 %v8894
      %v8943 = vunpack.c.l.b16 %v8895
      %v8944 = vunpack.c.l.b16 %v8896
      %v8945 = vunpack.c.l.b16 %v8897
      %v8946 = vunpack.c.l.b16 %v8898
      %v8947 = vunpack.c.l.b16 %v8899
      %v8948 = vunpack.c.l.b16 %v8900
      %v8949 = vunpack.c.l.b16 %v8901
      %v8950 = vunpack.c.l.b16 %v8902
      %v8951 = vunpack.c.l.b16 %v8903
      %v8952 = vunpack.c.l.b16 %v8904
      %v8953 = vunpack.c.l.b16 %v8905
      %v8954 = vunpack.c.l.b16 %v8906
      %v8955 = vunpack.c.l.b16 %v8907
      %v8956 = vunpack.c.l.b16 %v8908
      %v8957 = vpack.c.b16 %v8934, %v8933
      %v8958 = vpack.c.b16 %v8936, %v8935
      %v8959 = vpack.c.b16 %v8938, %v8937
      %v8960 = vpack.c.b16 %v8940, %v8939
      %v8961 = vpack.c.b16 %v8942, %v8941
      %v8962 = vpack.c.b16 %v8944, %v8943
      %v8963 = vpack.c.b16 %v8946, %v8945
      %v8964 = vpack.c.b16 %v8948, %v8947
      %v8965 = vpack.c.b16 %v8950, %v8949
      %v8966 = vpack.c.b16 %v8952, %v8951
      %v8967 = vpack.c.b16 %v8954, %v8953
      %v8968 = vpack.c.b16 %v8956, %v8955
      %8981 = vmatprep.subr.bf16.mxu0 0
      %8982 = vmatpush1.bf16.msra.mxu0 %v8957
      %8983 = vmatprep.subr.bf16.mxu0 0
      %8984 = vmatpush1.bf16.msra.mxu0 %v8958
      %8985 = vmatprep.subr.bf16.mxu0 0
      %8986 = vmatpush1.bf16.msra.mxu0 %v8959
      %8987 = vmatprep.subr.bf16.mxu0 0
      %8988 = vmatpush1.bf16.msra.mxu0 %v8960
      %8989 = vmatprep.subr.bf16.mxu0 0
      %8990 = vmatpush1.bf16.msra.mxu0 %v8961
      %8991 = vmatprep.subr.bf16.mxu0 0
      %8992 = vmatpush1.bf16.msra.mxu0 %v8962
      %8993 = vmatprep.subr.bf16.mxu0 0
      %8994 = vmatpush1.bf16.msra.mxu0 %v8963
      %8995 = vmatprep.subr.bf16.mxu0 0
      %8996 = vmatpush1.bf16.msra.mxu0 %v8964
      %8997 = vmatprep.subr.bf16.mxu0 0
      %8998 = vmatpush1.bf16.msra.mxu0 %v8965
      %8999 = vmatprep.subr.bf16.mxu0 0
      %9000 = vmatpush1.bf16.msra.mxu0 %v8966
      %9001 = vmatprep.subr.bf16.mxu0 0
      %9002 = vmatpush1.bf16.msra.mxu0 %v8967
      %9003 = vmatprep.subr.bf16.mxu0 0
      %9004 = vmatpush1.bf16.msra.mxu0 %v8968
      %9005 = vmatprep.subr.bf16.mxu0 0
      %9006 = vmatpush1.bf16.msra.mxu0 0
      %9007 = vmatprep.subr.bf16.mxu0 0
      %9008 = vmatpush1.bf16.msra.mxu0 0
      %9009 = vmatprep.subr.bf16.mxu0 0
      %9010 = vmatpush1.bf16.msra.mxu0 0
      %9011 = vmatprep.subr.bf16.mxu0 0
      %9012 = vmatpush1.bf16.msra.mxu0 0
      %9013 = vmatprep.mubr.bf16.mxu0 %v8754
      %9014 = vmatmul.mubr.bf16.gmra.mrb[0].mxu0 %v8639
      %v9015 = vpop.f32.mrb[0].mxu0
      %v9016 = vadd.f32 0.0, %v9015
      %v9017 = vpop.f32.mrb[0].mxu0
      %v9018 = vpop.f32.mrb[0].mxu0
      %v9019 = vadd.f32 0.0, %v9018
      %v9020 = vpop.f32.mrb[0].mxu0
      %9021 = vmatprep.mubr.bf16.mxu0 %v8757
      %9022 = vmatmul.mubr.bf16.gmra.mrb[0].mxu0 %v8641
      %v9023 = vpop.f32.mrb[0].mxu0
      %v9024 = vadd.f32 0.0, %v9023
      %v9025 = vpop.f32.mrb[0].mxu0
      %v9026 = vpop.f32.mrb[0].mxu0
      %v9027 = vadd.f32 0.0, %v9026
      %v9028 = vpop.f32.mrb[0].mxu0
      %9029 = vmatprep.mubr.bf16.mxu0 %v8760
      %9030 = vmatmul.mubr.bf16.gmra.mrb[0].mxu0 %v8643
      %v9031 = vpop.f32.mrb[0].mxu0
      %v9032 = vadd.f32 0.0, %v9031
      %v9033 = vpop.f32.mrb[0].mxu0
      %v9034 = vpop.f32.mrb[0].mxu0
      %v9035 = vadd.f32 0.0, %v9034
      %v9036 = vpop.f32.mrb[0].mxu0
      %9037 = vmatprep.mubr.bf16.mxu0 %v8763
      %9038 = vmatmul.mubr.bf16.gmra.mrb[0].mxu0 %v8645
      %v9039 = vpop.f32.mrb[0].mxu0
      %v9040 = vadd.f32 0.0, %v9039
      %v9041 = vpop.f32.mrb[0].mxu0
      %v9042 = vpop.f32.mrb[0].mxu0
      %v9043 = vadd.f32 0.0, %v9042
      %v9044 = vpop.f32.mrb[0].mxu0
      %9045 = vmatprep.mubr.bf16.mxu0 %v8766
      %9046 = vmatmul.mubr.bf16.gmra.mrb[0].mxu0 %v8647
      %v9047 = vpop.f32.mrb[0].mxu0
      %v9048 = vadd.f32 0.0, %v9047
      %v9049 = vpop.f32.mrb[0].mxu0
      %v9050 = vpop.f32.mrb[0].mxu0
      %v9051 = vadd.f32 0.0, %v9050
      %v9052 = vpop.f32.mrb[0].mxu0
      %9053 = vmatprep.mubr.bf16.mxu0 %v8769
      %9054 = vmatmul.mubr.bf16.gmra.mrb[0].mxu0 %v8649
      %v9055 = vpop.f32.mrb[0].mxu0
      %v9056 = vadd.f32 0.0, %v9055
      %v9057 = vpop.f32.mrb[0].mxu0
      %v9058 = vpop.f32.mrb[0].mxu0
      %v9059 = vadd.f32 0.0, %v9058
      %v9060 = vpop.f32.mrb[0].mxu0
      %9061 = vmatprep.mubr.bf16.mxu0 %v8772
      %9062 = vmatmul.mubr.bf16.gmra.mrb[0].mxu0 %v8651
      %v9063 = vpop.f32.mrb[0].mxu0
      %v9064 = vadd.f32 0.0, %v9063
      %v9065 = vpop.f32.mrb[0].mxu0
      %v9066 = vpop.f32.mrb[0].mxu0
      %v9067 = vadd.f32 0.0, %v9066
      %v9068 = vpop.f32.mrb[0].mxu0
      %9069 = vmatprep.mubr.bf16.mxu0 %v8775
      %9070 = vmatmul.mubr.bf16.gmra.mrb[0].mxu0 %v8653
      %v9071 = vpop.f32.mrb[0].mxu0
      %v9072 = vadd.f32 0.0, %v9071
      %v9073 = vpop.f32.mrb[0].mxu0
      %v9074 = vpop.f32.mrb[0].mxu0
      %v9075 = vadd.f32 0.0, %v9074
      %v9076 = vpop.f32.mrb[0].mxu0
      %9077 = vmatprep.mubr.bf16.mxu0 %v8778
      %9078 = vmatmul.mubr.bf16.gmra.mrb[0].mxu0 %v8655
      %v9079 = vpop.f32.mrb[0].mxu0
      %v9080 = vadd.f32 0.0, %v9079
      %v9081 = vpop.f32.mrb[0].mxu0
      %v9082 = vpop.f32.mrb[0].mxu0
      %v9083 = vadd.f32 0.0, %v9082
      %v9084 = vpop.f32.mrb[0].mxu0
      %9085 = vdwg.mxu0
      %s9086 = scalar_lea.vmem %s9, 192
      %v9087 = vld [vmem:[%s9086] sm:$0xf]
      %v9088 = vld [vmem:[%s9086 + $0x4] sm:$0xf]
      %v9089 = vld [vmem:[%s9086 + $0x8] sm:$0xf]
      %v9090 = vld [vmem:[%s9086 + $0xc] sm:$0xf]
      %v9091 = vld [vmem:[%s9086 + $0x10] sm:$0xf]
      %v9092 = vld [vmem:[%s9086 + $0x14] sm:$0xf]
      %v9093 = vld [vmem:[%s9086 + $0x18] sm:$0xf]
      %v9094 = vld [vmem:[%s9086 + $0x1c] sm:$0xf]
      %v9095 = vld [vmem:[%s9086 + $0x20] sm:$0xf]
      %v9096 = vld [vmem:[%s9086 + $0x24] sm:$0xf]
      %v9097 = vld [vmem:[%s9086 + $0x28] sm:$0xf]
      %v9098 = vld [vmem:[%s9086 + $0x2c] sm:$0xf]
      %v9099 = vld [vmem:[%s9086 + $0x30] sm:$0xf]
      %v9100 = vld [vmem:[%s9086 + $0x34] sm:$0xf]
      %v9101 = vld [vmem:[%s9086 + $0x38] sm:$0xf]
      %v9102 = vld [vmem:[%s9086 + $0x3c] sm:$0xf]
      %v9103 = vld [vmem:[%s9086 + $0x40] sm:$0xf]
      %v9104 = vld [vmem:[%s9086 + $0x44] sm:$0xf]
      %v9105 = vld [vmem:[%s9086 + $0x48] sm:$0xf]
      %v9106 = vld [vmem:[%s9086 + $0x4c] sm:$0xf]
      %v9107 = vld [vmem:[%s9086 + $0x50] sm:$0xf]
      %v9108 = vld [vmem:[%s9086 + $0x54] sm:$0xf]
      %v9109 = vld [vmem:[%s9086 + $0x58] sm:$0xf]
      %v9110 = vld [vmem:[%s9086 + $0x5c] sm:$0xf]
      %v9135 = vunpack.c.l.b16 %v9087
      %v9136 = vunpack.c.l.b16 %v9088
      %v9137 = vunpack.c.l.b16 %v9089
      %v9138 = vunpack.c.l.b16 %v9090
      %v9139 = vunpack.c.l.b16 %v9091
      %v9140 = vunpack.c.l.b16 %v9092
      %v9141 = vunpack.c.l.b16 %v9093
      %v9142 = vunpack.c.l.b16 %v9094
      %v9143 = vunpack.c.l.b16 %v9095
      %v9144 = vunpack.c.l.b16 %v9096
      %v9145 = vunpack.c.l.b16 %v9097
      %v9146 = vunpack.c.l.b16 %v9098
      %v9147 = vunpack.c.l.b16 %v9099
      %v9148 = vunpack.c.l.b16 %v9100
      %v9149 = vunpack.c.l.b16 %v9101
      %v9150 = vunpack.c.l.b16 %v9102
      %v9151 = vunpack.c.l.b16 %v9103
      %v9152 = vunpack.c.l.b16 %v9104
      %v9153 = vunpack.c.l.b16 %v9105
      %v9154 = vunpack.c.l.b16 %v9106
      %v9155 = vunpack.c.l.b16 %v9107
      %v9156 = vunpack.c.l.b16 %v9108
      %v9157 = vunpack.c.l.b16 %v9109
      %v9158 = vunpack.c.l.b16 %v9110
      %v9159 = vpack.c.b16 %v9136, %v9135
      %v9160 = vpack.c.b16 %v9138, %v9137
      %v9161 = vpack.c.b16 %v9140, %v9139
      %v9162 = vpack.c.b16 %v9142, %v9141
      %v9163 = vpack.c.b16 %v9144, %v9143
      %v9164 = vpack.c.b16 %v9146, %v9145
      %v9165 = vpack.c.b16 %v9148, %v9147
      %v9166 = vpack.c.b16 %v9150, %v9149
      %v9167 = vpack.c.b16 %v9152, %v9151
      %v9168 = vpack.c.b16 %v9154, %v9153
      %v9169 = vpack.c.b16 %v9156, %v9155
      %v9170 = vpack.c.b16 %v9158, %v9157
      %9183 = vmatprep.subr.bf16.mxu0 0
      %9184 = vmatpush1.bf16.msra.mxu0 %v9159
      %9185 = vmatprep.subr.bf16.mxu0 0
      %9186 = vmatpush1.bf16.msra.mxu0 %v9160
      %9187 = vmatprep.subr.bf16.mxu0 0
      %9188 = vmatpush1.bf16.msra.mxu0 %v9161
      %9189 = vmatprep.subr.bf16.mxu0 0
      %9190 = vmatpush1.bf16.msra.mxu0 %v9162
      %9191 = vmatprep.subr.bf16.mxu0 0
      %9192 = vmatpush1.bf16.msra.mxu0 %v9163
      %9193 = vmatprep.subr.bf16.mxu0 0
      %9194 = vmatpush1.bf16.msra.mxu0 %v9164
      %9195 = vmatprep.subr.bf16.mxu0 0
      %9196 = vmatpush1.bf16.msra.mxu0 %v9165
      %9197 = vmatprep.subr.bf16.mxu0 0
      %9198 = vmatpush1.bf16.msra.mxu0 %v9166
      %9199 = vmatprep.subr.bf16.mxu0 0
      %9200 = vmatpush1.bf16.msra.mxu0 %v9167
      %9201 = vmatprep.subr.bf16.mxu0 0
      %9202 = vmatpush1.bf16.msra.mxu0 %v9168
      %9203 = vmatprep.subr.bf16.mxu0 0
      %9204 = vmatpush1.bf16.msra.mxu0 %v9169
      %9205 = vmatprep.subr.bf16.mxu0 0
      %9206 = vmatpush1.bf16.msra.mxu0 %v9170
      %9207 = vmatprep.subr.bf16.mxu0 0
      %9208 = vmatpush1.bf16.msra.mxu0 0
      %9209 = vmatprep.subr.bf16.mxu0 0
      %9210 = vmatpush1.bf16.msra.mxu0 0
      %9211 = vmatprep.subr.bf16.mxu0 0
      %9212 = vmatpush1.bf16.msra.mxu0 0
      %9213 = vmatprep.subr.bf16.mxu0 0
      %9214 = vmatpush1.bf16.msra.mxu0 0
      %9215 = vmatprep.mubr.bf16.mxu0 %v8754
      %9216 = vmatmul.mubr.bf16.gmra.mrb[0].mxu0 %v8639
      %v9217 = vpop.f32.mrb[0].mxu0
      %v9218 = vadd.f32 0.0, %v9217
      %v9219 = vpop.f32.mrb[0].mxu0
      %v9220 = vpop.f32.mrb[0].mxu0
      %v9221 = vadd.f32 0.0, %v9220
      %v9222 = vpop.f32.mrb[0].mxu0
      %9223 = vmatprep.mubr.bf16.mxu0 %v8757
      %9224 = vmatmul.mubr.bf16.gmra.mrb[0].mxu0 %v8641
      %v9225 = vpop.f32.mrb[0].mxu0
      %v9226 = vadd.f32 0.0, %v9225
      %v9227 = vpop.f32.mrb[0].mxu0
      %v9228 = vpop.f32.mrb[0].mxu0
      %v9229 = vadd.f32 0.0, %v9228
      %v9230 = vpop.f32.mrb[0].mxu0
      %9231 = vmatprep.mubr.bf16.mxu0 %v8760
      %9232 = vmatmul.mubr.bf16.gmra.mrb[0].mxu0 %v8643
      %v9233 = vpop.f32.mrb[0].mxu0
      %v9234 = vadd.f32 0.0, %v9233
      %v9235 = vpop.f32.mrb[0].mxu0
      %v9236 = vpop.f32.mrb[0].mxu0
      %v9237 = vadd.f32 0.0, %v9236
      %v9238 = vpop.f32.mrb[0].mxu0
      %9239 = vmatprep.mubr.bf16.mxu0 %v8763
      %9240 = vmatmul.mubr.bf16.gmra.mrb[0].mxu0 %v8645
      %v9241 = vpop.f32.mrb[0].mxu0
      %v9242 = vadd.f32 0.0, %v9241
      %v9243 = vpop.f32.mrb[0].mxu0
      %v9244 = vpop.f32.mrb[0].mxu0
      %v9245 = vadd.f32 0.0, %v9244
      %v9246 = vpop.f32.mrb[0].mxu0
      %9247 = vmatprep.mubr.bf16.mxu0 %v8766
      %9248 = vmatmul.mubr.bf16.gmra.mrb[0].mxu0 %v8647
      %v9249 = vpop.f32.mrb[0].mxu0
      %v9250 = vadd.f32 0.0, %v9249
      %v9251 = vpop.f32.mrb[0].mxu0
      %v9252 = vpop.f32.mrb[0].mxu0
      %v9253 = vadd.f32 0.0, %v9252
      %v9254 = vpop.f32.mrb[0].mxu0
      %9255 = vmatprep.mubr.bf16.mxu0 %v8769
      %9256 = vmatmul.mubr.bf16.gmra.mrb[0].mxu0 %v8649
      %v9257 = vpop.f32.mrb[0].mxu0
      %v9258 = vadd.f32 0.0, %v9257
      %v9259 = vpop.f32.mrb[0].mxu0
      %v9260 = vpop.f32.mrb[0].mxu0
      %v9261 = vadd.f32 0.0, %v9260
      %v9262 = vpop.f32.mrb[0].mxu0
      %9263 = vmatprep.mubr.bf16.mxu0 %v8772
      %9264 = vmatmul.mubr.bf16.gmra.mrb[0].mxu0 %v8651
      %v9265 = vpop.f32.mrb[0].mxu0
      %v9266 = vadd.f32 0.0, %v9265
      %v9267 = vpop.f32.mrb[0].mxu0
      %v9268 = vpop.f32.mrb[0].mxu0
      %v9269 = vadd.f32 0.0, %v9268
      %v9270 = vpop.f32.mrb[0].mxu0
      %9271 = vmatprep.mubr.bf16.mxu0 %v8775
      %9272 = vmatmul.mubr.bf16.gmra.mrb[0].mxu0 %v8653
      %v9273 = vpop.f32.mrb[0].mxu0
      %v9274 = vadd.f32 0.0, %v9273
      %v9275 = vpop.f32.mrb[0].mxu0
      %v9276 = vpop.f32.mrb[0].mxu0
      %v9277 = vadd.f32 0.0, %v9276
      %v9278 = vpop.f32.mrb[0].mxu0
      %9279 = vmatprep.mubr.bf16.mxu0 %v8778
      %9280 = vmatmul.mubr.bf16.gmra.mrb[0].mxu0 %v8655
      %v9281 = vpop.f32.mrb[0].mxu0
      %v9282 = vadd.f32 0.0, %v9281
      %v9283 = vpop.f32.mrb[0].mxu0
      %v9284 = vpop.f32.mrb[0].mxu0
      %v9285 = vadd.f32 0.0, %v9284
      %v9286 = vpop.f32.mrb[0].mxu0
      %9287 = vdwg.mxu0
      %v9306 = vrot.slane %v9016, 1
      %v9307 = vrot.slane %v9019, 1
      %v9308 = vsel %vm4930, %v9306, %v9307
      %v9309 = vrot.slane %v9024, 1
      %v9310 = vsel %vm4930, %v9307, %v9309
      %v9311 = vrot.slane %v9027, 1
      %v9312 = vsel %vm4930, %v9309, %v9311
      %v9313 = vrot.slane %v9032, 1
      %v9314 = vsel %vm4930, %v9311, %v9313
      %v9315 = vrot.slane %v9035, 1
      %v9316 = vsel %vm4930, %v9313, %v9315
      %v9317 = vrot.slane %v9040, 1
      %v9318 = vsel %vm4930, %v9315, %v9317
      %v9319 = vrot.slane %v9043, 1
      %v9320 = vsel %vm4930, %v9317, %v9319
      %v9321 = vrot.slane %v9048, 1
      %v9322 = vsel %vm4930, %v9319, %v9321
      %v9323 = vrot.slane %v9051, 1
      %v9324 = vsel %vm4930, %v9321, %v9323
      %v9325 = vrot.slane %v9056, 1
      %v9326 = vsel %vm4930, %v9323, %v9325
      %v9327 = vrot.slane %v9059, 1
      %v9328 = vsel %vm4930, %v9325, %v9327
      %v9329 = vrot.slane %v9064, 1
      %v9330 = vsel %vm4930, %v9327, %v9329
      %v9331 = vrot.slane %v9067, 1
      %v9332 = vsel %vm4930, %v9329, %v9331
      %v9333 = vrot.slane %v9072, 1
      %v9334 = vsel %vm4930, %v9331, %v9333
      %v9335 = vrot.slane %v9075, 1
      %v9336 = vsel %vm4930, %v9333, %v9335
      %v9337 = vrot.slane %v9080, 1
      %v9338 = vsel %vm4930, %v9335, %v9337
      %v9339 = vrot.slane %v9083, 1
      %v9340 = vsel %vm4930, %v9337, %v9339
      %v9358 = vadd.f32 %v8815, %v9308
      %v9359 = vadd.f32 %v8818, %v9310
      %v9360 = vadd.f32 %v8823, %v9312
      %v9361 = vadd.f32 %v8826, %v9314
      %v9362 = vadd.f32 %v8831, %v9316
      %v9363 = vadd.f32 %v8834, %v9318
      %v9364 = vadd.f32 %v8839, %v9320
      %v9365 = vadd.f32 %v8842, %v9322
      %v9366 = vadd.f32 %v8847, %v9324
      %v9367 = vadd.f32 %v8850, %v9326
      %v9368 = vadd.f32 %v8855, %v9328
      %v9369 = vadd.f32 %v8858, %v9330
      %v9370 = vadd.f32 %v8863, %v9332
      %v9371 = vadd.f32 %v8866, %v9334
      %v9372 = vadd.f32 %v8871, %v9336
      %v9373 = vadd.f32 %v8874, %v9338
      %v9374 = vadd.f32 %v8879, %v9340
      %v9393 = vrot.slane %v9218, 2
      %v9394 = vrot.slane %v9221, 2
      %v9395 = vsel %vm6820, %v9393, %v9394
      %v9396 = vrot.slane %v9226, 2
      %v9397 = vsel %vm6820, %v9394, %v9396
      %v9398 = vrot.slane %v9229, 2
      %v9399 = vsel %vm6820, %v9396, %v9398
      %v9400 = vrot.slane %v9234, 2
      %v9401 = vsel %vm6820, %v9398, %v9400
      %v9402 = vrot.slane %v9237, 2
      %v9403 = vsel %vm6820, %v9400, %v9402
      %v9404 = vrot.slane %v9242, 2
      %v9405 = vsel %vm6820, %v9402, %v9404
      %v9406 = vrot.slane %v9245, 2
      %v9407 = vsel %vm6820, %v9404, %v9406
      %v9408 = vrot.slane %v9250, 2
      %v9409 = vsel %vm6820, %v9406, %v9408
      %v9410 = vrot.slane %v9253, 2
      %v9411 = vsel %vm6820, %v9408, %v9410
      %v9412 = vrot.slane %v9258, 2
      %v9413 = vsel %vm6820, %v9410, %v9412
      %v9414 = vrot.slane %v9261, 2
      %v9415 = vsel %vm6820, %v9412, %v9414
      %v9416 = vrot.slane %v9266, 2
      %v9417 = vsel %vm6820, %v9414, %v9416
      %v9418 = vrot.slane %v9269, 2
      %v9419 = vsel %vm6820, %v9416, %v9418
      %v9420 = vrot.slane %v9274, 2
      %v9421 = vsel %vm6820, %v9418, %v9420
      %v9422 = vrot.slane %v9277, 2
      %v9423 = vsel %vm6820, %v9420, %v9422
      %v9424 = vrot.slane %v9282, 2
      %v9425 = vsel %vm6820, %v9422, %v9424
      %v9426 = vrot.slane %v9285, 2
      %v9427 = vsel %vm6820, %v9424, %v9426
      %v9445 = vadd.f32 %v9358, %v9395
      %v9446 = vadd.f32 %v9359, %v9397
      %v9447 = vadd.f32 %v9360, %v9399
      %v9448 = vadd.f32 %v9361, %v9401
      %v9449 = vadd.f32 %v9362, %v9403
      %v9450 = vadd.f32 %v9363, %v9405
      %v9451 = vadd.f32 %v9364, %v9407
      %v9452 = vadd.f32 %v9365, %v9409
      %v9453 = vadd.f32 %v9366, %v9411
      %v9454 = vadd.f32 %v9367, %v9413
      %v9455 = vadd.f32 %v9368, %v9415
      %v9456 = vadd.f32 %v9369, %v9417
      %v9457 = vadd.f32 %v9370, %v9419
      %v9458 = vadd.f32 %v9371, %v9421
      %v9459 = vadd.f32 %v9372, %v9423
      %v9460 = vadd.f32 %v9373, %v9425
      %v9461 = vadd.f32 %v9374, %v9427
      %v9462 = vld [vmem:[%s10] sm:$0x1]
      %v9464 = vlaneseq
      %v9465 = vshrl.u32 %v9464, 7
      %v9466 = vsub.s32 0, %v9465
      %v9467 = vrot.slane %v9462, %v9466
      %v9469 = vadd.f32 %v9445, %v9467
      %v9470 = vadd.f32 %v9446, %v9467
      %v9471 = vadd.f32 %v9447, %v9467
      %v9472 = vadd.f32 %v9448, %v9467
      %v9473 = vadd.f32 %v9449, %v9467
      %v9474 = vadd.f32 %v9450, %v9467
      %v9475 = vadd.f32 %v9451, %v9467
      %v9476 = vadd.f32 %v9452, %v9467
      %v9477 = vadd.f32 %v9453, %v9467
      %v9478 = vadd.f32 %v9454, %v9467
      %v9479 = vadd.f32 %v9455, %v9467
      %v9480 = vadd.f32 %v9456, %v9467
      %v9481 = vadd.f32 %v9457, %v9467
      %v9482 = vadd.f32 %v9458, %v9467
      %v9483 = vadd.f32 %v9459, %v9467
      %v9484 = vadd.f32 %v9460, %v9467
      %v9485 = vadd.f32 %v9461, %v9467
      %v9486 = vmax.f32 %v9469, 0.0
      %v9487 = vmax.f32 %v9470, 0.0
      %v9488 = vmax.f32 %v9471, 0.0
      %v9489 = vmax.f32 %v9472, 0.0
      %v9490 = vmax.f32 %v9473, 0.0
      %v9491 = vmax.f32 %v9474, 0.0
      %v9492 = vmax.f32 %v9475, 0.0
      %v9493 = vmax.f32 %v9476, 0.0
      %v9494 = vmax.f32 %v9477, 0.0
      %v9495 = vmax.f32 %v9478, 0.0
      %v9496 = vmax.f32 %v9479, 0.0
      %v9497 = vmax.f32 %v9480, 0.0
      %v9498 = vmax.f32 %v9481, 0.0
      %v9499 = vmax.f32 %v9482, 0.0
      %v9500 = vmax.f32 %v9483, 0.0
      %v9501 = vmax.f32 %v9484, 0.0
      %v9502 = vmax.f32 %v9485, 0.0
      %9503 = vst.msk [vmem:[#allocation6] sm:$0xff] %vm3964, %v9486
      %9504 = vst.msk [vmem:[#allocation6 + $0x8] sm:$0xff] %vm3964, %v9487
      %9505 = vst.msk [vmem:[#allocation6 + $0x10] sm:$0xff] %vm3964, %v9488
      %9506 = vst.msk [vmem:[#allocation6 + $0x18] sm:$0xff] %vm3964, %v9489
      %9507 = vst.msk [vmem:[#allocation6 + $0x20] sm:$0xff] %vm3964, %v9490
      %9508 = vst.msk [vmem:[#allocation6 + $0x28] sm:$0xff] %vm3964, %v9491
      %9509 = vst.msk [vmem:[#allocation6 + $0x30] sm:$0xff] %vm3964, %v9492
      %9510 = vst.msk [vmem:[#allocation6 + $0x38] sm:$0xff] %vm3964, %v9493
      %9511 = vst.msk [vmem:[#allocation6 + $0x40] sm:$0xff] %vm3964, %v9494
      %9512 = vst.msk [vmem:[#allocation6 + $0x48] sm:$0xff] %vm3964, %v9495
      %9513 = vst.msk [vmem:[#allocation6 + $0x50] sm:$0xff] %vm3964, %v9496
      %9514 = vst.msk [vmem:[#allocation6 + $0x58] sm:$0xff] %vm3964, %v9497
      %9515 = vst.msk [vmem:[#allocation6 + $0x60] sm:$0xff] %vm3964, %v9498
      %9516 = vst.msk [vmem:[#allocation6 + $0x68] sm:$0xff] %vm3964, %v9499
      %9517 = vst.msk [vmem:[#allocation6 + $0x70] sm:$0xff] %vm3964, %v9500
      %9518 = vst.msk [vmem:[#allocation6 + $0x78] sm:$0xff] %vm3964, %v9501
      %9519 = vst.msk [vmem:[#allocation6 + $0x80] sm:$0xff] %vm3964, %v9502
      %v9520 = vld [vmem:[#allocation6] sm:$0xff]
      %v9521 = vld [vmem:[#allocation6 + $0x8] sm:$0xff]
      %v9522 = vld [vmem:[#allocation6 + $0x10] sm:$0xff]
      %v9523 = vld [vmem:[#allocation6 + $0x18] sm:$0xff]
      %v9524 = vld [vmem:[#allocation6 + $0x20] sm:$0xff]
      %v9525 = vld [vmem:[#allocation6 + $0x28] sm:$0xff]
      %v9526 = vld [vmem:[#allocation6 + $0x30] sm:$0xff]
      %v9527 = vld [vmem:[#allocation6 + $0x38] sm:$0xff]
      %v9528 = vld [vmem:[#allocation6 + $0x40] sm:$0xff]
      %v9529 = vld [vmem:[#allocation6 + $0x48] sm:$0xff]
      %v9530 = vld [vmem:[#allocation6 + $0x50] sm:$0xff]
      %v9531 = vld [vmem:[#allocation6 + $0x58] sm:$0xff]
      %v9532 = vld [vmem:[#allocation6 + $0x60] sm:$0xff]
      %v9533 = vld [vmem:[#allocation6 + $0x68] sm:$0xff]
      %v9534 = vld [vmem:[#allocation6 + $0x70] sm:$0xff]
      %v9535 = vld [vmem:[#allocation6 + $0x78] sm:$0xff]
      %v9536 = vld [vmem:[#allocation6 + $0x80] sm:$0xff]
      %v9537 = vld [vmem:[#allocation6 + $0x88] sm:$0xff]
      %9544 = vrot.lane.b32.xlu0 %v9526, 64
      %v9545 = vpop.permute.xlu0 %9544
      %9546 = vrot.lane.b32.xlu0 %v9527, 64
      %v9547 = vpop.permute.xlu0 %9546
      %9548 = vrot.lane.b32.xlu0 %v9528, 64
      %v9549 = vpop.permute.xlu0 %9548
      %9550 = vrot.lane.b32.xlu0 %v9529, 64
      %v9551 = vpop.permute.xlu0 %9550
      %9552 = vrot.lane.b32.xlu0 %v9530, 64
      %v9553 = vpop.permute.xlu0 %9552
      %9554 = vrot.lane.b32.xlu0 %v9531, 64
      %v9555 = vpop.permute.xlu0 %9554
      %v9562 = vsel %vm3964, %v9520, %v9545
      %v9563 = vsel %vm3964, %v9521, %v9547
      %v9564 = vsel %vm3964, %v9522, %v9549
      %v9565 = vsel %vm3964, %v9523, %v9551
      %v9566 = vsel %vm3964, %v9524, %v9553
      %v9567 = vsel %vm3964, %v9525, %v9555
      %v9568 = vpack.c.bf16 %v9563, %v9562
      %v9569 = vpack.c.bf16 %v9533, %v9532
      %v9570 = vpack.c.bf16 %v9565, %v9564
      %v9571 = vpack.c.bf16 %v9535, %v9534
      %v9572 = vpack.c.bf16 %v9567, %v9566
      %v9573 = vpack.c.bf16 %v9537, %v9536
      %v9574 = vld [vmem:[%s11] sm:$0xf]
      %v9575 = vld [vmem:[%s11 + $0x4] sm:$0xf]
      %v9576 = vld [vmem:[%s11 + $0x8] sm:$0xf]
      %v9577 = vld [vmem:[%s11 + $0xc] sm:$0xf]
      %v9578 = vld [vmem:[%s11 + $0x10] sm:$0xf]
      %v9579 = vld [vmem:[%s11 + $0x14] sm:$0xf]
      %v9580 = vld [vmem:[%s11 + $0x18] sm:$0xf]
      %v9581 = vld [vmem:[%s11 + $0x1c] sm:$0xf]
      %v9582 = vld [vmem:[%s11 + $0x20] sm:$0xf]
      %v9583 = vld [vmem:[%s11 + $0x24] sm:$0xf]
      %v9584 = vld [vmem:[%s11 + $0x28] sm:$0xf]
      %v9585 = vld [vmem:[%s11 + $0x2c] sm:$0xf]
      %v9586 = vld [vmem:[%s11 + $0x30] sm:$0xf]
      %v9587 = vld [vmem:[%s11 + $0x34] sm:$0xf]
      %v9588 = vld [vmem:[%s11 + $0x38] sm:$0xf]
      %v9589 = vld [vmem:[%s11 + $0x3c] sm:$0xf]
      %v9590 = vld [vmem:[%s11 + $0x40] sm:$0xf]
      %v9591 = vld [vmem:[%s11 + $0x44] sm:$0xf]
      %v9592 = vld [vmem:[%s11 + $0x48] sm:$0xf]
      %v9593 = vld [vmem:[%s11 + $0x4c] sm:$0xf]
      %v9594 = vld [vmem:[%s11 + $0x50] sm:$0xf]
      %v9595 = vld [vmem:[%s11 + $0x54] sm:$0xf]
      %v9596 = vld [vmem:[%s11 + $0x58] sm:$0xf]
      %v9597 = vld [vmem:[%s11 + $0x5c] sm:$0xf]
      %v9622 = vunpack.c.l.b16 %v9574
      %v9623 = vunpack.c.l.b16 %v9575
      %v9624 = vunpack.c.l.b16 %v9576
      %v9625 = vunpack.c.l.b16 %v9577
      %v9626 = vunpack.c.l.b16 %v9578
      %v9627 = vunpack.c.l.b16 %v9579
      %v9628 = vunpack.c.l.b16 %v9580
      %v9629 = vunpack.c.l.b16 %v9581
      %v9630 = vunpack.c.l.b16 %v9582
      %v9631 = vunpack.c.l.b16 %v9583
      %v9632 = vunpack.c.l.b16 %v9584
      %v9633 = vunpack.c.l.b16 %v9585
      %v9634 = vunpack.c.l.b16 %v9586
      %v9635 = vunpack.c.l.b16 %v9587
      %v9636 = vunpack.c.l.b16 %v9588
      %v9637 = vunpack.c.l.b16 %v9589
      %v9638 = vunpack.c.l.b16 %v9590
      %v9639 = vunpack.c.l.b16 %v9591
      %v9640 = vunpack.c.l.b16 %v9592
      %v9641 = vunpack.c.l.b16 %v9593
      %v9642 = vunpack.c.l.b16 %v9594
      %v9643 = vunpack.c.l.b16 %v9595
      %v9644 = vunpack.c.l.b16 %v9596
      %v9645 = vunpack.c.l.b16 %v9597
      %v9646 = vpack.c.b16 %v9623, %v9622
      %v9647 = vpack.c.b16 %v9625, %v9624
      %v9648 = vpack.c.b16 %v9627, %v9626
      %v9649 = vpack.c.b16 %v9629, %v9628
      %v9650 = vpack.c.b16 %v9631, %v9630
      %v9651 = vpack.c.b16 %v9633, %v9632
      %v9652 = vpack.c.b16 %v9635, %v9634
      %v9653 = vpack.c.b16 %v9637, %v9636
      %v9654 = vpack.c.b16 %v9639, %v9638
      %v9655 = vpack.c.b16 %v9641, %v9640
      %v9656 = vpack.c.b16 %v9643, %v9642
      %v9657 = vpack.c.b16 %v9645, %v9644
      %v9671 = vsel %vm3964, %v9569, 0
      %v9674 = vsel %vm3964, %v9571, 0
      %v9677 = vsel %vm3964, %v9573, 0
      %9679 = vmatprep.subr.bf16.mxu0 0
      %9680 = vmatpush1.bf16.msra.mxu0 %v9646
      %9681 = vmatprep.subr.bf16.mxu0 0
      %9682 = vmatpush1.bf16.msra.mxu0 %v9647
      %9683 = vmatprep.subr.bf16.mxu0 0
      %9684 = vmatpush1.bf16.msra.mxu0 %v9648
      %9685 = vmatprep.subr.bf16.mxu0 0
      %9686 = vmatpush1.bf16.msra.mxu0 %v9649
      %9687 = vmatprep.subr.bf16.mxu0 0
      %9688 = vmatpush1.bf16.msra.mxu0 %v9650
      %9689 = vmatprep.subr.bf16.mxu0 0
      %9690 = vmatpush1.bf16.msra.mxu0 %v9651
      %9691 = vmatprep.subr.bf16.mxu0 0
      %9692 = vmatpush1.bf16.msra.mxu0 %v9652
      %9693 = vmatprep.subr.bf16.mxu0 0
      %9694 = vmatpush1.bf16.msra.mxu0 %v9653
      %9695 = vmatprep.subr.bf16.mxu0 0
      %9696 = vmatpush1.bf16.msra.mxu0 %v9654
      %9697 = vmatprep.subr.bf16.mxu0 0
      %9698 = vmatpush1.bf16.msra.mxu0 %v9655
      %9699 = vmatprep.subr.bf16.mxu0 0
      %9700 = vmatpush1.bf16.msra.mxu0 %v9656
      %9701 = vmatprep.subr.bf16.mxu0 0
      %9702 = vmatpush1.bf16.msra.mxu0 %v9657
      %9703 = vmatprep.subr.bf16.mxu0 0
      %9704 = vmatpush1.bf16.msra.mxu0 0
      %9705 = vmatprep.subr.bf16.mxu0 0
      %9706 = vmatpush1.bf16.msra.mxu0 0
      %9707 = vmatprep.subr.bf16.mxu0 0
      %9708 = vmatpush1.bf16.msra.mxu0 0
      %9709 = vmatprep.subr.bf16.mxu0 0
      %9710 = vmatpush1.bf16.msra.mxu0 0
      %9711 = vmatprep.mubr.bf16.mxu0 %v9671
      %9712 = vmatmul.mubr.bf16.gmra.mrb[0].mxu0 %v9568
      %v9713 = vpop.f32.mrb[0].mxu0
      %v9714 = vadd.f32 0.0, %v9713
      %v9715 = vpop.f32.mrb[0].mxu0
      %v9716 = vpop.f32.mrb[0].mxu0
      %v9717 = vadd.f32 0.0, %v9716
      %v9718 = vpop.f32.mrb[0].mxu0
      %9719 = vmatprep.mubr.bf16.mxu0 %v9674
      %9720 = vmatmul.mubr.bf16.gmra.mrb[0].mxu0 %v9570
      %v9721 = vpop.f32.mrb[0].mxu0
      %v9722 = vadd.f32 0.0, %v9721
      %v9723 = vpop.f32.mrb[0].mxu0
      %v9724 = vpop.f32.mrb[0].mxu0
      %v9725 = vadd.f32 0.0, %v9724
      %v9726 = vpop.f32.mrb[0].mxu0
      %9727 = vmatprep.mubr.bf16.mxu0 %v9677
      %9728 = vmatmul.mubr.bf16.gmra.mrb[0].mxu0 %v9572
      %v9729 = vpop.f32.mrb[0].mxu0
      %v9730 = vadd.f32 0.0, %v9729
      %v9731 = vpop.f32.mrb[0].mxu0
      %v9732 = vpop.f32.mrb[0].mxu0
      %v9733 = vpop.f32.mrb[0].mxu0
      %9734 = vdwg.mxu0
      %s9735 = scalar_lea.vmem %s11, 96
      %v9736 = vld [vmem:[%s9735] sm:$0xf]
      %v9737 = vld [vmem:[%s9735 + $0x4] sm:$0xf]
      %v9738 = vld [vmem:[%s9735 + $0x8] sm:$0xf]
      %v9739 = vld [vmem:[%s9735 + $0xc] sm:$0xf]
      %v9740 = vld [vmem:[%s9735 + $0x10] sm:$0xf]
      %v9741 = vld [vmem:[%s9735 + $0x14] sm:$0xf]
      %v9742 = vld [vmem:[%s9735 + $0x18] sm:$0xf]
      %v9743 = vld [vmem:[%s9735 + $0x1c] sm:$0xf]
      %v9744 = vld [vmem:[%s9735 + $0x20] sm:$0xf]
      %v9745 = vld [vmem:[%s9735 + $0x24] sm:$0xf]
      %v9746 = vld [vmem:[%s9735 + $0x28] sm:$0xf]
      %v9747 = vld [vmem:[%s9735 + $0x2c] sm:$0xf]
      %v9748 = vld [vmem:[%s9735 + $0x30] sm:$0xf]
      %v9749 = vld [vmem:[%s9735 + $0x34] sm:$0xf]
      %v9750 = vld [vmem:[%s9735 + $0x38] sm:$0xf]
      %v9751 = vld [vmem:[%s9735 + $0x3c] sm:$0xf]
      %v9752 = vld [vmem:[%s9735 + $0x40] sm:$0xf]
      %v9753 = vld [vmem:[%s9735 + $0x44] sm:$0xf]
      %v9754 = vld [vmem:[%s9735 + $0x48] sm:$0xf]
      %v9755 = vld [vmem:[%s9735 + $0x4c] sm:$0xf]
      %v9756 = vld [vmem:[%s9735 + $0x50] sm:$0xf]
      %v9757 = vld [vmem:[%s9735 + $0x54] sm:$0xf]
      %v9758 = vld [vmem:[%s9735 + $0x58] sm:$0xf]
      %v9759 = vld [vmem:[%s9735 + $0x5c] sm:$0xf]
      %v9784 = vunpack.c.l.b16 %v9736
      %v9785 = vunpack.c.l.b16 %v9737
      %v9786 = vunpack.c.l.b16 %v9738
      %v9787 = vunpack.c.l.b16 %v9739
      %v9788 = vunpack.c.l.b16 %v9740
      %v9789 = vunpack.c.l.b16 %v9741
      %v9790 = vunpack.c.l.b16 %v9742
      %v9791 = vunpack.c.l.b16 %v9743
      %v9792 = vunpack.c.l.b16 %v9744
      %v9793 = vunpack.c.l.b16 %v9745
      %v9794 = vunpack.c.l.b16 %v9746
      %v9795 = vunpack.c.l.b16 %v9747
      %v9796 = vunpack.c.l.b16 %v9748
      %v9797 = vunpack.c.l.b16 %v9749
      %v9798 = vunpack.c.l.b16 %v9750
      %v9799 = vunpack.c.l.b16 %v9751
      %v9800 = vunpack.c.l.b16 %v9752
      %v9801 = vunpack.c.l.b16 %v9753
      %v9802 = vunpack.c.l.b16 %v9754
      %v9803 = vunpack.c.l.b16 %v9755
      %v9804 = vunpack.c.l.b16 %v9756
      %v9805 = vunpack.c.l.b16 %v9757
      %v9806 = vunpack.c.l.b16 %v9758
      %v9807 = vunpack.c.l.b16 %v9759
      %v9808 = vpack.c.b16 %v9785, %v9784
      %v9809 = vpack.c.b16 %v9787, %v9786
      %v9810 = vpack.c.b16 %v9789, %v9788
      %v9811 = vpack.c.b16 %v9791, %v9790
      %v9812 = vpack.c.b16 %v9793, %v9792
      %v9813 = vpack.c.b16 %v9795, %v9794
      %v9814 = vpack.c.b16 %v9797, %v9796
      %v9815 = vpack.c.b16 %v9799, %v9798
      %v9816 = vpack.c.b16 %v9801, %v9800
      %v9817 = vpack.c.b16 %v9803, %v9802
      %v9818 = vpack.c.b16 %v9805, %v9804
      %v9819 = vpack.c.b16 %v9807, %v9806
      %9832 = vmatprep.subr.bf16.mxu0 0
      %9833 = vmatpush1.bf16.msra.mxu0 %v9808
      %9834 = vmatprep.subr.bf16.mxu0 0
      %9835 = vmatpush1.bf16.msra.mxu0 %v9809
      %9836 = vmatprep.subr.bf16.mxu0 0
      %9837 = vmatpush1.bf16.msra.mxu0 %v9810
      %9838 = vmatprep.subr.bf16.mxu0 0
      %9839 = vmatpush1.bf16.msra.mxu0 %v9811
      %9840 = vmatprep.subr.bf16.mxu0 0
      %9841 = vmatpush1.bf16.msra.mxu0 %v9812
      %9842 = vmatprep.subr.bf16.mxu0 0
      %9843 = vmatpush1.bf16.msra.mxu0 %v9813
      %9844 = vmatprep.subr.bf16.mxu0 0
      %9845 = vmatpush1.bf16.msra.mxu0 %v9814
      %9846 = vmatprep.subr.bf16.mxu0 0
      %9847 = vmatpush1.bf16.msra.mxu0 %v9815
      %9848 = vmatprep.subr.bf16.mxu0 0
      %9849 = vmatpush1.bf16.msra.mxu0 %v9816
      %9850 = vmatprep.subr.bf16.mxu0 0
      %9851 = vmatpush1.bf16.msra.mxu0 %v9817
      %9852 = vmatprep.subr.bf16.mxu0 0
      %9853 = vmatpush1.bf16.msra.mxu0 %v9818
      %9854 = vmatprep.subr.bf16.mxu0 0
      %9855 = vmatpush1.bf16.msra.mxu0 %v9819
      %9856 = vmatprep.subr.bf16.mxu0 0
      %9857 = vmatpush1.bf16.msra.mxu0 0
      %9858 = vmatprep.subr.bf16.mxu0 0
      %9859 = vmatpush1.bf16.msra.mxu0 0
      %9860 = vmatprep.subr.bf16.mxu0 0
      %9861 = vmatpush1.bf16.msra.mxu0 0
      %9862 = vmatprep.subr.bf16.mxu0 0
      %9863 = vmatpush1.bf16.msra.mxu0 0
      %9864 = vmatprep.mubr.bf16.mxu0 %v9671
      %9865 = vmatmul.mubr.bf16.gmra.mrb[0].mxu0 %v9568
      %v9866 = vpop.f32.mrb[0].mxu0
      %v9867 = vadd.f32 0.0, %v9866
      %v9868 = vpop.f32.mrb[0].mxu0
      %v9869 = vpop.f32.mrb[0].mxu0
      %v9870 = vadd.f32 0.0, %v9869
      %v9871 = vpop.f32.mrb[0].mxu0
      %9872 = vmatprep.mubr.bf16.mxu0 %v9674
      %9873 = vmatmul.mubr.bf16.gmra.mrb[0].mxu0 %v9570
      %v9874 = vpop.f32.mrb[0].mxu0
      %v9875 = vadd.f32 0.0, %v9874
      %v9876 = vpop.f32.mrb[0].mxu0
      %v9877 = vpop.f32.mrb[0].mxu0
      %v9878 = vadd.f32 0.0, %v9877
      %v9879 = vpop.f32.mrb[0].mxu0
      %9880 = vmatprep.mubr.bf16.mxu0 %v9677
      %9881 = vmatmul.mubr.bf16.gmra.mrb[0].mxu0 %v9572
      %v9882 = vpop.f32.mrb[0].mxu0
      %v9883 = vadd.f32 0.0, %v9882
      %v9884 = vpop.f32.mrb[0].mxu0
      %v9885 = vpop.f32.mrb[0].mxu0
      %v9886 = vadd.f32 0.0, %v9885
      %v9887 = vpop.f32.mrb[0].mxu0
      %9888 = vdwg.mxu0
      %s9889 = scalar_lea.vmem %s11, 192
      %v9890 = vld [vmem:[%s9889] sm:$0xf]
      %v9891 = vld [vmem:[%s9889 + $0x4] sm:$0xf]
      %v9892 = vld [vmem:[%s9889 + $0x8] sm:$0xf]
      %v9893 = vld [vmem:[%s9889 + $0xc] sm:$0xf]
      %v9894 = vld [vmem:[%s9889 + $0x10] sm:$0xf]
      %v9895 = vld [vmem:[%s9889 + $0x14] sm:$0xf]
      %v9896 = vld [vmem:[%s9889 + $0x18] sm:$0xf]
      %v9897 = vld [vmem:[%s9889 + $0x1c] sm:$0xf]
      %v9898 = vld [vmem:[%s9889 + $0x20] sm:$0xf]
      %v9899 = vld [vmem:[%s9889 + $0x24] sm:$0xf]
      %v9900 = vld [vmem:[%s9889 + $0x28] sm:$0xf]
      %v9901 = vld [vmem:[%s9889 + $0x2c] sm:$0xf]
      %v9902 = vld [vmem:[%s9889 + $0x30] sm:$0xf]
      %v9903 = vld [vmem:[%s9889 + $0x34] sm:$0xf]
      %v9904 = vld [vmem:[%s9889 + $0x38] sm:$0xf]
      %v9905 = vld [vmem:[%s9889 + $0x3c] sm:$0xf]
      %v9906 = vld [vmem:[%s9889 + $0x40] sm:$0xf]
      %v9907 = vld [vmem:[%s9889 + $0x44] sm:$0xf]
      %v9908 = vld [vmem:[%s9889 + $0x48] sm:$0xf]
      %v9909 = vld [vmem:[%s9889 + $0x4c] sm:$0xf]
      %v9910 = vld [vmem:[%s9889 + $0x50] sm:$0xf]
      %v9911 = vld [vmem:[%s9889 + $0x54] sm:$0xf]
      %v9912 = vld [vmem:[%s9889 + $0x58] sm:$0xf]
      %v9913 = vld [vmem:[%s9889 + $0x5c] sm:$0xf]
      %v9938 = vunpack.c.l.b16 %v9890
      %v9939 = vunpack.c.l.b16 %v9891
      %v9940 = vunpack.c.l.b16 %v9892
      %v9941 = vunpack.c.l.b16 %v9893
      %v9942 = vunpack.c.l.b16 %v9894
      %v9943 = vunpack.c.l.b16 %v9895
      %v9944 = vunpack.c.l.b16 %v9896
      %v9945 = vunpack.c.l.b16 %v9897
      %v9946 = vunpack.c.l.b16 %v9898
      %v9947 = vunpack.c.l.b16 %v9899
      %v9948 = vunpack.c.l.b16 %v9900
      %v9949 = vunpack.c.l.b16 %v9901
      %v9950 = vunpack.c.l.b16 %v9902
      %v9951 = vunpack.c.l.b16 %v9903
      %v9952 = vunpack.c.l.b16 %v9904
      %v9953 = vunpack.c.l.b16 %v9905
      %v9954 = vunpack.c.l.b16 %v9906
      %v9955 = vunpack.c.l.b16 %v9907
      %v9956 = vunpack.c.l.b16 %v9908
      %v9957 = vunpack.c.l.b16 %v9909
      %v9958 = vunpack.c.l.b16 %v9910
      %v9959 = vunpack.c.l.b16 %v9911
      %v9960 = vunpack.c.l.b16 %v9912
      %v9961 = vunpack.c.l.b16 %v9913
      %v9962 = vpack.c.b16 %v9939, %v9938
      %v9963 = vpack.c.b16 %v9941, %v9940
      %v9964 = vpack.c.b16 %v9943, %v9942
      %v9965 = vpack.c.b16 %v9945, %v9944
      %v9966 = vpack.c.b16 %v9947, %v9946
      %v9967 = vpack.c.b16 %v9949, %v9948
      %v9968 = vpack.c.b16 %v9951, %v9950
      %v9969 = vpack.c.b16 %v9953, %v9952
      %v9970 = vpack.c.b16 %v9955, %v9954
      %v9971 = vpack.c.b16 %v9957, %v9956
      %v9972 = vpack.c.b16 %v9959, %v9958
      %v9973 = vpack.c.b16 %v9961, %v9960
      %9986 = vmatprep.subr.bf16.mxu0 0
      %9987 = vmatpush1.bf16.msra.mxu0 %v9962
      %9988 = vmatprep.subr.bf16.mxu0 0
      %9989 = vmatpush1.bf16.msra.mxu0 %v9963
      %9990 = vmatprep.subr.bf16.mxu0 0
      %9991 = vmatpush1.bf16.msra.mxu0 %v9964
      %9992 = vmatprep.subr.bf16.mxu0 0
      %9993 = vmatpush1.bf16.msra.mxu0 %v9965
      %9994 = vmatprep.subr.bf16.mxu0 0
      %9995 = vmatpush1.bf16.msra.mxu0 %v9966
      %9996 = vmatprep.subr.bf16.mxu0 0
      %9997 = vmatpush1.bf16.msra.mxu0 %v9967
      %9998 = vmatprep.subr.bf16.mxu0 0
      %9999 = vmatpush1.bf16.msra.mxu0 %v9968
      %10000 = vmatprep.subr.bf16.mxu0 0
      %10001 = vmatpush1.bf16.msra.mxu0 %v9969
      %10002 = vmatprep.subr.bf16.mxu0 0
      %10003 = vmatpush1.bf16.msra.mxu0 %v9970
      %10004 = vmatprep.subr.bf16.mxu0 0
      %10005 = vmatpush1.bf16.msra.mxu0 %v9971
      %10006 = vmatprep.subr.bf16.mxu0 0
      %10007 = vmatpush1.bf16.msra.mxu0 %v9972
      %10008 = vmatprep.subr.bf16.mxu0 0
      %10009 = vmatpush1.bf16.msra.mxu0 %v9973
      %10010 = vmatprep.subr.bf16.mxu0 0
      %10011 = vmatpush1.bf16.msra.mxu0 0
      %10012 = vmatprep.subr.bf16.mxu0 0
      %10013 = vmatpush1.bf16.msra.mxu0 0
      %10014 = vmatprep.subr.bf16.mxu0 0
      %10015 = vmatpush1.bf16.msra.mxu0 0
      %10016 = vmatprep.subr.bf16.mxu0 0
      %10017 = vmatpush1.bf16.msra.mxu0 0
      %10018 = vmatprep.mubr.bf16.mxu0 %v9671
      %10019 = vmatmul.mubr.bf16.gmra.mrb[0].mxu0 %v9568
      %v10020 = vpop.f32.mrb[0].mxu0
      %v10021 = vadd.f32 0.0, %v10020
      %v10022 = vpop.f32.mrb[0].mxu0
      %v10023 = vpop.f32.mrb[0].mxu0
      %v10024 = vadd.f32 0.0, %v10023
      %v10025 = vpop.f32.mrb[0].mxu0
      %10026 = vmatprep.mubr.bf16.mxu0 %v9674
      %10027 = vmatmul.mubr.bf16.gmra.mrb[0].mxu0 %v9570
      %v10028 = vpop.f32.mrb[0].mxu0
      %v10029 = vadd.f32 0.0, %v10028
      %v10030 = vpop.f32.mrb[0].mxu0
      %v10031 = vpop.f32.mrb[0].mxu0
      %v10032 = vadd.f32 0.0, %v10031
      %v10033 = vpop.f32.mrb[0].mxu0
      %10034 = vmatprep.mubr.bf16.mxu0 %v9677
      %10035 = vmatmul.mubr.bf16.gmra.mrb[0].mxu0 %v9572
      %v10036 = vpop.f32.mrb[0].mxu0
      %v10037 = vadd.f32 0.0, %v10036
      %v10038 = vpop.f32.mrb[0].mxu0
      %v10039 = vpop.f32.mrb[0].mxu0
      %v10040 = vadd.f32 0.0, %v10039
      %v10041 = vpop.f32.mrb[0].mxu0
      %10042 = vdwg.mxu0
      %v10049 = vrot.slane %v9867, 1
      %v10050 = vrot.slane %v9870, 1
      %v10051 = vsel %vm4930, %v10049, %v10050
      %v10052 = vrot.slane %v9875, 1
      %v10053 = vsel %vm4930, %v10050, %v10052
      %v10054 = vrot.slane %v9878, 1
      %v10055 = vsel %vm4930, %v10052, %v10054
      %v10056 = vrot.slane %v9883, 1
      %v10057 = vsel %vm4930, %v10054, %v10056
      %v10058 = vrot.slane %v9886, 1
      %v10059 = vsel %vm4930, %v10056, %v10058
      %v10065 = vadd.f32 %v9714, %v10051
      %v10066 = vadd.f32 %v9717, %v10053
      %v10067 = vadd.f32 %v9722, %v10055
      %v10068 = vadd.f32 %v9725, %v10057
      %v10069 = vadd.f32 %v9730, %v10059
      %v10076 = vrot.slane %v10021, 2
      %v10077 = vrot.slane %v10024, 2
      %v10078 = vsel %vm6820, %v10076, %v10077
      %v10079 = vrot.slane %v10029, 2
      %v10080 = vsel %vm6820, %v10077, %v10079
      %v10081 = vrot.slane %v10032, 2
      %v10082 = vsel %vm6820, %v10079, %v10081
      %v10083 = vrot.slane %v10037, 2
      %v10084 = vsel %vm6820, %v10081, %v10083
      %v10085 = vrot.slane %v10040, 2
      %v10086 = vsel %vm6820, %v10083, %v10085
      %v10092 = vadd.f32 %v10065, %v10078
      %v10093 = vadd.f32 %v10066, %v10080
      %v10094 = vadd.f32 %v10067, %v10082
      %v10095 = vadd.f32 %v10068, %v10084
      %v10096 = vadd.f32 %v10069, %v10086
      %v10097 = vld [vmem:[%s12] sm:$0x1]
      %v10099 = vlaneseq
      %v10100 = vshrl.u32 %v10099, 7
      %v10101 = vsub.s32 0, %v10100
      %v10102 = vrot.slane %v10097, %v10101
      %v10104 = vadd.f32 %v10092, %v10102
      %v10105 = vadd.f32 %v10093, %v10102
      %v10106 = vadd.f32 %v10094, %v10102
      %v10107 = vadd.f32 %v10095, %v10102
      %v10108 = vadd.f32 %v10096, %v10102
      %10109 = vst [vmem:[%s442] sm:$0xff] %v10104
      %10110 = vst [vmem:[%s442 + $0x8] sm:$0xff] %v10105
      %10111 = vst [vmem:[%s442 + $0x10] sm:$0xff] %v10106
      %10112 = vst [vmem:[%s442 + $0x18] sm:$0xff] %v10107
      %10113 = vst [vmem:[%s442 + $0x20] sm:$0xff] %v10108
      %10114 = vst [vmem:[%s442 + $0x28] sm:$0xff] 0.0
      %s10115 = smul.u32 6, %s24
      %p10116 = scmp.lt.s32.totalorder %s10115, 11
      %s10117 = scalar_select %p10116, %s10115, 11
      %s10118 = smul.addr %s10117, 8
      %s10119 = scalar_lea.vmem %s13, %s10118
      // Predicated region
      $region73: #{image_encoder_forward.1} parent=71 // pred_check
        %p10120 = pneg %p320
      $region74: #{image_encoder_forward.1} parent=71 // pred_check_branch
        %10122 = sbr.rel (%p10120) target = $region76
      $region75: #{image_encoder_forward.1} parent=71 // pred_region
        %s10123 = smul.u32 6, %s24
      $region76: #{image_encoder_forward.1} parent=71 // pred_fallthru
        _
    $region72: #{image_encoder_forward.1} parent=5 // pred_fallthru
      _
    %p10124 = scmp.le.s32.totalorder 2, %s19
    // Predicated region
    $region77: #{image_encoder_forward.1} parent=5 // pred_check
      %p10125 = pneg %p10124
    $region78: #{image_encoder_forward.1} parent=5 // pred_check_branch
      %10127 = sbr.rel (%p10125) target = $region80
    $region79: #{image_encoder_forward.1} parent=5 // pred_region
      %s10128 = ssub.s32 %s19, 2
      // Predicated region
      $region81: #{image_encoder_forward.1} parent=79 // pred_check
        %p10129 = pneg %p326
      $region82: #{image_encoder_forward.1} parent=79 // pred_check_branch
        %10131 = sbr.rel (%p10129) target = $region84
      $region83: #{image_encoder_forward.1} parent=79 // pred_region
        %s10132 = smul.u32 6, %s25
        %p10133 = scmp.lt.s32.totalorder %s10132, 11
        %s10134 = scalar_select %p10133, %s10132, 11
        %s10135 = smul.addr %s10134, 8
        %s10136 = scalar_lea.vmem %s13, %s10135
      $region84: #{image_encoder_forward.1} parent=79 // pred_fallthru
        _
    $region80: #{image_encoder_forward.1} parent=5 // pred_fallthru
      _
  $region6: #{image_encoder_forward.1} parent=0 // loop_footer
    %s23 = sadd.s32 1, %s19
  $region7: #{image_encoder_forward.1} parent=0 // loop_footer_branch
    %18 = sbr.rel target = $region3
  $region8: #{image_encoder_forward.1} parent=0 // loop_exit
    _

</llo_original>
